<compile_context>
chip_gen: v6e
topology: v6e:2x2x1
jax: 0.10.0
libtpu: 0.0.40
codegen_flags: <defaults>
</compile_context>

<pallas_src>
import jax
import jax.numpy as jnp
from jax import lax
from jax.experimental import pallas as pl
from jax.experimental.pallas import tpu as pltpu


# ----------------------------- wrapper-side prep -----------------------------
def _block_diag_tile(wm, W):
    """(Cin, Co) pointwise weight -> (W*Cin, W*Co) block-diagonal matrix."""
    eye = jnp.eye(W, dtype=wm.dtype)
    return jnp.einsum('pq,io->piqo', eye, wm).reshape(W * wm.shape[0], W * wm.shape[1])


def _tile_dw_weight(w, W, pad):
    """(K, K, C) depthwise weight -> (K*K, W*C) per-tap lane vectors.

    The W-boundary zero mask is folded in: tap (di, dj) is zeroed at output
    columns w where w + (dj - pad) falls outside [0, W)."""
    K = w.shape[0]
    wpos = jnp.arange(W)
    rows = []
    for di in range(K):
        for dj in range(K):
            ow = dj - pad
            valid = ((wpos + ow >= 0) & (wpos + ow < W)).astype(w.dtype)
            rows.append((valid[:, None] * w[di, dj][None, :]).reshape(-1))
    return jnp.stack(rows, axis=0)


def _group_lane_mask(C, G, W):
    """(G, W*C) one-hot group masks for the lane packing l = w*C + c."""
    lane_c = jnp.arange(W * C) % C
    grp = lane_c // (C // G)
    return (grp[None, :] == jnp.arange(G)[:, None]).astype(jnp.float32)


def _tile_chan(v, W):
    """(C,) per-channel vector -> (1, W*C) lane-tiled row."""
    return jnp.tile(v.astype(jnp.float32), W).reshape(1, -1)


def _pick_tb(N, H, WC, target_rows=256, max_block_bytes=1 << 20):
    """Batch tile: divides N, keeps >=2 grid steps when N >= 2 (v7x 2 TCs),
    stays under a VMEM budget, stops once TB*H reaches the MXU-fill target."""
    best = 1
    for tb in range(1, N + 1):
        if N % tb:
            continue
        if N >= 2 and N // tb < 2:
            continue
        if tb * H * WC * 4 > max_block_bytes:
            continue
        best = tb
        if tb * H >= target_rows:
            break
    return best


# --------------------------------- kernel ------------------------------------
def funnel_block_pallas_nhwc(x_nhwc, params, L, S):
    """FunnelBlock forward on an NHWC input; returns NHWC output."""
    N, H, W, C = x_nhwc.shape
    Cout = params['w11'].shape[1]
    assert S <= L, "padded scratch halo is sized for the large kernel (need S <= L)"
    assert C % 4 == 0 and Cout % 4 == 0, "GroupNorm needs channels divisible by 4"
    assert H % 8 == 0, "H must be a multiple of 8 (sublane-aligned slabs)"
    WC, WCo = W * C, W * Cout
    PL = L // 2
    ROW0 = 8                       # interior start row (sublane aligned)
    assert PL <= ROW0, "halo sized for depthwise kernels up to 17x17"
    SCR_ROWS = ROW0 + H + 8        # 8-row halo above and below the interior
    G, G3 = C // 4, Cout // 4
    EPS = 1e-5
    f32, bf16 = jnp.float32, jnp.bfloat16

    TB = _pick_tb(N, H, WC)
    TBH = TB * H

    # Lane-dense (N*H, W*C).  (Done here; if the surrounding model already
    # produces NHWC this costs nothing extra.)
    x2 = x_nhwc.astype(f32).reshape(N * H, WC)

    # Fold conv00/conv01 and conv10/conv11 (no nonlinearity between them).
    w00, w01 = params['w00'].astype(f32), params['w01'].astype(f32)
    w10, w11 = params['w10'].astype(f32), params['w11'].astype(f32)
    wa = w00 @ w01                                             # (C, C)
    ba = params['b00'].astype(f32) @ w01 + params['b01'].astype(f32)
    wb = w10 @ w11                                             # (C, Cout)
    bb = params['b10'].astype(f32) @ w11 + params['b11'].astype(f32)

    # Consolidated parameter slabs: one (R, WC) and one (R2, WCo) input
    # instead of ~14 tiny separately-DMA'd arrays.
    pwc = jnp.concatenate([
        _tile_dw_weight(params['w1'].astype(f32), W, L // 2),  # rows [0, L*L)
        _tile_dw_weight(params['w2'].astype(f32), W, S // 2),  # rows [L*L, +S*S)
        _tile_chan(params['b1'], W),
        _tile_chan(params['b2'], W),
        _tile_chan(ba, W),
        _tile_chan(params['g1'], W), _tile_chan(params['be1'], W),
        _tile_chan(params['g2'], W), _tile_chan(params['be2'], W),
        _group_lane_mask(C, G, W),
    ], axis=0)
    pwco = jnp.concatenate([
        _tile_chan(bb, W),
        _tile_chan(params['g3'], W), _tile_chan(params['be3'], W),
        _group_lane_mask(Cout, G3, W),
    ], axis=0)

    OFF_W1 = 0
    OFF_W2 = OFF_W1 + L * L
    OFF_B1 = OFF_W2 + S * S
    OFF_B2 = OFF_B1 + 1
    OFF_BA = OFF_B2 + 1
    OFF_G1 = OFF_BA + 1
    OFF_BE1 = OFF_G1 + 1
    OFF_G2 = OFF_BE1 + 1
    OFF_BE2 = OFF_G2 + 1
    OFF_GM12 = OFF_BE2 + 1
    OFF_BB, OFF_G3, OFF_BE3, OFF_GM3 = 0, 1, 2, 3

    # Folded 1x1 weights as block-diagonal MXU matrices, bf16 operands
    # (f32 accumulate).  NOTE: these grow as (W*C)^2 — for WC >~ 1024 tile the
    # output columns / single-buffer them (v7x has only 64 MiB VMEM); at
    # WC=128 they are 32 KiB each in bf16.
    wa_bd = _block_diag_tile(wa, W).astype(bf16)               # (WC, WC)
    wb_bd = _block_diag_tile(wb, W).astype(bf16)               # (WC, WCo)

    cnt12 = float(H * W * (C // G))
    cnt3 = float(H * W * (Cout // G3))

    def kernel(x_ref, pwc_ref, wa_ref, wb_ref, pwco_ref, o_ref, pad_ref, stk_ref):
        # Zero the halo with full sublane-aligned 8-row stores (unmasked vst).
        # The interior stores below never touch these rows.
        pad_ref[pl.ds(0, ROW0), :] = jnp.zeros((ROW0, WC), f32)
        pad_ref[pl.ds(ROW0 + H, SCR_ROWS - ROW0 - H), :] = jnp.zeros(
            (SCR_ROWS - ROW0 - H, WC), f32)

        def dw_conv_residual(xin, w_off, b_off, K):
            """xin + depthwise_conv(xin) + bias on an (H, W*C) slab.

            Lane (W) shifts are hoisted out of the row loop: K-1 pltpu.roll
            per stage (XLU) plus K interior stores; row (H) shifts are
            sublane-offset loads from the zero-halo scratch.  The W-boundary
            zero mask is folded into the pre-tiled tap weights.  Four
            accumulators break the serial mul+add chain."""
            pad = K // 2
            accs = [xin + pwc_ref[pl.ds(b_off, 1), :], None, None, None]
            t = 0
            for dj in range(K):
                ow = dj - pad
                xs = xin if ow == 0 else pltpu.roll(xin, (-ow * C) % WC, axis=1)
                pad_ref[pl.ds(ROW0, H), :] = xs              # rolled interior
                for di in range(K):
                    oh = di - pad
                    xrow = pad_ref[pl.ds(ROW0 + oh, H), :]            # (H, WC)
                    w_t = pwc_ref[pl.ds(w_off + di * K + dj, 1), :]   # (1, WC)
                    term = xrow * w_t
                    idx = t % 4
                    accs[idx] = term if accs[idx] is None else accs[idx] + term
                    t += 1
            parts = [a for a in accs if a is not None]
            while len(parts) > 1:
                nxt = [parts[i] + parts[i + 1] for i in range(0, len(parts) - 1, 2)]
                if len(parts) % 2:
                    nxt.append(parts[-1])
                parts = nxt
            return parts[0]

        def group_norm(xs, p_ref, gm_off, n_grp, gamma_off, beta_off, cnt):
            """Per-sample GroupNorm on a lane-packed (H, W*Cx) slab.
            Two-pass variance E[(x-mean)^2] (no cancellation).  For large G
            these masked lane reduces could instead be one small MXU matmul
            against the group-mask rows; G is tiny here."""
            inv_cnt = 1.0 / cnt
            gms = [p_ref[pl.ds(gm_off + g, 1), :] for g in range(n_grp)]
            ch_sum = jnp.sum(xs, axis=0, keepdims=True)              # (1, WCx)
            mean_l = jnp.zeros_like(ch_sum)
            for m in gms:
                gs = jnp.sum(ch_sum * m, axis=1, keepdims=True) * inv_cnt
                mean_l = mean_l + gs * m
            d = xs - mean_l
            sq_sum = jnp.sum(d * d, axis=0, keepdims=True)           # (1, WCx)
            var_l = jnp.zeros_like(sq_sum)
            for m in gms:
                gv = jnp.sum(sq_sum * m, axis=1, keepdims=True) * inv_cnt
                var_l = var_l + gv * m
            gamma = p_ref[pl.ds(gamma_off, 1), :]
            beta = p_ref[pl.ds(beta_off, 1), :]
            return d * lax.rsqrt(var_l + EPS) * gamma + beta

        # ---- Stages 1-2 (per sample): relu(x+conv1), relu(GN1(x+conv2)) ----
        for t in range(TB):
            xt = x_ref[pl.ds(t * H, H), :]                           # (H, WC)
            xt = jnp.maximum(dw_conv_residual(xt, OFF_W1, OFF_B1, L), 0.0)
            yt = dw_conv_residual(xt, OFF_W2, OFF_B2, S)
            xt = jnp.maximum(
                group_norm(yt, pwc_ref, OFF_GM12, G, OFF_G1, OFF_BE1, cnt12), 0.0)
            stk_ref[pl.ds(t * H, H), :] = xt

        # ---- Stage 3: folded 1x1s as ONE stacked MXU matmul + GN2 + relu ---
        xv = stk_ref[...]                                            # (TB*H, WC)
        h = jnp.dot(xv.astype(bf16), wa_ref[...], preferred_element_type=f32)
        y = xv + h + pwc_ref[pl.ds(OFF_BA, 1), :]
        for t in range(TB):
            yt = y[t * H:(t + 1) * H, :]
            stk_ref[pl.ds(t * H, H), :] = jnp.maximum(
                group_norm(yt, pwc_ref, OFF_GM12, G, OFF_G2, OFF_BE2, cnt12), 0.0)

        # ---- Stage 4: folded 1x1s as one stacked MXU matmul + GN3 ----------
        xv = stk_ref[...]
        h = jnp.dot(xv.astype(bf16), wb_ref[...],
                    preferred_element_type=f32) + pwco_ref[pl.ds(OFF_BB, 1), :]
        for t in range(TB):
            ht = h[t * H:(t + 1) * H, :]
            o_ref[pl.ds(t * H, H), :] = group_norm(
                ht, pwco_ref, OFF_GM3, G3, OFF_G3, OFF_BE3, cnt3)

    def _invariant(a):
        return pl.BlockSpec(a.shape, lambda b, n=a.ndim: (0,) * n)

    out2 = pl.pallas_call(
        kernel,
        out_shape=jax.ShapeDtypeStruct((N * H, WCo), f32),
        grid_spec=pltpu.PrefetchScalarGridSpec(
            num_scalar_prefetch=0,
            grid=(N // TB,),
            in_specs=[
                pl.BlockSpec((TBH, WC), lambda b: (b, 0)),   # TB-sample slab
                _invariant(pwc),
                _invariant(wa_bd),
                _invariant(wb_bd),
                _invariant(pwco),
            ],
            out_specs=pl.BlockSpec((TBH, WCo), lambda b: (b, 0)),
            scratch_shapes=[
                pltpu.VMEM((SCR_ROWS, WC), f32),             # zero-halo scratch
                pltpu.VMEM((TBH, WC), f32),                  # stacked stage buffer
            ],
        ),
        compiler_params=pltpu.CompilerParams(
            dimension_semantics=("parallel",)),              # batch steps independent
    )(x2, pwc, wa_bd, wb_bd, pwco)

    return out2.reshape(N, H, W, Cout)


def funnel_block_pallas(x_nchw, params, L, S):
    """NCHW drop-in matching the PyTorch module.  The transposes below are
    extra HBM round trips; prefer funnel_block_pallas_nhwc when the
    surrounding model can produce/consume NHWC directly."""
    x_nhwc = jnp.transpose(x_nchw, (0, 2, 3, 1))
    out = funnel_block_pallas_nhwc(x_nhwc, params, L, S)
    return jnp.transpose(out, (0, 3, 1, 2))


# ----------------------- pure-JAX reference (for checking) -------------------
def ref_forward(x, p, L, S):
    N, C, H, W = x.shape
    Cout = p['w11'].shape[1]

    def dw(x, w, b, pad):
        wt = jnp.transpose(w, (2, 0, 1))[:, None, :, :]            # (C,1,K,K)
        y = lax.conv_general_dilated(
            x, wt, window_strides=(1, 1), padding=[(pad, pad), (pad, pad)],
            dimension_numbers=('NCHW', 'OIHW', 'NCHW'), feature_group_count=C)
        return y + b[None, :, None, None]

    def pw(x, w, b):
        return jnp.einsum('nchw,co->nohw', x, w) + b[None, :, None, None]

    def gn(x, G, gamma, beta, eps=1e-5):
        n, c, h, w = x.shape
        xg = x.reshape(n, G, (c // G) * h * w)
        m = xg.mean(-1, keepdims=True)
        v = xg.var(-1, keepdims=True)
        xn = ((xg - m) / jnp.sqrt(v + eps)).reshape(n, c, h, w)
        return xn * gamma[None, :, None, None] + beta[None, :, None, None]

    x = jax.nn.relu(x + dw(x, p['w1'], p['b1'], L // 2))
    x = jax.nn.relu(gn(x + dw(x, p['w2'], p['b2'], S // 2), C // 4, p['g1'], p['be1']))
    x = jax.nn.relu(gn(x + pw(pw(x, p['w00'], p['b00']), p['w01'], p['b01']),
                       C // 4, p['g2'], p['be2']))
    x = gn(pw(pw(x, p['w10'], p['b10']), p['w11'], p['b11']),
           Cout // 4, p['g3'], p['be3'])
    return x


if __name__ == "__main__":
    # N=8 so the batch-blocked grid has TB=4 samples/step and 2 grid steps.
    N, C, H, W = 8, 8, 16, 16
    Cout = 8
    C15 = int(C * 1.5)
    L, S = 5, 3          # large/small depthwise kernels, stride = 1

    key = jax.random.PRNGKey(0)
    keys = jax.random.split(key, 20)
    r = lambda k, s, sc=0.1: sc * jax.random.normal(k, s, dtype=jnp.float32)

    params = dict(
        w1=r(keys[0], (L, L, C)), b1=r(keys[1], (C,)),
        w2=r(keys[2], (S, S, C)), b2=r(keys[3], (C,)),
        w00=r(keys[4], (C, C15)), b00=r(keys[5], (C15,)),
        w01=r(keys[6], (C15, C)), b01=r(keys[7], (C,)),
        w10=r(keys[8], (C, C15)), b10=r(keys[9], (C15,)),
        w11=r(keys[10], (C15, Cout)), b11=r(keys[11], (Cout,)),
        g1=1.0 + r(keys[12], (C,)), be1=r(keys[13], (C,)),
        g2=1.0 + r(keys[14], (C,)), be2=r(keys[15], (C,)),
        g3=1.0 + r(keys[16], (Cout,)), be3=r(keys[17], (Cout,)),
    )

    x = jax.random.normal(keys[18], (N, C, H, W), dtype=jnp.float32)

    out = jax.block_until_ready(funnel_block_pallas(x, params, L, S))
    ref = jax.block_until_ready(ref_forward(x, params, L, S))

    assert out.shape == ref.shape == (N, Cout, H, W)
    err = float(jnp.max(jnp.abs(out - ref)))
    # Tolerance is loosened vs the pure-f32 version because stages 3-4 use
    # bf16 MXU operands (f32 accumulate); everything else stays f32.
    assert jnp.allclose(out, ref, atol=5e-2, rtol=5e-2), f"max abs err {err}"
    print("KERNEL_OK")
</pallas_src>

<mosaic_0001>
module attributes {stable_mosaic.version = 11 : i64} {
  func.func @kernel(%arg0: i32, %arg1: memref<64x128xf32, #tpu.memory_space<vmem>>, %arg2: memref<43x128xf32, #tpu.memory_space<vmem>>, %arg3: memref<128x128xbf16, #tpu.memory_space<vmem>>, %arg4: memref<128x128xbf16, #tpu.memory_space<vmem>>, %arg5: memref<5x128xf32, #tpu.memory_space<vmem>>, %arg6: memref<64x128xf32, #tpu.memory_space<vmem>>, %arg7: memref<32x128xf32, #tpu.memory_space<vmem>>, %arg8: memref<64x128xf32, #tpu.memory_space<vmem>>) attributes {dimension_semantics = [#tpu.dimension_semantics<parallel>], iteration_bounds = array<i64: 2>, scalar_prefetch = 0 : i64, scratch_operands = 2 : i64, tpu.core_type = #tpu.core_type<tc>, window_params = [{transform_indices = @transform_0, window_bounds = array<i64: 64, 128>}, {pipeline_mode = #tpu.pipeline_mode<synchronous>, transform_indices = @transform_1, window_bounds = array<i64: 43, 128>}, {pipeline_mode = #tpu.pipeline_mode<synchronous>, transform_indices = @transform_2, window_bounds = array<i64: 128, 128>}, {pipeline_mode = #tpu.pipeline_mode<synchronous>, transform_indices = @transform_3, window_bounds = array<i64: 128, 128>}, {pipeline_mode = #tpu.pipeline_mode<synchronous>, transform_indices = @transform_4, window_bounds = array<i64: 5, 128>}, {transform_indices = @transform_5, window_bounds = array<i64: 64, 128>}]} {
    %cst = arith.constant 0.000000e+00 : f32
    %0 = vector.broadcast %cst : f32 to vector<8x128xf32>
    %c0 = arith.constant 0 : index
    %c0_0 = arith.constant 0 : index
    %1 = vector.load %arg7[%c0, %c0_0] : memref<32x128xf32, #tpu.memory_space<vmem>>, vector<8x128xf32>
    tpu.vector_store %arg7[%c0, %c0_0], %0 {strides = array<i32>} : memref<32x128xf32, #tpu.memory_space<vmem>>, vector<8x128xf32>,
    %cst_1 = arith.constant 0.000000e+00 : f32
    %2 = vector.broadcast %cst_1 : f32 to vector<8x128xf32>
    %c24 = arith.constant 24 : index
    %c0_2 = arith.constant 0 : index
    %3 = vector.load %arg7[%c24, %c0_2] : memref<32x128xf32, #tpu.memory_space<vmem>>, vector<8x128xf32>
    tpu.vector_store %arg7[%c24, %c0_2], %2 {strides = array<i32>} : memref<32x128xf32, #tpu.memory_space<vmem>>, vector<8x128xf32>,
    %c0_3 = arith.constant 0 : index
    %c0_4 = arith.constant 0 : index
    %4 = vector.load %arg1[%c0_3, %c0_4] : memref<64x128xf32, #tpu.memory_space<vmem>>, vector<16x128xf32>
    %c34 = arith.constant 34 : index
    %c0_5 = arith.constant 0 : index
    %5 = vector.load %arg2[%c34, %c0_5] : memref<43x128xf32, #tpu.memory_space<vmem>>, vector<1x128xf32>
    %6 = vector.broadcast %5 : vector<1x128xf32> to vector<16x128xf32>
    %7 = arith.addf %4, %6 : vector<16x128xf32>
    %c16_i32 = arith.constant 16 : i32
    %8 = tpu.dynamic_rotate %4 by %c16_i32 dim 1 : vector<16x128xf32>, i32 -> vector<16x128xf32>
    %c8 = arith.constant 8 : index
    %c0_6 = arith.constant 0 : index
    %9 = vector.load %arg7[%c8, %c0_6] : memref<32x128xf32, #tpu.memory_space<vmem>>, vector<16x128xf32>
    tpu.vector_store %arg7[%c8, %c0_6], %8 {strides = array<i32>} : memref<32x128xf32, #tpu.memory_space<vmem>>, vector<16x128xf32>,
    %c6 = arith.constant 6 : index
    %c0_7 = arith.constant 0 : index
    %10 = vector.load %arg7[%c6, %c0_7] : memref<32x128xf32, #tpu.memory_space<vmem>>, vector<16x128xf32>
    %c0_8 = arith.constant 0 : index
    %c0_9 = arith.constant 0 : index
    %11 = vector.load %arg2[%c0_8, %c0_9] : memref<43x128xf32, #tpu.memory_space<vmem>>, vector<1x128xf32>
    %12 = vector.broadcast %11 : vector<1x128xf32> to vector<16x128xf32>
    %13 = arith.mulf %10, %12 : vector<16x128xf32>
    %14 = arith.addf %7, %13 : vector<16x128xf32>
    %c7 = arith.constant 7 : index
    %c0_10 = arith.constant 0 : index
    %15 = vector.load %arg7[%c7, %c0_10] : memref<32x128xf32, #tpu.memory_space<vmem>>, vector<16x128xf32>
    %c5 = arith.constant 5 : index
    %c0_11 = arith.constant 0 : index
    %16 = vector.load %arg2[%c5, %c0_11] : memref<43x128xf32, #tpu.memory_space<vmem>>, vector<1x128xf32>
    %17 = vector.broadcast %16 : vector<1x128xf32> to vector<16x128xf32>
    %18 = arith.mulf %15, %17 : vector<16x128xf32>
    %c8_12 = arith.constant 8 : index
    %c0_13 = arith.constant 0 : index
    %19 = vector.load %arg7[%c8_12, %c0_13] : memref<32x128xf32, #tpu.memory_space<vmem>>, vector<16x128xf32>
    %c10 = arith.constant 10 : index
    %c0_14 = arith.constant 0 : index
    %20 = vector.load %arg2[%c10, %c0_14] : memref<43x128xf32, #tpu.memory_space<vmem>>, vector<1x128xf32>
    %21 = vector.broadcast %20 : vector<1x128xf32> to vector<16x128xf32>
    %22 = arith.mulf %19, %21 : vector<16x128xf32>
    %c9 = arith.constant 9 : index
    %c0_15 = arith.constant 0 : index
    %23 = vector.load %arg7[%c9, %c0_15] : memref<32x128xf32, #tpu.memory_space<vmem>>, vector<16x128xf32>
    %c15 = arith.constant 15 : index
    %c0_16 = arith.constant 0 : index
    %24 = vector.load %arg2[%c15, %c0_16] : memref<43x128xf32, #tpu.memory_space<vmem>>, vector<1x128xf32>
    %25 = vector.broadcast %24 : vector<1x128xf32> to vector<16x128xf32>
    %26 = arith.mulf %23, %25 : vector<16x128xf32>
    %c10_17 = arith.constant 10 : index
    %c0_18 = arith.constant 0 : index
    %27 = vector.load %arg7[%c10_17, %c0_18] : memref<32x128xf32, #tpu.memory_space<vmem>>, vector<16x128xf32>
    %c20 = arith.constant 20 : index
    %c0_19 = arith.constant 0 : index
    %28 = vector.load %arg2[%c20, %c0_19] : memref<43x128xf32, #tpu.memory_space<vmem>>, vector<1x128xf32>
    %29 = vector.broadcast %28 : vector<1x128xf32> to vector<16x128xf32>
    %30 = arith.mulf %27, %29 : vector<16x128xf32>
    %31 = arith.addf %14, %30 : vector<16x128xf32>
    %c8_i32 = arith.constant 8 : i32
    %32 = tpu.dynamic_rotate %4 by %c8_i32 dim 1 : vector<16x128xf32>, i32 -> vector<16x128xf32>
    %c8_20 = arith.constant 8 : index
    %c0_21 = arith.constant 0 : index
    %33 = vector.load %arg7[%c8_20, %c0_21] : memref<32x128xf32, #tpu.memory_space<vmem>>, vector<16x128xf32>
    tpu.vector_store %arg7[%c8_20, %c0_21], %32 {strides = array<i32>} : memref<32x128xf32, #tpu.memory_space<vmem>>, vector<16x128xf32>,
    %c6_22 = arith.constant 6 : index
    %c0_23 = arith.constant 0 : index
    %34 = vector.load %arg7[%c6_22, %c0_23] : memref<32x128xf32, #tpu.memory_space<vmem>>, vector<16x128xf32>
    %c1 = arith.constant 1 : index
    %c0_24 = arith.constant 0 : index
    %35 = vector.load %arg2[%c1, %c0_24] : memref<43x128xf32, #tpu.memory_space<vmem>>, vector<1x128xf32>
    %36 = vector.broadcast %35 : vector<1x128xf32> to vector<16x128xf32>
    %37 = arith.mulf %34, %36 : vector<16x128xf32>
    %38 = arith.addf %18, %37 : vector<16x128xf32>
    %c7_25 = arith.constant 7 : index
    %c0_26 = arith.constant 0 : index
    %39 = vector.load %arg7[%c7_25, %c0_26] : memref<32x128xf32, #tpu.memory_space<vmem>>, vector<16x128xf32>
    %c6_27 = arith.constant 6 : index
    %c0_28 = arith.constant 0 : index
    %40 = vector.load %arg2[%c6_27, %c0_28] : memref<43x128xf32, #tpu.memory_space<vmem>>, vector<1x128xf32>
    %41 = vector.broadcast %40 : vector<1x128xf32> to vector<16x128xf32>
    %42 = arith.mulf %39, %41 : vector<16x128xf32>
    %43 = arith.addf %22, %42 : vector<16x128xf32>
    %c8_29 = arith.constant 8 : index
    %c0_30 = arith.constant 0 : index
    %44 = vector.load %arg7[%c8_29, %c0_30] : memref<32x128xf32, #tpu.memory_space<vmem>>, vector<16x128xf32>
    %c11 = arith.constant 11 : index
    %c0_31 = arith.constant 0 : index
    %45 = vector.load %arg2[%c11, %c0_31] : memref<43x128xf32, #tpu.memory_space<vmem>>, vector<1x128xf32>
    %46 = vector.broadcast %45 : vector<1x128xf32> to vector<16x128xf32>
    %47 = arith.mulf %44, %46 : vector<16x128xf32>
    %48 = arith.addf %26, %47 : vector<16x128xf32>
    %c9_32 = arith.constant 9 : index
    %c0_33 = arith.constant 0 : index
    %49 = vector.load %arg7[%c9_32, %c0_33] : memref<32x128xf32, #tpu.memory_space<vmem>>, vector<16x128xf32>
    %c16 = arith.constant 16 : index
    %c0_34 = arith.constant 0 : index
    %50 = vector.load %arg2[%c16, %c0_34] : memref<43x128xf32, #tpu.memory_space<vmem>>, vector<1x128xf32>
    %51 = vector.broadcast %50 : vector<1x128xf32> to vector<16x128xf32>
    %52 = arith.mulf %49, %51 : vector<16x128xf32>
    %53 = arith.addf %31, %52 : vector<16x128xf32>
    %c10_35 = arith.constant 10 : index
    %c0_36 = arith.constant 0 : index
    %54 = vector.load %arg7[%c10_35, %c0_36] : memref<32x128xf32, #tpu.memory_space<vmem>>, vector<16x128xf32>
    %c21 = arith.constant 21 : index
    %c0_37 = arith.constant 0 : index
    %55 = vector.load %arg2[%c21, %c0_37] : memref<43x128xf32, #tpu.memory_space<vmem>>, vector<1x128xf32>
    %56 = vector.broadcast %55 : vector<1x128xf32> to vector<16x128xf32>
    %57 = arith.mulf %54, %56 : vector<16x128xf32>
    %58 = arith.addf %38, %57 : vector<16x128xf32>
    %c8_38 = arith.constant 8 : index
    %c0_39 = arith.constant 0 : index
    %59 = vector.load %arg7[%c8_38, %c0_39] : memref<32x128xf32, #tpu.memory_space<vmem>>, vector<16x128xf32>
    tpu.vector_store %arg7[%c8_38, %c0_39], %4 {strides = array<i32>} : memref<32x128xf32, #tpu.memory_space<vmem>>, vector<16x128xf32>,
    %c6_40 = arith.constant 6 : index
    %c0_41 = arith.constant 0 : index
    %60 = vector.load %arg7[%c6_40, %c0_41] : memref<32x128xf32, #tpu.memory_space<vmem>>, vector<16x128xf32>
    %c2 = arith.constant 2 : index
    %c0_42 = arith.constant 0 : index
    %61 = vector.load %arg2[%c2, %c0_42] : memref<43x128xf32, #tpu.memory_space<vmem>>, vector<1x128xf32>
    %62 = vector.broadcast %61 : vector<1x128xf32> to vector<16x128xf32>
    %63 = arith.mulf %60, %62 : vector<16x128xf32>
    %64 = arith.addf %43, %63 : vector<16x128xf32>
    %c7_43 = arith.constant 7 : index
    %c0_44 = arith.constant 0 : index
    %65 = vector.load %arg7[%c7_43, %c0_44] : memref<32x128xf32, #tpu.memory_space<vmem>>, vector<16x128xf32>
    %c7_45 = arith.constant 7 : index
    %c0_46 = arith.constant 0 : index
    %66 = vector.load %arg2[%c7_45, %c0_46] : memref<43x128xf32, #tpu.memory_space<vmem>>, vector<1x128xf32>
    %67 = vector.broadcast %66 : vector<1x128xf32> to vector<16x128xf32>
    %68 = arith.mulf %65, %67 : vector<16x128xf32>
    %69 = arith.addf %48, %68 : vector<16x128xf32>
    %c8_47 = arith.constant 8 : index
    %c0_48 = arith.constant 0 : index
    %70 = vector.load %arg7[%c8_47, %c0_48] : memref<32x128xf32, #tpu.memory_space<vmem>>, vector<16x128xf32>
    %c12 = arith.constant 12 : index
    %c0_49 = arith.constant 0 : index
    %71 = vector.load %arg2[%c12, %c0_49] : memref<43x128xf32, #tpu.memory_space<vmem>>, vector<1x128xf32>
    %72 = vector.broadcast %71 : vector<1x128xf32> to vector<16x128xf32>
    %73 = arith.mulf %70, %72 : vector<16x128xf32>
    %74 = arith.addf %53, %73 : vector<16x128xf32>
    %c9_50 = arith.constant 9 : index
    %c0_51 = arith.constant 0 : index
    %75 = vector.load %arg7[%c9_50, %c0_51] : memref<32x128xf32, #tpu.memory_space<vmem>>, vector<16x128xf32>
    %c17 = arith.constant 17 : index
    %c0_52 = arith.constant 0 : index
    %76 = vector.load %arg2[%c17, %c0_52] : memref<43x128xf32, #tpu.memory_space<vmem>>, vector<1x128xf32>
    %77 = vector.broadcast %76 : vector<1x128xf32> to vector<16x128xf32>
    %78 = arith.mulf %75, %77 : vector<16x128xf32>
    %79 = arith.addf %58, %78 : vector<16x128xf32>
    %c10_53 = arith.constant 10 : index
    %c0_54 = arith.constant 0 : index
    %80 = vector.load %arg7[%c10_53, %c0_54] : memref<32x128xf32, #tpu.memory_space<vmem>>, vector<16x128xf32>
    %c22 = arith.constant 22 : index
    %c0_55 = arith.constant 0 : index
    %81 = vector.load %arg2[%c22, %c0_55] : memref<43x128xf32, #tpu.memory_space<vmem>>, vector<1x128xf32>
    %82 = vector.broadcast %81 : vector<1x128xf32> to vector<16x128xf32>
    %83 = arith.mulf %80, %82 : vector<16x128xf32>
    %84 = arith.addf %64, %83 : vector<16x128xf32>
    %c120_i32 = arith.constant 120 : i32
    %85 = tpu.dynamic_rotate %4 by %c120_i32 dim 1 : vector<16x128xf32>, i32 -> vector<16x128xf32>
    %c8_56 = arith.constant 8 : index
    %c0_57 = arith.constant 0 : index
    %86 = vector.load %arg7[%c8_56, %c0_57] : memref<32x128xf32, #tpu.memory_space<vmem>>, vector<16x128xf32>
    tpu.vector_store %arg7[%c8_56, %c0_57], %85 {strides = array<i32>} : memref<32x128xf32, #tpu.memory_space<vmem>>, vector<16x128xf32>,
    %c6_58 = arith.constant 6 : index
    %c0_59 = arith.constant 0 : index
    %87 = vector.load %arg7[%c6_58, %c0_59] : memref<32x128xf32, #tpu.memory_space<vmem>>, vector<16x128xf32>
    %c3 = arith.constant 3 : index
    %c0_60 = arith.constant 0 : index
    %88 = vector.load %arg2[%c3, %c0_60] : memref<43x128xf32, #tpu.memory_space<vmem>>, vector<1x128xf32>
    %89 = vector.broadcast %88 : vector<1x128xf32> to vector<16x128xf32>
    %90 = arith.mulf %87, %89 : vector<16x128xf32>
    %91 = arith.addf %69, %90 : vector<16x128xf32>
    %c7_61 = arith.constant 7 : index
    %c0_62 = arith.constant 0 : index
    %92 = vector.load %arg7[%c7_61, %c0_62] : memref<32x128xf32, #tpu.memory_space<vmem>>, vector<16x128xf32>
    %c8_63 = arith.constant 8 : index
    %c0_64 = arith.constant 0 : index
    %93 = vector.load %arg2[%c8_63, %c0_64] : memref<43x128xf32, #tpu.memory_space<vmem>>, vector<1x128xf32>
    %94 = vector.broadcast %93 : vector<1x128xf32> to vector<16x128xf32>
    %95 = arith.mulf %92, %94 : vector<16x128xf32>
    %96 = arith.addf %74, %95 : vector<16x128xf32>
    %c8_65 = arith.constant 8 : index
    %c0_66 = arith.constant 0 : index
    %97 = vector.load %arg7[%c8_65, %c0_66] : memref<32x128xf32, #tpu.memory_space<vmem>>, vector<16x128xf32>
    %c13 = arith.constant 13 : index
    %c0_67 = arith.constant 0 : index
    %98 = vector.load %arg2[%c13, %c0_67] : memref<43x128xf32, #tpu.memory_space<vmem>>, vector<1x128xf32>
    %99 = vector.broadcast %98 : vector<1x128xf32> to vector<16x128xf32>
    %100 = arith.mulf %97, %99 : vector<16x128xf32>
    %101 = arith.addf %79, %100 : vector<16x128xf32>
    %c9_68 = arith.constant 9 : index
    %c0_69 = arith.constant 0 : index
    %102 = vector.load %arg7[%c9_68, %c0_69] : memref<32x128xf32, #tpu.memory_space<vmem>>, vector<16x128xf32>
    %c18 = arith.constant 18 : index
    %c0_70 = arith.constant 0 : index
    %103 = vector.load %arg2[%c18, %c0_70] : memref<43x128xf32, #tpu.memory_space<vmem>>, vector<1x128xf32>
    %104 = vector.broadcast %103 : vector<1x128xf32> to vector<16x128xf32>
    %105 = arith.mulf %102, %104 : vector<16x128xf32>
    %106 = arith.addf %84, %105 : vector<16x128xf32>
    %c10_71 = arith.constant 10 : index
    %c0_72 = arith.constant 0 : index
    %107 = vector.load %arg7[%c10_71, %c0_72] : memref<32x128xf32, #tpu.memory_space<vmem>>, vector<16x128xf32>
    %c23 = arith.constant 23 : index
    %c0_73 = arith.constant 0 : index
    %108 = vector.load %arg2[%c23, %c0_73] : memref<43x128xf32, #tpu.memory_space<vmem>>, vector<1x128xf32>
    %109 = vector.broadcast %108 : vector<1x128xf32> to vector<16x128xf32>
    %110 = arith.mulf %107, %109 : vector<16x128xf32>
    %111 = arith.addf %91, %110 : vector<16x128xf32>
    %c112_i32 = arith.constant 112 : i32
    %112 = tpu.dynamic_rotate %4 by %c112_i32 dim 1 : vector<16x128xf32>, i32 -> vector<16x128xf32>
    %c8_74 = arith.constant 8 : index
    %c0_75 = arith.constant 0 : index
    %113 = vector.load %arg7[%c8_74, %c0_75] : memref<32x128xf32, #tpu.memory_space<vmem>>, vector<16x128xf32>
    tpu.vector_store %arg7[%c8_74, %c0_75], %112 {strides = array<i32>} : memref<32x128xf32, #tpu.memory_space<vmem>>, vector<16x128xf32>,
    %c6_76 = arith.constant 6 : index
    %c0_77 = arith.constant 0 : index
    %114 = vector.load %arg7[%c6_76, %c0_77] : memref<32x128xf32, #tpu.memory_space<vmem>>, vector<16x128xf32>
    %c4 = arith.constant 4 : index
    %c0_78 = arith.constant 0 : index
    %115 = vector.load %arg2[%c4, %c0_78] : memref<43x128xf32, #tpu.memory_space<vmem>>, vector<1x128xf32>
    %116 = vector.broadcast %115 : vector<1x128xf32> to vector<16x128xf32>
    %117 = arith.mulf %114, %116 : vector<16x128xf32>
    %118 = arith.addf %96, %117 : vector<16x128xf32>
    %c7_79 = arith.constant 7 : index
    %c0_80 = arith.constant 0 : index
    %119 = vector.load %arg7[%c7_79, %c0_80] : memref<32x128xf32, #tpu.memory_space<vmem>>, vector<16x128xf32>
    %c9_81 = arith.constant 9 : index
    %c0_82 = arith.constant 0 : index
    %120 = vector.load %arg2[%c9_81, %c0_82] : memref<43x128xf32, #tpu.memory_space<vmem>>, vector<1x128xf32>
    %121 = vector.broadcast %120 : vector<1x128xf32> to vector<16x128xf32>
    %122 = arith.mulf %119, %121 : vector<16x128xf32>
    %123 = arith.addf %101, %122 : vector<16x128xf32>
    %c8_83 = arith.constant 8 : index
    %c0_84 = arith.constant 0 : index
    %124 = vector.load %arg7[%c8_83, %c0_84] : memref<32x128xf32, #tpu.memory_space<vmem>>, vector<16x128xf32>
    %c14 = arith.constant 14 : index
    %c0_85 = arith.constant 0 : index
    %125 = vector.load %arg2[%c14, %c0_85] : memref<43x128xf32, #tpu.memory_space<vmem>>, vector<1x128xf32>
    %126 = vector.broadcast %125 : vector<1x128xf32> to vector<16x128xf32>
    %127 = arith.mulf %124, %126 : vector<16x128xf32>
    %128 = arith.addf %106, %127 : vector<16x128xf32>
    %c9_86 = arith.constant 9 : index
    %c0_87 = arith.constant 0 : index
    %129 = vector.load %arg7[%c9_86, %c0_87] : memref<32x128xf32, #tpu.memory_space<vmem>>, vector<16x128xf32>
    %c19 = arith.constant 19 : index
    %c0_88 = arith.constant 0 : index
    %130 = vector.load %arg2[%c19, %c0_88] : memref<43x128xf32, #tpu.memory_space<vmem>>, vector<1x128xf32>
    %131 = vector.broadcast %130 : vector<1x128xf32> to vector<16x128xf32>
    %132 = arith.mulf %129, %131 : vector<16x128xf32>
    %133 = arith.addf %111, %132 : vector<16x128xf32>
    %c10_89 = arith.constant 10 : index
    %c0_90 = arith.constant 0 : index
    %134 = vector.load %arg7[%c10_89, %c0_90] : memref<32x128xf32, #tpu.memory_space<vmem>>, vector<16x128xf32>
    %c24_91 = arith.constant 24 : index
    %c0_92 = arith.constant 0 : index
    %135 = vector.load %arg2[%c24_91, %c0_92] : memref<43x128xf32, #tpu.memory_space<vmem>>, vector<1x128xf32>
    %136 = vector.broadcast %135 : vector<1x128xf32> to vector<16x128xf32>
    %137 = arith.mulf %134, %136 : vector<16x128xf32>
    %138 = arith.addf %118, %137 : vector<16x128xf32>
    %139 = arith.addf %138, %123 : vector<16x128xf32>
    %140 = arith.addf %128, %133 : vector<16x128xf32>
    %141 = arith.addf %139, %140 : vector<16x128xf32>
    %cst_93 = arith.constant 0.000000e+00 : f32
    %142 = vector.broadcast %cst_93 : f32 to vector<16x128xf32>
    %143 = arith.maximumf %141, %142 : vector<16x128xf32>
    %c35 = arith.constant 35 : index
    %c0_94 = arith.constant 0 : index
    %144 = vector.load %arg2[%c35, %c0_94] : memref<43x128xf32, #tpu.memory_space<vmem>>, vector<1x128xf32>
    %145 = vector.broadcast %144 : vector<1x128xf32> to vector<16x128xf32>
    %146 = arith.addf %143, %145 : vector<16x128xf32>
    %c8_i32_95 = arith.constant 8 : i32
    %147 = tpu.dynamic_rotate %143 by %c8_i32_95 dim 1 : vector<16x128xf32>, i32 -> vector<16x128xf32>
    %c8_96 = arith.constant 8 : index
    %c0_97 = arith.constant 0 : index
    %148 = vector.load %arg7[%c8_96, %c0_97] : memref<32x128xf32, #tpu.memory_space<vmem>>, vector<16x128xf32>
    tpu.vector_store %arg7[%c8_96, %c0_97], %147 {strides = array<i32>} : memref<32x128xf32, #tpu.memory_space<vmem>>, vector<16x128xf32>,
    %c7_98 = arith.constant 7 : index
    %c0_99 = arith.constant 0 : index
    %149 = vector.load %arg7[%c7_98, %c0_99] : memref<32x128xf32, #tpu.memory_space<vmem>>, vector<16x128xf32>
    %c25 = arith.constant 25 : index
    %c0_100 = arith.constant 0 : index
    %150 = vector.load %arg2[%c25, %c0_100] : memref<43x128xf32, #tpu.memory_space<vmem>>, vector<1x128xf32>
    %151 = vector.broadcast %150 : vector<1x128xf32> to vector<16x128xf32>
    %152 = arith.mulf %149, %151 : vector<16x128xf32>
    %153 = arith.addf %146, %152 : vector<16x128xf32>
    %c8_101 = arith.constant 8 : index
    %c0_102 = arith.constant 0 : index
    %154 = vector.load %arg7[%c8_101, %c0_102] : memref<32x128xf32, #tpu.memory_space<vmem>>, vector<16x128xf32>
    %c28 = arith.constant 28 : index
    %c0_103 = arith.constant 0 : index
    %155 = vector.load %arg2[%c28, %c0_103] : memref<43x128xf32, #tpu.memory_space<vmem>>, vector<1x128xf32>
    %156 = vector.broadcast %155 : vector<1x128xf32> to vector<16x128xf32>
    %157 = arith.mulf %154, %156 : vector<16x128xf32>
    %c9_104 = arith.constant 9 : index
    %c0_105 = arith.constant 0 : index
    %158 = vector.load %arg7[%c9_104, %c0_105] : memref<32x128xf32, #tpu.memory_space<vmem>>, vector<16x128xf32>
    %c31 = arith.constant 31 : index
    %c0_106 = arith.constant 0 : index
    %159 = vector.load %arg2[%c31, %c0_106] : memref<43x128xf32, #tpu.memory_space<vmem>>, vector<1x128xf32>
    %160 = vector.broadcast %159 : vector<1x128xf32> to vector<16x128xf32>
    %161 = arith.mulf %158, %160 : vector<16x128xf32>
    %c8_107 = arith.constant 8 : index
    %c0_108 = arith.constant 0 : index
    %162 = vector.load %arg7[%c8_107, %c0_108] : memref<32x128xf32, #tpu.memory_space<vmem>>, vector<16x128xf32>
    tpu.vector_store %arg7[%c8_107, %c0_108], %143 {strides = array<i32>} : memref<32x128xf32, #tpu.memory_space<vmem>>, vector<16x128xf32>,
    %c7_109 = arith.constant 7 : index
    %c0_110 = arith.constant 0 : index
    %163 = vector.load %arg7[%c7_109, %c0_110] : memref<32x128xf32, #tpu.memory_space<vmem>>, vector<16x128xf32>
    %c26 = arith.constant 26 : index
    %c0_111 = arith.constant 0 : index
    %164 = vector.load %arg2[%c26, %c0_111] : memref<43x128xf32, #tpu.memory_space<vmem>>, vector<1x128xf32>
    %165 = vector.broadcast %164 : vector<1x128xf32> to vector<16x128xf32>
    %166 = arith.mulf %163, %165 : vector<16x128xf32>
    %c8_112 = arith.constant 8 : index
    %c0_113 = arith.constant 0 : index
    %167 = vector.load %arg7[%c8_112, %c0_113] : memref<32x128xf32, #tpu.memory_space<vmem>>, vector<16x128xf32>
    %c29 = arith.constant 29 : index
    %c0_114 = arith.constant 0 : index
    %168 = vector.load %arg2[%c29, %c0_114] : memref<43x128xf32, #tpu.memory_space<vmem>>, vector<1x128xf32>
    %169 = vector.broadcast %168 : vector<1x128xf32> to vector<16x128xf32>
    %170 = arith.mulf %167, %169 : vector<16x128xf32>
    %171 = arith.addf %153, %170 : vector<16x128xf32>
    %c9_115 = arith.constant 9 : index
    %c0_116 = arith.constant 0 : index
    %172 = vector.load %arg7[%c9_115, %c0_116] : memref<32x128xf32, #tpu.memory_space<vmem>>, vector<16x128xf32>
    %c32 = arith.constant 32 : index
    %c0_117 = arith.constant 0 : index
    %173 = vector.load %arg2[%c32, %c0_117] : memref<43x128xf32, #tpu.memory_space<vmem>>, vector<1x128xf32>
    %174 = vector.broadcast %173 : vector<1x128xf32> to vector<16x128xf32>
    %175 = arith.mulf %172, %174 : vector<16x128xf32>
    %176 = arith.addf %157, %175 : vector<16x128xf32>
    %c120_i32_118 = arith.constant 120 : i32
    %177 = tpu.dynamic_rotate %143 by %c120_i32_118 dim 1 : vector<16x128xf32>, i32 -> vector<16x128xf32>
    %c8_119 = arith.constant 8 : index
    %c0_120 = arith.constant 0 : index
    %178 = vector.load %arg7[%c8_119, %c0_120] : memref<32x128xf32, #tpu.memory_space<vmem>>, vector<16x128xf32>
    tpu.vector_store %arg7[%c8_119, %c0_120], %177 {strides = array<i32>} : memref<32x128xf32, #tpu.memory_space<vmem>>, vector<16x128xf32>,
    %c7_121 = arith.constant 7 : index
    %c0_122 = arith.constant 0 : index
    %179 = vector.load %arg7[%c7_121, %c0_122] : memref<32x128xf32, #tpu.memory_space<vmem>>, vector<16x128xf32>
    %c27 = arith.constant 27 : index
    %c0_123 = arith.constant 0 : index
    %180 = vector.load %arg2[%c27, %c0_123] : memref<43x128xf32, #tpu.memory_space<vmem>>, vector<1x128xf32>
    %181 = vector.broadcast %180 : vector<1x128xf32> to vector<16x128xf32>
    %182 = arith.mulf %179, %181 : vector<16x128xf32>
    %183 = arith.addf %161, %182 : vector<16x128xf32>
    %c8_124 = arith.constant 8 : index
    %c0_125 = arith.constant 0 : index
    %184 = vector.load %arg7[%c8_124, %c0_125] : memref<32x128xf32, #tpu.memory_space<vmem>>, vector<16x128xf32>
    %c30 = arith.constant 30 : index
    %c0_126 = arith.constant 0 : index
    %185 = vector.load %arg2[%c30, %c0_126] : memref<43x128xf32, #tpu.memory_space<vmem>>, vector<1x128xf32>
    %186 = vector.broadcast %185 : vector<1x128xf32> to vector<16x128xf32>
    %187 = arith.mulf %184, %186 : vector<16x128xf32>
    %188 = arith.addf %166, %187 : vector<16x128xf32>
    %c9_127 = arith.constant 9 : index
    %c0_128 = arith.constant 0 : index
    %189 = vector.load %arg7[%c9_127, %c0_128] : memref<32x128xf32, #tpu.memory_space<vmem>>, vector<16x128xf32>
    %c33 = arith.constant 33 : index
    %c0_129 = arith.constant 0 : index
    %190 = vector.load %arg2[%c33, %c0_129] : memref<43x128xf32, #tpu.memory_space<vmem>>, vector<1x128xf32>
    %191 = vector.broadcast %190 : vector<1x128xf32> to vector<16x128xf32>
    %192 = arith.mulf %189, %191 : vector<16x128xf32>
    %193 = arith.addf %171, %192 : vector<16x128xf32>
    %194 = arith.addf %193, %176 : vector<16x128xf32>
    %195 = arith.addf %183, %188 : vector<16x128xf32>
    %196 = arith.addf %194, %195 : vector<16x128xf32>
    %c41 = arith.constant 41 : index
    %c0_130 = arith.constant 0 : index
    %197 = vector.load %arg2[%c41, %c0_130] : memref<43x128xf32, #tpu.memory_space<vmem>>, vector<1x128xf32>
    %c42 = arith.constant 42 : index
    %c0_131 = arith.constant 0 : index
    %198 = vector.load %arg2[%c42, %c0_131] : memref<43x128xf32, #tpu.memory_space<vmem>>, vector<1x128xf32>
    %cst_132 = arith.constant dense<0.000000e+00> : vector<128xf32>
    %199 = vector.multi_reduction <add>, %196, %cst_132 [0] : vector<16x128xf32> to vector<128xf32>
    %200 = vector.shape_cast %199 : vector<128xf32> to vector<1x128xf32>
    %cst_133 = arith.constant 0.000000e+00 : f32
    %201 = vector.broadcast %cst_133 : f32 to vector<1x128xf32>
    %202 = arith.mulf %200, %197 : vector<1x128xf32>
    %cst_134 = arith.constant dense<0.000000e+00> : vector<1xf32>
    %203 = vector.multi_reduction <add>, %202, %cst_134 [1] : vector<1x128xf32> to vector<1xf32>
    %204 = vector.shape_cast %203 : vector<1xf32> to vector<1x1xf32>
    %cst_135 = arith.constant 9.765625E-4 : f32
    %205 = vector.broadcast %cst_135 : f32 to vector<1x1xf32>
    %206 = arith.mulf %204, %205 : vector<1x1xf32>
    %207 = vector.broadcast %206 : vector<1x1xf32> to vector<1x128xf32>
    %208 = arith.mulf %207, %197 : vector<1x128xf32>
    %209 = arith.addf %201, %208 : vector<1x128xf32>
    %210 = arith.mulf %200, %198 : vector<1x128xf32>
    %cst_136 = arith.constant dense<0.000000e+00> : vector<1xf32>
    %211 = vector.multi_reduction <add>, %210, %cst_136 [1] : vector<1x128xf32> to vector<1xf32>
    %212 = vector.shape_cast %211 : vector<1xf32> to vector<1x1xf32>
    %cst_137 = arith.constant 9.765625E-4 : f32
    %213 = vector.broadcast %cst_137 : f32 to vector<1x1xf32>
    %214 = arith.mulf %212, %213 : vector<1x1xf32>
    %215 = vector.broadcast %214 : vector<1x1xf32> to vector<1x128xf32>
    %216 = arith.mulf %215, %198 : vector<1x128xf32>
    %217 = arith.addf %209, %216 : vector<1x128xf32>
    %218 = vector.broadcast %217 : vector<1x128xf32> to vector<16x128xf32>
    %219 = arith.subf %196, %218 : vector<16x128xf32>
    %220 = arith.mulf %219, %219 : vector<16x128xf32>
    %cst_138 = arith.constant dense<0.000000e+00> : vector<128xf32>
    %221 = vector.multi_reduction <add>, %220, %cst_138 [0] : vector<16x128xf32> to vector<128xf32>
    %222 = vector.shape_cast %221 : vector<128xf32> to vector<1x128xf32>
    %cst_139 = arith.constant 0.000000e+00 : f32
    %223 = vector.broadcast %cst_139 : f32 to vector<1x128xf32>
    %224 = arith.mulf %222, %197 : vector<1x128xf32>
    %cst_140 = arith.constant dense<0.000000e+00> : vector<1xf32>
    %225 = vector.multi_reduction <add>, %224, %cst_140 [1] : vector<1x128xf32> to vector<1xf32>
    %226 = vector.shape_cast %225 : vector<1xf32> to vector<1x1xf32>
    %cst_141 = arith.constant 9.765625E-4 : f32
    %227 = vector.broadcast %cst_141 : f32 to vector<1x1xf32>
    %228 = arith.mulf %226, %227 : vector<1x1xf32>
    %229 = vector.broadcast %228 : vector<1x1xf32> to vector<1x128xf32>
    %230 = arith.mulf %229, %197 : vector<1x128xf32>
    %231 = arith.addf %223, %230 : vector<1x128xf32>
    %232 = arith.mulf %222, %198 : vector<1x128xf32>
    %cst_142 = arith.constant dense<0.000000e+00> : vector<1xf32>
    %233 = vector.multi_reduction <add>, %232, %cst_142 [1] : vector<1x128xf32> to vector<1xf32>
    %234 = vector.shape_cast %233 : vector<1xf32> to vector<1x1xf32>
    %cst_143 = arith.constant 9.765625E-4 : f32
    %235 = vector.broadcast %cst_143 : f32 to vector<1x1xf32>
    %236 = arith.mulf %234, %235 : vector<1x1xf32>
    %237 = vector.broadcast %236 : vector<1x1xf32> to vector<1x128xf32>
    %238 = arith.mulf %237, %198 : vector<1x128xf32>
    %239 = arith.addf %231, %238 : vector<1x128xf32>
    %c37 = arith.constant 37 : index
    %c0_144 = arith.constant 0 : index
    %240 = vector.load %arg2[%c37, %c0_144] : memref<43x128xf32, #tpu.memory_space<vmem>>, vector<1x128xf32>
    %c38 = arith.constant 38 : index
    %c0_145 = arith.constant 0 : index
    %241 = vector.load %arg2[%c38, %c0_145] : memref<43x128xf32, #tpu.memory_space<vmem>>, vector<1x128xf32>
    %cst_146 = arith.constant 9.99999974E-6 : f32
    %242 = vector.broadcast %cst_146 : f32 to vector<1x128xf32>
    %243 = arith.addf %239, %242 : vector<1x128xf32>
    %244 = math.rsqrt %243 : vector<1x128xf32>
    %245 = vector.broadcast %244 : vector<1x128xf32> to vector<16x128xf32>
    %246 = arith.mulf %219, %245 : vector<16x128xf32>
    %247 = vector.broadcast %240 : vector<1x128xf32> to vector<16x128xf32>
    %248 = arith.mulf %246, %247 : vector<16x128xf32>
    %249 = vector.broadcast %241 : vector<1x128xf32> to vector<16x128xf32>
    %250 = arith.addf %248, %249 : vector<16x128xf32>
    %cst_147 = arith.constant 0.000000e+00 : f32
    %251 = vector.broadcast %cst_147 : f32 to vector<16x128xf32>
    %252 = arith.maximumf %250, %251 : vector<16x128xf32>
    %c0_148 = arith.constant 0 : index
    %c0_149 = arith.constant 0 : index
    %253 = vector.load %arg8[%c0_148, %c0_149] : memref<64x128xf32, #tpu.memory_space<vmem>>, vector<16x128xf32>
    tpu.vector_store %arg8[%c0_148, %c0_149], %252 {strides = array<i32>} : memref<64x128xf32, #tpu.memory_space<vmem>>, vector<16x128xf32>,
    %c16_150 = arith.constant 16 : index
    %c0_151 = arith.constant 0 : index
    %254 = vector.load %arg1[%c16_150, %c0_151] : memref<64x128xf32, #tpu.memory_space<vmem>>, vector<16x128xf32>
    %c34_152 = arith.constant 34 : index
    %c0_153 = arith.constant 0 : index
    %255 = vector.load %arg2[%c34_152, %c0_153] : memref<43x128xf32, #tpu.memory_space<vmem>>, vector<1x128xf32>
    %256 = vector.broadcast %255 : vector<1x128xf32> to vector<16x128xf32>
    %257 = arith.addf %254, %256 : vector<16x128xf32>
    %c16_i32_154 = arith.constant 16 : i32
    %258 = tpu.dynamic_rotate %254 by %c16_i32_154 dim 1 : vector<16x128xf32>, i32 -> vector<16x128xf32>
    %c8_155 = arith.constant 8 : index
    %c0_156 = arith.constant 0 : index
    %259 = vector.load %arg7[%c8_155, %c0_156] : memref<32x128xf32, #tpu.memory_space<vmem>>, vector<16x128xf32>
    tpu.vector_store %arg7[%c8_155, %c0_156], %258 {strides = array<i32>} : memref<32x128xf32, #tpu.memory_space<vmem>>, vector<16x128xf32>,
    %c6_157 = arith.constant 6 : index
    %c0_158 = arith.constant 0 : index
    %260 = vector.load %arg7[%c6_157, %c0_158] : memref<32x128xf32, #tpu.memory_space<vmem>>, vector<16x128xf32>
    %c0_159 = arith.constant 0 : index
    %c0_160 = arith.constant 0 : index
    %261 = vector.load %arg2[%c0_159, %c0_160] : memref<43x128xf32, #tpu.memory_space<vmem>>, vector<1x128xf32>
    %262 = vector.broadcast %261 : vector<1x128xf32> to vector<16x128xf32>
    %263 = arith.mulf %260, %262 : vector<16x128xf32>
    %264 = arith.addf %257, %263 : vector<16x128xf32>
    %c7_161 = arith.constant 7 : index
    %c0_162 = arith.constant 0 : index
    %265 = vector.load %arg7[%c7_161, %c0_162] : memref<32x128xf32, #tpu.memory_space<vmem>>, vector<16x128xf32>
    %c5_163 = arith.constant 5 : index
    %c0_164 = arith.constant 0 : index
    %266 = vector.load %arg2[%c5_163, %c0_164] : memref<43x128xf32, #tpu.memory_space<vmem>>, vector<1x128xf32>
    %267 = vector.broadcast %266 : vector<1x128xf32> to vector<16x128xf32>
    %268 = arith.mulf %265, %267 : vector<16x128xf32>
    %c8_165 = arith.constant 8 : index
    %c0_166 = arith.constant 0 : index
    %269 = vector.load %arg7[%c8_165, %c0_166] : memref<32x128xf32, #tpu.memory_space<vmem>>, vector<16x128xf32>
    %c10_167 = arith.constant 10 : index
    %c0_168 = arith.constant 0 : index
    %270 = vector.load %arg2[%c10_167, %c0_168] : memref<43x128xf32, #tpu.memory_space<vmem>>, vector<1x128xf32>
    %271 = vector.broadcast %270 : vector<1x128xf32> to vector<16x128xf32>
    %272 = arith.mulf %269, %271 : vector<16x128xf32>
    %c9_169 = arith.constant 9 : index
    %c0_170 = arith.constant 0 : index
    %273 = vector.load %arg7[%c9_169, %c0_170] : memref<32x128xf32, #tpu.memory_space<vmem>>, vector<16x128xf32>
    %c15_171 = arith.constant 15 : index
    %c0_172 = arith.constant 0 : index
    %274 = vector.load %arg2[%c15_171, %c0_172] : memref<43x128xf32, #tpu.memory_space<vmem>>, vector<1x128xf32>
    %275 = vector.broadcast %274 : vector<1x128xf32> to vector<16x128xf32>
    %276 = arith.mulf %273, %275 : vector<16x128xf32>
    %c10_173 = arith.constant 10 : index
    %c0_174 = arith.constant 0 : index
    %277 = vector.load %arg7[%c10_173, %c0_174] : memref<32x128xf32, #tpu.memory_space<vmem>>, vector<16x128xf32>
    %c20_175 = arith.constant 20 : index
    %c0_176 = arith.constant 0 : index
    %278 = vector.load %arg2[%c20_175, %c0_176] : memref<43x128xf32, #tpu.memory_space<vmem>>, vector<1x128xf32>
    %279 = vector.broadcast %278 : vector<1x128xf32> to vector<16x128xf32>
    %280 = arith.mulf %277, %279 : vector<16x128xf32>
    %281 = arith.addf %264, %280 : vector<16x128xf32>
    %c8_i32_177 = arith.constant 8 : i32
    %282 = tpu.dynamic_rotate %254 by %c8_i32_177 dim 1 : vector<16x128xf32>, i32 -> vector<16x128xf32>
    %c8_178 = arith.constant 8 : index
    %c0_179 = arith.constant 0 : index
    %283 = vector.load %arg7[%c8_178, %c0_179] : memref<32x128xf32, #tpu.memory_space<vmem>>, vector<16x128xf32>
    tpu.vector_store %arg7[%c8_178, %c0_179], %282 {strides = array<i32>} : memref<32x128xf32, #tpu.memory_space<vmem>>, vector<16x128xf32>,
    %c6_180 = arith.constant 6 : index
    %c0_181 = arith.constant 0 : index
    %284 = vector.load %arg7[%c6_180, %c0_181] : memref<32x128xf32, #tpu.memory_space<vmem>>, vector<16x128xf32>
    %c1_182 = arith.constant 1 : index
    %c0_183 = arith.constant 0 : index
    %285 = vector.load %arg2[%c1_182, %c0_183] : memref<43x128xf32, #tpu.memory_space<vmem>>, vector<1x128xf32>
    %286 = vector.broadcast %285 : vector<1x128xf32> to vector<16x128xf32>
    %287 = arith.mulf %284, %286 : vector<16x128xf32>
    %288 = arith.addf %268, %287 : vector<16x128xf32>
    %c7_184 = arith.constant 7 : index
    %c0_185 = arith.constant 0 : index
    %289 = vector.load %arg7[%c7_184, %c0_185] : memref<32x128xf32, #tpu.memory_space<vmem>>, vector<16x128xf32>
    %c6_186 = arith.constant 6 : index
    %c0_187 = arith.constant 0 : index
    %290 = vector.load %arg2[%c6_186, %c0_187] : memref<43x128xf32, #tpu.memory_space<vmem>>, vector<1x128xf32>
    %291 = vector.broadcast %290 : vector<1x128xf32> to vector<16x128xf32>
    %292 = arith.mulf %289, %291 : vector<16x128xf32>
    %293 = arith.addf %272, %292 : vector<16x128xf32>
    %c8_188 = arith.constant 8 : index
    %c0_189 = arith.constant 0 : index
    %294 = vector.load %arg7[%c8_188, %c0_189] : memref<32x128xf32, #tpu.memory_space<vmem>>, vector<16x128xf32>
    %c11_190 = arith.constant 11 : index
    %c0_191 = arith.constant 0 : index
    %295 = vector.load %arg2[%c11_190, %c0_191] : memref<43x128xf32, #tpu.memory_space<vmem>>, vector<1x128xf32>
    %296 = vector.broadcast %295 : vector<1x128xf32> to vector<16x128xf32>
    %297 = arith.mulf %294, %296 : vector<16x128xf32>
    %298 = arith.addf %276, %297 : vector<16x128xf32>
    %c9_192 = arith.constant 9 : index
    %c0_193 = arith.constant 0 : index
    %299 = vector.load %arg7[%c9_192, %c0_193] : memref<32x128xf32, #tpu.memory_space<vmem>>, vector<16x128xf32>
    %c16_194 = arith.constant 16 : index
    %c0_195 = arith.constant 0 : index
    %300 = vector.load %arg2[%c16_194, %c0_195] : memref<43x128xf32, #tpu.memory_space<vmem>>, vector<1x128xf32>
    %301 = vector.broadcast %300 : vector<1x128xf32> to vector<16x128xf32>
    %302 = arith.mulf %299, %301 : vector<16x128xf32>
    %303 = arith.addf %281, %302 : vector<16x128xf32>
    %c10_196 = arith.constant 10 : index
    %c0_197 = arith.constant 0 : index
    %304 = vector.load %arg7[%c10_196, %c0_197] : memref<32x128xf32, #tpu.memory_space<vmem>>, vector<16x128xf32>
    %c21_198 = arith.constant 21 : index
    %c0_199 = arith.constant 0 : index
    %305 = vector.load %arg2[%c21_198, %c0_199] : memref<43x128xf32, #tpu.memory_space<vmem>>, vector<1x128xf32>
    %306 = vector.broadcast %305 : vector<1x128xf32> to vector<16x128xf32>
    %307 = arith.mulf %304, %306 : vector<16x128xf32>
    %308 = arith.addf %288, %307 : vector<16x128xf32>
    %c8_200 = arith.constant 8 : index
    %c0_201 = arith.constant 0 : index
    %309 = vector.load %arg7[%c8_200, %c0_201] : memref<32x128xf32, #tpu.memory_space<vmem>>, vector<16x128xf32>
    tpu.vector_store %arg7[%c8_200, %c0_201], %254 {strides = array<i32>} : memref<32x128xf32, #tpu.memory_space<vmem>>, vector<16x128xf32>,
    %c6_202 = arith.constant 6 : index
    %c0_203 = arith.constant 0 : index
    %310 = vector.load %arg7[%c6_202, %c0_203] : memref<32x128xf32, #tpu.memory_space<vmem>>, vector<16x128xf32>
    %c2_204 = arith.constant 2 : index
    %c0_205 = arith.constant 0 : index
    %311 = vector.load %arg2[%c2_204, %c0_205] : memref<43x128xf32, #tpu.memory_space<vmem>>, vector<1x128xf32>
    %312 = vector.broadcast %311 : vector<1x128xf32> to vector<16x128xf32>
    %313 = arith.mulf %310, %312 : vector<16x128xf32>
    %314 = arith.addf %293, %313 : vector<16x128xf32>
    %c7_206 = arith.constant 7 : index
    %c0_207 = arith.constant 0 : index
    %315 = vector.load %arg7[%c7_206, %c0_207] : memref<32x128xf32, #tpu.memory_space<vmem>>, vector<16x128xf32>
    %c7_208 = arith.constant 7 : index
    %c0_209 = arith.constant 0 : index
    %316 = vector.load %arg2[%c7_208, %c0_209] : memref<43x128xf32, #tpu.memory_space<vmem>>, vector<1x128xf32>
    %317 = vector.broadcast %316 : vector<1x128xf32> to vector<16x128xf32>
    %318 = arith.mulf %315, %317 : vector<16x128xf32>
    %319 = arith.addf %298, %318 : vector<16x128xf32>
    %c8_210 = arith.constant 8 : index
    %c0_211 = arith.constant 0 : index
    %320 = vector.load %arg7[%c8_210, %c0_211] : memref<32x128xf32, #tpu.memory_space<vmem>>, vector<16x128xf32>
    %c12_212 = arith.constant 12 : index
    %c0_213 = arith.constant 0 : index
    %321 = vector.load %arg2[%c12_212, %c0_213] : memref<43x128xf32, #tpu.memory_space<vmem>>, vector<1x128xf32>
    %322 = vector.broadcast %321 : vector<1x128xf32> to vector<16x128xf32>
    %323 = arith.mulf %320, %322 : vector<16x128xf32>
    %324 = arith.addf %303, %323 : vector<16x128xf32>
    %c9_214 = arith.constant 9 : index
    %c0_215 = arith.constant 0 : index
    %325 = vector.load %arg7[%c9_214, %c0_215] : memref<32x128xf32, #tpu.memory_space<vmem>>, vector<16x128xf32>
    %c17_216 = arith.constant 17 : index
    %c0_217 = arith.constant 0 : index
    %326 = vector.load %arg2[%c17_216, %c0_217] : memref<43x128xf32, #tpu.memory_space<vmem>>, vector<1x128xf32>
    %327 = vector.broadcast %326 : vector<1x128xf32> to vector<16x128xf32>
    %328 = arith.mulf %325, %327 : vector<16x128xf32>
    %329 = arith.addf %308, %328 : vector<16x128xf32>
    %c10_218 = arith.constant 10 : index
    %c0_219 = arith.constant 0 : index
    %330 = vector.load %arg7[%c10_218, %c0_219] : memref<32x128xf32, #tpu.memory_space<vmem>>, vector<16x128xf32>
    %c22_220 = arith.constant 22 : index
    %c0_221 = arith.constant 0 : index
    %331 = vector.load %arg2[%c22_220, %c0_221] : memref<43x128xf32, #tpu.memory_space<vmem>>, vector<1x128xf32>
    %332 = vector.broadcast %331 : vector<1x128xf32> to vector<16x128xf32>
    %333 = arith.mulf %330, %332 : vector<16x128xf32>
    %334 = arith.addf %314, %333 : vector<16x128xf32>
    %c120_i32_222 = arith.constant 120 : i32
    %335 = tpu.dynamic_rotate %254 by %c120_i32_222 dim 1 : vector<16x128xf32>, i32 -> vector<16x128xf32>
    %c8_223 = arith.constant 8 : index
    %c0_224 = arith.constant 0 : index
    %336 = vector.load %arg7[%c8_223, %c0_224] : memref<32x128xf32, #tpu.memory_space<vmem>>, vector<16x128xf32>
    tpu.vector_store %arg7[%c8_223, %c0_224], %335 {strides = array<i32>} : memref<32x128xf32, #tpu.memory_space<vmem>>, vector<16x128xf32>,
    %c6_225 = arith.constant 6 : index
    %c0_226 = arith.constant 0 : index
    %337 = vector.load %arg7[%c6_225, %c0_226] : memref<32x128xf32, #tpu.memory_space<vmem>>, vector<16x128xf32>
    %c3_227 = arith.constant 3 : index
    %c0_228 = arith.constant 0 : index
    %338 = vector.load %arg2[%c3_227, %c0_228] : memref<43x128xf32, #tpu.memory_space<vmem>>, vector<1x128xf32>
    %339 = vector.broadcast %338 : vector<1x128xf32> to vector<16x128xf32>
    %340 = arith.mulf %337, %339 : vector<16x128xf32>
    %341 = arith.addf %319, %340 : vector<16x128xf32>
    %c7_229 = arith.constant 7 : index
    %c0_230 = arith.constant 0 : index
    %342 = vector.load %arg7[%c7_229, %c0_230] : memref<32x128xf32, #tpu.memory_space<vmem>>, vector<16x128xf32>
    %c8_231 = arith.constant 8 : index
    %c0_232 = arith.constant 0 : index
    %343 = vector.load %arg2[%c8_231, %c0_232] : memref<43x128xf32, #tpu.memory_space<vmem>>, vector<1x128xf32>
    %344 = vector.broadcast %343 : vector<1x128xf32> to vector<16x128xf32>
    %345 = arith.mulf %342, %344 : vector<16x128xf32>
    %346 = arith.addf %324, %345 : vector<16x128xf32>
    %c8_233 = arith.constant 8 : index
    %c0_234 = arith.constant 0 : index
    %347 = vector.load %arg7[%c8_233, %c0_234] : memref<32x128xf32, #tpu.memory_space<vmem>>, vector<16x128xf32>
    %c13_235 = arith.constant 13 : index
    %c0_236 = arith.constant 0 : index
    %348 = vector.load %arg2[%c13_235, %c0_236] : memref<43x128xf32, #tpu.memory_space<vmem>>, vector<1x128xf32>
    %349 = vector.broadcast %348 : vector<1x128xf32> to vector<16x128xf32>
    %350 = arith.mulf %347, %349 : vector<16x128xf32>
    %351 = arith.addf %329, %350 : vector<16x128xf32>
    %c9_237 = arith.constant 9 : index
    %c0_238 = arith.constant 0 : index
    %352 = vector.load %arg7[%c9_237, %c0_238] : memref<32x128xf32, #tpu.memory_space<vmem>>, vector<16x128xf32>
    %c18_239 = arith.constant 18 : index
    %c0_240 = arith.constant 0 : index
    %353 = vector.load %arg2[%c18_239, %c0_240] : memref<43x128xf32, #tpu.memory_space<vmem>>, vector<1x128xf32>
    %354 = vector.broadcast %353 : vector<1x128xf32> to vector<16x128xf32>
    %355 = arith.mulf %352, %354 : vector<16x128xf32>
    %356 = arith.addf %334, %355 : vector<16x128xf32>
    %c10_241 = arith.constant 10 : index
    %c0_242 = arith.constant 0 : index
    %357 = vector.load %arg7[%c10_241, %c0_242] : memref<32x128xf32, #tpu.memory_space<vmem>>, vector<16x128xf32>
    %c23_243 = arith.constant 23 : index
    %c0_244 = arith.constant 0 : index
    %358 = vector.load %arg2[%c23_243, %c0_244] : memref<43x128xf32, #tpu.memory_space<vmem>>, vector<1x128xf32>
    %359 = vector.broadcast %358 : vector<1x128xf32> to vector<16x128xf32>
    %360 = arith.mulf %357, %359 : vector<16x128xf32>
    %361 = arith.addf %341, %360 : vector<16x128xf32>
    %c112_i32_245 = arith.constant 112 : i32
    %362 = tpu.dynamic_rotate %254 by %c112_i32_245 dim 1 : vector<16x128xf32>, i32 -> vector<16x128xf32>
    %c8_246 = arith.constant 8 : index
    %c0_247 = arith.constant 0 : index
    %363 = vector.load %arg7[%c8_246, %c0_247] : memref<32x128xf32, #tpu.memory_space<vmem>>, vector<16x128xf32>
    tpu.vector_store %arg7[%c8_246, %c0_247], %362 {strides = array<i32>} : memref<32x128xf32, #tpu.memory_space<vmem>>, vector<16x128xf32>,
    %c6_248 = arith.constant 6 : index
    %c0_249 = arith.constant 0 : index
    %364 = vector.load %arg7[%c6_248, %c0_249] : memref<32x128xf32, #tpu.memory_space<vmem>>, vector<16x128xf32>
    %c4_250 = arith.constant 4 : index
    %c0_251 = arith.constant 0 : index
    %365 = vector.load %arg2[%c4_250, %c0_251] : memref<43x128xf32, #tpu.memory_space<vmem>>, vector<1x128xf32>
    %366 = vector.broadcast %365 : vector<1x128xf32> to vector<16x128xf32>
    %367 = arith.mulf %364, %366 : vector<16x128xf32>
    %368 = arith.addf %346, %367 : vector<16x128xf32>
    %c7_252 = arith.constant 7 : index
    %c0_253 = arith.constant 0 : index
    %369 = vector.load %arg7[%c7_252, %c0_253] : memref<32x128xf32, #tpu.memory_space<vmem>>, vector<16x128xf32>
    %c9_254 = arith.constant 9 : index
    %c0_255 = arith.constant 0 : index
    %370 = vector.load %arg2[%c9_254, %c0_255] : memref<43x128xf32, #tpu.memory_space<vmem>>, vector<1x128xf32>
    %371 = vector.broadcast %370 : vector<1x128xf32> to vector<16x128xf32>
    %372 = arith.mulf %369, %371 : vector<16x128xf32>
    %373 = arith.addf %351, %372 : vector<16x128xf32>
    %c8_256 = arith.constant 8 : index
    %c0_257 = arith.constant 0 : index
    %374 = vector.load %arg7[%c8_256, %c0_257] : memref<32x128xf32, #tpu.memory_space<vmem>>, vector<16x128xf32>
    %c14_258 = arith.constant 14 : index
    %c0_259 = arith.constant 0 : index
    %375 = vector.load %arg2[%c14_258, %c0_259] : memref<43x128xf32, #tpu.memory_space<vmem>>, vector<1x128xf32>
    %376 = vector.broadcast %375 : vector<1x128xf32> to vector<16x128xf32>
    %377 = arith.mulf %374, %376 : vector<16x128xf32>
    %378 = arith.addf %356, %377 : vector<16x128xf32>
    %c9_260 = arith.constant 9 : index
    %c0_261 = arith.constant 0 : index
    %379 = vector.load %arg7[%c9_260, %c0_261] : memref<32x128xf32, #tpu.memory_space<vmem>>, vector<16x128xf32>
    %c19_262 = arith.constant 19 : index
    %c0_263 = arith.constant 0 : index
    %380 = vector.load %arg2[%c19_262, %c0_263] : memref<43x128xf32, #tpu.memory_space<vmem>>, vector<1x128xf32>
    %381 = vector.broadcast %380 : vector<1x128xf32> to vector<16x128xf32>
    %382 = arith.mulf %379, %381 : vector<16x128xf32>
    %383 = arith.addf %361, %382 : vector<16x128xf32>
    %c10_264 = arith.constant 10 : index
    %c0_265 = arith.constant 0 : index
    %384 = vector.load %arg7[%c10_264, %c0_265] : memref<32x128xf32, #tpu.memory_space<vmem>>, vector<16x128xf32>
    %c24_266 = arith.constant 24 : index
    %c0_267 = arith.constant 0 : index
    %385 = vector.load %arg2[%c24_266, %c0_267] : memref<43x128xf32, #tpu.memory_space<vmem>>, vector<1x128xf32>
    %386 = vector.broadcast %385 : vector<1x128xf32> to vector<16x128xf32>
    %387 = arith.mulf %384, %386 : vector<16x128xf32>
    %388 = arith.addf %368, %387 : vector<16x128xf32>
    %389 = arith.addf %388, %373 : vector<16x128xf32>
    %390 = arith.addf %378, %383 : vector<16x128xf32>
    %391 = arith.addf %389, %390 : vector<16x128xf32>
    %cst_268 = arith.constant 0.000000e+00 : f32
    %392 = vector.broadcast %cst_268 : f32 to vector<16x128xf32>
    %393 = arith.maximumf %391, %392 : vector<16x128xf32>
    %c35_269 = arith.constant 35 : index
    %c0_270 = arith.constant 0 : index
    %394 = vector.load %arg2[%c35_269, %c0_270] : memref<43x128xf32, #tpu.memory_space<vmem>>, vector<1x128xf32>
    %395 = vector.broadcast %394 : vector<1x128xf32> to vector<16x128xf32>
    %396 = arith.addf %393, %395 : vector<16x128xf32>
    %c8_i32_271 = arith.constant 8 : i32
    %397 = tpu.dynamic_rotate %393 by %c8_i32_271 dim 1 : vector<16x128xf32>, i32 -> vector<16x128xf32>
    %c8_272 = arith.constant 8 : index
    %c0_273 = arith.constant 0 : index
    %398 = vector.load %arg7[%c8_272, %c0_273] : memref<32x128xf32, #tpu.memory_space<vmem>>, vector<16x128xf32>
    tpu.vector_store %arg7[%c8_272, %c0_273], %397 {strides = array<i32>} : memref<32x128xf32, #tpu.memory_space<vmem>>, vector<16x128xf32>,
    %c7_274 = arith.constant 7 : index
    %c0_275 = arith.constant 0 : index
    %399 = vector.load %arg7[%c7_274, %c0_275] : memref<32x128xf32, #tpu.memory_space<vmem>>, vector<16x128xf32>
    %c25_276 = arith.constant 25 : index
    %c0_277 = arith.constant 0 : index
    %400 = vector.load %arg2[%c25_276, %c0_277] : memref<43x128xf32, #tpu.memory_space<vmem>>, vector<1x128xf32>
    %401 = vector.broadcast %400 : vector<1x128xf32> to vector<16x128xf32>
    %402 = arith.mulf %399, %401 : vector<16x128xf32>
    %403 = arith.addf %396, %402 : vector<16x128xf32>
    %c8_278 = arith.constant 8 : index
    %c0_279 = arith.constant 0 : index
    %404 = vector.load %arg7[%c8_278, %c0_279] : memref<32x128xf32, #tpu.memory_space<vmem>>, vector<16x128xf32>
    %c28_280 = arith.constant 28 : index
    %c0_281 = arith.constant 0 : index
    %405 = vector.load %arg2[%c28_280, %c0_281] : memref<43x128xf32, #tpu.memory_space<vmem>>, vector<1x128xf32>
    %406 = vector.broadcast %405 : vector<1x128xf32> to vector<16x128xf32>
    %407 = arith.mulf %404, %406 : vector<16x128xf32>
    %c9_282 = arith.constant 9 : index
    %c0_283 = arith.constant 0 : index
    %408 = vector.load %arg7[%c9_282, %c0_283] : memref<32x128xf32, #tpu.memory_space<vmem>>, vector<16x128xf32>
    %c31_284 = arith.constant 31 : index
    %c0_285 = arith.constant 0 : index
    %409 = vector.load %arg2[%c31_284, %c0_285] : memref<43x128xf32, #tpu.memory_space<vmem>>, vector<1x128xf32>
    %410 = vector.broadcast %409 : vector<1x128xf32> to vector<16x128xf32>
    %411 = arith.mulf %408, %410 : vector<16x128xf32>
    %c8_286 = arith.constant 8 : index
    %c0_287 = arith.constant 0 : index
    %412 = vector.load %arg7[%c8_286, %c0_287] : memref<32x128xf32, #tpu.memory_space<vmem>>, vector<16x128xf32>
    tpu.vector_store %arg7[%c8_286, %c0_287], %393 {strides = array<i32>} : memref<32x128xf32, #tpu.memory_space<vmem>>, vector<16x128xf32>,
    %c7_288 = arith.constant 7 : index
    %c0_289 = arith.constant 0 : index
    %413 = vector.load %arg7[%c7_288, %c0_289] : memref<32x128xf32, #tpu.memory_space<vmem>>, vector<16x128xf32>
    %c26_290 = arith.constant 26 : index
    %c0_291 = arith.constant 0 : index
    %414 = vector.load %arg2[%c26_290, %c0_291] : memref<43x128xf32, #tpu.memory_space<vmem>>, vector<1x128xf32>
    %415 = vector.broadcast %414 : vector<1x128xf32> to vector<16x128xf32>
    %416 = arith.mulf %413, %415 : vector<16x128xf32>
    %c8_292 = arith.constant 8 : index
    %c0_293 = arith.constant 0 : index
    %417 = vector.load %arg7[%c8_292, %c0_293] : memref<32x128xf32, #tpu.memory_space<vmem>>, vector<16x128xf32>
    %c29_294 = arith.constant 29 : index
    %c0_295 = arith.constant 0 : index
    %418 = vector.load %arg2[%c29_294, %c0_295] : memref<43x128xf32, #tpu.memory_space<vmem>>, vector<1x128xf32>
    %419 = vector.broadcast %418 : vector<1x128xf32> to vector<16x128xf32>
    %420 = arith.mulf %417, %419 : vector<16x128xf32>
    %421 = arith.addf %403, %420 : vector<16x128xf32>
    %c9_296 = arith.constant 9 : index
    %c0_297 = arith.constant 0 : index
    %422 = vector.load %arg7[%c9_296, %c0_297] : memref<32x128xf32, #tpu.memory_space<vmem>>, vector<16x128xf32>
    %c32_298 = arith.constant 32 : index
    %c0_299 = arith.constant 0 : index
    %423 = vector.load %arg2[%c32_298, %c0_299] : memref<43x128xf32, #tpu.memory_space<vmem>>, vector<1x128xf32>
    %424 = vector.broadcast %423 : vector<1x128xf32> to vector<16x128xf32>
    %425 = arith.mulf %422, %424 : vector<16x128xf32>
    %426 = arith.addf %407, %425 : vector<16x128xf32>
    %c120_i32_300 = arith.constant 120 : i32
    %427 = tpu.dynamic_rotate %393 by %c120_i32_300 dim 1 : vector<16x128xf32>, i32 -> vector<16x128xf32>
    %c8_301 = arith.constant 8 : index
    %c0_302 = arith.constant 0 : index
    %428 = vector.load %arg7[%c8_301, %c0_302] : memref<32x128xf32, #tpu.memory_space<vmem>>, vector<16x128xf32>
    tpu.vector_store %arg7[%c8_301, %c0_302], %427 {strides = array<i32>} : memref<32x128xf32, #tpu.memory_space<vmem>>, vector<16x128xf32>,
    %c7_303 = arith.constant 7 : index
    %c0_304 = arith.constant 0 : index
    %429 = vector.load %arg7[%c7_303, %c0_304] : memref<32x128xf32, #tpu.memory_space<vmem>>, vector<16x128xf32>
    %c27_305 = arith.constant 27 : index
    %c0_306 = arith.constant 0 : index
    %430 = vector.load %arg2[%c27_305, %c0_306] : memref<43x128xf32, #tpu.memory_space<vmem>>, vector<1x128xf32>
    %431 = vector.broadcast %430 : vector<1x128xf32> to vector<16x128xf32>
    %432 = arith.mulf %429, %431 : vector<16x128xf32>
    %433 = arith.addf %411, %432 : vector<16x128xf32>
    %c8_307 = arith.constant 8 : index
    %c0_308 = arith.constant 0 : index
    %434 = vector.load %arg7[%c8_307, %c0_308] : memref<32x128xf32, #tpu.memory_space<vmem>>, vector<16x128xf32>
    %c30_309 = arith.constant 30 : index
    %c0_310 = arith.constant 0 : index
    %435 = vector.load %arg2[%c30_309, %c0_310] : memref<43x128xf32, #tpu.memory_space<vmem>>, vector<1x128xf32>
    %436 = vector.broadcast %435 : vector<1x128xf32> to vector<16x128xf32>
    %437 = arith.mulf %434, %436 : vector<16x128xf32>
    %438 = arith.addf %416, %437 : vector<16x128xf32>
    %c9_311 = arith.constant 9 : index
    %c0_312 = arith.constant 0 : index
    %439 = vector.load %arg7[%c9_311, %c0_312] : memref<32x128xf32, #tpu.memory_space<vmem>>, vector<16x128xf32>
    %c33_313 = arith.constant 33 : index
    %c0_314 = arith.constant 0 : index
    %440 = vector.load %arg2[%c33_313, %c0_314] : memref<43x128xf32, #tpu.memory_space<vmem>>, vector<1x128xf32>
    %441 = vector.broadcast %440 : vector<1x128xf32> to vector<16x128xf32>
    %442 = arith.mulf %439, %441 : vector<16x128xf32>
    %443 = arith.addf %421, %442 : vector<16x128xf32>
    %444 = arith.addf %443, %426 : vector<16x128xf32>
    %445 = arith.addf %433, %438 : vector<16x128xf32>
    %446 = arith.addf %444, %445 : vector<16x128xf32>
    %c41_315 = arith.constant 41 : index
    %c0_316 = arith.constant 0 : index
    %447 = vector.load %arg2[%c41_315, %c0_316] : memref<43x128xf32, #tpu.memory_space<vmem>>, vector<1x128xf32>
    %c42_317 = arith.constant 42 : index
    %c0_318 = arith.constant 0 : index
    %448 = vector.load %arg2[%c42_317, %c0_318] : memref<43x128xf32, #tpu.memory_space<vmem>>, vector<1x128xf32>
    %cst_319 = arith.constant dense<0.000000e+00> : vector<128xf32>
    %449 = vector.multi_reduction <add>, %446, %cst_319 [0] : vector<16x128xf32> to vector<128xf32>
    %450 = vector.shape_cast %449 : vector<128xf32> to vector<1x128xf32>
    %cst_320 = arith.constant 0.000000e+00 : f32
    %451 = vector.broadcast %cst_320 : f32 to vector<1x128xf32>
    %452 = arith.mulf %450, %447 : vector<1x128xf32>
    %cst_321 = arith.constant dense<0.000000e+00> : vector<1xf32>
    %453 = vector.multi_reduction <add>, %452, %cst_321 [1] : vector<1x128xf32> to vector<1xf32>
    %454 = vector.shape_cast %453 : vector<1xf32> to vector<1x1xf32>
    %cst_322 = arith.constant 9.765625E-4 : f32
    %455 = vector.broadcast %cst_322 : f32 to vector<1x1xf32>
    %456 = arith.mulf %454, %455 : vector<1x1xf32>
    %457 = vector.broadcast %456 : vector<1x1xf32> to vector<1x128xf32>
    %458 = arith.mulf %457, %447 : vector<1x128xf32>
    %459 = arith.addf %451, %458 : vector<1x128xf32>
    %460 = arith.mulf %450, %448 : vector<1x128xf32>
    %cst_323 = arith.constant dense<0.000000e+00> : vector<1xf32>
    %461 = vector.multi_reduction <add>, %460, %cst_323 [1] : vector<1x128xf32> to vector<1xf32>
    %462 = vector.shape_cast %461 : vector<1xf32> to vector<1x1xf32>
    %cst_324 = arith.constant 9.765625E-4 : f32
    %463 = vector.broadcast %cst_324 : f32 to vector<1x1xf32>
    %464 = arith.mulf %462, %463 : vector<1x1xf32>
    %465 = vector.broadcast %464 : vector<1x1xf32> to vector<1x128xf32>
    %466 = arith.mulf %465, %448 : vector<1x128xf32>
    %467 = arith.addf %459, %466 : vector<1x128xf32>
    %468 = vector.broadcast %467 : vector<1x128xf32> to vector<16x128xf32>
    %469 = arith.subf %446, %468 : vector<16x128xf32>
    %470 = arith.mulf %469, %469 : vector<16x128xf32>
    %cst_325 = arith.constant dense<0.000000e+00> : vector<128xf32>
    %471 = vector.multi_reduction <add>, %470, %cst_325 [0] : vector<16x128xf32> to vector<128xf32>
    %472 = vector.shape_cast %471 : vector<128xf32> to vector<1x128xf32>
    %cst_326 = arith.constant 0.000000e+00 : f32
    %473 = vector.broadcast %cst_326 : f32 to vector<1x128xf32>
    %474 = arith.mulf %472, %447 : vector<1x128xf32>
    %cst_327 = arith.constant dense<0.000000e+00> : vector<1xf32>
    %475 = vector.multi_reduction <add>, %474, %cst_327 [1] : vector<1x128xf32> to vector<1xf32>
    %476 = vector.shape_cast %475 : vector<1xf32> to vector<1x1xf32>
    %cst_328 = arith.constant 9.765625E-4 : f32
    %477 = vector.broadcast %cst_328 : f32 to vector<1x1xf32>
    %478 = arith.mulf %476, %477 : vector<1x1xf32>
    %479 = vector.broadcast %478 : vector<1x1xf32> to vector<1x128xf32>
    %480 = arith.mulf %479, %447 : vector<1x128xf32>
    %481 = arith.addf %473, %480 : vector<1x128xf32>
    %482 = arith.mulf %472, %448 : vector<1x128xf32>
    %cst_329 = arith.constant dense<0.000000e+00> : vector<1xf32>
    %483 = vector.multi_reduction <add>, %482, %cst_329 [1] : vector<1x128xf32> to vector<1xf32>
    %484 = vector.shape_cast %483 : vector<1xf32> to vector<1x1xf32>
    %cst_330 = arith.constant 9.765625E-4 : f32
    %485 = vector.broadcast %cst_330 : f32 to vector<1x1xf32>
    %486 = arith.mulf %484, %485 : vector<1x1xf32>
    %487 = vector.broadcast %486 : vector<1x1xf32> to vector<1x128xf32>
    %488 = arith.mulf %487, %448 : vector<1x128xf32>
    %489 = arith.addf %481, %488 : vector<1x128xf32>
    %c37_331 = arith.constant 37 : index
    %c0_332 = arith.constant 0 : index
    %490 = vector.load %arg2[%c37_331, %c0_332] : memref<43x128xf32, #tpu.memory_space<vmem>>, vector<1x128xf32>
    %c38_333 = arith.constant 38 : index
    %c0_334 = arith.constant 0 : index
    %491 = vector.load %arg2[%c38_333, %c0_334] : memref<43x128xf32, #tpu.memory_space<vmem>>, vector<1x128xf32>
    %cst_335 = arith.constant 9.99999974E-6 : f32
    %492 = vector.broadcast %cst_335 : f32 to vector<1x128xf32>
    %493 = arith.addf %489, %492 : vector<1x128xf32>
    %494 = math.rsqrt %493 : vector<1x128xf32>
    %495 = vector.broadcast %494 : vector<1x128xf32> to vector<16x128xf32>
    %496 = arith.mulf %469, %495 : vector<16x128xf32>
    %497 = vector.broadcast %490 : vector<1x128xf32> to vector<16x128xf32>
    %498 = arith.mulf %496, %497 : vector<16x128xf32>
    %499 = vector.broadcast %491 : vector<1x128xf32> to vector<16x128xf32>
    %500 = arith.addf %498, %499 : vector<16x128xf32>
    %cst_336 = arith.constant 0.000000e+00 : f32
    %501 = vector.broadcast %cst_336 : f32 to vector<16x128xf32>
    %502 = arith.maximumf %500, %501 : vector<16x128xf32>
    %c16_337 = arith.constant 16 : index
    %c0_338 = arith.constant 0 : index
    %503 = vector.load %arg8[%c16_337, %c0_338] : memref<64x128xf32, #tpu.memory_space<vmem>>, vector<16x128xf32>
    tpu.vector_store %arg8[%c16_337, %c0_338], %502 {strides = array<i32>} : memref<64x128xf32, #tpu.memory_space<vmem>>, vector<16x128xf32>,
    %c32_339 = arith.constant 32 : index
    %c0_340 = arith.constant 0 : index
    %504 = vector.load %arg1[%c32_339, %c0_340] : memref<64x128xf32, #tpu.memory_space<vmem>>, vector<16x128xf32>
    %c34_341 = arith.constant 34 : index
    %c0_342 = arith.constant 0 : index
    %505 = vector.load %arg2[%c34_341, %c0_342] : memref<43x128xf32, #tpu.memory_space<vmem>>, vector<1x128xf32>
    %506 = vector.broadcast %505 : vector<1x128xf32> to vector<16x128xf32>
    %507 = arith.addf %504, %506 : vector<16x128xf32>
    %c16_i32_343 = arith.constant 16 : i32
    %508 = tpu.dynamic_rotate %504 by %c16_i32_343 dim 1 : vector<16x128xf32>, i32 -> vector<16x128xf32>
    %c8_344 = arith.constant 8 : index
    %c0_345 = arith.constant 0 : index
    %509 = vector.load %arg7[%c8_344, %c0_345] : memref<32x128xf32, #tpu.memory_space<vmem>>, vector<16x128xf32>
    tpu.vector_store %arg7[%c8_344, %c0_345], %508 {strides = array<i32>} : memref<32x128xf32, #tpu.memory_space<vmem>>, vector<16x128xf32>,
    %c6_346 = arith.constant 6 : index
    %c0_347 = arith.constant 0 : index
    %510 = vector.load %arg7[%c6_346, %c0_347] : memref<32x128xf32, #tpu.memory_space<vmem>>, vector<16x128xf32>
    %c0_348 = arith.constant 0 : index
    %c0_349 = arith.constant 0 : index
    %511 = vector.load %arg2[%c0_348, %c0_349] : memref<43x128xf32, #tpu.memory_space<vmem>>, vector<1x128xf32>
    %512 = vector.broadcast %511 : vector<1x128xf32> to vector<16x128xf32>
    %513 = arith.mulf %510, %512 : vector<16x128xf32>
    %514 = arith.addf %507, %513 : vector<16x128xf32>
    %c7_350 = arith.constant 7 : index
    %c0_351 = arith.constant 0 : index
    %515 = vector.load %arg7[%c7_350, %c0_351] : memref<32x128xf32, #tpu.memory_space<vmem>>, vector<16x128xf32>
    %c5_352 = arith.constant 5 : index
    %c0_353 = arith.constant 0 : index
    %516 = vector.load %arg2[%c5_352, %c0_353] : memref<43x128xf32, #tpu.memory_space<vmem>>, vector<1x128xf32>
    %517 = vector.broadcast %516 : vector<1x128xf32> to vector<16x128xf32>
    %518 = arith.mulf %515, %517 : vector<16x128xf32>
    %c8_354 = arith.constant 8 : index
    %c0_355 = arith.constant 0 : index
    %519 = vector.load %arg7[%c8_354, %c0_355] : memref<32x128xf32, #tpu.memory_space<vmem>>, vector<16x128xf32>
    %c10_356 = arith.constant 10 : index
    %c0_357 = arith.constant 0 : index
    %520 = vector.load %arg2[%c10_356, %c0_357] : memref<43x128xf32, #tpu.memory_space<vmem>>, vector<1x128xf32>
    %521 = vector.broadcast %520 : vector<1x128xf32> to vector<16x128xf32>
    %522 = arith.mulf %519, %521 : vector<16x128xf32>
    %c9_358 = arith.constant 9 : index
    %c0_359 = arith.constant 0 : index
    %523 = vector.load %arg7[%c9_358, %c0_359] : memref<32x128xf32, #tpu.memory_space<vmem>>, vector<16x128xf32>
    %c15_360 = arith.constant 15 : index
    %c0_361 = arith.constant 0 : index
    %524 = vector.load %arg2[%c15_360, %c0_361] : memref<43x128xf32, #tpu.memory_space<vmem>>, vector<1x128xf32>
    %525 = vector.broadcast %524 : vector<1x128xf32> to vector<16x128xf32>
    %526 = arith.mulf %523, %525 : vector<16x128xf32>
    %c10_362 = arith.constant 10 : index
    %c0_363 = arith.constant 0 : index
    %527 = vector.load %arg7[%c10_362, %c0_363] : memref<32x128xf32, #tpu.memory_space<vmem>>, vector<16x128xf32>
    %c20_364 = arith.constant 20 : index
    %c0_365 = arith.constant 0 : index
    %528 = vector.load %arg2[%c20_364, %c0_365] : memref<43x128xf32, #tpu.memory_space<vmem>>, vector<1x128xf32>
    %529 = vector.broadcast %528 : vector<1x128xf32> to vector<16x128xf32>
    %530 = arith.mulf %527, %529 : vector<16x128xf32>
    %531 = arith.addf %514, %530 : vector<16x128xf32>
    %c8_i32_366 = arith.constant 8 : i32
    %532 = tpu.dynamic_rotate %504 by %c8_i32_366 dim 1 : vector<16x128xf32>, i32 -> vector<16x128xf32>
    %c8_367 = arith.constant 8 : index
    %c0_368 = arith.constant 0 : index
    %533 = vector.load %arg7[%c8_367, %c0_368] : memref<32x128xf32, #tpu.memory_space<vmem>>, vector<16x128xf32>
    tpu.vector_store %arg7[%c8_367, %c0_368], %532 {strides = array<i32>} : memref<32x128xf32, #tpu.memory_space<vmem>>, vector<16x128xf32>,
    %c6_369 = arith.constant 6 : index
    %c0_370 = arith.constant 0 : index
    %534 = vector.load %arg7[%c6_369, %c0_370] : memref<32x128xf32, #tpu.memory_space<vmem>>, vector<16x128xf32>
    %c1_371 = arith.constant 1 : index
    %c0_372 = arith.constant 0 : index
    %535 = vector.load %arg2[%c1_371, %c0_372] : memref<43x128xf32, #tpu.memory_space<vmem>>, vector<1x128xf32>
    %536 = vector.broadcast %535 : vector<1x128xf32> to vector<16x128xf32>
    %537 = arith.mulf %534, %536 : vector<16x128xf32>
    %538 = arith.addf %518, %537 : vector<16x128xf32>
    %c7_373 = arith.constant 7 : index
    %c0_374 = arith.constant 0 : index
    %539 = vector.load %arg7[%c7_373, %c0_374] : memref<32x128xf32, #tpu.memory_space<vmem>>, vector<16x128xf32>
    %c6_375 = arith.constant 6 : index
    %c0_376 = arith.constant 0 : index
    %540 = vector.load %arg2[%c6_375, %c0_376] : memref<43x128xf32, #tpu.memory_space<vmem>>, vector<1x128xf32>
    %541 = vector.broadcast %540 : vector<1x128xf32> to vector<16x128xf32>
    %542 = arith.mulf %539, %541 : vector<16x128xf32>
    %543 = arith.addf %522, %542 : vector<16x128xf32>
    %c8_377 = arith.constant 8 : index
    %c0_378 = arith.constant 0 : index
    %544 = vector.load %arg7[%c8_377, %c0_378] : memref<32x128xf32, #tpu.memory_space<vmem>>, vector<16x128xf32>
    %c11_379 = arith.constant 11 : index
    %c0_380 = arith.constant 0 : index
    %545 = vector.load %arg2[%c11_379, %c0_380] : memref<43x128xf32, #tpu.memory_space<vmem>>, vector<1x128xf32>
    %546 = vector.broadcast %545 : vector<1x128xf32> to vector<16x128xf32>
    %547 = arith.mulf %544, %546 : vector<16x128xf32>
    %548 = arith.addf %526, %547 : vector<16x128xf32>
    %c9_381 = arith.constant 9 : index
    %c0_382 = arith.constant 0 : index
    %549 = vector.load %arg7[%c9_381, %c0_382] : memref<32x128xf32, #tpu.memory_space<vmem>>, vector<16x128xf32>
    %c16_383 = arith.constant 16 : index
    %c0_384 = arith.constant 0 : index
    %550 = vector.load %arg2[%c16_383, %c0_384] : memref<43x128xf32, #tpu.memory_space<vmem>>, vector<1x128xf32>
    %551 = vector.broadcast %550 : vector<1x128xf32> to vector<16x128xf32>
    %552 = arith.mulf %549, %551 : vector<16x128xf32>
    %553 = arith.addf %531, %552 : vector<16x128xf32>
    %c10_385 = arith.constant 10 : index
    %c0_386 = arith.constant 0 : index
    %554 = vector.load %arg7[%c10_385, %c0_386] : memref<32x128xf32, #tpu.memory_space<vmem>>, vector<16x128xf32>
    %c21_387 = arith.constant 21 : index
    %c0_388 = arith.constant 0 : index
    %555 = vector.load %arg2[%c21_387, %c0_388] : memref<43x128xf32, #tpu.memory_space<vmem>>, vector<1x128xf32>
    %556 = vector.broadcast %555 : vector<1x128xf32> to vector<16x128xf32>
    %557 = arith.mulf %554, %556 : vector<16x128xf32>
    %558 = arith.addf %538, %557 : vector<16x128xf32>
    %c8_389 = arith.constant 8 : index
    %c0_390 = arith.constant 0 : index
    %559 = vector.load %arg7[%c8_389, %c0_390] : memref<32x128xf32, #tpu.memory_space<vmem>>, vector<16x128xf32>
    tpu.vector_store %arg7[%c8_389, %c0_390], %504 {strides = array<i32>} : memref<32x128xf32, #tpu.memory_space<vmem>>, vector<16x128xf32>,
    %c6_391 = arith.constant 6 : index
    %c0_392 = arith.constant 0 : index
    %560 = vector.load %arg7[%c6_391, %c0_392] : memref<32x128xf32, #tpu.memory_space<vmem>>, vector<16x128xf32>
    %c2_393 = arith.constant 2 : index
    %c0_394 = arith.constant 0 : index
    %561 = vector.load %arg2[%c2_393, %c0_394] : memref<43x128xf32, #tpu.memory_space<vmem>>, vector<1x128xf32>
    %562 = vector.broadcast %561 : vector<1x128xf32> to vector<16x128xf32>
    %563 = arith.mulf %560, %562 : vector<16x128xf32>
    %564 = arith.addf %543, %563 : vector<16x128xf32>
    %c7_395 = arith.constant 7 : index
    %c0_396 = arith.constant 0 : index
    %565 = vector.load %arg7[%c7_395, %c0_396] : memref<32x128xf32, #tpu.memory_space<vmem>>, vector<16x128xf32>
    %c7_397 = arith.constant 7 : index
    %c0_398 = arith.constant 0 : index
    %566 = vector.load %arg2[%c7_397, %c0_398] : memref<43x128xf32, #tpu.memory_space<vmem>>, vector<1x128xf32>
    %567 = vector.broadcast %566 : vector<1x128xf32> to vector<16x128xf32>
    %568 = arith.mulf %565, %567 : vector<16x128xf32>
    %569 = arith.addf %548, %568 : vector<16x128xf32>
    %c8_399 = arith.constant 8 : index
    %c0_400 = arith.constant 0 : index
    %570 = vector.load %arg7[%c8_399, %c0_400] : memref<32x128xf32, #tpu.memory_space<vmem>>, vector<16x128xf32>
    %c12_401 = arith.constant 12 : index
    %c0_402 = arith.constant 0 : index
    %571 = vector.load %arg2[%c12_401, %c0_402] : memref<43x128xf32, #tpu.memory_space<vmem>>, vector<1x128xf32>
    %572 = vector.broadcast %571 : vector<1x128xf32> to vector<16x128xf32>
    %573 = arith.mulf %570, %572 : vector<16x128xf32>
    %574 = arith.addf %553, %573 : vector<16x128xf32>
    %c9_403 = arith.constant 9 : index
    %c0_404 = arith.constant 0 : index
    %575 = vector.load %arg7[%c9_403, %c0_404] : memref<32x128xf32, #tpu.memory_space<vmem>>, vector<16x128xf32>
    %c17_405 = arith.constant 17 : index
    %c0_406 = arith.constant 0 : index
    %576 = vector.load %arg2[%c17_405, %c0_406] : memref<43x128xf32, #tpu.memory_space<vmem>>, vector<1x128xf32>
    %577 = vector.broadcast %576 : vector<1x128xf32> to vector<16x128xf32>
    %578 = arith.mulf %575, %577 : vector<16x128xf32>
    %579 = arith.addf %558, %578 : vector<16x128xf32>
    %c10_407 = arith.constant 10 : index
    %c0_408 = arith.constant 0 : index
    %580 = vector.load %arg7[%c10_407, %c0_408] : memref<32x128xf32, #tpu.memory_space<vmem>>, vector<16x128xf32>
    %c22_409 = arith.constant 22 : index
    %c0_410 = arith.constant 0 : index
    %581 = vector.load %arg2[%c22_409, %c0_410] : memref<43x128xf32, #tpu.memory_space<vmem>>, vector<1x128xf32>
    %582 = vector.broadcast %581 : vector<1x128xf32> to vector<16x128xf32>
    %583 = arith.mulf %580, %582 : vector<16x128xf32>
    %584 = arith.addf %564, %583 : vector<16x128xf32>
    %c120_i32_411 = arith.constant 120 : i32
    %585 = tpu.dynamic_rotate %504 by %c120_i32_411 dim 1 : vector<16x128xf32>, i32 -> vector<16x128xf32>
    %c8_412 = arith.constant 8 : index
    %c0_413 = arith.constant 0 : index
    %586 = vector.load %arg7[%c8_412, %c0_413] : memref<32x128xf32, #tpu.memory_space<vmem>>, vector<16x128xf32>
    tpu.vector_store %arg7[%c8_412, %c0_413], %585 {strides = array<i32>} : memref<32x128xf32, #tpu.memory_space<vmem>>, vector<16x128xf32>,
    %c6_414 = arith.constant 6 : index
    %c0_415 = arith.constant 0 : index
    %587 = vector.load %arg7[%c6_414, %c0_415] : memref<32x128xf32, #tpu.memory_space<vmem>>, vector<16x128xf32>
    %c3_416 = arith.constant 3 : index
    %c0_417 = arith.constant 0 : index
    %588 = vector.load %arg2[%c3_416, %c0_417] : memref<43x128xf32, #tpu.memory_space<vmem>>, vector<1x128xf32>
    %589 = vector.broadcast %588 : vector<1x128xf32> to vector<16x128xf32>
    %590 = arith.mulf %587, %589 : vector<16x128xf32>
    %591 = arith.addf %569, %590 : vector<16x128xf32>
    %c7_418 = arith.constant 7 : index
    %c0_419 = arith.constant 0 : index
    %592 = vector.load %arg7[%c7_418, %c0_419] : memref<32x128xf32, #tpu.memory_space<vmem>>, vector<16x128xf32>
    %c8_420 = arith.constant 8 : index
    %c0_421 = arith.constant 0 : index
    %593 = vector.load %arg2[%c8_420, %c0_421] : memref<43x128xf32, #tpu.memory_space<vmem>>, vector<1x128xf32>
    %594 = vector.broadcast %593 : vector<1x128xf32> to vector<16x128xf32>
    %595 = arith.mulf %592, %594 : vector<16x128xf32>
    %596 = arith.addf %574, %595 : vector<16x128xf32>
    %c8_422 = arith.constant 8 : index
    %c0_423 = arith.constant 0 : index
    %597 = vector.load %arg7[%c8_422, %c0_423] : memref<32x128xf32, #tpu.memory_space<vmem>>, vector<16x128xf32>
    %c13_424 = arith.constant 13 : index
    %c0_425 = arith.constant 0 : index
    %598 = vector.load %arg2[%c13_424, %c0_425] : memref<43x128xf32, #tpu.memory_space<vmem>>, vector<1x128xf32>
    %599 = vector.broadcast %598 : vector<1x128xf32> to vector<16x128xf32>
    %600 = arith.mulf %597, %599 : vector<16x128xf32>
    %601 = arith.addf %579, %600 : vector<16x128xf32>
    %c9_426 = arith.constant 9 : index
    %c0_427 = arith.constant 0 : index
    %602 = vector.load %arg7[%c9_426, %c0_427] : memref<32x128xf32, #tpu.memory_space<vmem>>, vector<16x128xf32>
    %c18_428 = arith.constant 18 : index
    %c0_429 = arith.constant 0 : index
    %603 = vector.load %arg2[%c18_428, %c0_429] : memref<43x128xf32, #tpu.memory_space<vmem>>, vector<1x128xf32>
    %604 = vector.broadcast %603 : vector<1x128xf32> to vector<16x128xf32>
    %605 = arith.mulf %602, %604 : vector<16x128xf32>
    %606 = arith.addf %584, %605 : vector<16x128xf32>
    %c10_430 = arith.constant 10 : index
    %c0_431 = arith.constant 0 : index
    %607 = vector.load %arg7[%c10_430, %c0_431] : memref<32x128xf32, #tpu.memory_space<vmem>>, vector<16x128xf32>
    %c23_432 = arith.constant 23 : index
    %c0_433 = arith.constant 0 : index
    %608 = vector.load %arg2[%c23_432, %c0_433] : memref<43x128xf32, #tpu.memory_space<vmem>>, vector<1x128xf32>
    %609 = vector.broadcast %608 : vector<1x128xf32> to vector<16x128xf32>
    %610 = arith.mulf %607, %609 : vector<16x128xf32>
    %611 = arith.addf %591, %610 : vector<16x128xf32>
    %c112_i32_434 = arith.constant 112 : i32
    %612 = tpu.dynamic_rotate %504 by %c112_i32_434 dim 1 : vector<16x128xf32>, i32 -> vector<16x128xf32>
    %c8_435 = arith.constant 8 : index
    %c0_436 = arith.constant 0 : index
    %613 = vector.load %arg7[%c8_435, %c0_436] : memref<32x128xf32, #tpu.memory_space<vmem>>, vector<16x128xf32>
    tpu.vector_store %arg7[%c8_435, %c0_436], %612 {strides = array<i32>} : memref<32x128xf32, #tpu.memory_space<vmem>>, vector<16x128xf32>,
    %c6_437 = arith.constant 6 : index
    %c0_438 = arith.constant 0 : index
    %614 = vector.load %arg7[%c6_437, %c0_438] : memref<32x128xf32, #tpu.memory_space<vmem>>, vector<16x128xf32>
    %c4_439 = arith.constant 4 : index
    %c0_440 = arith.constant 0 : index
    %615 = vector.load %arg2[%c4_439, %c0_440] : memref<43x128xf32, #tpu.memory_space<vmem>>, vector<1x128xf32>
    %616 = vector.broadcast %615 : vector<1x128xf32> to vector<16x128xf32>
    %617 = arith.mulf %614, %616 : vector<16x128xf32>
    %618 = arith.addf %596, %617 : vector<16x128xf32>
    %c7_441 = arith.constant 7 : index
    %c0_442 = arith.constant 0 : index
    %619 = vector.load %arg7[%c7_441, %c0_442] : memref<32x128xf32, #tpu.memory_space<vmem>>, vector<16x128xf32>
    %c9_443 = arith.constant 9 : index
    %c0_444 = arith.constant 0 : index
    %620 = vector.load %arg2[%c9_443, %c0_444] : memref<43x128xf32, #tpu.memory_space<vmem>>, vector<1x128xf32>
    %621 = vector.broadcast %620 : vector<1x128xf32> to vector<16x128xf32>
    %622 = arith.mulf %619, %621 : vector<16x128xf32>
    %623 = arith.addf %601, %622 : vector<16x128xf32>
    %c8_445 = arith.constant 8 : index
    %c0_446 = arith.constant 0 : index
    %624 = vector.load %arg7[%c8_445, %c0_446] : memref<32x128xf32, #tpu.memory_space<vmem>>, vector<16x128xf32>
    %c14_447 = arith.constant 14 : index
    %c0_448 = arith.constant 0 : index
    %625 = vector.load %arg2[%c14_447, %c0_448] : memref<43x128xf32, #tpu.memory_space<vmem>>, vector<1x128xf32>
    %626 = vector.broadcast %625 : vector<1x128xf32> to vector<16x128xf32>
    %627 = arith.mulf %624, %626 : vector<16x128xf32>
    %628 = arith.addf %606, %627 : vector<16x128xf32>
    %c9_449 = arith.constant 9 : index
    %c0_450 = arith.constant 0 : index
    %629 = vector.load %arg7[%c9_449, %c0_450] : memref<32x128xf32, #tpu.memory_space<vmem>>, vector<16x128xf32>
    %c19_451 = arith.constant 19 : index
    %c0_452 = arith.constant 0 : index
    %630 = vector.load %arg2[%c19_451, %c0_452] : memref<43x128xf32, #tpu.memory_space<vmem>>, vector<1x128xf32>
    %631 = vector.broadcast %630 : vector<1x128xf32> to vector<16x128xf32>
    %632 = arith.mulf %629, %631 : vector<16x128xf32>
    %633 = arith.addf %611, %632 : vector<16x128xf32>
    %c10_453 = arith.constant 10 : index
    %c0_454 = arith.constant 0 : index
    %634 = vector.load %arg7[%c10_453, %c0_454] : memref<32x128xf32, #tpu.memory_space<vmem>>, vector<16x128xf32>
    %c24_455 = arith.constant 24 : index
    %c0_456 = arith.constant 0 : index
    %635 = vector.load %arg2[%c24_455, %c0_456] : memref<43x128xf32, #tpu.memory_space<vmem>>, vector<1x128xf32>
    %636 = vector.broadcast %635 : vector<1x128xf32> to vector<16x128xf32>
    %637 = arith.mulf %634, %636 : vector<16x128xf32>
    %638 = arith.addf %618, %637 : vector<16x128xf32>
    %639 = arith.addf %638, %623 : vector<16x128xf32>
    %640 = arith.addf %628, %633 : vector<16x128xf32>
    %641 = arith.addf %639, %640 : vector<16x128xf32>
    %cst_457 = arith.constant 0.000000e+00 : f32
    %642 = vector.broadcast %cst_457 : f32 to vector<16x128xf32>
    %643 = arith.maximumf %641, %642 : vector<16x128xf32>
    %c35_458 = arith.constant 35 : index
    %c0_459 = arith.constant 0 : index
    %644 = vector.load %arg2[%c35_458, %c0_459] : memref<43x128xf32, #tpu.memory_space<vmem>>, vector<1x128xf32>
    %645 = vector.broadcast %644 : vector<1x128xf32> to vector<16x128xf32>
    %646 = arith.addf %643, %645 : vector<16x128xf32>
    %c8_i32_460 = arith.constant 8 : i32
    %647 = tpu.dynamic_rotate %643 by %c8_i32_460 dim 1 : vector<16x128xf32>, i32 -> vector<16x128xf32>
    %c8_461 = arith.constant 8 : index
    %c0_462 = arith.constant 0 : index
    %648 = vector.load %arg7[%c8_461, %c0_462] : memref<32x128xf32, #tpu.memory_space<vmem>>, vector<16x128xf32>
    tpu.vector_store %arg7[%c8_461, %c0_462], %647 {strides = array<i32>} : memref<32x128xf32, #tpu.memory_space<vmem>>, vector<16x128xf32>,
    %c7_463 = arith.constant 7 : index
    %c0_464 = arith.constant 0 : index
    %649 = vector.load %arg7[%c7_463, %c0_464] : memref<32x128xf32, #tpu.memory_space<vmem>>, vector<16x128xf32>
    %c25_465 = arith.constant 25 : index
    %c0_466 = arith.constant 0 : index
    %650 = vector.load %arg2[%c25_465, %c0_466] : memref<43x128xf32, #tpu.memory_space<vmem>>, vector<1x128xf32>
    %651 = vector.broadcast %650 : vector<1x128xf32> to vector<16x128xf32>
    %652 = arith.mulf %649, %651 : vector<16x128xf32>
    %653 = arith.addf %646, %652 : vector<16x128xf32>
    %c8_467 = arith.constant 8 : index
    %c0_468 = arith.constant 0 : index
    %654 = vector.load %arg7[%c8_467, %c0_468] : memref<32x128xf32, #tpu.memory_space<vmem>>, vector<16x128xf32>
    %c28_469 = arith.constant 28 : index
    %c0_470 = arith.constant 0 : index
    %655 = vector.load %arg2[%c28_469, %c0_470] : memref<43x128xf32, #tpu.memory_space<vmem>>, vector<1x128xf32>
    %656 = vector.broadcast %655 : vector<1x128xf32> to vector<16x128xf32>
    %657 = arith.mulf %654, %656 : vector<16x128xf32>
    %c9_471 = arith.constant 9 : index
    %c0_472 = arith.constant 0 : index
    %658 = vector.load %arg7[%c9_471, %c0_472] : memref<32x128xf32, #tpu.memory_space<vmem>>, vector<16x128xf32>
    %c31_473 = arith.constant 31 : index
    %c0_474 = arith.constant 0 : index
    %659 = vector.load %arg2[%c31_473, %c0_474] : memref<43x128xf32, #tpu.memory_space<vmem>>, vector<1x128xf32>
    %660 = vector.broadcast %659 : vector<1x128xf32> to vector<16x128xf32>
    %661 = arith.mulf %658, %660 : vector<16x128xf32>
    %c8_475 = arith.constant 8 : index
    %c0_476 = arith.constant 0 : index
    %662 = vector.load %arg7[%c8_475, %c0_476] : memref<32x128xf32, #tpu.memory_space<vmem>>, vector<16x128xf32>
    tpu.vector_store %arg7[%c8_475, %c0_476], %643 {strides = array<i32>} : memref<32x128xf32, #tpu.memory_space<vmem>>, vector<16x128xf32>,
    %c7_477 = arith.constant 7 : index
    %c0_478 = arith.constant 0 : index
    %663 = vector.load %arg7[%c7_477, %c0_478] : memref<32x128xf32, #tpu.memory_space<vmem>>, vector<16x128xf32>
    %c26_479 = arith.constant 26 : index
    %c0_480 = arith.constant 0 : index
    %664 = vector.load %arg2[%c26_479, %c0_480] : memref<43x128xf32, #tpu.memory_space<vmem>>, vector<1x128xf32>
    %665 = vector.broadcast %664 : vector<1x128xf32> to vector<16x128xf32>
    %666 = arith.mulf %663, %665 : vector<16x128xf32>
    %c8_481 = arith.constant 8 : index
    %c0_482 = arith.constant 0 : index
    %667 = vector.load %arg7[%c8_481, %c0_482] : memref<32x128xf32, #tpu.memory_space<vmem>>, vector<16x128xf32>
    %c29_483 = arith.constant 29 : index
    %c0_484 = arith.constant 0 : index
    %668 = vector.load %arg2[%c29_483, %c0_484] : memref<43x128xf32, #tpu.memory_space<vmem>>, vector<1x128xf32>
    %669 = vector.broadcast %668 : vector<1x128xf32> to vector<16x128xf32>
    %670 = arith.mulf %667, %669 : vector<16x128xf32>
    %671 = arith.addf %653, %670 : vector<16x128xf32>
    %c9_485 = arith.constant 9 : index
    %c0_486 = arith.constant 0 : index
    %672 = vector.load %arg7[%c9_485, %c0_486] : memref<32x128xf32, #tpu.memory_space<vmem>>, vector<16x128xf32>
    %c32_487 = arith.constant 32 : index
    %c0_488 = arith.constant 0 : index
    %673 = vector.load %arg2[%c32_487, %c0_488] : memref<43x128xf32, #tpu.memory_space<vmem>>, vector<1x128xf32>
    %674 = vector.broadcast %673 : vector<1x128xf32> to vector<16x128xf32>
    %675 = arith.mulf %672, %674 : vector<16x128xf32>
    %676 = arith.addf %657, %675 : vector<16x128xf32>
    %c120_i32_489 = arith.constant 120 : i32
    %677 = tpu.dynamic_rotate %643 by %c120_i32_489 dim 1 : vector<16x128xf32>, i32 -> vector<16x128xf32>
    %c8_490 = arith.constant 8 : index
    %c0_491 = arith.constant 0 : index
    %678 = vector.load %arg7[%c8_490, %c0_491] : memref<32x128xf32, #tpu.memory_space<vmem>>, vector<16x128xf32>
    tpu.vector_store %arg7[%c8_490, %c0_491], %677 {strides = array<i32>} : memref<32x128xf32, #tpu.memory_space<vmem>>, vector<16x128xf32>,
    %c7_492 = arith.constant 7 : index
    %c0_493 = arith.constant 0 : index
    %679 = vector.load %arg7[%c7_492, %c0_493] : memref<32x128xf32, #tpu.memory_space<vmem>>, vector<16x128xf32>
    %c27_494 = arith.constant 27 : index
    %c0_495 = arith.constant 0 : index
    %680 = vector.load %arg2[%c27_494, %c0_495] : memref<43x128xf32, #tpu.memory_space<vmem>>, vector<1x128xf32>
    %681 = vector.broadcast %680 : vector<1x128xf32> to vector<16x128xf32>
    %682 = arith.mulf %679, %681 : vector<16x128xf32>
    %683 = arith.addf %661, %682 : vector<16x128xf32>
    %c8_496 = arith.constant 8 : index
    %c0_497 = arith.constant 0 : index
    %684 = vector.load %arg7[%c8_496, %c0_497] : memref<32x128xf32, #tpu.memory_space<vmem>>, vector<16x128xf32>
    %c30_498 = arith.constant 30 : index
    %c0_499 = arith.constant 0 : index
    %685 = vector.load %arg2[%c30_498, %c0_499] : memref<43x128xf32, #tpu.memory_space<vmem>>, vector<1x128xf32>
    %686 = vector.broadcast %685 : vector<1x128xf32> to vector<16x128xf32>
    %687 = arith.mulf %684, %686 : vector<16x128xf32>
    %688 = arith.addf %666, %687 : vector<16x128xf32>
    %c9_500 = arith.constant 9 : index
    %c0_501 = arith.constant 0 : index
    %689 = vector.load %arg7[%c9_500, %c0_501] : memref<32x128xf32, #tpu.memory_space<vmem>>, vector<16x128xf32>
    %c33_502 = arith.constant 33 : index
    %c0_503 = arith.constant 0 : index
    %690 = vector.load %arg2[%c33_502, %c0_503] : memref<43x128xf32, #tpu.memory_space<vmem>>, vector<1x128xf32>
    %691 = vector.broadcast %690 : vector<1x128xf32> to vector<16x128xf32>
    %692 = arith.mulf %689, %691 : vector<16x128xf32>
    %693 = arith.addf %671, %692 : vector<16x128xf32>
    %694 = arith.addf %693, %676 : vector<16x128xf32>
    %695 = arith.addf %683, %688 : vector<16x128xf32>
    %696 = arith.addf %694, %695 : vector<16x128xf32>
    %c41_504 = arith.constant 41 : index
    %c0_505 = arith.constant 0 : index
    %697 = vector.load %arg2[%c41_504, %c0_505] : memref<43x128xf32, #tpu.memory_space<vmem>>, vector<1x128xf32>
    %c42_506 = arith.constant 42 : index
    %c0_507 = arith.constant 0 : index
    %698 = vector.load %arg2[%c42_506, %c0_507] : memref<43x128xf32, #tpu.memory_space<vmem>>, vector<1x128xf32>
    %cst_508 = arith.constant dense<0.000000e+00> : vector<128xf32>
    %699 = vector.multi_reduction <add>, %696, %cst_508 [0] : vector<16x128xf32> to vector<128xf32>
    %700 = vector.shape_cast %699 : vector<128xf32> to vector<1x128xf32>
    %cst_509 = arith.constant 0.000000e+00 : f32
    %701 = vector.broadcast %cst_509 : f32 to vector<1x128xf32>
    %702 = arith.mulf %700, %697 : vector<1x128xf32>
    %cst_510 = arith.constant dense<0.000000e+00> : vector<1xf32>
    %703 = vector.multi_reduction <add>, %702, %cst_510 [1] : vector<1x128xf32> to vector<1xf32>
    %704 = vector.shape_cast %703 : vector<1xf32> to vector<1x1xf32>
    %cst_511 = arith.constant 9.765625E-4 : f32
    %705 = vector.broadcast %cst_511 : f32 to vector<1x1xf32>
    %706 = arith.mulf %704, %705 : vector<1x1xf32>
    %707 = vector.broadcast %706 : vector<1x1xf32> to vector<1x128xf32>
    %708 = arith.mulf %707, %697 : vector<1x128xf32>
    %709 = arith.addf %701, %708 : vector<1x128xf32>
    %710 = arith.mulf %700, %698 : vector<1x128xf32>
    %cst_512 = arith.constant dense<0.000000e+00> : vector<1xf32>
    %711 = vector.multi_reduction <add>, %710, %cst_512 [1] : vector<1x128xf32> to vector<1xf32>
    %712 = vector.shape_cast %711 : vector<1xf32> to vector<1x1xf32>
    %cst_513 = arith.constant 9.765625E-4 : f32
    %713 = vector.broadcast %cst_513 : f32 to vector<1x1xf32>
    %714 = arith.mulf %712, %713 : vector<1x1xf32>
    %715 = vector.broadcast %714 : vector<1x1xf32> to vector<1x128xf32>
    %716 = arith.mulf %715, %698 : vector<1x128xf32>
    %717 = arith.addf %709, %716 : vector<1x128xf32>
    %718 = vector.broadcast %717 : vector<1x128xf32> to vector<16x128xf32>
    %719 = arith.subf %696, %718 : vector<16x128xf32>
    %720 = arith.mulf %719, %719 : vector<16x128xf32>
    %cst_514 = arith.constant dense<0.000000e+00> : vector<128xf32>
    %721 = vector.multi_reduction <add>, %720, %cst_514 [0] : vector<16x128xf32> to vector<128xf32>
    %722 = vector.shape_cast %721 : vector<128xf32> to vector<1x128xf32>
    %cst_515 = arith.constant 0.000000e+00 : f32
    %723 = vector.broadcast %cst_515 : f32 to vector<1x128xf32>
    %724 = arith.mulf %722, %697 : vector<1x128xf32>
    %cst_516 = arith.constant dense<0.000000e+00> : vector<1xf32>
    %725 = vector.multi_reduction <add>, %724, %cst_516 [1] : vector<1x128xf32> to vector<1xf32>
    %726 = vector.shape_cast %725 : vector<1xf32> to vector<1x1xf32>
    %cst_517 = arith.constant 9.765625E-4 : f32
    %727 = vector.broadcast %cst_517 : f32 to vector<1x1xf32>
    %728 = arith.mulf %726, %727 : vector<1x1xf32>
    %729 = vector.broadcast %728 : vector<1x1xf32> to vector<1x128xf32>
    %730 = arith.mulf %729, %697 : vector<1x128xf32>
    %731 = arith.addf %723, %730 : vector<1x128xf32>
    %732 = arith.mulf %722, %698 : vector<1x128xf32>
    %cst_518 = arith.constant dense<0.000000e+00> : vector<1xf32>
    %733 = vector.multi_reduction <add>, %732, %cst_518 [1] : vector<1x128xf32> to vector<1xf32>
    %734 = vector.shape_cast %733 : vector<1xf32> to vector<1x1xf32>
    %cst_519 = arith.constant 9.765625E-4 : f32
    %735 = vector.broadcast %cst_519 : f32 to vector<1x1xf32>
    %736 = arith.mulf %734, %735 : vector<1x1xf32>
    %737 = vector.broadcast %736 : vector<1x1xf32> to vector<1x128xf32>
    %738 = arith.mulf %737, %698 : vector<1x128xf32>
    %739 = arith.addf %731, %738 : vector<1x128xf32>
    %c37_520 = arith.constant 37 : index
    %c0_521 = arith.constant 0 : index
    %740 = vector.load %arg2[%c37_520, %c0_521] : memref<43x128xf32, #tpu.memory_space<vmem>>, vector<1x128xf32>
    %c38_522 = arith.constant 38 : index
    %c0_523 = arith.constant 0 : index
    %741 = vector.load %arg2[%c38_522, %c0_523] : memref<43x128xf32, #tpu.memory_space<vmem>>, vector<1x128xf32>
    %cst_524 = arith.constant 9.99999974E-6 : f32
    %742 = vector.broadcast %cst_524 : f32 to vector<1x128xf32>
    %743 = arith.addf %739, %742 : vector<1x128xf32>
    %744 = math.rsqrt %743 : vector<1x128xf32>
    %745 = vector.broadcast %744 : vector<1x128xf32> to vector<16x128xf32>
    %746 = arith.mulf %719, %745 : vector<16x128xf32>
    %747 = vector.broadcast %740 : vector<1x128xf32> to vector<16x128xf32>
    %748 = arith.mulf %746, %747 : vector<16x128xf32>
    %749 = vector.broadcast %741 : vector<1x128xf32> to vector<16x128xf32>
    %750 = arith.addf %748, %749 : vector<16x128xf32>
    %cst_525 = arith.constant 0.000000e+00 : f32
    %751 = vector.broadcast %cst_525 : f32 to vector<16x128xf32>
    %752 = arith.maximumf %750, %751 : vector<16x128xf32>
    %c32_526 = arith.constant 32 : index
    %c0_527 = arith.constant 0 : index
    %753 = vector.load %arg8[%c32_526, %c0_527] : memref<64x128xf32, #tpu.memory_space<vmem>>, vector<16x128xf32>
    tpu.vector_store %arg8[%c32_526, %c0_527], %752 {strides = array<i32>} : memref<64x128xf32, #tpu.memory_space<vmem>>, vector<16x128xf32>,
    %c48 = arith.constant 48 : index
    %c0_528 = arith.constant 0 : index
    %754 = vector.load %arg1[%c48, %c0_528] : memref<64x128xf32, #tpu.memory_space<vmem>>, vector<16x128xf32>
    %c34_529 = arith.constant 34 : index
    %c0_530 = arith.constant 0 : index
    %755 = vector.load %arg2[%c34_529, %c0_530] : memref<43x128xf32, #tpu.memory_space<vmem>>, vector<1x128xf32>
    %756 = vector.broadcast %755 : vector<1x128xf32> to vector<16x128xf32>
    %757 = arith.addf %754, %756 : vector<16x128xf32>
    %c16_i32_531 = arith.constant 16 : i32
    %758 = tpu.dynamic_rotate %754 by %c16_i32_531 dim 1 : vector<16x128xf32>, i32 -> vector<16x128xf32>
    %c8_532 = arith.constant 8 : index
    %c0_533 = arith.constant 0 : index
    %759 = vector.load %arg7[%c8_532, %c0_533] : memref<32x128xf32, #tpu.memory_space<vmem>>, vector<16x128xf32>
    tpu.vector_store %arg7[%c8_532, %c0_533], %758 {strides = array<i32>} : memref<32x128xf32, #tpu.memory_space<vmem>>, vector<16x128xf32>,
    %c6_534 = arith.constant 6 : index
    %c0_535 = arith.constant 0 : index
    %760 = vector.load %arg7[%c6_534, %c0_535] : memref<32x128xf32, #tpu.memory_space<vmem>>, vector<16x128xf32>
    %c0_536 = arith.constant 0 : index
    %c0_537 = arith.constant 0 : index
    %761 = vector.load %arg2[%c0_536, %c0_537] : memref<43x128xf32, #tpu.memory_space<vmem>>, vector<1x128xf32>
    %762 = vector.broadcast %761 : vector<1x128xf32> to vector<16x128xf32>
    %763 = arith.mulf %760, %762 : vector<16x128xf32>
    %764 = arith.addf %757, %763 : vector<16x128xf32>
    %c7_538 = arith.constant 7 : index
    %c0_539 = arith.constant 0 : index
    %765 = vector.load %arg7[%c7_538, %c0_539] : memref<32x128xf32, #tpu.memory_space<vmem>>, vector<16x128xf32>
    %c5_540 = arith.constant 5 : index
    %c0_541 = arith.constant 0 : index
    %766 = vector.load %arg2[%c5_540, %c0_541] : memref<43x128xf32, #tpu.memory_space<vmem>>, vector<1x128xf32>
    %767 = vector.broadcast %766 : vector<1x128xf32> to vector<16x128xf32>
    %768 = arith.mulf %765, %767 : vector<16x128xf32>
    %c8_542 = arith.constant 8 : index
    %c0_543 = arith.constant 0 : index
    %769 = vector.load %arg7[%c8_542, %c0_543] : memref<32x128xf32, #tpu.memory_space<vmem>>, vector<16x128xf32>
    %c10_544 = arith.constant 10 : index
    %c0_545 = arith.constant 0 : index
    %770 = vector.load %arg2[%c10_544, %c0_545] : memref<43x128xf32, #tpu.memory_space<vmem>>, vector<1x128xf32>
    %771 = vector.broadcast %770 : vector<1x128xf32> to vector<16x128xf32>
    %772 = arith.mulf %769, %771 : vector<16x128xf32>
    %c9_546 = arith.constant 9 : index
    %c0_547 = arith.constant 0 : index
    %773 = vector.load %arg7[%c9_546, %c0_547] : memref<32x128xf32, #tpu.memory_space<vmem>>, vector<16x128xf32>
    %c15_548 = arith.constant 15 : index
    %c0_549 = arith.constant 0 : index
    %774 = vector.load %arg2[%c15_548, %c0_549] : memref<43x128xf32, #tpu.memory_space<vmem>>, vector<1x128xf32>
    %775 = vector.broadcast %774 : vector<1x128xf32> to vector<16x128xf32>
    %776 = arith.mulf %773, %775 : vector<16x128xf32>
    %c10_550 = arith.constant 10 : index
    %c0_551 = arith.constant 0 : index
    %777 = vector.load %arg7[%c10_550, %c0_551] : memref<32x128xf32, #tpu.memory_space<vmem>>, vector<16x128xf32>
    %c20_552 = arith.constant 20 : index
    %c0_553 = arith.constant 0 : index
    %778 = vector.load %arg2[%c20_552, %c0_553] : memref<43x128xf32, #tpu.memory_space<vmem>>, vector<1x128xf32>
    %779 = vector.broadcast %778 : vector<1x128xf32> to vector<16x128xf32>
    %780 = arith.mulf %777, %779 : vector<16x128xf32>
    %781 = arith.addf %764, %780 : vector<16x128xf32>
    %c8_i32_554 = arith.constant 8 : i32
    %782 = tpu.dynamic_rotate %754 by %c8_i32_554 dim 1 : vector<16x128xf32>, i32 -> vector<16x128xf32>
    %c8_555 = arith.constant 8 : index
    %c0_556 = arith.constant 0 : index
    %783 = vector.load %arg7[%c8_555, %c0_556] : memref<32x128xf32, #tpu.memory_space<vmem>>, vector<16x128xf32>
    tpu.vector_store %arg7[%c8_555, %c0_556], %782 {strides = array<i32>} : memref<32x128xf32, #tpu.memory_space<vmem>>, vector<16x128xf32>,
    %c6_557 = arith.constant 6 : index
    %c0_558 = arith.constant 0 : index
    %784 = vector.load %arg7[%c6_557, %c0_558] : memref<32x128xf32, #tpu.memory_space<vmem>>, vector<16x128xf32>
    %c1_559 = arith.constant 1 : index
    %c0_560 = arith.constant 0 : index
    %785 = vector.load %arg2[%c1_559, %c0_560] : memref<43x128xf32, #tpu.memory_space<vmem>>, vector<1x128xf32>
    %786 = vector.broadcast %785 : vector<1x128xf32> to vector<16x128xf32>
    %787 = arith.mulf %784, %786 : vector<16x128xf32>
    %788 = arith.addf %768, %787 : vector<16x128xf32>
    %c7_561 = arith.constant 7 : index
    %c0_562 = arith.constant 0 : index
    %789 = vector.load %arg7[%c7_561, %c0_562] : memref<32x128xf32, #tpu.memory_space<vmem>>, vector<16x128xf32>
    %c6_563 = arith.constant 6 : index
    %c0_564 = arith.constant 0 : index
    %790 = vector.load %arg2[%c6_563, %c0_564] : memref<43x128xf32, #tpu.memory_space<vmem>>, vector<1x128xf32>
    %791 = vector.broadcast %790 : vector<1x128xf32> to vector<16x128xf32>
    %792 = arith.mulf %789, %791 : vector<16x128xf32>
    %793 = arith.addf %772, %792 : vector<16x128xf32>
    %c8_565 = arith.constant 8 : index
    %c0_566 = arith.constant 0 : index
    %794 = vector.load %arg7[%c8_565, %c0_566] : memref<32x128xf32, #tpu.memory_space<vmem>>, vector<16x128xf32>
    %c11_567 = arith.constant 11 : index
    %c0_568 = arith.constant 0 : index
    %795 = vector.load %arg2[%c11_567, %c0_568] : memref<43x128xf32, #tpu.memory_space<vmem>>, vector<1x128xf32>
    %796 = vector.broadcast %795 : vector<1x128xf32> to vector<16x128xf32>
    %797 = arith.mulf %794, %796 : vector<16x128xf32>
    %798 = arith.addf %776, %797 : vector<16x128xf32>
    %c9_569 = arith.constant 9 : index
    %c0_570 = arith.constant 0 : index
    %799 = vector.load %arg7[%c9_569, %c0_570] : memref<32x128xf32, #tpu.memory_space<vmem>>, vector<16x128xf32>
    %c16_571 = arith.constant 16 : index
    %c0_572 = arith.constant 0 : index
    %800 = vector.load %arg2[%c16_571, %c0_572] : memref<43x128xf32, #tpu.memory_space<vmem>>, vector<1x128xf32>
    %801 = vector.broadcast %800 : vector<1x128xf32> to vector<16x128xf32>
    %802 = arith.mulf %799, %801 : vector<16x128xf32>
    %803 = arith.addf %781, %802 : vector<16x128xf32>
    %c10_573 = arith.constant 10 : index
    %c0_574 = arith.constant 0 : index
    %804 = vector.load %arg7[%c10_573, %c0_574] : memref<32x128xf32, #tpu.memory_space<vmem>>, vector<16x128xf32>
    %c21_575 = arith.constant 21 : index
    %c0_576 = arith.constant 0 : index
    %805 = vector.load %arg2[%c21_575, %c0_576] : memref<43x128xf32, #tpu.memory_space<vmem>>, vector<1x128xf32>
    %806 = vector.broadcast %805 : vector<1x128xf32> to vector<16x128xf32>
    %807 = arith.mulf %804, %806 : vector<16x128xf32>
    %808 = arith.addf %788, %807 : vector<16x128xf32>
    %c8_577 = arith.constant 8 : index
    %c0_578 = arith.constant 0 : index
    %809 = vector.load %arg7[%c8_577, %c0_578] : memref<32x128xf32, #tpu.memory_space<vmem>>, vector<16x128xf32>
    tpu.vector_store %arg7[%c8_577, %c0_578], %754 {strides = array<i32>} : memref<32x128xf32, #tpu.memory_space<vmem>>, vector<16x128xf32>,
    %c6_579 = arith.constant 6 : index
    %c0_580 = arith.constant 0 : index
    %810 = vector.load %arg7[%c6_579, %c0_580] : memref<32x128xf32, #tpu.memory_space<vmem>>, vector<16x128xf32>
    %c2_581 = arith.constant 2 : index
    %c0_582 = arith.constant 0 : index
    %811 = vector.load %arg2[%c2_581, %c0_582] : memref<43x128xf32, #tpu.memory_space<vmem>>, vector<1x128xf32>
    %812 = vector.broadcast %811 : vector<1x128xf32> to vector<16x128xf32>
    %813 = arith.mulf %810, %812 : vector<16x128xf32>
    %814 = arith.addf %793, %813 : vector<16x128xf32>
    %c7_583 = arith.constant 7 : index
    %c0_584 = arith.constant 0 : index
    %815 = vector.load %arg7[%c7_583, %c0_584] : memref<32x128xf32, #tpu.memory_space<vmem>>, vector<16x128xf32>
    %c7_585 = arith.constant 7 : index
    %c0_586 = arith.constant 0 : index
    %816 = vector.load %arg2[%c7_585, %c0_586] : memref<43x128xf32, #tpu.memory_space<vmem>>, vector<1x128xf32>
    %817 = vector.broadcast %816 : vector<1x128xf32> to vector<16x128xf32>
    %818 = arith.mulf %815, %817 : vector<16x128xf32>
    %819 = arith.addf %798, %818 : vector<16x128xf32>
    %c8_587 = arith.constant 8 : index
    %c0_588 = arith.constant 0 : index
    %820 = vector.load %arg7[%c8_587, %c0_588] : memref<32x128xf32, #tpu.memory_space<vmem>>, vector<16x128xf32>
    %c12_589 = arith.constant 12 : index
    %c0_590 = arith.constant 0 : index
    %821 = vector.load %arg2[%c12_589, %c0_590] : memref<43x128xf32, #tpu.memory_space<vmem>>, vector<1x128xf32>
    %822 = vector.broadcast %821 : vector<1x128xf32> to vector<16x128xf32>
    %823 = arith.mulf %820, %822 : vector<16x128xf32>
    %824 = arith.addf %803, %823 : vector<16x128xf32>
    %c9_591 = arith.constant 9 : index
    %c0_592 = arith.constant 0 : index
    %825 = vector.load %arg7[%c9_591, %c0_592] : memref<32x128xf32, #tpu.memory_space<vmem>>, vector<16x128xf32>
    %c17_593 = arith.constant 17 : index
    %c0_594 = arith.constant 0 : index
    %826 = vector.load %arg2[%c17_593, %c0_594] : memref<43x128xf32, #tpu.memory_space<vmem>>, vector<1x128xf32>
    %827 = vector.broadcast %826 : vector<1x128xf32> to vector<16x128xf32>
    %828 = arith.mulf %825, %827 : vector<16x128xf32>
    %829 = arith.addf %808, %828 : vector<16x128xf32>
    %c10_595 = arith.constant 10 : index
    %c0_596 = arith.constant 0 : index
    %830 = vector.load %arg7[%c10_595, %c0_596] : memref<32x128xf32, #tpu.memory_space<vmem>>, vector<16x128xf32>
    %c22_597 = arith.constant 22 : index
    %c0_598 = arith.constant 0 : index
    %831 = vector.load %arg2[%c22_597, %c0_598] : memref<43x128xf32, #tpu.memory_space<vmem>>, vector<1x128xf32>
    %832 = vector.broadcast %831 : vector<1x128xf32> to vector<16x128xf32>
    %833 = arith.mulf %830, %832 : vector<16x128xf32>
    %834 = arith.addf %814, %833 : vector<16x128xf32>
    %c120_i32_599 = arith.constant 120 : i32
    %835 = tpu.dynamic_rotate %754 by %c120_i32_599 dim 1 : vector<16x128xf32>, i32 -> vector<16x128xf32>
    %c8_600 = arith.constant 8 : index
    %c0_601 = arith.constant 0 : index
    %836 = vector.load %arg7[%c8_600, %c0_601] : memref<32x128xf32, #tpu.memory_space<vmem>>, vector<16x128xf32>
    tpu.vector_store %arg7[%c8_600, %c0_601], %835 {strides = array<i32>} : memref<32x128xf32, #tpu.memory_space<vmem>>, vector<16x128xf32>,
    %c6_602 = arith.constant 6 : index
    %c0_603 = arith.constant 0 : index
    %837 = vector.load %arg7[%c6_602, %c0_603] : memref<32x128xf32, #tpu.memory_space<vmem>>, vector<16x128xf32>
    %c3_604 = arith.constant 3 : index
    %c0_605 = arith.constant 0 : index
    %838 = vector.load %arg2[%c3_604, %c0_605] : memref<43x128xf32, #tpu.memory_space<vmem>>, vector<1x128xf32>
    %839 = vector.broadcast %838 : vector<1x128xf32> to vector<16x128xf32>
    %840 = arith.mulf %837, %839 : vector<16x128xf32>
    %841 = arith.addf %819, %840 : vector<16x128xf32>
    %c7_606 = arith.constant 7 : index
    %c0_607 = arith.constant 0 : index
    %842 = vector.load %arg7[%c7_606, %c0_607] : memref<32x128xf32, #tpu.memory_space<vmem>>, vector<16x128xf32>
    %c8_608 = arith.constant 8 : index
    %c0_609 = arith.constant 0 : index
    %843 = vector.load %arg2[%c8_608, %c0_609] : memref<43x128xf32, #tpu.memory_space<vmem>>, vector<1x128xf32>
    %844 = vector.broadcast %843 : vector<1x128xf32> to vector<16x128xf32>
    %845 = arith.mulf %842, %844 : vector<16x128xf32>
    %846 = arith.addf %824, %845 : vector<16x128xf32>
    %c8_610 = arith.constant 8 : index
    %c0_611 = arith.constant 0 : index
    %847 = vector.load %arg7[%c8_610, %c0_611] : memref<32x128xf32, #tpu.memory_space<vmem>>, vector<16x128xf32>
    %c13_612 = arith.constant 13 : index
    %c0_613 = arith.constant 0 : index
    %848 = vector.load %arg2[%c13_612, %c0_613] : memref<43x128xf32, #tpu.memory_space<vmem>>, vector<1x128xf32>
    %849 = vector.broadcast %848 : vector<1x128xf32> to vector<16x128xf32>
    %850 = arith.mulf %847, %849 : vector<16x128xf32>
    %851 = arith.addf %829, %850 : vector<16x128xf32>
    %c9_614 = arith.constant 9 : index
    %c0_615 = arith.constant 0 : index
    %852 = vector.load %arg7[%c9_614, %c0_615] : memref<32x128xf32, #tpu.memory_space<vmem>>, vector<16x128xf32>
    %c18_616 = arith.constant 18 : index
    %c0_617 = arith.constant 0 : index
    %853 = vector.load %arg2[%c18_616, %c0_617] : memref<43x128xf32, #tpu.memory_space<vmem>>, vector<1x128xf32>
    %854 = vector.broadcast %853 : vector<1x128xf32> to vector<16x128xf32>
    %855 = arith.mulf %852, %854 : vector<16x128xf32>
    %856 = arith.addf %834, %855 : vector<16x128xf32>
    %c10_618 = arith.constant 10 : index
    %c0_619 = arith.constant 0 : index
    %857 = vector.load %arg7[%c10_618, %c0_619] : memref<32x128xf32, #tpu.memory_space<vmem>>, vector<16x128xf32>
    %c23_620 = arith.constant 23 : index
    %c0_621 = arith.constant 0 : index
    %858 = vector.load %arg2[%c23_620, %c0_621] : memref<43x128xf32, #tpu.memory_space<vmem>>, vector<1x128xf32>
    %859 = vector.broadcast %858 : vector<1x128xf32> to vector<16x128xf32>
    %860 = arith.mulf %857, %859 : vector<16x128xf32>
    %861 = arith.addf %841, %860 : vector<16x128xf32>
    %c112_i32_622 = arith.constant 112 : i32
    %862 = tpu.dynamic_rotate %754 by %c112_i32_622 dim 1 : vector<16x128xf32>, i32 -> vector<16x128xf32>
    %c8_623 = arith.constant 8 : index
    %c0_624 = arith.constant 0 : index
    %863 = vector.load %arg7[%c8_623, %c0_624] : memref<32x128xf32, #tpu.memory_space<vmem>>, vector<16x128xf32>
    tpu.vector_store %arg7[%c8_623, %c0_624], %862 {strides = array<i32>} : memref<32x128xf32, #tpu.memory_space<vmem>>, vector<16x128xf32>,
    %c6_625 = arith.constant 6 : index
    %c0_626 = arith.constant 0 : index
    %864 = vector.load %arg7[%c6_625, %c0_626] : memref<32x128xf32, #tpu.memory_space<vmem>>, vector<16x128xf32>
    %c4_627 = arith.constant 4 : index
    %c0_628 = arith.constant 0 : index
    %865 = vector.load %arg2[%c4_627, %c0_628] : memref<43x128xf32, #tpu.memory_space<vmem>>, vector<1x128xf32>
    %866 = vector.broadcast %865 : vector<1x128xf32> to vector<16x128xf32>
    %867 = arith.mulf %864, %866 : vector<16x128xf32>
    %868 = arith.addf %846, %867 : vector<16x128xf32>
    %c7_629 = arith.constant 7 : index
    %c0_630 = arith.constant 0 : index
    %869 = vector.load %arg7[%c7_629, %c0_630] : memref<32x128xf32, #tpu.memory_space<vmem>>, vector<16x128xf32>
    %c9_631 = arith.constant 9 : index
    %c0_632 = arith.constant 0 : index
    %870 = vector.load %arg2[%c9_631, %c0_632] : memref<43x128xf32, #tpu.memory_space<vmem>>, vector<1x128xf32>
    %871 = vector.broadcast %870 : vector<1x128xf32> to vector<16x128xf32>
    %872 = arith.mulf %869, %871 : vector<16x128xf32>
    %873 = arith.addf %851, %872 : vector<16x128xf32>
    %c8_633 = arith.constant 8 : index
    %c0_634 = arith.constant 0 : index
    %874 = vector.load %arg7[%c8_633, %c0_634] : memref<32x128xf32, #tpu.memory_space<vmem>>, vector<16x128xf32>
    %c14_635 = arith.constant 14 : index
    %c0_636 = arith.constant 0 : index
    %875 = vector.load %arg2[%c14_635, %c0_636] : memref<43x128xf32, #tpu.memory_space<vmem>>, vector<1x128xf32>
    %876 = vector.broadcast %875 : vector<1x128xf32> to vector<16x128xf32>
    %877 = arith.mulf %874, %876 : vector<16x128xf32>
    %878 = arith.addf %856, %877 : vector<16x128xf32>
    %c9_637 = arith.constant 9 : index
    %c0_638 = arith.constant 0 : index
    %879 = vector.load %arg7[%c9_637, %c0_638] : memref<32x128xf32, #tpu.memory_space<vmem>>, vector<16x128xf32>
    %c19_639 = arith.constant 19 : index
    %c0_640 = arith.constant 0 : index
    %880 = vector.load %arg2[%c19_639, %c0_640] : memref<43x128xf32, #tpu.memory_space<vmem>>, vector<1x128xf32>
    %881 = vector.broadcast %880 : vector<1x128xf32> to vector<16x128xf32>
    %882 = arith.mulf %879, %881 : vector<16x128xf32>
    %883 = arith.addf %861, %882 : vector<16x128xf32>
    %c10_641 = arith.constant 10 : index
    %c0_642 = arith.constant 0 : index
    %884 = vector.load %arg7[%c10_641, %c0_642] : memref<32x128xf32, #tpu.memory_space<vmem>>, vector<16x128xf32>
    %c24_643 = arith.constant 24 : index
    %c0_644 = arith.constant 0 : index
    %885 = vector.load %arg2[%c24_643, %c0_644] : memref<43x128xf32, #tpu.memory_space<vmem>>, vector<1x128xf32>
    %886 = vector.broadcast %885 : vector<1x128xf32> to vector<16x128xf32>
    %887 = arith.mulf %884, %886 : vector<16x128xf32>
    %888 = arith.addf %868, %887 : vector<16x128xf32>
    %889 = arith.addf %888, %873 : vector<16x128xf32>
    %890 = arith.addf %878, %883 : vector<16x128xf32>
    %891 = arith.addf %889, %890 : vector<16x128xf32>
    %cst_645 = arith.constant 0.000000e+00 : f32
    %892 = vector.broadcast %cst_645 : f32 to vector<16x128xf32>
    %893 = arith.maximumf %891, %892 : vector<16x128xf32>
    %c35_646 = arith.constant 35 : index
    %c0_647 = arith.constant 0 : index
    %894 = vector.load %arg2[%c35_646, %c0_647] : memref<43x128xf32, #tpu.memory_space<vmem>>, vector<1x128xf32>
    %895 = vector.broadcast %894 : vector<1x128xf32> to vector<16x128xf32>
    %896 = arith.addf %893, %895 : vector<16x128xf32>
    %c8_i32_648 = arith.constant 8 : i32
    %897 = tpu.dynamic_rotate %893 by %c8_i32_648 dim 1 : vector<16x128xf32>, i32 -> vector<16x128xf32>
    %c8_649 = arith.constant 8 : index
    %c0_650 = arith.constant 0 : index
    %898 = vector.load %arg7[%c8_649, %c0_650] : memref<32x128xf32, #tpu.memory_space<vmem>>, vector<16x128xf32>
    tpu.vector_store %arg7[%c8_649, %c0_650], %897 {strides = array<i32>} : memref<32x128xf32, #tpu.memory_space<vmem>>, vector<16x128xf32>,
    %c7_651 = arith.constant 7 : index
    %c0_652 = arith.constant 0 : index
    %899 = vector.load %arg7[%c7_651, %c0_652] : memref<32x128xf32, #tpu.memory_space<vmem>>, vector<16x128xf32>
    %c25_653 = arith.constant 25 : index
    %c0_654 = arith.constant 0 : index
    %900 = vector.load %arg2[%c25_653, %c0_654] : memref<43x128xf32, #tpu.memory_space<vmem>>, vector<1x128xf32>
    %901 = vector.broadcast %900 : vector<1x128xf32> to vector<16x128xf32>
    %902 = arith.mulf %899, %901 : vector<16x128xf32>
    %903 = arith.addf %896, %902 : vector<16x128xf32>
    %c8_655 = arith.constant 8 : index
    %c0_656 = arith.constant 0 : index
    %904 = vector.load %arg7[%c8_655, %c0_656] : memref<32x128xf32, #tpu.memory_space<vmem>>, vector<16x128xf32>
    %c28_657 = arith.constant 28 : index
    %c0_658 = arith.constant 0 : index
    %905 = vector.load %arg2[%c28_657, %c0_658] : memref<43x128xf32, #tpu.memory_space<vmem>>, vector<1x128xf32>
    %906 = vector.broadcast %905 : vector<1x128xf32> to vector<16x128xf32>
    %907 = arith.mulf %904, %906 : vector<16x128xf32>
    %c9_659 = arith.constant 9 : index
    %c0_660 = arith.constant 0 : index
    %908 = vector.load %arg7[%c9_659, %c0_660] : memref<32x128xf32, #tpu.memory_space<vmem>>, vector<16x128xf32>
    %c31_661 = arith.constant 31 : index
    %c0_662 = arith.constant 0 : index
    %909 = vector.load %arg2[%c31_661, %c0_662] : memref<43x128xf32, #tpu.memory_space<vmem>>, vector<1x128xf32>
    %910 = vector.broadcast %909 : vector<1x128xf32> to vector<16x128xf32>
    %911 = arith.mulf %908, %910 : vector<16x128xf32>
    %c8_663 = arith.constant 8 : index
    %c0_664 = arith.constant 0 : index
    %912 = vector.load %arg7[%c8_663, %c0_664] : memref<32x128xf32, #tpu.memory_space<vmem>>, vector<16x128xf32>
    tpu.vector_store %arg7[%c8_663, %c0_664], %893 {strides = array<i32>} : memref<32x128xf32, #tpu.memory_space<vmem>>, vector<16x128xf32>,
    %c7_665 = arith.constant 7 : index
    %c0_666 = arith.constant 0 : index
    %913 = vector.load %arg7[%c7_665, %c0_666] : memref<32x128xf32, #tpu.memory_space<vmem>>, vector<16x128xf32>
    %c26_667 = arith.constant 26 : index
    %c0_668 = arith.constant 0 : index
    %914 = vector.load %arg2[%c26_667, %c0_668] : memref<43x128xf32, #tpu.memory_space<vmem>>, vector<1x128xf32>
    %915 = vector.broadcast %914 : vector<1x128xf32> to vector<16x128xf32>
    %916 = arith.mulf %913, %915 : vector<16x128xf32>
    %c8_669 = arith.constant 8 : index
    %c0_670 = arith.constant 0 : index
    %917 = vector.load %arg7[%c8_669, %c0_670] : memref<32x128xf32, #tpu.memory_space<vmem>>, vector<16x128xf32>
    %c29_671 = arith.constant 29 : index
    %c0_672 = arith.constant 0 : index
    %918 = vector.load %arg2[%c29_671, %c0_672] : memref<43x128xf32, #tpu.memory_space<vmem>>, vector<1x128xf32>
    %919 = vector.broadcast %918 : vector<1x128xf32> to vector<16x128xf32>
    %920 = arith.mulf %917, %919 : vector<16x128xf32>
    %921 = arith.addf %903, %920 : vector<16x128xf32>
    %c9_673 = arith.constant 9 : index
    %c0_674 = arith.constant 0 : index
    %922 = vector.load %arg7[%c9_673, %c0_674] : memref<32x128xf32, #tpu.memory_space<vmem>>, vector<16x128xf32>
    %c32_675 = arith.constant 32 : index
    %c0_676 = arith.constant 0 : index
    %923 = vector.load %arg2[%c32_675, %c0_676] : memref<43x128xf32, #tpu.memory_space<vmem>>, vector<1x128xf32>
    %924 = vector.broadcast %923 : vector<1x128xf32> to vector<16x128xf32>
    %925 = arith.mulf %922, %924 : vector<16x128xf32>
    %926 = arith.addf %907, %925 : vector<16x128xf32>
    %c120_i32_677 = arith.constant 120 : i32
    %927 = tpu.dynamic_rotate %893 by %c120_i32_677 dim 1 : vector<16x128xf32>, i32 -> vector<16x128xf32>
    %c8_678 = arith.constant 8 : index
    %c0_679 = arith.constant 0 : index
    %928 = vector.load %arg7[%c8_678, %c0_679] : memref<32x128xf32, #tpu.memory_space<vmem>>, vector<16x128xf32>
    tpu.vector_store %arg7[%c8_678, %c0_679], %927 {strides = array<i32>} : memref<32x128xf32, #tpu.memory_space<vmem>>, vector<16x128xf32>,
    %c7_680 = arith.constant 7 : index
    %c0_681 = arith.constant 0 : index
    %929 = vector.load %arg7[%c7_680, %c0_681] : memref<32x128xf32, #tpu.memory_space<vmem>>, vector<16x128xf32>
    %c27_682 = arith.constant 27 : index
    %c0_683 = arith.constant 0 : index
    %930 = vector.load %arg2[%c27_682, %c0_683] : memref<43x128xf32, #tpu.memory_space<vmem>>, vector<1x128xf32>
    %931 = vector.broadcast %930 : vector<1x128xf32> to vector<16x128xf32>
    %932 = arith.mulf %929, %931 : vector<16x128xf32>
    %933 = arith.addf %911, %932 : vector<16x128xf32>
    %c8_684 = arith.constant 8 : index
    %c0_685 = arith.constant 0 : index
    %934 = vector.load %arg7[%c8_684, %c0_685] : memref<32x128xf32, #tpu.memory_space<vmem>>, vector<16x128xf32>
    %c30_686 = arith.constant 30 : index
    %c0_687 = arith.constant 0 : index
    %935 = vector.load %arg2[%c30_686, %c0_687] : memref<43x128xf32, #tpu.memory_space<vmem>>, vector<1x128xf32>
    %936 = vector.broadcast %935 : vector<1x128xf32> to vector<16x128xf32>
    %937 = arith.mulf %934, %936 : vector<16x128xf32>
    %938 = arith.addf %916, %937 : vector<16x128xf32>
    %c9_688 = arith.constant 9 : index
    %c0_689 = arith.constant 0 : index
    %939 = vector.load %arg7[%c9_688, %c0_689] : memref<32x128xf32, #tpu.memory_space<vmem>>, vector<16x128xf32>
    %c33_690 = arith.constant 33 : index
    %c0_691 = arith.constant 0 : index
    %940 = vector.load %arg2[%c33_690, %c0_691] : memref<43x128xf32, #tpu.memory_space<vmem>>, vector<1x128xf32>
    %941 = vector.broadcast %940 : vector<1x128xf32> to vector<16x128xf32>
    %942 = arith.mulf %939, %941 : vector<16x128xf32>
    %943 = arith.addf %921, %942 : vector<16x128xf32>
    %944 = arith.addf %943, %926 : vector<16x128xf32>
    %945 = arith.addf %933, %938 : vector<16x128xf32>
    %946 = arith.addf %944, %945 : vector<16x128xf32>
    %c41_692 = arith.constant 41 : index
    %c0_693 = arith.constant 0 : index
    %947 = vector.load %arg2[%c41_692, %c0_693] : memref<43x128xf32, #tpu.memory_space<vmem>>, vector<1x128xf32>
    %c42_694 = arith.constant 42 : index
    %c0_695 = arith.constant 0 : index
    %948 = vector.load %arg2[%c42_694, %c0_695] : memref<43x128xf32, #tpu.memory_space<vmem>>, vector<1x128xf32>
    %cst_696 = arith.constant dense<0.000000e+00> : vector<128xf32>
    %949 = vector.multi_reduction <add>, %946, %cst_696 [0] : vector<16x128xf32> to vector<128xf32>
    %950 = vector.shape_cast %949 : vector<128xf32> to vector<1x128xf32>
    %cst_697 = arith.constant 0.000000e+00 : f32
    %951 = vector.broadcast %cst_697 : f32 to vector<1x128xf32>
    %952 = arith.mulf %950, %947 : vector<1x128xf32>
    %cst_698 = arith.constant dense<0.000000e+00> : vector<1xf32>
    %953 = vector.multi_reduction <add>, %952, %cst_698 [1] : vector<1x128xf32> to vector<1xf32>
    %954 = vector.shape_cast %953 : vector<1xf32> to vector<1x1xf32>
    %cst_699 = arith.constant 9.765625E-4 : f32
    %955 = vector.broadcast %cst_699 : f32 to vector<1x1xf32>
    %956 = arith.mulf %954, %955 : vector<1x1xf32>
    %957 = vector.broadcast %956 : vector<1x1xf32> to vector<1x128xf32>
    %958 = arith.mulf %957, %947 : vector<1x128xf32>
    %959 = arith.addf %951, %958 : vector<1x128xf32>
    %960 = arith.mulf %950, %948 : vector<1x128xf32>
    %cst_700 = arith.constant dense<0.000000e+00> : vector<1xf32>
    %961 = vector.multi_reduction <add>, %960, %cst_700 [1] : vector<1x128xf32> to vector<1xf32>
    %962 = vector.shape_cast %961 : vector<1xf32> to vector<1x1xf32>
    %cst_701 = arith.constant 9.765625E-4 : f32
    %963 = vector.broadcast %cst_701 : f32 to vector<1x1xf32>
    %964 = arith.mulf %962, %963 : vector<1x1xf32>
    %965 = vector.broadcast %964 : vector<1x1xf32> to vector<1x128xf32>
    %966 = arith.mulf %965, %948 : vector<1x128xf32>
    %967 = arith.addf %959, %966 : vector<1x128xf32>
    %968 = vector.broadcast %967 : vector<1x128xf32> to vector<16x128xf32>
    %969 = arith.subf %946, %968 : vector<16x128xf32>
    %970 = arith.mulf %969, %969 : vector<16x128xf32>
    %cst_702 = arith.constant dense<0.000000e+00> : vector<128xf32>
    %971 = vector.multi_reduction <add>, %970, %cst_702 [0] : vector<16x128xf32> to vector<128xf32>
    %972 = vector.shape_cast %971 : vector<128xf32> to vector<1x128xf32>
    %cst_703 = arith.constant 0.000000e+00 : f32
    %973 = vector.broadcast %cst_703 : f32 to vector<1x128xf32>
    %974 = arith.mulf %972, %947 : vector<1x128xf32>
    %cst_704 = arith.constant dense<0.000000e+00> : vector<1xf32>
    %975 = vector.multi_reduction <add>, %974, %cst_704 [1] : vector<1x128xf32> to vector<1xf32>
    %976 = vector.shape_cast %975 : vector<1xf32> to vector<1x1xf32>
    %cst_705 = arith.constant 9.765625E-4 : f32
    %977 = vector.broadcast %cst_705 : f32 to vector<1x1xf32>
    %978 = arith.mulf %976, %977 : vector<1x1xf32>
    %979 = vector.broadcast %978 : vector<1x1xf32> to vector<1x128xf32>
    %980 = arith.mulf %979, %947 : vector<1x128xf32>
    %981 = arith.addf %973, %980 : vector<1x128xf32>
    %982 = arith.mulf %972, %948 : vector<1x128xf32>
    %cst_706 = arith.constant dense<0.000000e+00> : vector<1xf32>
    %983 = vector.multi_reduction <add>, %982, %cst_706 [1] : vector<1x128xf32> to vector<1xf32>
    %984 = vector.shape_cast %983 : vector<1xf32> to vector<1x1xf32>
    %cst_707 = arith.constant 9.765625E-4 : f32
    %985 = vector.broadcast %cst_707 : f32 to vector<1x1xf32>
    %986 = arith.mulf %984, %985 : vector<1x1xf32>
    %987 = vector.broadcast %986 : vector<1x1xf32> to vector<1x128xf32>
    %988 = arith.mulf %987, %948 : vector<1x128xf32>
    %989 = arith.addf %981, %988 : vector<1x128xf32>
    %c37_708 = arith.constant 37 : index
    %c0_709 = arith.constant 0 : index
    %990 = vector.load %arg2[%c37_708, %c0_709] : memref<43x128xf32, #tpu.memory_space<vmem>>, vector<1x128xf32>
    %c38_710 = arith.constant 38 : index
    %c0_711 = arith.constant 0 : index
    %991 = vector.load %arg2[%c38_710, %c0_711] : memref<43x128xf32, #tpu.memory_space<vmem>>, vector<1x128xf32>
    %cst_712 = arith.constant 9.99999974E-6 : f32
    %992 = vector.broadcast %cst_712 : f32 to vector<1x128xf32>
    %993 = arith.addf %989, %992 : vector<1x128xf32>
    %994 = math.rsqrt %993 : vector<1x128xf32>
    %995 = vector.broadcast %994 : vector<1x128xf32> to vector<16x128xf32>
    %996 = arith.mulf %969, %995 : vector<16x128xf32>
    %997 = vector.broadcast %990 : vector<1x128xf32> to vector<16x128xf32>
    %998 = arith.mulf %996, %997 : vector<16x128xf32>
    %999 = vector.broadcast %991 : vector<1x128xf32> to vector<16x128xf32>
    %1000 = arith.addf %998, %999 : vector<16x128xf32>
    %cst_713 = arith.constant 0.000000e+00 : f32
    %1001 = vector.broadcast %cst_713 : f32 to vector<16x128xf32>
    %1002 = arith.maximumf %1000, %1001 : vector<16x128xf32>
    %c48_714 = arith.constant 48 : index
    %c0_715 = arith.constant 0 : index
    %1003 = vector.load %arg8[%c48_714, %c0_715] : memref<64x128xf32, #tpu.memory_space<vmem>>, vector<16x128xf32>
    tpu.vector_store %arg8[%c48_714, %c0_715], %1002 {strides = array<i32>} : memref<64x128xf32, #tpu.memory_space<vmem>>, vector<16x128xf32>,
    %c0_716 = arith.constant 0 : index
    %c0_717 = arith.constant 0 : index
    %1004 = vector.load %arg8[%c0_716, %c0_717] : memref<64x128xf32, #tpu.memory_space<vmem>>, vector<64x128xf32>
    %1005 = arith.truncf %1004 : vector<64x128xf32> to vector<64x128xbf16>
    %c0_718 = arith.constant 0 : index
    %c0_719 = arith.constant 0 : index
    %1006 = vector.load %arg3[%c0_718, %c0_719] : memref<128x128xbf16, #tpu.memory_space<vmem>>, vector<128x128xbf16>
    %cst_720 = arith.constant dense<0.000000e+00> : vector<64x128xf32>
    %1007 = tpu.matmul %1005, %1006, %cst_720 {dimension_numbers = #tpu.dot_dimension_numbers<[1], [0], [0], [1], [0, 0, 1, 1], [], []>} : vector<64x128xbf16>, vector<128x128xbf16>, vector<64x128xf32> -> vector<64x128xf32>
    %1008 = arith.addf %1004, %1007 : vector<64x128xf32>
    %c36 = arith.constant 36 : index
    %c0_721 = arith.constant 0 : index
    %1009 = vector.load %arg2[%c36, %c0_721] : memref<43x128xf32, #tpu.memory_space<vmem>>, vector<1x128xf32>
    %1010 = vector.broadcast %1009 : vector<1x128xf32> to vector<64x128xf32>
    %1011 = arith.addf %1008, %1010 : vector<64x128xf32>
    %1012 = vector.extract_strided_slice %1011 {offsets = [0, 0], sizes = [16, 128], strides = [1, 1]} : vector<64x128xf32> to vector<16x128xf32>
    %c41_722 = arith.constant 41 : index
    %c0_723 = arith.constant 0 : index
    %1013 = vector.load %arg2[%c41_722, %c0_723] : memref<43x128xf32, #tpu.memory_space<vmem>>, vector<1x128xf32>
    %c42_724 = arith.constant 42 : index
    %c0_725 = arith.constant 0 : index
    %1014 = vector.load %arg2[%c42_724, %c0_725] : memref<43x128xf32, #tpu.memory_space<vmem>>, vector<1x128xf32>
    %cst_726 = arith.constant dense<0.000000e+00> : vector<128xf32>
    %1015 = vector.multi_reduction <add>, %1012, %cst_726 [0] : vector<16x128xf32> to vector<128xf32>
    %1016 = vector.shape_cast %1015 : vector<128xf32> to vector<1x128xf32>
    %cst_727 = arith.constant 0.000000e+00 : f32
    %1017 = vector.broadcast %cst_727 : f32 to vector<1x128xf32>
    %1018 = arith.mulf %1016, %1013 : vector<1x128xf32>
    %cst_728 = arith.constant dense<0.000000e+00> : vector<1xf32>
    %1019 = vector.multi_reduction <add>, %1018, %cst_728 [1] : vector<1x128xf32> to vector<1xf32>
    %1020 = vector.shape_cast %1019 : vector<1xf32> to vector<1x1xf32>
    %cst_729 = arith.constant 9.765625E-4 : f32
    %1021 = vector.broadcast %cst_729 : f32 to vector<1x1xf32>
    %1022 = arith.mulf %1020, %1021 : vector<1x1xf32>
    %1023 = vector.broadcast %1022 : vector<1x1xf32> to vector<1x128xf32>
    %1024 = arith.mulf %1023, %1013 : vector<1x128xf32>
    %1025 = arith.addf %1017, %1024 : vector<1x128xf32>
    %1026 = arith.mulf %1016, %1014 : vector<1x128xf32>
    %cst_730 = arith.constant dense<0.000000e+00> : vector<1xf32>
    %1027 = vector.multi_reduction <add>, %1026, %cst_730 [1] : vector<1x128xf32> to vector<1xf32>
    %1028 = vector.shape_cast %1027 : vector<1xf32> to vector<1x1xf32>
    %cst_731 = arith.constant 9.765625E-4 : f32
    %1029 = vector.broadcast %cst_731 : f32 to vector<1x1xf32>
    %1030 = arith.mulf %1028, %1029 : vector<1x1xf32>
    %1031 = vector.broadcast %1030 : vector<1x1xf32> to vector<1x128xf32>
    %1032 = arith.mulf %1031, %1014 : vector<1x128xf32>
    %1033 = arith.addf %1025, %1032 : vector<1x128xf32>
    %1034 = vector.broadcast %1033 : vector<1x128xf32> to vector<16x128xf32>
    %1035 = arith.subf %1012, %1034 : vector<16x128xf32>
    %1036 = arith.mulf %1035, %1035 : vector<16x128xf32>
    %cst_732 = arith.constant dense<0.000000e+00> : vector<128xf32>
    %1037 = vector.multi_reduction <add>, %1036, %cst_732 [0] : vector<16x128xf32> to vector<128xf32>
    %1038 = vector.shape_cast %1037 : vector<128xf32> to vector<1x128xf32>
    %cst_733 = arith.constant 0.000000e+00 : f32
    %1039 = vector.broadcast %cst_733 : f32 to vector<1x128xf32>
    %1040 = arith.mulf %1038, %1013 : vector<1x128xf32>
    %cst_734 = arith.constant dense<0.000000e+00> : vector<1xf32>
    %1041 = vector.multi_reduction <add>, %1040, %cst_734 [1] : vector<1x128xf32> to vector<1xf32>
    %1042 = vector.shape_cast %1041 : vector<1xf32> to vector<1x1xf32>
    %cst_735 = arith.constant 9.765625E-4 : f32
    %1043 = vector.broadcast %cst_735 : f32 to vector<1x1xf32>
    %1044 = arith.mulf %1042, %1043 : vector<1x1xf32>
    %1045 = vector.broadcast %1044 : vector<1x1xf32> to vector<1x128xf32>
    %1046 = arith.mulf %1045, %1013 : vector<1x128xf32>
    %1047 = arith.addf %1039, %1046 : vector<1x128xf32>
    %1048 = arith.mulf %1038, %1014 : vector<1x128xf32>
    %cst_736 = arith.constant dense<0.000000e+00> : vector<1xf32>
    %1049 = vector.multi_reduction <add>, %1048, %cst_736 [1] : vector<1x128xf32> to vector<1xf32>
    %1050 = vector.shape_cast %1049 : vector<1xf32> to vector<1x1xf32>
    %cst_737 = arith.constant 9.765625E-4 : f32
    %1051 = vector.broadcast %cst_737 : f32 to vector<1x1xf32>
    %1052 = arith.mulf %1050, %1051 : vector<1x1xf32>
    %1053 = vector.broadcast %1052 : vector<1x1xf32> to vector<1x128xf32>
    %1054 = arith.mulf %1053, %1014 : vector<1x128xf32>
    %1055 = arith.addf %1047, %1054 : vector<1x128xf32>
    %c39 = arith.constant 39 : index
    %c0_738 = arith.constant 0 : index
    %1056 = vector.load %arg2[%c39, %c0_738] : memref<43x128xf32, #tpu.memory_space<vmem>>, vector<1x128xf32>
    %c40 = arith.constant 40 : index
    %c0_739 = arith.constant 0 : index
    %1057 = vector.load %arg2[%c40, %c0_739] : memref<43x128xf32, #tpu.memory_space<vmem>>, vector<1x128xf32>
    %cst_740 = arith.constant 9.99999974E-6 : f32
    %1058 = vector.broadcast %cst_740 : f32 to vector<1x128xf32>
    %1059 = arith.addf %1055, %1058 : vector<1x128xf32>
    %1060 = math.rsqrt %1059 : vector<1x128xf32>
    %1061 = vector.broadcast %1060 : vector<1x128xf32> to vector<16x128xf32>
    %1062 = arith.mulf %1035, %1061 : vector<16x128xf32>
    %1063 = vector.broadcast %1056 : vector<1x128xf32> to vector<16x128xf32>
    %1064 = arith.mulf %1062, %1063 : vector<16x128xf32>
    %1065 = vector.broadcast %1057 : vector<1x128xf32> to vector<16x128xf32>
    %1066 = arith.addf %1064, %1065 : vector<16x128xf32>
    %cst_741 = arith.constant 0.000000e+00 : f32
    %1067 = vector.broadcast %cst_741 : f32 to vector<16x128xf32>
    %1068 = arith.maximumf %1066, %1067 : vector<16x128xf32>
    %c0_742 = arith.constant 0 : index
    %c0_743 = arith.constant 0 : index
    %1069 = vector.load %arg8[%c0_742, %c0_743] : memref<64x128xf32, #tpu.memory_space<vmem>>, vector<16x128xf32>
    tpu.vector_store %arg8[%c0_742, %c0_743], %1068 {strides = array<i32>} : memref<64x128xf32, #tpu.memory_space<vmem>>, vector<16x128xf32>,
    %1070 = vector.extract_strided_slice %1011 {offsets = [16, 0], sizes = [16, 128], strides = [1, 1]} : vector<64x128xf32> to vector<16x128xf32>
    %c41_744 = arith.constant 41 : index
    %c0_745 = arith.constant 0 : index
    %1071 = vector.load %arg2[%c41_744, %c0_745] : memref<43x128xf32, #tpu.memory_space<vmem>>, vector<1x128xf32>
    %c42_746 = arith.constant 42 : index
    %c0_747 = arith.constant 0 : index
    %1072 = vector.load %arg2[%c42_746, %c0_747] : memref<43x128xf32, #tpu.memory_space<vmem>>, vector<1x128xf32>
    %cst_748 = arith.constant dense<0.000000e+00> : vector<128xf32>
    %1073 = vector.multi_reduction <add>, %1070, %cst_748 [0] : vector<16x128xf32> to vector<128xf32>
    %1074 = vector.shape_cast %1073 : vector<128xf32> to vector<1x128xf32>
    %cst_749 = arith.constant 0.000000e+00 : f32
    %1075 = vector.broadcast %cst_749 : f32 to vector<1x128xf32>
    %1076 = arith.mulf %1074, %1071 : vector<1x128xf32>
    %cst_750 = arith.constant dense<0.000000e+00> : vector<1xf32>
    %1077 = vector.multi_reduction <add>, %1076, %cst_750 [1] : vector<1x128xf32> to vector<1xf32>
    %1078 = vector.shape_cast %1077 : vector<1xf32> to vector<1x1xf32>
    %cst_751 = arith.constant 9.765625E-4 : f32
    %1079 = vector.broadcast %cst_751 : f32 to vector<1x1xf32>
    %1080 = arith.mulf %1078, %1079 : vector<1x1xf32>
    %1081 = vector.broadcast %1080 : vector<1x1xf32> to vector<1x128xf32>
    %1082 = arith.mulf %1081, %1071 : vector<1x128xf32>
    %1083 = arith.addf %1075, %1082 : vector<1x128xf32>
    %1084 = arith.mulf %1074, %1072 : vector<1x128xf32>
    %cst_752 = arith.constant dense<0.000000e+00> : vector<1xf32>
    %1085 = vector.multi_reduction <add>, %1084, %cst_752 [1] : vector<1x128xf32> to vector<1xf32>
    %1086 = vector.shape_cast %1085 : vector<1xf32> to vector<1x1xf32>
    %cst_753 = arith.constant 9.765625E-4 : f32
    %1087 = vector.broadcast %cst_753 : f32 to vector<1x1xf32>
    %1088 = arith.mulf %1086, %1087 : vector<1x1xf32>
    %1089 = vector.broadcast %1088 : vector<1x1xf32> to vector<1x128xf32>
    %1090 = arith.mulf %1089, %1072 : vector<1x128xf32>
    %1091 = arith.addf %1083, %1090 : vector<1x128xf32>
    %1092 = vector.broadcast %1091 : vector<1x128xf32> to vector<16x128xf32>
    %1093 = arith.subf %1070, %1092 : vector<16x128xf32>
    %1094 = arith.mulf %1093, %1093 : vector<16x128xf32>
    %cst_754 = arith.constant dense<0.000000e+00> : vector<128xf32>
    %1095 = vector.multi_reduction <add>, %1094, %cst_754 [0] : vector<16x128xf32> to vector<128xf32>
    %1096 = vector.shape_cast %1095 : vector<128xf32> to vector<1x128xf32>
    %cst_755 = arith.constant 0.000000e+00 : f32
    %1097 = vector.broadcast %cst_755 : f32 to vector<1x128xf32>
    %1098 = arith.mulf %1096, %1071 : vector<1x128xf32>
    %cst_756 = arith.constant dense<0.000000e+00> : vector<1xf32>
    %1099 = vector.multi_reduction <add>, %1098, %cst_756 [1] : vector<1x128xf32> to vector<1xf32>
    %1100 = vector.shape_cast %1099 : vector<1xf32> to vector<1x1xf32>
    %cst_757 = arith.constant 9.765625E-4 : f32
    %1101 = vector.broadcast %cst_757 : f32 to vector<1x1xf32>
    %1102 = arith.mulf %1100, %1101 : vector<1x1xf32>
    %1103 = vector.broadcast %1102 : vector<1x1xf32> to vector<1x128xf32>
    %1104 = arith.mulf %1103, %1071 : vector<1x128xf32>
    %1105 = arith.addf %1097, %1104 : vector<1x128xf32>
    %1106 = arith.mulf %1096, %1072 : vector<1x128xf32>
    %cst_758 = arith.constant dense<0.000000e+00> : vector<1xf32>
    %1107 = vector.multi_reduction <add>, %1106, %cst_758 [1] : vector<1x128xf32> to vector<1xf32>
    %1108 = vector.shape_cast %1107 : vector<1xf32> to vector<1x1xf32>
    %cst_759 = arith.constant 9.765625E-4 : f32
    %1109 = vector.broadcast %cst_759 : f32 to vector<1x1xf32>
    %1110 = arith.mulf %1108, %1109 : vector<1x1xf32>
    %1111 = vector.broadcast %1110 : vector<1x1xf32> to vector<1x128xf32>
    %1112 = arith.mulf %1111, %1072 : vector<1x128xf32>
    %1113 = arith.addf %1105, %1112 : vector<1x128xf32>
    %c39_760 = arith.constant 39 : index
    %c0_761 = arith.constant 0 : index
    %1114 = vector.load %arg2[%c39_760, %c0_761] : memref<43x128xf32, #tpu.memory_space<vmem>>, vector<1x128xf32>
    %c40_762 = arith.constant 40 : index
    %c0_763 = arith.constant 0 : index
    %1115 = vector.load %arg2[%c40_762, %c0_763] : memref<43x128xf32, #tpu.memory_space<vmem>>, vector<1x128xf32>
    %cst_764 = arith.constant 9.99999974E-6 : f32
    %1116 = vector.broadcast %cst_764 : f32 to vector<1x128xf32>
    %1117 = arith.addf %1113, %1116 : vector<1x128xf32>
    %1118 = math.rsqrt %1117 : vector<1x128xf32>
    %1119 = vector.broadcast %1118 : vector<1x128xf32> to vector<16x128xf32>
    %1120 = arith.mulf %1093, %1119 : vector<16x128xf32>
    %1121 = vector.broadcast %1114 : vector<1x128xf32> to vector<16x128xf32>
    %1122 = arith.mulf %1120, %1121 : vector<16x128xf32>
    %1123 = vector.broadcast %1115 : vector<1x128xf32> to vector<16x128xf32>
    %1124 = arith.addf %1122, %1123 : vector<16x128xf32>
    %cst_765 = arith.constant 0.000000e+00 : f32
    %1125 = vector.broadcast %cst_765 : f32 to vector<16x128xf32>
    %1126 = arith.maximumf %1124, %1125 : vector<16x128xf32>
    %c16_766 = arith.constant 16 : index
    %c0_767 = arith.constant 0 : index
    %1127 = vector.load %arg8[%c16_766, %c0_767] : memref<64x128xf32, #tpu.memory_space<vmem>>, vector<16x128xf32>
    tpu.vector_store %arg8[%c16_766, %c0_767], %1126 {strides = array<i32>} : memref<64x128xf32, #tpu.memory_space<vmem>>, vector<16x128xf32>,
    %1128 = vector.extract_strided_slice %1011 {offsets = [32, 0], sizes = [16, 128], strides = [1, 1]} : vector<64x128xf32> to vector<16x128xf32>
    %c41_768 = arith.constant 41 : index
    %c0_769 = arith.constant 0 : index
    %1129 = vector.load %arg2[%c41_768, %c0_769] : memref<43x128xf32, #tpu.memory_space<vmem>>, vector<1x128xf32>
    %c42_770 = arith.constant 42 : index
    %c0_771 = arith.constant 0 : index
    %1130 = vector.load %arg2[%c42_770, %c0_771] : memref<43x128xf32, #tpu.memory_space<vmem>>, vector<1x128xf32>
    %cst_772 = arith.constant dense<0.000000e+00> : vector<128xf32>
    %1131 = vector.multi_reduction <add>, %1128, %cst_772 [0] : vector<16x128xf32> to vector<128xf32>
    %1132 = vector.shape_cast %1131 : vector<128xf32> to vector<1x128xf32>
    %cst_773 = arith.constant 0.000000e+00 : f32
    %1133 = vector.broadcast %cst_773 : f32 to vector<1x128xf32>
    %1134 = arith.mulf %1132, %1129 : vector<1x128xf32>
    %cst_774 = arith.constant dense<0.000000e+00> : vector<1xf32>
    %1135 = vector.multi_reduction <add>, %1134, %cst_774 [1] : vector<1x128xf32> to vector<1xf32>
    %1136 = vector.shape_cast %1135 : vector<1xf32> to vector<1x1xf32>
    %cst_775 = arith.constant 9.765625E-4 : f32
    %1137 = vector.broadcast %cst_775 : f32 to vector<1x1xf32>
    %1138 = arith.mulf %1136, %1137 : vector<1x1xf32>
    %1139 = vector.broadcast %1138 : vector<1x1xf32> to vector<1x128xf32>
    %1140 = arith.mulf %1139, %1129 : vector<1x128xf32>
    %1141 = arith.addf %1133, %1140 : vector<1x128xf32>
    %1142 = arith.mulf %1132, %1130 : vector<1x128xf32>
    %cst_776 = arith.constant dense<0.000000e+00> : vector<1xf32>
    %1143 = vector.multi_reduction <add>, %1142, %cst_776 [1] : vector<1x128xf32> to vector<1xf32>
    %1144 = vector.shape_cast %1143 : vector<1xf32> to vector<1x1xf32>
    %cst_777 = arith.constant 9.765625E-4 : f32
    %1145 = vector.broadcast %cst_777 : f32 to vector<1x1xf32>
    %1146 = arith.mulf %1144, %1145 : vector<1x1xf32>
    %1147 = vector.broadcast %1146 : vector<1x1xf32> to vector<1x128xf32>
    %1148 = arith.mulf %1147, %1130 : vector<1x128xf32>
    %1149 = arith.addf %1141, %1148 : vector<1x128xf32>
    %1150 = vector.broadcast %1149 : vector<1x128xf32> to vector<16x128xf32>
    %1151 = arith.subf %1128, %1150 : vector<16x128xf32>
    %1152 = arith.mulf %1151, %1151 : vector<16x128xf32>
    %cst_778 = arith.constant dense<0.000000e+00> : vector<128xf32>
    %1153 = vector.multi_reduction <add>, %1152, %cst_778 [0] : vector<16x128xf32> to vector<128xf32>
    %1154 = vector.shape_cast %1153 : vector<128xf32> to vector<1x128xf32>
    %cst_779 = arith.constant 0.000000e+00 : f32
    %1155 = vector.broadcast %cst_779 : f32 to vector<1x128xf32>
    %1156 = arith.mulf %1154, %1129 : vector<1x128xf32>
    %cst_780 = arith.constant dense<0.000000e+00> : vector<1xf32>
    %1157 = vector.multi_reduction <add>, %1156, %cst_780 [1] : vector<1x128xf32> to vector<1xf32>
    %1158 = vector.shape_cast %1157 : vector<1xf32> to vector<1x1xf32>
    %cst_781 = arith.constant 9.765625E-4 : f32
    %1159 = vector.broadcast %cst_781 : f32 to vector<1x1xf32>
    %1160 = arith.mulf %1158, %1159 : vector<1x1xf32>
    %1161 = vector.broadcast %1160 : vector<1x1xf32> to vector<1x128xf32>
    %1162 = arith.mulf %1161, %1129 : vector<1x128xf32>
    %1163 = arith.addf %1155, %1162 : vector<1x128xf32>
    %1164 = arith.mulf %1154, %1130 : vector<1x128xf32>
    %cst_782 = arith.constant dense<0.000000e+00> : vector<1xf32>
    %1165 = vector.multi_reduction <add>, %1164, %cst_782 [1] : vector<1x128xf32> to vector<1xf32>
    %1166 = vector.shape_cast %1165 : vector<1xf32> to vector<1x1xf32>
    %cst_783 = arith.constant 9.765625E-4 : f32
    %1167 = vector.broadcast %cst_783 : f32 to vector<1x1xf32>
    %1168 = arith.mulf %1166, %1167 : vector<1x1xf32>
    %1169 = vector.broadcast %1168 : vector<1x1xf32> to vector<1x128xf32>
    %1170 = arith.mulf %1169, %1130 : vector<1x128xf32>
    %1171 = arith.addf %1163, %1170 : vector<1x128xf32>
    %c39_784 = arith.constant 39 : index
    %c0_785 = arith.constant 0 : index
    %1172 = vector.load %arg2[%c39_784, %c0_785] : memref<43x128xf32, #tpu.memory_space<vmem>>, vector<1x128xf32>
    %c40_786 = arith.constant 40 : index
    %c0_787 = arith.constant 0 : index
    %1173 = vector.load %arg2[%c40_786, %c0_787] : memref<43x128xf32, #tpu.memory_space<vmem>>, vector<1x128xf32>
    %cst_788 = arith.constant 9.99999974E-6 : f32
    %1174 = vector.broadcast %cst_788 : f32 to vector<1x128xf32>
    %1175 = arith.addf %1171, %1174 : vector<1x128xf32>
    %1176 = math.rsqrt %1175 : vector<1x128xf32>
    %1177 = vector.broadcast %1176 : vector<1x128xf32> to vector<16x128xf32>
    %1178 = arith.mulf %1151, %1177 : vector<16x128xf32>
    %1179 = vector.broadcast %1172 : vector<1x128xf32> to vector<16x128xf32>
    %1180 = arith.mulf %1178, %1179 : vector<16x128xf32>
    %1181 = vector.broadcast %1173 : vector<1x128xf32> to vector<16x128xf32>
    %1182 = arith.addf %1180, %1181 : vector<16x128xf32>
    %cst_789 = arith.constant 0.000000e+00 : f32
    %1183 = vector.broadcast %cst_789 : f32 to vector<16x128xf32>
    %1184 = arith.maximumf %1182, %1183 : vector<16x128xf32>
    %c32_790 = arith.constant 32 : index
    %c0_791 = arith.constant 0 : index
    %1185 = vector.load %arg8[%c32_790, %c0_791] : memref<64x128xf32, #tpu.memory_space<vmem>>, vector<16x128xf32>
    tpu.vector_store %arg8[%c32_790, %c0_791], %1184 {strides = array<i32>} : memref<64x128xf32, #tpu.memory_space<vmem>>, vector<16x128xf32>,
    %1186 = vector.extract_strided_slice %1011 {offsets = [48, 0], sizes = [16, 128], strides = [1, 1]} : vector<64x128xf32> to vector<16x128xf32>
    %c41_792 = arith.constant 41 : index
    %c0_793 = arith.constant 0 : index
    %1187 = vector.load %arg2[%c41_792, %c0_793] : memref<43x128xf32, #tpu.memory_space<vmem>>, vector<1x128xf32>
    %c42_794 = arith.constant 42 : index
    %c0_795 = arith.constant 0 : index
    %1188 = vector.load %arg2[%c42_794, %c0_795] : memref<43x128xf32, #tpu.memory_space<vmem>>, vector<1x128xf32>
    %cst_796 = arith.constant dense<0.000000e+00> : vector<128xf32>
    %1189 = vector.multi_reduction <add>, %1186, %cst_796 [0] : vector<16x128xf32> to vector<128xf32>
    %1190 = vector.shape_cast %1189 : vector<128xf32> to vector<1x128xf32>
    %cst_797 = arith.constant 0.000000e+00 : f32
    %1191 = vector.broadcast %cst_797 : f32 to vector<1x128xf32>
    %1192 = arith.mulf %1190, %1187 : vector<1x128xf32>
    %cst_798 = arith.constant dense<0.000000e+00> : vector<1xf32>
    %1193 = vector.multi_reduction <add>, %1192, %cst_798 [1] : vector<1x128xf32> to vector<1xf32>
    %1194 = vector.shape_cast %1193 : vector<1xf32> to vector<1x1xf32>
    %cst_799 = arith.constant 9.765625E-4 : f32
    %1195 = vector.broadcast %cst_799 : f32 to vector<1x1xf32>
    %1196 = arith.mulf %1194, %1195 : vector<1x1xf32>
    %1197 = vector.broadcast %1196 : vector<1x1xf32> to vector<1x128xf32>
    %1198 = arith.mulf %1197, %1187 : vector<1x128xf32>
    %1199 = arith.addf %1191, %1198 : vector<1x128xf32>
    %1200 = arith.mulf %1190, %1188 : vector<1x128xf32>
    %cst_800 = arith.constant dense<0.000000e+00> : vector<1xf32>
    %1201 = vector.multi_reduction <add>, %1200, %cst_800 [1] : vector<1x128xf32> to vector<1xf32>
    %1202 = vector.shape_cast %1201 : vector<1xf32> to vector<1x1xf32>
    %cst_801 = arith.constant 9.765625E-4 : f32
    %1203 = vector.broadcast %cst_801 : f32 to vector<1x1xf32>
    %1204 = arith.mulf %1202, %1203 : vector<1x1xf32>
    %1205 = vector.broadcast %1204 : vector<1x1xf32> to vector<1x128xf32>
    %1206 = arith.mulf %1205, %1188 : vector<1x128xf32>
    %1207 = arith.addf %1199, %1206 : vector<1x128xf32>
    %1208 = vector.broadcast %1207 : vector<1x128xf32> to vector<16x128xf32>
    %1209 = arith.subf %1186, %1208 : vector<16x128xf32>
    %1210 = arith.mulf %1209, %1209 : vector<16x128xf32>
    %cst_802 = arith.constant dense<0.000000e+00> : vector<128xf32>
    %1211 = vector.multi_reduction <add>, %1210, %cst_802 [0] : vector<16x128xf32> to vector<128xf32>
    %1212 = vector.shape_cast %1211 : vector<128xf32> to vector<1x128xf32>
    %cst_803 = arith.constant 0.000000e+00 : f32
    %1213 = vector.broadcast %cst_803 : f32 to vector<1x128xf32>
    %1214 = arith.mulf %1212, %1187 : vector<1x128xf32>
    %cst_804 = arith.constant dense<0.000000e+00> : vector<1xf32>
    %1215 = vector.multi_reduction <add>, %1214, %cst_804 [1] : vector<1x128xf32> to vector<1xf32>
    %1216 = vector.shape_cast %1215 : vector<1xf32> to vector<1x1xf32>
    %cst_805 = arith.constant 9.765625E-4 : f32
    %1217 = vector.broadcast %cst_805 : f32 to vector<1x1xf32>
    %1218 = arith.mulf %1216, %1217 : vector<1x1xf32>
    %1219 = vector.broadcast %1218 : vector<1x1xf32> to vector<1x128xf32>
    %1220 = arith.mulf %1219, %1187 : vector<1x128xf32>
    %1221 = arith.addf %1213, %1220 : vector<1x128xf32>
    %1222 = arith.mulf %1212, %1188 : vector<1x128xf32>
    %cst_806 = arith.constant dense<0.000000e+00> : vector<1xf32>
    %1223 = vector.multi_reduction <add>, %1222, %cst_806 [1] : vector<1x128xf32> to vector<1xf32>
    %1224 = vector.shape_cast %1223 : vector<1xf32> to vector<1x1xf32>
    %cst_807 = arith.constant 9.765625E-4 : f32
    %1225 = vector.broadcast %cst_807 : f32 to vector<1x1xf32>
    %1226 = arith.mulf %1224, %1225 : vector<1x1xf32>
    %1227 = vector.broadcast %1226 : vector<1x1xf32> to vector<1x128xf32>
    %1228 = arith.mulf %1227, %1188 : vector<1x128xf32>
    %1229 = arith.addf %1221, %1228 : vector<1x128xf32>
    %c39_808 = arith.constant 39 : index
    %c0_809 = arith.constant 0 : index
    %1230 = vector.load %arg2[%c39_808, %c0_809] : memref<43x128xf32, #tpu.memory_space<vmem>>, vector<1x128xf32>
    %c40_810 = arith.constant 40 : index
    %c0_811 = arith.constant 0 : index
    %1231 = vector.load %arg2[%c40_810, %c0_811] : memref<43x128xf32, #tpu.memory_space<vmem>>, vector<1x128xf32>
    %cst_812 = arith.constant 9.99999974E-6 : f32
    %1232 = vector.broadcast %cst_812 : f32 to vector<1x128xf32>
    %1233 = arith.addf %1229, %1232 : vector<1x128xf32>
    %1234 = math.rsqrt %1233 : vector<1x128xf32>
    %1235 = vector.broadcast %1234 : vector<1x128xf32> to vector<16x128xf32>
    %1236 = arith.mulf %1209, %1235 : vector<16x128xf32>
    %1237 = vector.broadcast %1230 : vector<1x128xf32> to vector<16x128xf32>
    %1238 = arith.mulf %1236, %1237 : vector<16x128xf32>
    %1239 = vector.broadcast %1231 : vector<1x128xf32> to vector<16x128xf32>
    %1240 = arith.addf %1238, %1239 : vector<16x128xf32>
    %cst_813 = arith.constant 0.000000e+00 : f32
    %1241 = vector.broadcast %cst_813 : f32 to vector<16x128xf32>
    %1242 = arith.maximumf %1240, %1241 : vector<16x128xf32>
    %c48_814 = arith.constant 48 : index
    %c0_815 = arith.constant 0 : index
    %1243 = vector.load %arg8[%c48_814, %c0_815] : memref<64x128xf32, #tpu.memory_space<vmem>>, vector<16x128xf32>
    tpu.vector_store %arg8[%c48_814, %c0_815], %1242 {strides = array<i32>} : memref<64x128xf32, #tpu.memory_space<vmem>>, vector<16x128xf32>,
    %c0_816 = arith.constant 0 : index
    %c0_817 = arith.constant 0 : index
    %1244 = vector.load %arg8[%c0_816, %c0_817] : memref<64x128xf32, #tpu.memory_space<vmem>>, vector<64x128xf32>
    %1245 = arith.truncf %1244 : vector<64x128xf32> to vector<64x128xbf16>
    %c0_818 = arith.constant 0 : index
    %c0_819 = arith.constant 0 : index
    %1246 = vector.load %arg4[%c0_818, %c0_819] : memref<128x128xbf16, #tpu.memory_space<vmem>>, vector<128x128xbf16>
    %cst_820 = arith.constant dense<0.000000e+00> : vector<64x128xf32>
    %1247 = tpu.matmul %1245, %1246, %cst_820 {dimension_numbers = #tpu.dot_dimension_numbers<[1], [0], [0], [1], [0, 0, 1, 1], [], []>} : vector<64x128xbf16>, vector<128x128xbf16>, vector<64x128xf32> -> vector<64x128xf32>
    %c0_821 = arith.constant 0 : index
    %c0_822 = arith.constant 0 : index
    %1248 = vector.load %arg5[%c0_821, %c0_822] : memref<5x128xf32, #tpu.memory_space<vmem>>, vector<1x128xf32>
    %1249 = vector.broadcast %1248 : vector<1x128xf32> to vector<64x128xf32>
    %1250 = arith.addf %1247, %1249 : vector<64x128xf32>
    %1251 = vector.extract_strided_slice %1250 {offsets = [0, 0], sizes = [16, 128], strides = [1, 1]} : vector<64x128xf32> to vector<16x128xf32>
    %c3_823 = arith.constant 3 : index
    %c0_824 = arith.constant 0 : index
    %1252 = vector.load %arg5[%c3_823, %c0_824] : memref<5x128xf32, #tpu.memory_space<vmem>>, vector<1x128xf32>
    %c4_825 = arith.constant 4 : index
    %c0_826 = arith.constant 0 : index
    %1253 = vector.load %arg5[%c4_825, %c0_826] : memref<5x128xf32, #tpu.memory_space<vmem>>, vector<1x128xf32>
    %cst_827 = arith.constant dense<0.000000e+00> : vector<128xf32>
    %1254 = vector.multi_reduction <add>, %1251, %cst_827 [0] : vector<16x128xf32> to vector<128xf32>
    %1255 = vector.shape_cast %1254 : vector<128xf32> to vector<1x128xf32>
    %cst_828 = arith.constant 0.000000e+00 : f32
    %1256 = vector.broadcast %cst_828 : f32 to vector<1x128xf32>
    %1257 = arith.mulf %1255, %1252 : vector<1x128xf32>
    %cst_829 = arith.constant dense<0.000000e+00> : vector<1xf32>
    %1258 = vector.multi_reduction <add>, %1257, %cst_829 [1] : vector<1x128xf32> to vector<1xf32>
    %1259 = vector.shape_cast %1258 : vector<1xf32> to vector<1x1xf32>
    %cst_830 = arith.constant 9.765625E-4 : f32
    %1260 = vector.broadcast %cst_830 : f32 to vector<1x1xf32>
    %1261 = arith.mulf %1259, %1260 : vector<1x1xf32>
    %1262 = vector.broadcast %1261 : vector<1x1xf32> to vector<1x128xf32>
    %1263 = arith.mulf %1262, %1252 : vector<1x128xf32>
    %1264 = arith.addf %1256, %1263 : vector<1x128xf32>
    %1265 = arith.mulf %1255, %1253 : vector<1x128xf32>
    %cst_831 = arith.constant dense<0.000000e+00> : vector<1xf32>
    %1266 = vector.multi_reduction <add>, %1265, %cst_831 [1] : vector<1x128xf32> to vector<1xf32>
    %1267 = vector.shape_cast %1266 : vector<1xf32> to vector<1x1xf32>
    %cst_832 = arith.constant 9.765625E-4 : f32
    %1268 = vector.broadcast %cst_832 : f32 to vector<1x1xf32>
    %1269 = arith.mulf %1267, %1268 : vector<1x1xf32>
    %1270 = vector.broadcast %1269 : vector<1x1xf32> to vector<1x128xf32>
    %1271 = arith.mulf %1270, %1253 : vector<1x128xf32>
    %1272 = arith.addf %1264, %1271 : vector<1x128xf32>
    %1273 = vector.broadcast %1272 : vector<1x128xf32> to vector<16x128xf32>
    %1274 = arith.subf %1251, %1273 : vector<16x128xf32>
    %1275 = arith.mulf %1274, %1274 : vector<16x128xf32>
    %cst_833 = arith.constant dense<0.000000e+00> : vector<128xf32>
    %1276 = vector.multi_reduction <add>, %1275, %cst_833 [0] : vector<16x128xf32> to vector<128xf32>
    %1277 = vector.shape_cast %1276 : vector<128xf32> to vector<1x128xf32>
    %cst_834 = arith.constant 0.000000e+00 : f32
    %1278 = vector.broadcast %cst_834 : f32 to vector<1x128xf32>
    %1279 = arith.mulf %1277, %1252 : vector<1x128xf32>
    %cst_835 = arith.constant dense<0.000000e+00> : vector<1xf32>
    %1280 = vector.multi_reduction <add>, %1279, %cst_835 [1] : vector<1x128xf32> to vector<1xf32>
    %1281 = vector.shape_cast %1280 : vector<1xf32> to vector<1x1xf32>
    %cst_836 = arith.constant 9.765625E-4 : f32
    %1282 = vector.broadcast %cst_836 : f32 to vector<1x1xf32>
    %1283 = arith.mulf %1281, %1282 : vector<1x1xf32>
    %1284 = vector.broadcast %1283 : vector<1x1xf32> to vector<1x128xf32>
    %1285 = arith.mulf %1284, %1252 : vector<1x128xf32>
    %1286 = arith.addf %1278, %1285 : vector<1x128xf32>
    %1287 = arith.mulf %1277, %1253 : vector<1x128xf32>
    %cst_837 = arith.constant dense<0.000000e+00> : vector<1xf32>
    %1288 = vector.multi_reduction <add>, %1287, %cst_837 [1] : vector<1x128xf32> to vector<1xf32>
    %1289 = vector.shape_cast %1288 : vector<1xf32> to vector<1x1xf32>
    %cst_838 = arith.constant 9.765625E-4 : f32
    %1290 = vector.broadcast %cst_838 : f32 to vector<1x1xf32>
    %1291 = arith.mulf %1289, %1290 : vector<1x1xf32>
    %1292 = vector.broadcast %1291 : vector<1x1xf32> to vector<1x128xf32>
    %1293 = arith.mulf %1292, %1253 : vector<1x128xf32>
    %1294 = arith.addf %1286, %1293 : vector<1x128xf32>
    %c1_839 = arith.constant 1 : index
    %c0_840 = arith.constant 0 : index
    %1295 = vector.load %arg5[%c1_839, %c0_840] : memref<5x128xf32, #tpu.memory_space<vmem>>, vector<1x128xf32>
    %c2_841 = arith.constant 2 : index
    %c0_842 = arith.constant 0 : index
    %1296 = vector.load %arg5[%c2_841, %c0_842] : memref<5x128xf32, #tpu.memory_space<vmem>>, vector<1x128xf32>
    %cst_843 = arith.constant 9.99999974E-6 : f32
    %1297 = vector.broadcast %cst_843 : f32 to vector<1x128xf32>
    %1298 = arith.addf %1294, %1297 : vector<1x128xf32>
    %1299 = math.rsqrt %1298 : vector<1x128xf32>
    %1300 = vector.broadcast %1299 : vector<1x128xf32> to vector<16x128xf32>
    %1301 = arith.mulf %1274, %1300 : vector<16x128xf32>
    %1302 = vector.broadcast %1295 : vector<1x128xf32> to vector<16x128xf32>
    %1303 = arith.mulf %1301, %1302 : vector<16x128xf32>
    %1304 = vector.broadcast %1296 : vector<1x128xf32> to vector<16x128xf32>
    %1305 = arith.addf %1303, %1304 : vector<16x128xf32>
    %c0_844 = arith.constant 0 : index
    %c0_845 = arith.constant 0 : index
    %1306 = vector.load %arg6[%c0_844, %c0_845] : memref<64x128xf32, #tpu.memory_space<vmem>>, vector<16x128xf32>
    tpu.vector_store %arg6[%c0_844, %c0_845], %1305 {strides = array<i32>} : memref<64x128xf32, #tpu.memory_space<vmem>>, vector<16x128xf32>,
    %1307 = vector.extract_strided_slice %1250 {offsets = [16, 0], sizes = [16, 128], strides = [1, 1]} : vector<64x128xf32> to vector<16x128xf32>
    %c3_846 = arith.constant 3 : index
    %c0_847 = arith.constant 0 : index
    %1308 = vector.load %arg5[%c3_846, %c0_847] : memref<5x128xf32, #tpu.memory_space<vmem>>, vector<1x128xf32>
    %c4_848 = arith.constant 4 : index
    %c0_849 = arith.constant 0 : index
    %1309 = vector.load %arg5[%c4_848, %c0_849] : memref<5x128xf32, #tpu.memory_space<vmem>>, vector<1x128xf32>
    %cst_850 = arith.constant dense<0.000000e+00> : vector<128xf32>
    %1310 = vector.multi_reduction <add>, %1307, %cst_850 [0] : vector<16x128xf32> to vector<128xf32>
    %1311 = vector.shape_cast %1310 : vector<128xf32> to vector<1x128xf32>
    %cst_851 = arith.constant 0.000000e+00 : f32
    %1312 = vector.broadcast %cst_851 : f32 to vector<1x128xf32>
    %1313 = arith.mulf %1311, %1308 : vector<1x128xf32>
    %cst_852 = arith.constant dense<0.000000e+00> : vector<1xf32>
    %1314 = vector.multi_reduction <add>, %1313, %cst_852 [1] : vector<1x128xf32> to vector<1xf32>
    %1315 = vector.shape_cast %1314 : vector<1xf32> to vector<1x1xf32>
    %cst_853 = arith.constant 9.765625E-4 : f32
    %1316 = vector.broadcast %cst_853 : f32 to vector<1x1xf32>
    %1317 = arith.mulf %1315, %1316 : vector<1x1xf32>
    %1318 = vector.broadcast %1317 : vector<1x1xf32> to vector<1x128xf32>
    %1319 = arith.mulf %1318, %1308 : vector<1x128xf32>
    %1320 = arith.addf %1312, %1319 : vector<1x128xf32>
    %1321 = arith.mulf %1311, %1309 : vector<1x128xf32>
    %cst_854 = arith.constant dense<0.000000e+00> : vector<1xf32>
    %1322 = vector.multi_reduction <add>, %1321, %cst_854 [1] : vector<1x128xf32> to vector<1xf32>
    %1323 = vector.shape_cast %1322 : vector<1xf32> to vector<1x1xf32>
    %cst_855 = arith.constant 9.765625E-4 : f32
    %1324 = vector.broadcast %cst_855 : f32 to vector<1x1xf32>
    %1325 = arith.mulf %1323, %1324 : vector<1x1xf32>
    %1326 = vector.broadcast %1325 : vector<1x1xf32> to vector<1x128xf32>
    %1327 = arith.mulf %1326, %1309 : vector<1x128xf32>
    %1328 = arith.addf %1320, %1327 : vector<1x128xf32>
    %1329 = vector.broadcast %1328 : vector<1x128xf32> to vector<16x128xf32>
    %1330 = arith.subf %1307, %1329 : vector<16x128xf32>
    %1331 = arith.mulf %1330, %1330 : vector<16x128xf32>
    %cst_856 = arith.constant dense<0.000000e+00> : vector<128xf32>
    %1332 = vector.multi_reduction <add>, %1331, %cst_856 [0] : vector<16x128xf32> to vector<128xf32>
    %1333 = vector.shape_cast %1332 : vector<128xf32> to vector<1x128xf32>
    %cst_857 = arith.constant 0.000000e+00 : f32
    %1334 = vector.broadcast %cst_857 : f32 to vector<1x128xf32>
    %1335 = arith.mulf %1333, %1308 : vector<1x128xf32>
    %cst_858 = arith.constant dense<0.000000e+00> : vector<1xf32>
    %1336 = vector.multi_reduction <add>, %1335, %cst_858 [1] : vector<1x128xf32> to vector<1xf32>
    %1337 = vector.shape_cast %1336 : vector<1xf32> to vector<1x1xf32>
    %cst_859 = arith.constant 9.765625E-4 : f32
    %1338 = vector.broadcast %cst_859 : f32 to vector<1x1xf32>
    %1339 = arith.mulf %1337, %1338 : vector<1x1xf32>
    %1340 = vector.broadcast %1339 : vector<1x1xf32> to vector<1x128xf32>
    %1341 = arith.mulf %1340, %1308 : vector<1x128xf32>
    %1342 = arith.addf %1334, %1341 : vector<1x128xf32>
    %1343 = arith.mulf %1333, %1309 : vector<1x128xf32>
    %cst_860 = arith.constant dense<0.000000e+00> : vector<1xf32>
    %1344 = vector.multi_reduction <add>, %1343, %cst_860 [1] : vector<1x128xf32> to vector<1xf32>
    %1345 = vector.shape_cast %1344 : vector<1xf32> to vector<1x1xf32>
    %cst_861 = arith.constant 9.765625E-4 : f32
    %1346 = vector.broadcast %cst_861 : f32 to vector<1x1xf32>
    %1347 = arith.mulf %1345, %1346 : vector<1x1xf32>
    %1348 = vector.broadcast %1347 : vector<1x1xf32> to vector<1x128xf32>
    %1349 = arith.mulf %1348, %1309 : vector<1x128xf32>
    %1350 = arith.addf %1342, %1349 : vector<1x128xf32>
    %c1_862 = arith.constant 1 : index
    %c0_863 = arith.constant 0 : index
    %1351 = vector.load %arg5[%c1_862, %c0_863] : memref<5x128xf32, #tpu.memory_space<vmem>>, vector<1x128xf32>
    %c2_864 = arith.constant 2 : index
    %c0_865 = arith.constant 0 : index
    %1352 = vector.load %arg5[%c2_864, %c0_865] : memref<5x128xf32, #tpu.memory_space<vmem>>, vector<1x128xf32>
    %cst_866 = arith.constant 9.99999974E-6 : f32
    %1353 = vector.broadcast %cst_866 : f32 to vector<1x128xf32>
    %1354 = arith.addf %1350, %1353 : vector<1x128xf32>
    %1355 = math.rsqrt %1354 : vector<1x128xf32>
    %1356 = vector.broadcast %1355 : vector<1x128xf32> to vector<16x128xf32>
    %1357 = arith.mulf %1330, %1356 : vector<16x128xf32>
    %1358 = vector.broadcast %1351 : vector<1x128xf32> to vector<16x128xf32>
    %1359 = arith.mulf %1357, %1358 : vector<16x128xf32>
    %1360 = vector.broadcast %1352 : vector<1x128xf32> to vector<16x128xf32>
    %1361 = arith.addf %1359, %1360 : vector<16x128xf32>
    %c16_867 = arith.constant 16 : index
    %c0_868 = arith.constant 0 : index
    %1362 = vector.load %arg6[%c16_867, %c0_868] : memref<64x128xf32, #tpu.memory_space<vmem>>, vector<16x128xf32>
    tpu.vector_store %arg6[%c16_867, %c0_868], %1361 {strides = array<i32>} : memref<64x128xf32, #tpu.memory_space<vmem>>, vector<16x128xf32>,
    %1363 = vector.extract_strided_slice %1250 {offsets = [32, 0], sizes = [16, 128], strides = [1, 1]} : vector<64x128xf32> to vector<16x128xf32>
    %c3_869 = arith.constant 3 : index
    %c0_870 = arith.constant 0 : index
    %1364 = vector.load %arg5[%c3_869, %c0_870] : memref<5x128xf32, #tpu.memory_space<vmem>>, vector<1x128xf32>
    %c4_871 = arith.constant 4 : index
    %c0_872 = arith.constant 0 : index
    %1365 = vector.load %arg5[%c4_871, %c0_872] : memref<5x128xf32, #tpu.memory_space<vmem>>, vector<1x128xf32>
    %cst_873 = arith.constant dense<0.000000e+00> : vector<128xf32>
    %1366 = vector.multi_reduction <add>, %1363, %cst_873 [0] : vector<16x128xf32> to vector<128xf32>
    %1367 = vector.shape_cast %1366 : vector<128xf32> to vector<1x128xf32>
    %cst_874 = arith.constant 0.000000e+00 : f32
    %1368 = vector.broadcast %cst_874 : f32 to vector<1x128xf32>
    %1369 = arith.mulf %1367, %1364 : vector<1x128xf32>
    %cst_875 = arith.constant dense<0.000000e+00> : vector<1xf32>
    %1370 = vector.multi_reduction <add>, %1369, %cst_875 [1] : vector<1x128xf32> to vector<1xf32>
    %1371 = vector.shape_cast %1370 : vector<1xf32> to vector<1x1xf32>
    %cst_876 = arith.constant 9.765625E-4 : f32
    %1372 = vector.broadcast %cst_876 : f32 to vector<1x1xf32>
    %1373 = arith.mulf %1371, %1372 : vector<1x1xf32>
    %1374 = vector.broadcast %1373 : vector<1x1xf32> to vector<1x128xf32>
    %1375 = arith.mulf %1374, %1364 : vector<1x128xf32>
    %1376 = arith.addf %1368, %1375 : vector<1x128xf32>
    %1377 = arith.mulf %1367, %1365 : vector<1x128xf32>
    %cst_877 = arith.constant dense<0.000000e+00> : vector<1xf32>
    %1378 = vector.multi_reduction <add>, %1377, %cst_877 [1] : vector<1x128xf32> to vector<1xf32>
    %1379 = vector.shape_cast %1378 : vector<1xf32> to vector<1x1xf32>
    %cst_878 = arith.constant 9.765625E-4 : f32
    %1380 = vector.broadcast %cst_878 : f32 to vector<1x1xf32>
    %1381 = arith.mulf %1379, %1380 : vector<1x1xf32>
    %1382 = vector.broadcast %1381 : vector<1x1xf32> to vector<1x128xf32>
    %1383 = arith.mulf %1382, %1365 : vector<1x128xf32>
    %1384 = arith.addf %1376, %1383 : vector<1x128xf32>
    %1385 = vector.broadcast %1384 : vector<1x128xf32> to vector<16x128xf32>
    %1386 = arith.subf %1363, %1385 : vector<16x128xf32>
    %1387 = arith.mulf %1386, %1386 : vector<16x128xf32>
    %cst_879 = arith.constant dense<0.000000e+00> : vector<128xf32>
    %1388 = vector.multi_reduction <add>, %1387, %cst_879 [0] : vector<16x128xf32> to vector<128xf32>
    %1389 = vector.shape_cast %1388 : vector<128xf32> to vector<1x128xf32>
    %cst_880 = arith.constant 0.000000e+00 : f32
    %1390 = vector.broadcast %cst_880 : f32 to vector<1x128xf32>
    %1391 = arith.mulf %1389, %1364 : vector<1x128xf32>
    %cst_881 = arith.constant dense<0.000000e+00> : vector<1xf32>
    %1392 = vector.multi_reduction <add>, %1391, %cst_881 [1] : vector<1x128xf32> to vector<1xf32>
    %1393 = vector.shape_cast %1392 : vector<1xf32> to vector<1x1xf32>
    %cst_882 = arith.constant 9.765625E-4 : f32
    %1394 = vector.broadcast %cst_882 : f32 to vector<1x1xf32>
    %1395 = arith.mulf %1393, %1394 : vector<1x1xf32>
    %1396 = vector.broadcast %1395 : vector<1x1xf32> to vector<1x128xf32>
    %1397 = arith.mulf %1396, %1364 : vector<1x128xf32>
    %1398 = arith.addf %1390, %1397 : vector<1x128xf32>
    %1399 = arith.mulf %1389, %1365 : vector<1x128xf32>
    %cst_883 = arith.constant dense<0.000000e+00> : vector<1xf32>
    %1400 = vector.multi_reduction <add>, %1399, %cst_883 [1] : vector<1x128xf32> to vector<1xf32>
    %1401 = vector.shape_cast %1400 : vector<1xf32> to vector<1x1xf32>
    %cst_884 = arith.constant 9.765625E-4 : f32
    %1402 = vector.broadcast %cst_884 : f32 to vector<1x1xf32>
    %1403 = arith.mulf %1401, %1402 : vector<1x1xf32>
    %1404 = vector.broadcast %1403 : vector<1x1xf32> to vector<1x128xf32>
    %1405 = arith.mulf %1404, %1365 : vector<1x128xf32>
    %1406 = arith.addf %1398, %1405 : vector<1x128xf32>
    %c1_885 = arith.constant 1 : index
    %c0_886 = arith.constant 0 : index
    %1407 = vector.load %arg5[%c1_885, %c0_886] : memref<5x128xf32, #tpu.memory_space<vmem>>, vector<1x128xf32>
    %c2_887 = arith.constant 2 : index
    %c0_888 = arith.constant 0 : index
    %1408 = vector.load %arg5[%c2_887, %c0_888] : memref<5x128xf32, #tpu.memory_space<vmem>>, vector<1x128xf32>
    %cst_889 = arith.constant 9.99999974E-6 : f32
    %1409 = vector.broadcast %cst_889 : f32 to vector<1x128xf32>
    %1410 = arith.addf %1406, %1409 : vector<1x128xf32>
    %1411 = math.rsqrt %1410 : vector<1x128xf32>
    %1412 = vector.broadcast %1411 : vector<1x128xf32> to vector<16x128xf32>
    %1413 = arith.mulf %1386, %1412 : vector<16x128xf32>
    %1414 = vector.broadcast %1407 : vector<1x128xf32> to vector<16x128xf32>
    %1415 = arith.mulf %1413, %1414 : vector<16x128xf32>
    %1416 = vector.broadcast %1408 : vector<1x128xf32> to vector<16x128xf32>
    %1417 = arith.addf %1415, %1416 : vector<16x128xf32>
    %c32_890 = arith.constant 32 : index
    %c0_891 = arith.constant 0 : index
    %1418 = vector.load %arg6[%c32_890, %c0_891] : memref<64x128xf32, #tpu.memory_space<vmem>>, vector<16x128xf32>
    tpu.vector_store %arg6[%c32_890, %c0_891], %1417 {strides = array<i32>} : memref<64x128xf32, #tpu.memory_space<vmem>>, vector<16x128xf32>,
    %1419 = vector.extract_strided_slice %1250 {offsets = [48, 0], sizes = [16, 128], strides = [1, 1]} : vector<64x128xf32> to vector<16x128xf32>
    %c3_892 = arith.constant 3 : index
    %c0_893 = arith.constant 0 : index
    %1420 = vector.load %arg5[%c3_892, %c0_893] : memref<5x128xf32, #tpu.memory_space<vmem>>, vector<1x128xf32>
    %c4_894 = arith.constant 4 : index
    %c0_895 = arith.constant 0 : index
    %1421 = vector.load %arg5[%c4_894, %c0_895] : memref<5x128xf32, #tpu.memory_space<vmem>>, vector<1x128xf32>
    %cst_896 = arith.constant dense<0.000000e+00> : vector<128xf32>
    %1422 = vector.multi_reduction <add>, %1419, %cst_896 [0] : vector<16x128xf32> to vector<128xf32>
    %1423 = vector.shape_cast %1422 : vector<128xf32> to vector<1x128xf32>
    %cst_897 = arith.constant 0.000000e+00 : f32
    %1424 = vector.broadcast %cst_897 : f32 to vector<1x128xf32>
    %1425 = arith.mulf %1423, %1420 : vector<1x128xf32>
    %cst_898 = arith.constant dense<0.000000e+00> : vector<1xf32>
    %1426 = vector.multi_reduction <add>, %1425, %cst_898 [1] : vector<1x128xf32> to vector<1xf32>
    %1427 = vector.shape_cast %1426 : vector<1xf32> to vector<1x1xf32>
    %cst_899 = arith.constant 9.765625E-4 : f32
    %1428 = vector.broadcast %cst_899 : f32 to vector<1x1xf32>
    %1429 = arith.mulf %1427, %1428 : vector<1x1xf32>
    %1430 = vector.broadcast %1429 : vector<1x1xf32> to vector<1x128xf32>
    %1431 = arith.mulf %1430, %1420 : vector<1x128xf32>
    %1432 = arith.addf %1424, %1431 : vector<1x128xf32>
    %1433 = arith.mulf %1423, %1421 : vector<1x128xf32>
    %cst_900 = arith.constant dense<0.000000e+00> : vector<1xf32>
    %1434 = vector.multi_reduction <add>, %1433, %cst_900 [1] : vector<1x128xf32> to vector<1xf32>
    %1435 = vector.shape_cast %1434 : vector<1xf32> to vector<1x1xf32>
    %cst_901 = arith.constant 9.765625E-4 : f32
    %1436 = vector.broadcast %cst_901 : f32 to vector<1x1xf32>
    %1437 = arith.mulf %1435, %1436 : vector<1x1xf32>
    %1438 = vector.broadcast %1437 : vector<1x1xf32> to vector<1x128xf32>
    %1439 = arith.mulf %1438, %1421 : vector<1x128xf32>
    %1440 = arith.addf %1432, %1439 : vector<1x128xf32>
    %1441 = vector.broadcast %1440 : vector<1x128xf32> to vector<16x128xf32>
    %1442 = arith.subf %1419, %1441 : vector<16x128xf32>
    %1443 = arith.mulf %1442, %1442 : vector<16x128xf32>
    %cst_902 = arith.constant dense<0.000000e+00> : vector<128xf32>
    %1444 = vector.multi_reduction <add>, %1443, %cst_902 [0] : vector<16x128xf32> to vector<128xf32>
    %1445 = vector.shape_cast %1444 : vector<128xf32> to vector<1x128xf32>
    %cst_903 = arith.constant 0.000000e+00 : f32
    %1446 = vector.broadcast %cst_903 : f32 to vector<1x128xf32>
    %1447 = arith.mulf %1445, %1420 : vector<1x128xf32>
    %cst_904 = arith.constant dense<0.000000e+00> : vector<1xf32>
    %1448 = vector.multi_reduction <add>, %1447, %cst_904 [1] : vector<1x128xf32> to vector<1xf32>
    %1449 = vector.shape_cast %1448 : vector<1xf32> to vector<1x1xf32>
    %cst_905 = arith.constant 9.765625E-4 : f32
    %1450 = vector.broadcast %cst_905 : f32 to vector<1x1xf32>
    %1451 = arith.mulf %1449, %1450 : vector<1x1xf32>
    %1452 = vector.broadcast %1451 : vector<1x1xf32> to vector<1x128xf32>
    %1453 = arith.mulf %1452, %1420 : vector<1x128xf32>
    %1454 = arith.addf %1446, %1453 : vector<1x128xf32>
    %1455 = arith.mulf %1445, %1421 : vector<1x128xf32>
    %cst_906 = arith.constant dense<0.000000e+00> : vector<1xf32>
    %1456 = vector.multi_reduction <add>, %1455, %cst_906 [1] : vector<1x128xf32> to vector<1xf32>
    %1457 = vector.shape_cast %1456 : vector<1xf32> to vector<1x1xf32>
    %cst_907 = arith.constant 9.765625E-4 : f32
    %1458 = vector.broadcast %cst_907 : f32 to vector<1x1xf32>
    %1459 = arith.mulf %1457, %1458 : vector<1x1xf32>
    %1460 = vector.broadcast %1459 : vector<1x1xf32> to vector<1x128xf32>
    %1461 = arith.mulf %1460, %1421 : vector<1x128xf32>
    %1462 = arith.addf %1454, %1461 : vector<1x128xf32>
    %c1_908 = arith.constant 1 : index
    %c0_909 = arith.constant 0 : index
    %1463 = vector.load %arg5[%c1_908, %c0_909] : memref<5x128xf32, #tpu.memory_space<vmem>>, vector<1x128xf32>
    %c2_910 = arith.constant 2 : index
    %c0_911 = arith.constant 0 : index
    %1464 = vector.load %arg5[%c2_910, %c0_911] : memref<5x128xf32, #tpu.memory_space<vmem>>, vector<1x128xf32>
    %cst_912 = arith.constant 9.99999974E-6 : f32
    %1465 = vector.broadcast %cst_912 : f32 to vector<1x128xf32>
    %1466 = arith.addf %1462, %1465 : vector<1x128xf32>
    %1467 = math.rsqrt %1466 : vector<1x128xf32>
    %1468 = vector.broadcast %1467 : vector<1x128xf32> to vector<16x128xf32>
    %1469 = arith.mulf %1442, %1468 : vector<16x128xf32>
    %1470 = vector.broadcast %1463 : vector<1x128xf32> to vector<16x128xf32>
    %1471 = arith.mulf %1469, %1470 : vector<16x128xf32>
    %1472 = vector.broadcast %1464 : vector<1x128xf32> to vector<16x128xf32>
    %1473 = arith.addf %1471, %1472 : vector<16x128xf32>
    %c48_913 = arith.constant 48 : index
    %c0_914 = arith.constant 0 : index
    %1474 = vector.load %arg6[%c48_913, %c0_914] : memref<64x128xf32, #tpu.memory_space<vmem>>, vector<16x128xf32>
    tpu.vector_store %arg6[%c48_913, %c0_914], %1473 {strides = array<i32>} : memref<64x128xf32, #tpu.memory_space<vmem>>, vector<16x128xf32>,
    return
  }
  func.func @transform_0(%arg0: i32) -> (i32, i32) {
    %c0_i32 = arith.constant 0 : i32
    %c0_i32_0 = arith.constant 0 : i32
    return %arg0, %c0_i32 : i32, i32
  }
  func.func @transform_1(%arg0: i32) -> (i32, i32) {
    %c0_i32 = arith.constant 0 : i32
    %c0_i32_0 = arith.constant 0 : i32
    %c0_i32_1 = arith.constant 0 : i32
    return %c0_i32, %c0_i32_0 : i32, i32
  }
  func.func @transform_2(%arg0: i32) -> (i32, i32) {
    %c0_i32 = arith.constant 0 : i32
    %c0_i32_0 = arith.constant 0 : i32
    %c0_i32_1 = arith.constant 0 : i32
    return %c0_i32, %c0_i32_0 : i32, i32
  }
  func.func @transform_3(%arg0: i32) -> (i32, i32) {
    %c0_i32 = arith.constant 0 : i32
    %c0_i32_0 = arith.constant 0 : i32
    %c0_i32_1 = arith.constant 0 : i32
    return %c0_i32, %c0_i32_0 : i32, i32
  }
  func.func @transform_4(%arg0: i32) -> (i32, i32) {
    %c0_i32 = arith.constant 0 : i32
    %c0_i32_0 = arith.constant 0 : i32
    %c0_i32_1 = arith.constant 0 : i32
    return %c0_i32, %c0_i32_0 : i32, i32
  }
  func.func @transform_5(%arg0: i32) -> (i32, i32) {
    %c0_i32 = arith.constant 0 : i32
    %c0_i32_0 = arith.constant 0 : i32
    return %arg0, %c0_i32 : i32, i32
  }
}

</mosaic_0001>

<llo_original>
// kernel: tpu_custom_call.1
$region0: #{tpu_custom_call.1}
  #allocation0 [shape = 'u32[]', space=smem, size = 0x4, offset = 0x4, fixed_abs, tag = 'smem constant byte address 0x4 - core index']
  #allocation1 [shape = 'u32[144,128]{1,0:T(1,128)}', space=vmem, size = 0x12000, scoped, tag = 'internal scratch']
  #allocation2 [shape = 'f32[32,128]{1,0:T(8,128)}', space=vmem, size = 0x4000, scoped, tag = 'scratch operand']
  #allocation3 [shape = 'f32[64,128]{1,0:T(8,128)}', space=vmem, size = 0x8000, scoped, tag = 'scratch operand']
  %s0 = inlined_call_operand.hbm [shape: f32[128,128], index: 0, kind: input, shape index: {}]
  %s1 = inlined_call_operand.hbm [shape: f32[43,128], index: 1, kind: input, shape index: {}]
  %s2 = inlined_call_operand.hbm [shape: bf16[128,128], index: 2, kind: input, shape index: {}]
  %s3 = inlined_call_operand.hbm [shape: bf16[128,128], index: 3, kind: input, shape index: {}]
  %s4 = inlined_call_operand.hbm [shape: f32[5,128], index: 4, kind: input, shape index: {}]
  %s5 = inlined_call_operand.hbm [shape: f32[128,128], index: 5, kind: output, shape index: {}]
  %s6 = sld [smem:[#allocation0]]
  $region73: #{tpu_custom_call.1} parent=0
    _
  %s8 = ssub.s32 1, %s6
  %s9 = scalar_select 0, %s8, %s6
  $region1: #{tpu_custom_call.1} parent=0
    #allocation4 [shape = 'u8[65536]{0}', space=vmem, size = 0x10000, scoped, tag = 'input window, operand 0']
    #allocation5 [shape = 's32[2]{0}', space=sflag, size = 0x8, scoped, tag = 'scoped memory for tpu_custom_call.1']
    #allocation6 [shape = 's32[2]{0}', space=sflag, size = 0x8, scoped, tag = 'scoped memory for tpu_custom_call.1']
    #allocation7 [shape = 'u8[24576]{0}', space=vmem, size = 0x6000, scoped, tag = 'input window, operand 1, single buffered']
    #allocation8 [shape = 's32[1]{0}', space=sflag, size = 0x4, scoped, tag = 'scoped memory for tpu_custom_call.1']
    #allocation9 [shape = 'u8[32768]{0}', space=vmem, size = 0x8000, scoped, tag = 'input window, operand 2, single buffered']
    #allocation10 [shape = 'u8[32768]{0}', space=vmem, size = 0x8000, scoped, tag = 'input window, operand 3, single buffered']
    #allocation11 [shape = 's32[1]{0}', space=sflag, size = 0x4, scoped, tag = 'scoped memory for tpu_custom_call.1']
    #allocation12 [shape = 'u8[4096]{0}', space=vmem, size = 0x1000, scoped, tag = 'input window, operand 4, single buffered']
    #allocation13 [shape = 'u8[65536]{0}', space=vmem, size = 0x10000, scoped, tag = 'output window, operand 0']
    %10 = vsyncpa [#allocation5], 0
    %s11 = scalar_lea.sflag [#allocation5], 1
    %12 = vsyncpa %s11, 0
    %13 = vsyncpa [#allocation8], 0
    %14 = vsyncpa [#allocation11], 0
    %15 = vsyncpa [#allocation6], 0
    %s16 = scalar_lea.sflag [#allocation6], 1
    %17 = vsyncpa %s16, 0
    loop: start=0, step=1, limit=4
    $region2: #{tpu_custom_call.1} parent=1 // loop_pre_header
      _
    $region3: #{tpu_custom_call.1} parent=1 // loop_header
      %s19 = sphi 0, %s23
      %p20 = scmp.ge.s32.totalorder %s19, 4
      %s29 = sphi 0, %s31
      %s32 = sphi 0, %s29
      %s33 = sphi 0, %s32
      %s49 = sphi 0, %s33
      %s53 = sphi 0, %s53
      %s55 = sphi 0, %s53
      %s56 = sphi 0, %s55
      %s70 = sphi 0, %s56
      %s74 = sphi 0, %s74
      %s76 = sphi 0, %s74
      %s77 = sphi 0, %s76
      %s91 = sphi 0, %s77
      %s95 = sphi 0, %s95
      %s97 = sphi 0, %s95
      %s98 = sphi 0, %s97
      %s112 = sphi 0, %s98
      %s116 = sphi 0, %s116
      %s118 = sphi 0, %s116
      %s119 = sphi 0, %s118
      %s133 = sphi 0, %s119
      %s139 = sphi 0, %s141
      %s142 = sphi 0, %s139
      %s143 = sphi 0, %s142
      %s159 = sphi 0, %s143
    $region4: #{tpu_custom_call.1} parent=1 // loop_header_branch
      %22 = sbr.rel (%p20) target = $region8
    $region5: #{tpu_custom_call.1} parent=1 // loop_body
      %s24 = ssub.s32 %s19, 1
      %s25 = ssub.s32 %s19, 2
      %s26 = sadd.s32 %s19, 1
      %s27 = ssub.s32 %s19, %s26
      %p28 = scmp.eq.s32.totalorder %s27, 0
      %s30 = sadd.s32 %s29, 1
      %s31 = scalar_select %p28, %s29, %s30
      %p34 = pneg %p28
      %p35 = scmp.eq.s32.totalorder %s19, 1
      %p36 = por %p34, %p35
      %p37 = scmp.ne.s32.totalorder %s29, %s32
      %p38 = scmp.eq.s32.totalorder %s19, 0
      %p39 = por %p37, %p38
      %p40 = scmp.ne.s32.totalorder %s29, %s32
      %p41 = scmp.eq.s32.totalorder %s24, 1
      %p42 = por %p40, %p41
      %p43 = scmp.ne.s32.totalorder %s32, %s33
      %p44 = scmp.eq.s32.totalorder %s24, 0
      %p45 = por %p43, %p44
      %p46 = scmp.ne.s32.totalorder %s32, %s33
      %p47 = scmp.eq.s32.totalorder %s25, 1
      %p48 = por %p46, %p47
      %p50 = scmp.ne.s32.totalorder %s33, %s49
      %p51 = scmp.eq.s32.totalorder %s25, 0
      %p52 = por %p50, %p51
      %s54 = sadd.s32 %s53, 1
      %p57 = scmp.eq.s32.totalorder %s19, 1
      %p58 = scmp.ne.s32.totalorder %s53, %s55
      %p59 = scmp.eq.s32.totalorder %s19, 0
      %p60 = por %p58, %p59
      %p61 = scmp.ne.s32.totalorder %s53, %s55
      %p62 = scmp.eq.s32.totalorder %s24, 1
      %p63 = por %p61, %p62
      %p64 = scmp.ne.s32.totalorder %s55, %s56
      %p65 = scmp.eq.s32.totalorder %s24, 0
      %p66 = por %p64, %p65
      %p67 = scmp.ne.s32.totalorder %s55, %s56
      %p68 = scmp.eq.s32.totalorder %s25, 1
      %p69 = por %p67, %p68
      %p71 = scmp.ne.s32.totalorder %s56, %s70
      %p72 = scmp.eq.s32.totalorder %s25, 0
      %p73 = por %p71, %p72
      %s75 = sadd.s32 %s74, 1
      %p78 = scmp.eq.s32.totalorder %s19, 1
      %p79 = scmp.ne.s32.totalorder %s74, %s76
      %p80 = scmp.eq.s32.totalorder %s19, 0
      %p81 = por %p79, %p80
      %p82 = scmp.ne.s32.totalorder %s74, %s76
      %p83 = scmp.eq.s32.totalorder %s24, 1
      %p84 = por %p82, %p83
      %p85 = scmp.ne.s32.totalorder %s76, %s77
      %p86 = scmp.eq.s32.totalorder %s24, 0
      %p87 = por %p85, %p86
      %p88 = scmp.ne.s32.totalorder %s76, %s77
      %p89 = scmp.eq.s32.totalorder %s25, 1
      %p90 = por %p88, %p89
      %p92 = scmp.ne.s32.totalorder %s77, %s91
      %p93 = scmp.eq.s32.totalorder %s25, 0
      %p94 = por %p92, %p93
      %s96 = sadd.s32 %s95, 1
      %p99 = scmp.eq.s32.totalorder %s19, 1
      %p100 = scmp.ne.s32.totalorder %s95, %s97
      %p101 = scmp.eq.s32.totalorder %s19, 0
      %p102 = por %p100, %p101
      %p103 = scmp.ne.s32.totalorder %s95, %s97
      %p104 = scmp.eq.s32.totalorder %s24, 1
      %p105 = por %p103, %p104
      %p106 = scmp.ne.s32.totalorder %s97, %s98
      %p107 = scmp.eq.s32.totalorder %s24, 0
      %p108 = por %p106, %p107
      %p109 = scmp.ne.s32.totalorder %s97, %s98
      %p110 = scmp.eq.s32.totalorder %s25, 1
      %p111 = por %p109, %p110
      %p113 = scmp.ne.s32.totalorder %s98, %s112
      %p114 = scmp.eq.s32.totalorder %s25, 0
      %p115 = por %p113, %p114
      %s117 = sadd.s32 %s116, 1
      %p120 = scmp.eq.s32.totalorder %s19, 1
      %p121 = scmp.ne.s32.totalorder %s116, %s118
      %p122 = scmp.eq.s32.totalorder %s19, 0
      %p123 = por %p121, %p122
      %p124 = scmp.ne.s32.totalorder %s116, %s118
      %p125 = scmp.eq.s32.totalorder %s24, 1
      %p126 = por %p124, %p125
      %p127 = scmp.ne.s32.totalorder %s118, %s119
      %p128 = scmp.eq.s32.totalorder %s24, 0
      %p129 = por %p127, %p128
      %p130 = scmp.ne.s32.totalorder %s118, %s119
      %p131 = scmp.eq.s32.totalorder %s25, 1
      %p132 = por %p130, %p131
      %p134 = scmp.ne.s32.totalorder %s119, %s133
      %p135 = scmp.eq.s32.totalorder %s25, 0
      %p136 = por %p134, %p135
      %s137 = ssub.s32 %s19, %s26
      %p138 = scmp.eq.s32.totalorder %s137, 0
      %s140 = sadd.s32 %s139, 1
      %s141 = scalar_select %p138, %s139, %s140
      %p144 = pneg %p138
      %p145 = scmp.eq.s32.totalorder %s19, 1
      %p146 = por %p144, %p145
      %p147 = scmp.ne.s32.totalorder %s139, %s142
      %p148 = scmp.eq.s32.totalorder %s19, 0
      %p149 = por %p147, %p148
      %p150 = scmp.ne.s32.totalorder %s139, %s142
      %p151 = scmp.eq.s32.totalorder %s24, 1
      %p152 = por %p150, %p151
      %p153 = scmp.ne.s32.totalorder %s142, %s143
      %p154 = scmp.eq.s32.totalorder %s24, 0
      %p155 = por %p153, %p154
      %p156 = scmp.ne.s32.totalorder %s142, %s143
      %p157 = scmp.eq.s32.totalorder %s25, 1
      %p158 = por %p156, %p157
      %p160 = scmp.ne.s32.totalorder %s143, %s159
      %p161 = scmp.eq.s32.totalorder %s25, 0
      %p162 = por %p160, %p161
      %p163 = scmp.le.s32.totalorder 1, %s19
      %p164 = scmp.lt.s32.totalorder %s19, 3
      %p165 = pnand %p163, %p164
      %p166 = pneg %p165
      // Predicated region
      $region9: #{tpu_custom_call.1} parent=5 // pred_check
        _
      $region10: #{tpu_custom_call.1} parent=5 // pred_check_branch
        %168 = sbr.rel (%p165) target = $region12
      $region11: #{tpu_custom_call.1} parent=5 // pred_region
        %s169 = ssub.s32 %s19, 1
        // Predicated region
        $region13: #{tpu_custom_call.1} parent=11 // pred_check
          %p170 = pneg %p66
        $region14: #{tpu_custom_call.1} parent=11 // pred_check_branch
          %172 = sbr.rel (%p170) target = $region16
        $region15: #{tpu_custom_call.1} parent=11 // pred_region
          %s174 = ssub.s32 768, 768
          %175 = vsyncadd [#allocation8], %s174
          %s176 = sshll.u32 [#allocation7], 4
          %s177 = int_to_ptr.vmem [resolvable:$true] %s176
          %182 = dma.hbm_to_vmem [thread:$0]  %s1, 768, %s177, [#allocation8], 128, 128, 8
        $region16: #{tpu_custom_call.1} parent=11 // pred_fallthru
          _
        // Predicated region
        $region17: #{tpu_custom_call.1} parent=11 // pred_check
          %p183 = pneg %p87
        $region18: #{tpu_custom_call.1} parent=11 // pred_check_branch
          %185 = sbr.rel (%p183) target = $region20
        $region19: #{tpu_custom_call.1} parent=11 // pred_region
          %s187 = ssub.s32 1024, 1024
          %188 = vsyncadd [#allocation8], %s187
          %s189 = sshll.u32 [#allocation9], 4
          %s190 = int_to_ptr.vmem [resolvable:$true] %s189
          %195 = dma.hbm_to_vmem [thread:$0]  %s2, 1024, %s190, [#allocation8], 64, 64, 4
        $region20: #{tpu_custom_call.1} parent=11 // pred_fallthru
          _
        // Predicated region
        $region21: #{tpu_custom_call.1} parent=11 // pred_check
          %p196 = pneg %p108
        $region22: #{tpu_custom_call.1} parent=11 // pred_check_branch
          %198 = sbr.rel (%p196) target = $region24
        $region23: #{tpu_custom_call.1} parent=11 // pred_region
          %s200 = ssub.s32 1024, 1024
          %201 = vsyncadd [#allocation11], %s200
          %s202 = sshll.u32 [#allocation10], 4
          %s203 = int_to_ptr.vmem [resolvable:$true] %s202
          %208 = dma.hbm_to_vmem [thread:$0]  %s3, 1024, %s203, [#allocation11], 64, 64, 4
        $region24: #{tpu_custom_call.1} parent=11 // pred_fallthru
          _
        // Predicated region
        $region25: #{tpu_custom_call.1} parent=11 // pred_check
          %p209 = pneg %p129
        $region26: #{tpu_custom_call.1} parent=11 // pred_check_branch
          %211 = sbr.rel (%p209) target = $region28
        $region27: #{tpu_custom_call.1} parent=11 // pred_region
          %s213 = ssub.s32 128, 128
          %214 = vsyncadd [#allocation11], %s213
          %s216 = sshll.u32 [#allocation12], 4
          %s217 = int_to_ptr.vmem [resolvable:$true] %s216
          %219 = dma.hbm_to_vmem [thread:$0]  %s4, 128, %s217, [#allocation11]
        $region28: #{tpu_custom_call.1} parent=11 // pred_fallthru
          _
      $region12: #{tpu_custom_call.1} parent=5 // pred_fallthru
        _
      %p220 = scmp.lt.s32.totalorder %s19, 2
      // Predicated region
      $region29: #{tpu_custom_call.1} parent=5 // pred_check
        %p221 = pneg %p220
      $region30: #{tpu_custom_call.1} parent=5 // pred_check_branch
        %223 = sbr.rel (%p221) target = $region32
      $region31: #{tpu_custom_call.1} parent=5 // pred_region
        // Predicated region
        $region33: #{tpu_custom_call.1} parent=31 // pred_check
          %p224 = pneg %p39
        $region34: #{tpu_custom_call.1} parent=31 // pred_check_branch
          %226 = sbr.rel (%p224) target = $region36
        $region35: #{tpu_custom_call.1} parent=31 // pred_region
          %s227 = sand.u32 %s29, 1
          %s228 = scalar_lea.sflag [#allocation5], %s227
          %s229 = sand.u32 %s29, 1
          %s230 = smul.addr %s229, 64
          %s231 = scalar_lea.vmem [#allocation4], %s230
          %s232 = smul.u32 8, %s19
          %s234 = ssub.s32 1024, 1024
          %235 = vsyncadd %s228, %s234
          %s236 = smul.addr %s232, 128
          %s237 = scalar_lea.hbm %s0, %s236
          %s238 = sshll.u32 %s231, 4
          %s239 = int_to_ptr.vmem [resolvable:$true] %s238
          %244 = dma.hbm_to_vmem [thread:$0]  %s237, 1024, %s239, %s228, 128, 128, 8
        $region36: #{tpu_custom_call.1} parent=31 // pred_fallthru
          _
      $region32: #{tpu_custom_call.1} parent=5 // pred_fallthru
        _
      %p245 = scmp.le.s32.totalorder 1, %s19
      %p246 = scmp.lt.s32.totalorder %s19, 3
      %p247 = pnand %p245, %p246
      %p248 = pneg %p247
      // Predicated region
      $region37: #{tpu_custom_call.1} parent=5 // pred_check
        _
      $region38: #{tpu_custom_call.1} parent=5 // pred_check_branch
        %250 = sbr.rel (%p247) target = $region40
      $region39: #{tpu_custom_call.1} parent=5 // pred_region
        %s251 = ssub.s32 %s19, 1
        %s252 = sand.u32 %s32, 1
        %s253 = scalar_lea.sflag [#allocation5], %s252
        %s254 = sand.u32 %s32, 1
        %s255 = smul.addr %s254, 64
        %s256 = scalar_lea.vmem [#allocation4], %s255
        // Predicated region
        $region41: #{tpu_custom_call.1} parent=39 // pred_check
          %p257 = pneg %p45
        $region42: #{tpu_custom_call.1} parent=39 // pred_check_branch
          %259 = sbr.rel (%p257) target = $region44
        $region43: #{tpu_custom_call.1} parent=39 // pred_region
          %260 = dma.done %s253, 1024
        $region44: #{tpu_custom_call.1} parent=39 // pred_fallthru
          _
        // Predicated region
        $region45: #{tpu_custom_call.1} parent=39 // pred_check
          %p261 = pneg %p66
        $region46: #{tpu_custom_call.1} parent=39 // pred_check_branch
          %263 = sbr.rel (%p261) target = $region48
        $region47: #{tpu_custom_call.1} parent=39 // pred_region
          %264 = dma.done [#allocation8], 768
        $region48: #{tpu_custom_call.1} parent=39 // pred_fallthru
          _
        // Predicated region
        $region49: #{tpu_custom_call.1} parent=39 // pred_check
          %p265 = pneg %p87
        $region50: #{tpu_custom_call.1} parent=39 // pred_check_branch
          %267 = sbr.rel (%p265) target = $region52
        $region51: #{tpu_custom_call.1} parent=39 // pred_region
          %268 = dma.done [#allocation8], 1024
        $region52: #{tpu_custom_call.1} parent=39 // pred_fallthru
          _
        // Predicated region
        $region53: #{tpu_custom_call.1} parent=39 // pred_check
          %p269 = pneg %p108
        $region54: #{tpu_custom_call.1} parent=39 // pred_check_branch
          %271 = sbr.rel (%p269) target = $region56
        $region55: #{tpu_custom_call.1} parent=39 // pred_region
          %272 = dma.done [#allocation11], 1024
        $region56: #{tpu_custom_call.1} parent=39 // pred_fallthru
          _
        // Predicated region
        $region57: #{tpu_custom_call.1} parent=39 // pred_check
          %p273 = pneg %p129
        $region58: #{tpu_custom_call.1} parent=39 // pred_check_branch
          %275 = sbr.rel (%p273) target = $region60
        $region59: #{tpu_custom_call.1} parent=39 // pred_region
          %276 = dma.done [#allocation11], 128
        $region60: #{tpu_custom_call.1} parent=39 // pred_fallthru
          _
        %s277 = sand.u32 %s32, 1
        %s278 = scalar_lea.sflag [#allocation5], %s277
        %s279 = sand.u32 %s32, 1
        %s280 = smul.addr %s279, 64
        %s281 = scalar_lea.vmem [#allocation4], %s280
        %p282 = pneg %p45
        %p283 = pneg %p42
        %p284 = pneg %p66
        %p285 = pneg %p63
        %p286 = pneg %p87
        %p287 = pneg %p84
        %p288 = pneg %p108
        %p289 = pneg %p105
        %p290 = pneg %p129
        %p291 = pneg %p126
        %p292 = pneg %p155
        %p293 = pneg %p152
        %s294 = sand.u32 %s142, 1
        %s295 = scalar_lea.sflag [#allocation6], %s294
        %s296 = sand.u32 %s142, 1
        %s297 = smul.addr %s296, 64
        %s298 = scalar_lea.vmem [#allocation13], %s297
        %s299 = smul.u32 8, %s24
        %s300 = smul.u32 8, %s24
        %302 = vst [vmem:[#allocation2] sm:$0xff] 0.0
        %303 = vst [vmem:[#allocation2 + $0x18] sm:$0xff] 0.0
        %v304 = vld [vmem:[%s256] sm:$0xff]
        %v305 = vld [vmem:[%s256 + $0x8] sm:$0xff]
        %v306 = vld [vmem:[#allocation7 + $0x22] sm:$0x1]
        %v307 = vlaneseq
        %v308 = vshrl.u32 %v307, 7
        %v309 = vsub.s32 0, %v308
        %v310 = vrot.slane %v306, %v309
        %v311 = vadd.f32 %v304, %v310
        %v312 = vadd.f32 %v305, %v310
        %313 = vrot.lane.b32.xlu0 %v304, 16
        %v314 = vpop.permute.xlu0 %313
        %315 = vrot.lane.b32.xlu0 %v305, 16
        %v316 = vpop.permute.xlu0 %315
        %317 = vst [vmem:[#allocation2 + $0x8] sm:$0xff] %v314
        %318 = vst [vmem:[#allocation2 + $0x10] sm:$0xff] %v316
        %v319 = vld [vmem:[#allocation2 + $0x6] sm:$0xff]
        %v320 = vld [vmem:[#allocation2 + $0xe] sm:$0xff]
        %v321 = vld [vmem:[#allocation7] sm:$0x1]
        %v322 = vlaneseq
        %v323 = vshrl.u32 %v322, 7
        %v324 = vsub.s32 0, %v323
        %v325 = vrot.slane %v321, %v324
        %v326 = vmul.f32 %v319, %v325
        %v327 = vmul.f32 %v320, %v325
        %v328 = vadd.f32 %v311, %v326
        %v329 = vadd.f32 %v312, %v327
        %v330 = vld [vmem:[#allocation2 + $0x7] sm:$0xff]
        %v331 = vld [vmem:[#allocation2 + $0xf] sm:$0xff]
        %v332 = vld [vmem:[#allocation7 + $0x5] sm:$0x1]
        %v333 = vlaneseq
        %v334 = vshrl.u32 %v333, 7
        %v335 = vsub.s32 0, %v334
        %v336 = vrot.slane %v332, %v335
        %v337 = vmul.f32 %v330, %v336
        %v338 = vmul.f32 %v331, %v336
        %v339 = vld [vmem:[#allocation2 + $0x8] sm:$0xff]
        %v340 = vld [vmem:[#allocation2 + $0x10] sm:$0xff]
        %v341 = vld [vmem:[#allocation7 + $0xa] sm:$0x1]
        %v342 = vlaneseq
        %v343 = vshrl.u32 %v342, 7
        %v344 = vsub.s32 0, %v343
        %v345 = vrot.slane %v341, %v344
        %v346 = vmul.f32 %v339, %v345
        %v347 = vmul.f32 %v340, %v345
        %v348 = vld [vmem:[#allocation2 + $0x9] sm:$0xff]
        %v349 = vld [vmem:[#allocation2 + $0x11] sm:$0xff]
        %v350 = vld [vmem:[#allocation7 + $0xf] sm:$0x1]
        %v351 = vlaneseq
        %v352 = vshrl.u32 %v351, 7
        %v353 = vsub.s32 0, %v352
        %v354 = vrot.slane %v350, %v353
        %v355 = vmul.f32 %v348, %v354
        %v356 = vmul.f32 %v349, %v354
        %v357 = vld [vmem:[#allocation2 + $0xa] sm:$0xff]
        %v358 = vld [vmem:[#allocation2 + $0x12] sm:$0xff]
        %v359 = vld [vmem:[#allocation7 + $0x14] sm:$0x1]
        %v360 = vlaneseq
        %v361 = vshrl.u32 %v360, 7
        %v362 = vsub.s32 0, %v361
        %v363 = vrot.slane %v359, %v362
        %v364 = vmul.f32 %v357, %v363
        %v365 = vmul.f32 %v358, %v363
        %v366 = vadd.f32 %v328, %v364
        %v367 = vadd.f32 %v329, %v365
        %368 = vrot.lane.b32.xlu0 %v304, 8
        %v369 = vpop.permute.xlu0 %368
        %370 = vrot.lane.b32.xlu0 %v305, 8
        %v371 = vpop.permute.xlu0 %370
        %372 = vst [vmem:[#allocation2 + $0x8] sm:$0xff] %v369
        %373 = vst [vmem:[#allocation2 + $0x10] sm:$0xff] %v371
        %v374 = vld [vmem:[#allocation2 + $0x6] sm:$0xff]
        %v375 = vld [vmem:[#allocation2 + $0xe] sm:$0xff]
        %v376 = vld [vmem:[#allocation7 + $0x1] sm:$0x1]
        %v377 = vlaneseq
        %v378 = vshrl.u32 %v377, 7
        %v379 = vsub.s32 0, %v378
        %v380 = vrot.slane %v376, %v379
        %v381 = vmul.f32 %v374, %v380
        %v382 = vmul.f32 %v375, %v380
        %v383 = vadd.f32 %v337, %v381
        %v384 = vadd.f32 %v338, %v382
        %v385 = vld [vmem:[#allocation2 + $0x7] sm:$0xff]
        %v386 = vld [vmem:[#allocation2 + $0xf] sm:$0xff]
        %v387 = vld [vmem:[#allocation7 + $0x6] sm:$0x1]
        %v388 = vlaneseq
        %v389 = vshrl.u32 %v388, 7
        %v390 = vsub.s32 0, %v389
        %v391 = vrot.slane %v387, %v390
        %v392 = vmul.f32 %v385, %v391
        %v393 = vmul.f32 %v386, %v391
        %v394 = vadd.f32 %v346, %v392
        %v395 = vadd.f32 %v347, %v393
        %v396 = vld [vmem:[#allocation2 + $0x8] sm:$0xff]
        %v397 = vld [vmem:[#allocation2 + $0x10] sm:$0xff]
        %v398 = vld [vmem:[#allocation7 + $0xb] sm:$0x1]
        %v399 = vlaneseq
        %v400 = vshrl.u32 %v399, 7
        %v401 = vsub.s32 0, %v400
        %v402 = vrot.slane %v398, %v401
        %v403 = vmul.f32 %v396, %v402
        %v404 = vmul.f32 %v397, %v402
        %v405 = vadd.f32 %v355, %v403
        %v406 = vadd.f32 %v356, %v404
        %v407 = vld [vmem:[#allocation2 + $0x9] sm:$0xff]
        %v408 = vld [vmem:[#allocation2 + $0x11] sm:$0xff]
        %v409 = vld [vmem:[#allocation7 + $0x10] sm:$0x1]
        %v410 = vlaneseq
        %v411 = vshrl.u32 %v410, 7
        %v412 = vsub.s32 0, %v411
        %v413 = vrot.slane %v409, %v412
        %v414 = vmul.f32 %v407, %v413
        %v415 = vmul.f32 %v408, %v413
        %v416 = vadd.f32 %v366, %v414
        %v417 = vadd.f32 %v367, %v415
        %v418 = vld [vmem:[#allocation2 + $0xa] sm:$0xff]
        %v419 = vld [vmem:[#allocation2 + $0x12] sm:$0xff]
        %v420 = vld [vmem:[#allocation7 + $0x15] sm:$0x1]
        %v421 = vlaneseq
        %v422 = vshrl.u32 %v421, 7
        %v423 = vsub.s32 0, %v422
        %v424 = vrot.slane %v420, %v423
        %v425 = vmul.f32 %v418, %v424
        %v426 = vmul.f32 %v419, %v424
        %v427 = vadd.f32 %v383, %v425
        %v428 = vadd.f32 %v384, %v426
        %429 = vst [vmem:[#allocation2 + $0x8] sm:$0xff] %v304
        %430 = vst [vmem:[#allocation2 + $0x10] sm:$0xff] %v305
        %v431 = vld [vmem:[#allocation2 + $0x6] sm:$0xff]
        %v432 = vld [vmem:[#allocation2 + $0xe] sm:$0xff]
        %v433 = vld [vmem:[#allocation7 + $0x2] sm:$0x1]
        %v434 = vlaneseq
        %v435 = vshrl.u32 %v434, 7
        %v436 = vsub.s32 0, %v435
        %v437 = vrot.slane %v433, %v436
        %v438 = vmul.f32 %v431, %v437
        %v439 = vmul.f32 %v432, %v437
        %v440 = vadd.f32 %v394, %v438
        %v441 = vadd.f32 %v395, %v439
        %v442 = vld [vmem:[#allocation2 + $0x7] sm:$0xff]
        %v443 = vld [vmem:[#allocation2 + $0xf] sm:$0xff]
        %v444 = vld [vmem:[#allocation7 + $0x7] sm:$0x1]
        %v445 = vlaneseq
        %v446 = vshrl.u32 %v445, 7
        %v447 = vsub.s32 0, %v446
        %v448 = vrot.slane %v444, %v447
        %v449 = vmul.f32 %v442, %v448
        %v450 = vmul.f32 %v443, %v448
        %v451 = vadd.f32 %v405, %v449
        %v452 = vadd.f32 %v406, %v450
        %v453 = vld [vmem:[#allocation2 + $0x8] sm:$0xff]
        %v454 = vld [vmem:[#allocation2 + $0x10] sm:$0xff]
        %v455 = vld [vmem:[#allocation7 + $0xc] sm:$0x1]
        %v456 = vlaneseq
        %v457 = vshrl.u32 %v456, 7
        %v458 = vsub.s32 0, %v457
        %v459 = vrot.slane %v455, %v458
        %v460 = vmul.f32 %v453, %v459
        %v461 = vmul.f32 %v454, %v459
        %v462 = vadd.f32 %v416, %v460
        %v463 = vadd.f32 %v417, %v461
        %v464 = vld [vmem:[#allocation2 + $0x9] sm:$0xff]
        %v465 = vld [vmem:[#allocation2 + $0x11] sm:$0xff]
        %v466 = vld [vmem:[#allocation7 + $0x11] sm:$0x1]
        %v467 = vlaneseq
        %v468 = vshrl.u32 %v467, 7
        %v469 = vsub.s32 0, %v468
        %v470 = vrot.slane %v466, %v469
        %v471 = vmul.f32 %v464, %v470
        %v472 = vmul.f32 %v465, %v470
        %v473 = vadd.f32 %v427, %v471
        %v474 = vadd.f32 %v428, %v472
        %v475 = vld [vmem:[#allocation2 + $0xa] sm:$0xff]
        %v476 = vld [vmem:[#allocation2 + $0x12] sm:$0xff]
        %v477 = vld [vmem:[#allocation7 + $0x16] sm:$0x1]
        %v478 = vlaneseq
        %v479 = vshrl.u32 %v478, 7
        %v480 = vsub.s32 0, %v479
        %v481 = vrot.slane %v477, %v480
        %v482 = vmul.f32 %v475, %v481
        %v483 = vmul.f32 %v476, %v481
        %v484 = vadd.f32 %v440, %v482
        %v485 = vadd.f32 %v441, %v483
        %486 = vrot.lane.b32.xlu0 %v304, 120
        %v487 = vpop.permute.xlu0 %486
        %488 = vrot.lane.b32.xlu0 %v305, 120
        %v489 = vpop.permute.xlu0 %488
        %490 = vst [vmem:[#allocation2 + $0x8] sm:$0xff] %v487
        %491 = vst [vmem:[#allocation2 + $0x10] sm:$0xff] %v489
        %v492 = vld [vmem:[#allocation2 + $0x6] sm:$0xff]
        %v493 = vld [vmem:[#allocation2 + $0xe] sm:$0xff]
        %v494 = vld [vmem:[#allocation7 + $0x3] sm:$0x1]
        %v495 = vlaneseq
        %v496 = vshrl.u32 %v495, 7
        %v497 = vsub.s32 0, %v496
        %v498 = vrot.slane %v494, %v497
        %v499 = vmul.f32 %v492, %v498
        %v500 = vmul.f32 %v493, %v498
        %v501 = vadd.f32 %v451, %v499
        %v502 = vadd.f32 %v452, %v500
        %v503 = vld [vmem:[#allocation2 + $0x7] sm:$0xff]
        %v504 = vld [vmem:[#allocation2 + $0xf] sm:$0xff]
        %v505 = vld [vmem:[#allocation7 + $0x8] sm:$0x1]
        %v506 = vlaneseq
        %v507 = vshrl.u32 %v506, 7
        %v508 = vsub.s32 0, %v507
        %v509 = vrot.slane %v505, %v508
        %v510 = vmul.f32 %v503, %v509
        %v511 = vmul.f32 %v504, %v509
        %v512 = vadd.f32 %v462, %v510
        %v513 = vadd.f32 %v463, %v511
        %v514 = vld [vmem:[#allocation2 + $0x8] sm:$0xff]
        %v515 = vld [vmem:[#allocation2 + $0x10] sm:$0xff]
        %v516 = vld [vmem:[#allocation7 + $0xd] sm:$0x1]
        %v517 = vlaneseq
        %v518 = vshrl.u32 %v517, 7
        %v519 = vsub.s32 0, %v518
        %v520 = vrot.slane %v516, %v519
        %v521 = vmul.f32 %v514, %v520
        %v522 = vmul.f32 %v515, %v520
        %v523 = vadd.f32 %v473, %v521
        %v524 = vadd.f32 %v474, %v522
        %v525 = vld [vmem:[#allocation2 + $0x9] sm:$0xff]
        %v526 = vld [vmem:[#allocation2 + $0x11] sm:$0xff]
        %v527 = vld [vmem:[#allocation7 + $0x12] sm:$0x1]
        %v528 = vlaneseq
        %v529 = vshrl.u32 %v528, 7
        %v530 = vsub.s32 0, %v529
        %v531 = vrot.slane %v527, %v530
        %v532 = vmul.f32 %v525, %v531
        %v533 = vmul.f32 %v526, %v531
        %v534 = vadd.f32 %v484, %v532
        %v535 = vadd.f32 %v485, %v533
        %v536 = vld [vmem:[#allocation2 + $0xa] sm:$0xff]
        %v537 = vld [vmem:[#allocation2 + $0x12] sm:$0xff]
        %v538 = vld [vmem:[#allocation7 + $0x17] sm:$0x1]
        %v539 = vlaneseq
        %v540 = vshrl.u32 %v539, 7
        %v541 = vsub.s32 0, %v540
        %v542 = vrot.slane %v538, %v541
        %v543 = vmul.f32 %v536, %v542
        %v544 = vmul.f32 %v537, %v542
        %v545 = vadd.f32 %v501, %v543
        %v546 = vadd.f32 %v502, %v544
        %547 = vrot.lane.b32.xlu0 %v304, 112
        %v548 = vpop.permute.xlu0 %547
        %549 = vrot.lane.b32.xlu0 %v305, 112
        %v550 = vpop.permute.xlu0 %549
        %551 = vst [vmem:[#allocation2 + $0x8] sm:$0xff] %v548
        %552 = vst [vmem:[#allocation2 + $0x10] sm:$0xff] %v550
        %v553 = vld [vmem:[#allocation2 + $0x6] sm:$0xff]
        %v554 = vld [vmem:[#allocation2 + $0xe] sm:$0xff]
        %v555 = vld [vmem:[#allocation7 + $0x4] sm:$0x1]
        %v556 = vlaneseq
        %v557 = vshrl.u32 %v556, 7
        %v558 = vsub.s32 0, %v557
        %v559 = vrot.slane %v555, %v558
        %v560 = vmul.f32 %v553, %v559
        %v561 = vmul.f32 %v554, %v559
        %v562 = vadd.f32 %v512, %v560
        %v563 = vadd.f32 %v513, %v561
        %v564 = vld [vmem:[#allocation2 + $0x7] sm:$0xff]
        %v565 = vld [vmem:[#allocation2 + $0xf] sm:$0xff]
        %v566 = vld [vmem:[#allocation7 + $0x9] sm:$0x1]
        %v567 = vlaneseq
        %v568 = vshrl.u32 %v567, 7
        %v569 = vsub.s32 0, %v568
        %v570 = vrot.slane %v566, %v569
        %v571 = vmul.f32 %v564, %v570
        %v572 = vmul.f32 %v565, %v570
        %v573 = vadd.f32 %v523, %v571
        %v574 = vadd.f32 %v524, %v572
        %v575 = vld [vmem:[#allocation2 + $0x8] sm:$0xff]
        %v576 = vld [vmem:[#allocation2 + $0x10] sm:$0xff]
        %v577 = vld [vmem:[#allocation7 + $0xe] sm:$0x1]
        %v578 = vlaneseq
        %v579 = vshrl.u32 %v578, 7
        %v580 = vsub.s32 0, %v579
        %v581 = vrot.slane %v577, %v580
        %v582 = vmul.f32 %v575, %v581
        %v583 = vmul.f32 %v576, %v581
        %v584 = vadd.f32 %v534, %v582
        %v585 = vadd.f32 %v535, %v583
        %v586 = vld [vmem:[#allocation2 + $0x9] sm:$0xff]
        %v587 = vld [vmem:[#allocation2 + $0x11] sm:$0xff]
        %v588 = vld [vmem:[#allocation7 + $0x13] sm:$0x1]
        %v589 = vlaneseq
        %v590 = vshrl.u32 %v589, 7
        %v591 = vsub.s32 0, %v590
        %v592 = vrot.slane %v588, %v591
        %v593 = vmul.f32 %v586, %v592
        %v594 = vmul.f32 %v587, %v592
        %v595 = vadd.f32 %v545, %v593
        %v596 = vadd.f32 %v546, %v594
        %v597 = vld [vmem:[#allocation2 + $0xa] sm:$0xff]
        %v598 = vld [vmem:[#allocation2 + $0x12] sm:$0xff]
        %v599 = vld [vmem:[#allocation7 + $0x18] sm:$0x1]
        %v600 = vlaneseq
        %v601 = vshrl.u32 %v600, 7
        %v602 = vsub.s32 0, %v601
        %v603 = vrot.slane %v599, %v602
        %v604 = vmul.f32 %v597, %v603
        %v605 = vmul.f32 %v598, %v603
        %v606 = vadd.f32 %v562, %v604
        %v607 = vadd.f32 %v563, %v605
        %v608 = vadd.f32 %v606, %v573
        %v609 = vadd.f32 %v607, %v574
        %v610 = vadd.f32 %v584, %v595
        %v611 = vadd.f32 %v585, %v596
        %v612 = vadd.f32 %v608, %v610
        %v613 = vadd.f32 %v609, %v611
        %v614 = vmax.f32 %v612, 0.0
        %v615 = vmax.f32 %v613, 0.0
        %v616 = vld [vmem:[#allocation7 + $0x23] sm:$0x1]
        %v617 = vlaneseq
        %v618 = vshrl.u32 %v617, 7
        %v619 = vsub.s32 0, %v618
        %v620 = vrot.slane %v616, %v619
        %v621 = vadd.f32 %v614, %v620
        %v622 = vadd.f32 %v615, %v620
        %623 = vrot.lane.b32.xlu0 %v614, 8
        %v624 = vpop.permute.xlu0 %623
        %625 = vrot.lane.b32.xlu0 %v615, 8
        %v626 = vpop.permute.xlu0 %625
        %627 = vst [vmem:[#allocation2 + $0x8] sm:$0xff] %v624
        %628 = vst [vmem:[#allocation2 + $0x10] sm:$0xff] %v626
        %v629 = vld [vmem:[#allocation2 + $0x7] sm:$0xff]
        %v630 = vld [vmem:[#allocation2 + $0xf] sm:$0xff]
        %v631 = vld [vmem:[#allocation7 + $0x19] sm:$0x1]
        %v632 = vlaneseq
        %v633 = vshrl.u32 %v632, 7
        %v634 = vsub.s32 0, %v633
        %v635 = vrot.slane %v631, %v634
        %v636 = vmul.f32 %v629, %v635
        %v637 = vmul.f32 %v630, %v635
        %v638 = vadd.f32 %v621, %v636
        %v639 = vadd.f32 %v622, %v637
        %v640 = vld [vmem:[#allocation2 + $0x8] sm:$0xff]
        %v641 = vld [vmem:[#allocation2 + $0x10] sm:$0xff]
        %v642 = vld [vmem:[#allocation7 + $0x1c] sm:$0x1]
        %v643 = vlaneseq
        %v644 = vshrl.u32 %v643, 7
        %v645 = vsub.s32 0, %v644
        %v646 = vrot.slane %v642, %v645
        %v647 = vmul.f32 %v640, %v646
        %v648 = vmul.f32 %v641, %v646
        %v649 = vld [vmem:[#allocation2 + $0x9] sm:$0xff]
        %v650 = vld [vmem:[#allocation2 + $0x11] sm:$0xff]
        %v651 = vld [vmem:[#allocation7 + $0x1f] sm:$0x1]
        %v652 = vlaneseq
        %v653 = vshrl.u32 %v652, 7
        %v654 = vsub.s32 0, %v653
        %v655 = vrot.slane %v651, %v654
        %v656 = vmul.f32 %v649, %v655
        %v657 = vmul.f32 %v650, %v655
        %658 = vst [vmem:[#allocation2 + $0x8] sm:$0xff] %v614
        %659 = vst [vmem:[#allocation2 + $0x10] sm:$0xff] %v615
        %v660 = vld [vmem:[#allocation2 + $0x7] sm:$0xff]
        %v661 = vld [vmem:[#allocation2 + $0xf] sm:$0xff]
        %v662 = vld [vmem:[#allocation7 + $0x1a] sm:$0x1]
        %v663 = vlaneseq
        %v664 = vshrl.u32 %v663, 7
        %v665 = vsub.s32 0, %v664
        %v666 = vrot.slane %v662, %v665
        %v667 = vmul.f32 %v660, %v666
        %v668 = vmul.f32 %v661, %v666
        %v669 = vld [vmem:[#allocation2 + $0x8] sm:$0xff]
        %v670 = vld [vmem:[#allocation2 + $0x10] sm:$0xff]
        %v671 = vld [vmem:[#allocation7 + $0x1d] sm:$0x1]
        %v672 = vlaneseq
        %v673 = vshrl.u32 %v672, 7
        %v674 = vsub.s32 0, %v673
        %v675 = vrot.slane %v671, %v674
        %v676 = vmul.f32 %v669, %v675
        %v677 = vmul.f32 %v670, %v675
        %v678 = vadd.f32 %v638, %v676
        %v679 = vadd.f32 %v639, %v677
        %v680 = vld [vmem:[#allocation2 + $0x9] sm:$0xff]
        %v681 = vld [vmem:[#allocation2 + $0x11] sm:$0xff]
        %v682 = vld [vmem:[#allocation7 + $0x20] sm:$0x1]
        %v683 = vlaneseq
        %v684 = vshrl.u32 %v683, 7
        %v685 = vsub.s32 0, %v684
        %v686 = vrot.slane %v682, %v685
        %v687 = vmul.f32 %v680, %v686
        %v688 = vmul.f32 %v681, %v686
        %v689 = vadd.f32 %v647, %v687
        %v690 = vadd.f32 %v648, %v688
        %691 = vrot.lane.b32.xlu0 %v614, 120
        %v692 = vpop.permute.xlu0 %691
        %693 = vrot.lane.b32.xlu0 %v615, 120
        %v694 = vpop.permute.xlu0 %693
        %695 = vst [vmem:[#allocation2 + $0x8] sm:$0xff] %v692
        %696 = vst [vmem:[#allocation2 + $0x10] sm:$0xff] %v694
        %v697 = vld [vmem:[#allocation2 + $0x7] sm:$0xff]
        %v698 = vld [vmem:[#allocation2 + $0xf] sm:$0xff]
        %v699 = vld [vmem:[#allocation7 + $0x1b] sm:$0x1]
        %v700 = vlaneseq
        %v701 = vshrl.u32 %v700, 7
        %v702 = vsub.s32 0, %v701
        %v703 = vrot.slane %v699, %v702
        %v704 = vmul.f32 %v697, %v703
        %v705 = vmul.f32 %v698, %v703
        %v706 = vadd.f32 %v656, %v704
        %v707 = vadd.f32 %v657, %v705
        %v708 = vld [vmem:[#allocation2 + $0x8] sm:$0xff]
        %v709 = vld [vmem:[#allocation2 + $0x10] sm:$0xff]
        %v710 = vld [vmem:[#allocation7 + $0x1e] sm:$0x1]
        %v711 = vlaneseq
        %v712 = vshrl.u32 %v711, 7
        %v713 = vsub.s32 0, %v712
        %v714 = vrot.slane %v710, %v713
        %v715 = vmul.f32 %v708, %v714
        %v716 = vmul.f32 %v709, %v714
        %v717 = vadd.f32 %v667, %v715
        %v718 = vadd.f32 %v668, %v716
        %v719 = vld [vmem:[#allocation2 + $0x9] sm:$0xff]
        %v720 = vld [vmem:[#allocation2 + $0x11] sm:$0xff]
        %v721 = vld [vmem:[#allocation7 + $0x21] sm:$0x1]
        %v722 = vlaneseq
        %v723 = vshrl.u32 %v722, 7
        %v724 = vsub.s32 0, %v723
        %v725 = vrot.slane %v721, %v724
        %v726 = vmul.f32 %v719, %v725
        %v727 = vmul.f32 %v720, %v725
        %v728 = vadd.f32 %v678, %v726
        %v729 = vadd.f32 %v679, %v727
        %v730 = vadd.f32 %v728, %v689
        %v731 = vadd.f32 %v729, %v690
        %v732 = vadd.f32 %v706, %v717
        %v733 = vadd.f32 %v707, %v718
        %v734 = vadd.f32 %v730, %v732
        %v735 = vadd.f32 %v731, %v733
        %v736 = vld [vmem:[#allocation7 + $0x29] sm:$0x1]
        %v737 = vld [vmem:[#allocation7 + $0x2a] sm:$0x1]
        %v738 = vadd.f32 %v734, %v735
        %v739 = vrot.slane %v738, 4
        %v740 = vadd.f32 %v738, %v739
        %v741 = vrot.slane %v740, 2
        %v742 = vadd.f32 %v740, %v741
        %v743 = vrot.slane %v742, 1
        %v744 = vadd.f32 %v742, %v743
        %v745 = vmul.f32 %v744, %v736
        %vm746 = vcmask 1040384
        %v747 = vsel %vm746, %v745, 0.0
        %748 = vadd.xlane.f32.xlu0 %v747
        %v749 = vpop.xlane.xlu0 %748
        %v750 = vmul.f32 %v749, 0.0009765625
        %v751 = vmul.f32 %v750, %v736
        %v752 = vadd.f32 %v751, 0.0
        %v753 = vmul.f32 %v744, %v737
        %v754 = vsel %vm746, %v753, 0.0
        %755 = vadd.xlane.f32.xlu0 %v754
        %v756 = vpop.xlane.xlu0 %755
        %v757 = vmul.f32 %v756, 0.0009765625
        %v758 = vmul.f32 %v757, %v737
        %v759 = vadd.f32 %v752, %v758
        %v760 = vlaneseq
        %v761 = vshrl.u32 %v760, 7
        %v762 = vsub.s32 0, %v761
        %v763 = vrot.slane %v759, %v762
        %v764 = vsub.f32 %v734, %v763
        %v765 = vsub.f32 %v735, %v763
        %v766 = vmul.f32 %v764, %v764
        %v767 = vmul.f32 %v765, %v765
        %v768 = vadd.f32 %v766, %v767
        %v769 = vrot.slane %v768, 4
        %v770 = vadd.f32 %v768, %v769
        %v771 = vrot.slane %v770, 2
        %v772 = vadd.f32 %v770, %v771
        %v773 = vrot.slane %v772, 1
        %v774 = vadd.f32 %v772, %v773
        %v775 = vmul.f32 %v774, %v736
        %v776 = vsel %vm746, %v775, 0.0
        %777 = vadd.xlane.f32.xlu0 %v776
        %v778 = vpop.xlane.xlu0 %777
        %v779 = vmul.f32 %v778, 0.0009765625
        %v780 = vmul.f32 %v779, %v736
        %v781 = vadd.f32 %v780, 0.0
        %v782 = vmul.f32 %v774, %v737
        %v783 = vsel %vm746, %v782, 0.0
        %784 = vadd.xlane.f32.xlu0 %v783
        %v785 = vpop.xlane.xlu0 %784
        %v786 = vmul.f32 %v785, 0.0009765625
        %v787 = vmul.f32 %v786, %v737
        %v788 = vadd.f32 %v781, %v787
        %v789 = vld [vmem:[#allocation7 + $0x25] sm:$0x1]
        %v790 = vld [vmem:[#allocation7 + $0x26] sm:$0x1]
        %v791 = vadd.f32 %v788, 1e-05
        %v792 = vrsqrt.pop %v791
        %v793 = vlaneseq
        %v794 = vshrl.u32 %v793, 7
        %v795 = vsub.s32 0, %v794
        %v796 = vrot.slane %v792, %v795
        %v797 = vmul.f32 %v764, %v796
        %v798 = vmul.f32 %v765, %v796
        %v799 = vlaneseq
        %v800 = vshrl.u32 %v799, 7
        %v801 = vsub.s32 0, %v800
        %v802 = vrot.slane %v789, %v801
        %v803 = vmul.f32 %v797, %v802
        %v804 = vmul.f32 %v798, %v802
        %v805 = vlaneseq
        %v806 = vshrl.u32 %v805, 7
        %v807 = vsub.s32 0, %v806
        %v808 = vrot.slane %v790, %v807
        %v809 = vadd.f32 %v803, %v808
        %v810 = vadd.f32 %v804, %v808
        %v811 = vmax.f32 %v809, 0.0
        %v812 = vmax.f32 %v810, 0.0
        %813 = vst [vmem:[#allocation3] sm:$0xff] %v811
        %814 = vst [vmem:[#allocation3 + $0x8] sm:$0xff] %v812
        %v815 = vld [vmem:[%s256 + $0x10] sm:$0xff]
        %v816 = vld [vmem:[%s256 + $0x18] sm:$0xff]
        %v817 = vld [vmem:[#allocation7 + $0x22] sm:$0x1]
        %v818 = vlaneseq
        %v819 = vshrl.u32 %v818, 7
        %v820 = vsub.s32 0, %v819
        %v821 = vrot.slane %v817, %v820
        %v822 = vadd.f32 %v815, %v821
        %v823 = vadd.f32 %v816, %v821
        %824 = vrot.lane.b32.xlu0 %v815, 16
        %v825 = vpop.permute.xlu0 %824
        %826 = vrot.lane.b32.xlu0 %v816, 16
        %v827 = vpop.permute.xlu0 %826
        %828 = vst [vmem:[#allocation2 + $0x8] sm:$0xff] %v825
        %829 = vst [vmem:[#allocation2 + $0x10] sm:$0xff] %v827
        %v830 = vld [vmem:[#allocation2 + $0x6] sm:$0xff]
        %v831 = vld [vmem:[#allocation2 + $0xe] sm:$0xff]
        %v832 = vld [vmem:[#allocation7] sm:$0x1]
        %v833 = vlaneseq
        %v834 = vshrl.u32 %v833, 7
        %v835 = vsub.s32 0, %v834
        %v836 = vrot.slane %v832, %v835
        %v837 = vmul.f32 %v830, %v836
        %v838 = vmul.f32 %v831, %v836
        %v839 = vadd.f32 %v822, %v837
        %v840 = vadd.f32 %v823, %v838
        %v841 = vld [vmem:[#allocation2 + $0x7] sm:$0xff]
        %v842 = vld [vmem:[#allocation2 + $0xf] sm:$0xff]
        %v843 = vld [vmem:[#allocation7 + $0x5] sm:$0x1]
        %v844 = vlaneseq
        %v845 = vshrl.u32 %v844, 7
        %v846 = vsub.s32 0, %v845
        %v847 = vrot.slane %v843, %v846
        %v848 = vmul.f32 %v841, %v847
        %v849 = vmul.f32 %v842, %v847
        %v850 = vld [vmem:[#allocation2 + $0x8] sm:$0xff]
        %v851 = vld [vmem:[#allocation2 + $0x10] sm:$0xff]
        %v852 = vld [vmem:[#allocation7 + $0xa] sm:$0x1]
        %v853 = vlaneseq
        %v854 = vshrl.u32 %v853, 7
        %v855 = vsub.s32 0, %v854
        %v856 = vrot.slane %v852, %v855
        %v857 = vmul.f32 %v850, %v856
        %v858 = vmul.f32 %v851, %v856
        %v859 = vld [vmem:[#allocation2 + $0x9] sm:$0xff]
        %v860 = vld [vmem:[#allocation2 + $0x11] sm:$0xff]
        %v861 = vld [vmem:[#allocation7 + $0xf] sm:$0x1]
        %v862 = vlaneseq
        %v863 = vshrl.u32 %v862, 7
        %v864 = vsub.s32 0, %v863
        %v865 = vrot.slane %v861, %v864
        %v866 = vmul.f32 %v859, %v865
        %v867 = vmul.f32 %v860, %v865
        %v868 = vld [vmem:[#allocation2 + $0xa] sm:$0xff]
        %v869 = vld [vmem:[#allocation2 + $0x12] sm:$0xff]
        %v870 = vld [vmem:[#allocation7 + $0x14] sm:$0x1]
        %v871 = vlaneseq
        %v872 = vshrl.u32 %v871, 7
        %v873 = vsub.s32 0, %v872
        %v874 = vrot.slane %v870, %v873
        %v875 = vmul.f32 %v868, %v874
        %v876 = vmul.f32 %v869, %v874
        %v877 = vadd.f32 %v839, %v875
        %v878 = vadd.f32 %v840, %v876
        %879 = vrot.lane.b32.xlu0 %v815, 8
        %v880 = vpop.permute.xlu0 %879
        %881 = vrot.lane.b32.xlu0 %v816, 8
        %v882 = vpop.permute.xlu0 %881
        %883 = vst [vmem:[#allocation2 + $0x8] sm:$0xff] %v880
        %884 = vst [vmem:[#allocation2 + $0x10] sm:$0xff] %v882
        %v885 = vld [vmem:[#allocation2 + $0x6] sm:$0xff]
        %v886 = vld [vmem:[#allocation2 + $0xe] sm:$0xff]
        %v887 = vld [vmem:[#allocation7 + $0x1] sm:$0x1]
        %v888 = vlaneseq
        %v889 = vshrl.u32 %v888, 7
        %v890 = vsub.s32 0, %v889
        %v891 = vrot.slane %v887, %v890
        %v892 = vmul.f32 %v885, %v891
        %v893 = vmul.f32 %v886, %v891
        %v894 = vadd.f32 %v848, %v892
        %v895 = vadd.f32 %v849, %v893
        %v896 = vld [vmem:[#allocation2 + $0x7] sm:$0xff]
        %v897 = vld [vmem:[#allocation2 + $0xf] sm:$0xff]
        %v898 = vld [vmem:[#allocation7 + $0x6] sm:$0x1]
        %v899 = vlaneseq
        %v900 = vshrl.u32 %v899, 7
        %v901 = vsub.s32 0, %v900
        %v902 = vrot.slane %v898, %v901
        %v903 = vmul.f32 %v896, %v902
        %v904 = vmul.f32 %v897, %v902
        %v905 = vadd.f32 %v857, %v903
        %v906 = vadd.f32 %v858, %v904
        %v907 = vld [vmem:[#allocation2 + $0x8] sm:$0xff]
        %v908 = vld [vmem:[#allocation2 + $0x10] sm:$0xff]
        %v909 = vld [vmem:[#allocation7 + $0xb] sm:$0x1]
        %v910 = vlaneseq
        %v911 = vshrl.u32 %v910, 7
        %v912 = vsub.s32 0, %v911
        %v913 = vrot.slane %v909, %v912
        %v914 = vmul.f32 %v907, %v913
        %v915 = vmul.f32 %v908, %v913
        %v916 = vadd.f32 %v866, %v914
        %v917 = vadd.f32 %v867, %v915
        %v918 = vld [vmem:[#allocation2 + $0x9] sm:$0xff]
        %v919 = vld [vmem:[#allocation2 + $0x11] sm:$0xff]
        %v920 = vld [vmem:[#allocation7 + $0x10] sm:$0x1]
        %v921 = vlaneseq
        %v922 = vshrl.u32 %v921, 7
        %v923 = vsub.s32 0, %v922
        %v924 = vrot.slane %v920, %v923
        %v925 = vmul.f32 %v918, %v924
        %v926 = vmul.f32 %v919, %v924
        %v927 = vadd.f32 %v877, %v925
        %v928 = vadd.f32 %v878, %v926
        %v929 = vld [vmem:[#allocation2 + $0xa] sm:$0xff]
        %v930 = vld [vmem:[#allocation2 + $0x12] sm:$0xff]
        %v931 = vld [vmem:[#allocation7 + $0x15] sm:$0x1]
        %v932 = vlaneseq
        %v933 = vshrl.u32 %v932, 7
        %v934 = vsub.s32 0, %v933
        %v935 = vrot.slane %v931, %v934
        %v936 = vmul.f32 %v929, %v935
        %v937 = vmul.f32 %v930, %v935
        %v938 = vadd.f32 %v894, %v936
        %v939 = vadd.f32 %v895, %v937
        %940 = vst [vmem:[#allocation2 + $0x8] sm:$0xff] %v815
        %941 = vst [vmem:[#allocation2 + $0x10] sm:$0xff] %v816
        %v942 = vld [vmem:[#allocation2 + $0x6] sm:$0xff]
        %v943 = vld [vmem:[#allocation2 + $0xe] sm:$0xff]
        %v944 = vld [vmem:[#allocation7 + $0x2] sm:$0x1]
        %v945 = vlaneseq
        %v946 = vshrl.u32 %v945, 7
        %v947 = vsub.s32 0, %v946
        %v948 = vrot.slane %v944, %v947
        %v949 = vmul.f32 %v942, %v948
        %v950 = vmul.f32 %v943, %v948
        %v951 = vadd.f32 %v905, %v949
        %v952 = vadd.f32 %v906, %v950
        %v953 = vld [vmem:[#allocation2 + $0x7] sm:$0xff]
        %v954 = vld [vmem:[#allocation2 + $0xf] sm:$0xff]
        %v955 = vld [vmem:[#allocation7 + $0x7] sm:$0x1]
        %v956 = vlaneseq
        %v957 = vshrl.u32 %v956, 7
        %v958 = vsub.s32 0, %v957
        %v959 = vrot.slane %v955, %v958
        %v960 = vmul.f32 %v953, %v959
        %v961 = vmul.f32 %v954, %v959
        %v962 = vadd.f32 %v916, %v960
        %v963 = vadd.f32 %v917, %v961
        %v964 = vld [vmem:[#allocation2 + $0x8] sm:$0xff]
        %v965 = vld [vmem:[#allocation2 + $0x10] sm:$0xff]
        %v966 = vld [vmem:[#allocation7 + $0xc] sm:$0x1]
        %v967 = vlaneseq
        %v968 = vshrl.u32 %v967, 7
        %v969 = vsub.s32 0, %v968
        %v970 = vrot.slane %v966, %v969
        %v971 = vmul.f32 %v964, %v970
        %v972 = vmul.f32 %v965, %v970
        %v973 = vadd.f32 %v927, %v971
        %v974 = vadd.f32 %v928, %v972
        %v975 = vld [vmem:[#allocation2 + $0x9] sm:$0xff]
        %v976 = vld [vmem:[#allocation2 + $0x11] sm:$0xff]
        %v977 = vld [vmem:[#allocation7 + $0x11] sm:$0x1]
        %v978 = vlaneseq
        %v979 = vshrl.u32 %v978, 7
        %v980 = vsub.s32 0, %v979
        %v981 = vrot.slane %v977, %v980
        %v982 = vmul.f32 %v975, %v981
        %v983 = vmul.f32 %v976, %v981
        %v984 = vadd.f32 %v938, %v982
        %v985 = vadd.f32 %v939, %v983
        %v986 = vld [vmem:[#allocation2 + $0xa] sm:$0xff]
        %v987 = vld [vmem:[#allocation2 + $0x12] sm:$0xff]
        %v988 = vld [vmem:[#allocation7 + $0x16] sm:$0x1]
        %v989 = vlaneseq
        %v990 = vshrl.u32 %v989, 7
        %v991 = vsub.s32 0, %v990
        %v992 = vrot.slane %v988, %v991
        %v993 = vmul.f32 %v986, %v992
        %v994 = vmul.f32 %v987, %v992
        %v995 = vadd.f32 %v951, %v993
        %v996 = vadd.f32 %v952, %v994
        %997 = vrot.lane.b32.xlu0 %v815, 120
        %v998 = vpop.permute.xlu0 %997
        %999 = vrot.lane.b32.xlu0 %v816, 120
        %v1000 = vpop.permute.xlu0 %999
        %1001 = vst [vmem:[#allocation2 + $0x8] sm:$0xff] %v998
        %1002 = vst [vmem:[#allocation2 + $0x10] sm:$0xff] %v1000
        %v1003 = vld [vmem:[#allocation2 + $0x6] sm:$0xff]
        %v1004 = vld [vmem:[#allocation2 + $0xe] sm:$0xff]
        %v1005 = vld [vmem:[#allocation7 + $0x3] sm:$0x1]
        %v1006 = vlaneseq
        %v1007 = vshrl.u32 %v1006, 7
        %v1008 = vsub.s32 0, %v1007
        %v1009 = vrot.slane %v1005, %v1008
        %v1010 = vmul.f32 %v1003, %v1009
        %v1011 = vmul.f32 %v1004, %v1009
        %v1012 = vadd.f32 %v962, %v1010
        %v1013 = vadd.f32 %v963, %v1011
        %v1014 = vld [vmem:[#allocation2 + $0x7] sm:$0xff]
        %v1015 = vld [vmem:[#allocation2 + $0xf] sm:$0xff]
        %v1016 = vld [vmem:[#allocation7 + $0x8] sm:$0x1]
        %v1017 = vlaneseq
        %v1018 = vshrl.u32 %v1017, 7
        %v1019 = vsub.s32 0, %v1018
        %v1020 = vrot.slane %v1016, %v1019
        %v1021 = vmul.f32 %v1014, %v1020
        %v1022 = vmul.f32 %v1015, %v1020
        %v1023 = vadd.f32 %v973, %v1021
        %v1024 = vadd.f32 %v974, %v1022
        %v1025 = vld [vmem:[#allocation2 + $0x8] sm:$0xff]
        %v1026 = vld [vmem:[#allocation2 + $0x10] sm:$0xff]
        %v1027 = vld [vmem:[#allocation7 + $0xd] sm:$0x1]
        %v1028 = vlaneseq
        %v1029 = vshrl.u32 %v1028, 7
        %v1030 = vsub.s32 0, %v1029
        %v1031 = vrot.slane %v1027, %v1030
        %v1032 = vmul.f32 %v1025, %v1031
        %v1033 = vmul.f32 %v1026, %v1031
        %v1034 = vadd.f32 %v984, %v1032
        %v1035 = vadd.f32 %v985, %v1033
        %v1036 = vld [vmem:[#allocation2 + $0x9] sm:$0xff]
        %v1037 = vld [vmem:[#allocation2 + $0x11] sm:$0xff]
        %v1038 = vld [vmem:[#allocation7 + $0x12] sm:$0x1]
        %v1039 = vlaneseq
        %v1040 = vshrl.u32 %v1039, 7
        %v1041 = vsub.s32 0, %v1040
        %v1042 = vrot.slane %v1038, %v1041
        %v1043 = vmul.f32 %v1036, %v1042
        %v1044 = vmul.f32 %v1037, %v1042
        %v1045 = vadd.f32 %v995, %v1043
        %v1046 = vadd.f32 %v996, %v1044
        %v1047 = vld [vmem:[#allocation2 + $0xa] sm:$0xff]
        %v1048 = vld [vmem:[#allocation2 + $0x12] sm:$0xff]
        %v1049 = vld [vmem:[#allocation7 + $0x17] sm:$0x1]
        %v1050 = vlaneseq
        %v1051 = vshrl.u32 %v1050, 7
        %v1052 = vsub.s32 0, %v1051
        %v1053 = vrot.slane %v1049, %v1052
        %v1054 = vmul.f32 %v1047, %v1053
        %v1055 = vmul.f32 %v1048, %v1053
        %v1056 = vadd.f32 %v1012, %v1054
        %v1057 = vadd.f32 %v1013, %v1055
        %1058 = vrot.lane.b32.xlu0 %v815, 112
        %v1059 = vpop.permute.xlu0 %1058
        %1060 = vrot.lane.b32.xlu0 %v816, 112
        %v1061 = vpop.permute.xlu0 %1060
        %1062 = vst [vmem:[#allocation2 + $0x8] sm:$0xff] %v1059
        %1063 = vst [vmem:[#allocation2 + $0x10] sm:$0xff] %v1061
        %v1064 = vld [vmem:[#allocation2 + $0x6] sm:$0xff]
        %v1065 = vld [vmem:[#allocation2 + $0xe] sm:$0xff]
        %v1066 = vld [vmem:[#allocation7 + $0x4] sm:$0x1]
        %v1067 = vlaneseq
        %v1068 = vshrl.u32 %v1067, 7
        %v1069 = vsub.s32 0, %v1068
        %v1070 = vrot.slane %v1066, %v1069
        %v1071 = vmul.f32 %v1064, %v1070
        %v1072 = vmul.f32 %v1065, %v1070
        %v1073 = vadd.f32 %v1023, %v1071
        %v1074 = vadd.f32 %v1024, %v1072
        %v1075 = vld [vmem:[#allocation2 + $0x7] sm:$0xff]
        %v1076 = vld [vmem:[#allocation2 + $0xf] sm:$0xff]
        %v1077 = vld [vmem:[#allocation7 + $0x9] sm:$0x1]
        %v1078 = vlaneseq
        %v1079 = vshrl.u32 %v1078, 7
        %v1080 = vsub.s32 0, %v1079
        %v1081 = vrot.slane %v1077, %v1080
        %v1082 = vmul.f32 %v1075, %v1081
        %v1083 = vmul.f32 %v1076, %v1081
        %v1084 = vadd.f32 %v1034, %v1082
        %v1085 = vadd.f32 %v1035, %v1083
        %v1086 = vld [vmem:[#allocation2 + $0x8] sm:$0xff]
        %v1087 = vld [vmem:[#allocation2 + $0x10] sm:$0xff]
        %v1088 = vld [vmem:[#allocation7 + $0xe] sm:$0x1]
        %v1089 = vlaneseq
        %v1090 = vshrl.u32 %v1089, 7
        %v1091 = vsub.s32 0, %v1090
        %v1092 = vrot.slane %v1088, %v1091
        %v1093 = vmul.f32 %v1086, %v1092
        %v1094 = vmul.f32 %v1087, %v1092
        %v1095 = vadd.f32 %v1045, %v1093
        %v1096 = vadd.f32 %v1046, %v1094
        %v1097 = vld [vmem:[#allocation2 + $0x9] sm:$0xff]
        %v1098 = vld [vmem:[#allocation2 + $0x11] sm:$0xff]
        %v1099 = vld [vmem:[#allocation7 + $0x13] sm:$0x1]
        %v1100 = vlaneseq
        %v1101 = vshrl.u32 %v1100, 7
        %v1102 = vsub.s32 0, %v1101
        %v1103 = vrot.slane %v1099, %v1102
        %v1104 = vmul.f32 %v1097, %v1103
        %v1105 = vmul.f32 %v1098, %v1103
        %v1106 = vadd.f32 %v1056, %v1104
        %v1107 = vadd.f32 %v1057, %v1105
        %v1108 = vld [vmem:[#allocation2 + $0xa] sm:$0xff]
        %v1109 = vld [vmem:[#allocation2 + $0x12] sm:$0xff]
        %v1110 = vld [vmem:[#allocation7 + $0x18] sm:$0x1]
        %v1111 = vlaneseq
        %v1112 = vshrl.u32 %v1111, 7
        %v1113 = vsub.s32 0, %v1112
        %v1114 = vrot.slane %v1110, %v1113
        %v1115 = vmul.f32 %v1108, %v1114
        %v1116 = vmul.f32 %v1109, %v1114
        %v1117 = vadd.f32 %v1073, %v1115
        %v1118 = vadd.f32 %v1074, %v1116
        %v1119 = vadd.f32 %v1117, %v1084
        %v1120 = vadd.f32 %v1118, %v1085
        %v1121 = vadd.f32 %v1095, %v1106
        %v1122 = vadd.f32 %v1096, %v1107
        %v1123 = vadd.f32 %v1119, %v1121
        %v1124 = vadd.f32 %v1120, %v1122
        %v1125 = vmax.f32 %v1123, 0.0
        %v1126 = vmax.f32 %v1124, 0.0
        %v1127 = vld [vmem:[#allocation7 + $0x23] sm:$0x1]
        %v1128 = vlaneseq
        %v1129 = vshrl.u32 %v1128, 7
        %v1130 = vsub.s32 0, %v1129
        %v1131 = vrot.slane %v1127, %v1130
        %v1132 = vadd.f32 %v1125, %v1131
        %v1133 = vadd.f32 %v1126, %v1131
        %1134 = vrot.lane.b32.xlu0 %v1125, 8
        %v1135 = vpop.permute.xlu0 %1134
        %1136 = vrot.lane.b32.xlu0 %v1126, 8
        %v1137 = vpop.permute.xlu0 %1136
        %1138 = vst [vmem:[#allocation2 + $0x8] sm:$0xff] %v1135
        %1139 = vst [vmem:[#allocation2 + $0x10] sm:$0xff] %v1137
        %v1140 = vld [vmem:[#allocation2 + $0x7] sm:$0xff]
        %v1141 = vld [vmem:[#allocation2 + $0xf] sm:$0xff]
        %v1142 = vld [vmem:[#allocation7 + $0x19] sm:$0x1]
        %v1143 = vlaneseq
        %v1144 = vshrl.u32 %v1143, 7
        %v1145 = vsub.s32 0, %v1144
        %v1146 = vrot.slane %v1142, %v1145
        %v1147 = vmul.f32 %v1140, %v1146
        %v1148 = vmul.f32 %v1141, %v1146
        %v1149 = vadd.f32 %v1132, %v1147
        %v1150 = vadd.f32 %v1133, %v1148
        %v1151 = vld [vmem:[#allocation2 + $0x8] sm:$0xff]
        %v1152 = vld [vmem:[#allocation2 + $0x10] sm:$0xff]
        %v1153 = vld [vmem:[#allocation7 + $0x1c] sm:$0x1]
        %v1154 = vlaneseq
        %v1155 = vshrl.u32 %v1154, 7
        %v1156 = vsub.s32 0, %v1155
        %v1157 = vrot.slane %v1153, %v1156
        %v1158 = vmul.f32 %v1151, %v1157
        %v1159 = vmul.f32 %v1152, %v1157
        %v1160 = vld [vmem:[#allocation2 + $0x9] sm:$0xff]
        %v1161 = vld [vmem:[#allocation2 + $0x11] sm:$0xff]
        %v1162 = vld [vmem:[#allocation7 + $0x1f] sm:$0x1]
        %v1163 = vlaneseq
        %v1164 = vshrl.u32 %v1163, 7
        %v1165 = vsub.s32 0, %v1164
        %v1166 = vrot.slane %v1162, %v1165
        %v1167 = vmul.f32 %v1160, %v1166
        %v1168 = vmul.f32 %v1161, %v1166
        %1169 = vst [vmem:[#allocation2 + $0x8] sm:$0xff] %v1125
        %1170 = vst [vmem:[#allocation2 + $0x10] sm:$0xff] %v1126
        %v1171 = vld [vmem:[#allocation2 + $0x7] sm:$0xff]
        %v1172 = vld [vmem:[#allocation2 + $0xf] sm:$0xff]
        %v1173 = vld [vmem:[#allocation7 + $0x1a] sm:$0x1]
        %v1174 = vlaneseq
        %v1175 = vshrl.u32 %v1174, 7
        %v1176 = vsub.s32 0, %v1175
        %v1177 = vrot.slane %v1173, %v1176
        %v1178 = vmul.f32 %v1171, %v1177
        %v1179 = vmul.f32 %v1172, %v1177
        %v1180 = vld [vmem:[#allocation2 + $0x8] sm:$0xff]
        %v1181 = vld [vmem:[#allocation2 + $0x10] sm:$0xff]
        %v1182 = vld [vmem:[#allocation7 + $0x1d] sm:$0x1]
        %v1183 = vlaneseq
        %v1184 = vshrl.u32 %v1183, 7
        %v1185 = vsub.s32 0, %v1184
        %v1186 = vrot.slane %v1182, %v1185
        %v1187 = vmul.f32 %v1180, %v1186
        %v1188 = vmul.f32 %v1181, %v1186
        %v1189 = vadd.f32 %v1149, %v1187
        %v1190 = vadd.f32 %v1150, %v1188
        %v1191 = vld [vmem:[#allocation2 + $0x9] sm:$0xff]
        %v1192 = vld [vmem:[#allocation2 + $0x11] sm:$0xff]
        %v1193 = vld [vmem:[#allocation7 + $0x20] sm:$0x1]
        %v1194 = vlaneseq
        %v1195 = vshrl.u32 %v1194, 7
        %v1196 = vsub.s32 0, %v1195
        %v1197 = vrot.slane %v1193, %v1196
        %v1198 = vmul.f32 %v1191, %v1197
        %v1199 = vmul.f32 %v1192, %v1197
        %v1200 = vadd.f32 %v1158, %v1198
        %v1201 = vadd.f32 %v1159, %v1199
        %1202 = vrot.lane.b32.xlu0 %v1125, 120
        %v1203 = vpop.permute.xlu0 %1202
        %1204 = vrot.lane.b32.xlu0 %v1126, 120
        %v1205 = vpop.permute.xlu0 %1204
        %1206 = vst [vmem:[#allocation2 + $0x8] sm:$0xff] %v1203
        %1207 = vst [vmem:[#allocation2 + $0x10] sm:$0xff] %v1205
        %v1208 = vld [vmem:[#allocation2 + $0x7] sm:$0xff]
        %v1209 = vld [vmem:[#allocation2 + $0xf] sm:$0xff]
        %v1210 = vld [vmem:[#allocation7 + $0x1b] sm:$0x1]
        %v1211 = vlaneseq
        %v1212 = vshrl.u32 %v1211, 7
        %v1213 = vsub.s32 0, %v1212
        %v1214 = vrot.slane %v1210, %v1213
        %v1215 = vmul.f32 %v1208, %v1214
        %v1216 = vmul.f32 %v1209, %v1214
        %v1217 = vadd.f32 %v1167, %v1215
        %v1218 = vadd.f32 %v1168, %v1216
        %v1219 = vld [vmem:[#allocation2 + $0x8] sm:$0xff]
        %v1220 = vld [vmem:[#allocation2 + $0x10] sm:$0xff]
        %v1221 = vld [vmem:[#allocation7 + $0x1e] sm:$0x1]
        %v1222 = vlaneseq
        %v1223 = vshrl.u32 %v1222, 7
        %v1224 = vsub.s32 0, %v1223
        %v1225 = vrot.slane %v1221, %v1224
        %v1226 = vmul.f32 %v1219, %v1225
        %v1227 = vmul.f32 %v1220, %v1225
        %v1228 = vadd.f32 %v1178, %v1226
        %v1229 = vadd.f32 %v1179, %v1227
        %v1230 = vld [vmem:[#allocation2 + $0x9] sm:$0xff]
        %v1231 = vld [vmem:[#allocation2 + $0x11] sm:$0xff]
        %v1232 = vld [vmem:[#allocation7 + $0x21] sm:$0x1]
        %v1233 = vlaneseq
        %v1234 = vshrl.u32 %v1233, 7
        %v1235 = vsub.s32 0, %v1234
        %v1236 = vrot.slane %v1232, %v1235
        %v1237 = vmul.f32 %v1230, %v1236
        %v1238 = vmul.f32 %v1231, %v1236
        %v1239 = vadd.f32 %v1189, %v1237
        %v1240 = vadd.f32 %v1190, %v1238
        %v1241 = vadd.f32 %v1239, %v1200
        %v1242 = vadd.f32 %v1240, %v1201
        %v1243 = vadd.f32 %v1217, %v1228
        %v1244 = vadd.f32 %v1218, %v1229
        %v1245 = vadd.f32 %v1241, %v1243
        %v1246 = vadd.f32 %v1242, %v1244
        %v1247 = vld [vmem:[#allocation7 + $0x29] sm:$0x1]
        %v1248 = vld [vmem:[#allocation7 + $0x2a] sm:$0x1]
        %v1249 = vadd.f32 %v1245, %v1246
        %v1250 = vrot.slane %v1249, 4
        %v1251 = vadd.f32 %v1249, %v1250
        %v1252 = vrot.slane %v1251, 2
        %v1253 = vadd.f32 %v1251, %v1252
        %v1254 = vrot.slane %v1253, 1
        %v1255 = vadd.f32 %v1253, %v1254
        %v1256 = vmul.f32 %v1255, %v1247
        %v1257 = vsel %vm746, %v1256, 0.0
        %1258 = vadd.xlane.f32.xlu0 %v1257
        %v1259 = vpop.xlane.xlu0 %1258
        %v1260 = vmul.f32 %v1259, 0.0009765625
        %v1261 = vmul.f32 %v1260, %v1247
        %v1262 = vadd.f32 %v1261, 0.0
        %v1263 = vmul.f32 %v1255, %v1248
        %v1264 = vsel %vm746, %v1263, 0.0
        %1265 = vadd.xlane.f32.xlu0 %v1264
        %v1266 = vpop.xlane.xlu0 %1265
        %v1267 = vmul.f32 %v1266, 0.0009765625
        %v1268 = vmul.f32 %v1267, %v1248
        %v1269 = vadd.f32 %v1262, %v1268
        %v1270 = vlaneseq
        %v1271 = vshrl.u32 %v1270, 7
        %v1272 = vsub.s32 0, %v1271
        %v1273 = vrot.slane %v1269, %v1272
        %v1274 = vsub.f32 %v1245, %v1273
        %v1275 = vsub.f32 %v1246, %v1273
        %v1276 = vmul.f32 %v1274, %v1274
        %v1277 = vmul.f32 %v1275, %v1275
        %v1278 = vadd.f32 %v1276, %v1277
        %v1279 = vrot.slane %v1278, 4
        %v1280 = vadd.f32 %v1278, %v1279
        %v1281 = vrot.slane %v1280, 2
        %v1282 = vadd.f32 %v1280, %v1281
        %v1283 = vrot.slane %v1282, 1
        %v1284 = vadd.f32 %v1282, %v1283
        %v1285 = vmul.f32 %v1284, %v1247
        %v1286 = vsel %vm746, %v1285, 0.0
        %1287 = vadd.xlane.f32.xlu0 %v1286
        %v1288 = vpop.xlane.xlu0 %1287
        %v1289 = vmul.f32 %v1288, 0.0009765625
        %v1290 = vmul.f32 %v1289, %v1247
        %v1291 = vadd.f32 %v1290, 0.0
        %v1292 = vmul.f32 %v1284, %v1248
        %v1293 = vsel %vm746, %v1292, 0.0
        %1294 = vadd.xlane.f32.xlu0 %v1293
        %v1295 = vpop.xlane.xlu0 %1294
        %v1296 = vmul.f32 %v1295, 0.0009765625
        %v1297 = vmul.f32 %v1296, %v1248
        %v1298 = vadd.f32 %v1291, %v1297
        %v1299 = vld [vmem:[#allocation7 + $0x25] sm:$0x1]
        %v1300 = vld [vmem:[#allocation7 + $0x26] sm:$0x1]
        %v1301 = vadd.f32 %v1298, 1e-05
        %v1302 = vrsqrt.pop %v1301
        %v1303 = vlaneseq
        %v1304 = vshrl.u32 %v1303, 7
        %v1305 = vsub.s32 0, %v1304
        %v1306 = vrot.slane %v1302, %v1305
        %v1307 = vmul.f32 %v1274, %v1306
        %v1308 = vmul.f32 %v1275, %v1306
        %v1309 = vlaneseq
        %v1310 = vshrl.u32 %v1309, 7
        %v1311 = vsub.s32 0, %v1310
        %v1312 = vrot.slane %v1299, %v1311
        %v1313 = vmul.f32 %v1307, %v1312
        %v1314 = vmul.f32 %v1308, %v1312
        %v1315 = vlaneseq
        %v1316 = vshrl.u32 %v1315, 7
        %v1317 = vsub.s32 0, %v1316
        %v1318 = vrot.slane %v1300, %v1317
        %v1319 = vadd.f32 %v1313, %v1318
        %v1320 = vadd.f32 %v1314, %v1318
        %v1321 = vmax.f32 %v1319, 0.0
        %v1322 = vmax.f32 %v1320, 0.0
        %1323 = vst [vmem:[#allocation3 + $0x10] sm:$0xff] %v1321
        %1324 = vst [vmem:[#allocation3 + $0x18] sm:$0xff] %v1322
        %v1325 = vld [vmem:[%s256 + $0x20] sm:$0xff]
        %v1326 = vld [vmem:[%s256 + $0x28] sm:$0xff]
        %v1327 = vld [vmem:[#allocation7 + $0x22] sm:$0x1]
        %v1328 = vlaneseq
        %v1329 = vshrl.u32 %v1328, 7
        %v1330 = vsub.s32 0, %v1329
        %v1331 = vrot.slane %v1327, %v1330
        %v1332 = vadd.f32 %v1325, %v1331
        %v1333 = vadd.f32 %v1326, %v1331
        %1334 = vrot.lane.b32.xlu0 %v1325, 16
        %v1335 = vpop.permute.xlu0 %1334
        %1336 = vrot.lane.b32.xlu0 %v1326, 16
        %v1337 = vpop.permute.xlu0 %1336
        %1338 = vst [vmem:[#allocation2 + $0x8] sm:$0xff] %v1335
        %1339 = vst [vmem:[#allocation2 + $0x10] sm:$0xff] %v1337
        %v1340 = vld [vmem:[#allocation2 + $0x6] sm:$0xff]
        %v1341 = vld [vmem:[#allocation2 + $0xe] sm:$0xff]
        %v1342 = vld [vmem:[#allocation7] sm:$0x1]
        %v1343 = vlaneseq
        %v1344 = vshrl.u32 %v1343, 7
        %v1345 = vsub.s32 0, %v1344
        %v1346 = vrot.slane %v1342, %v1345
        %v1347 = vmul.f32 %v1340, %v1346
        %v1348 = vmul.f32 %v1341, %v1346
        %v1349 = vadd.f32 %v1332, %v1347
        %v1350 = vadd.f32 %v1333, %v1348
        %v1351 = vld [vmem:[#allocation2 + $0x7] sm:$0xff]
        %v1352 = vld [vmem:[#allocation2 + $0xf] sm:$0xff]
        %v1353 = vld [vmem:[#allocation7 + $0x5] sm:$0x1]
        %v1354 = vlaneseq
        %v1355 = vshrl.u32 %v1354, 7
        %v1356 = vsub.s32 0, %v1355
        %v1357 = vrot.slane %v1353, %v1356
        %v1358 = vmul.f32 %v1351, %v1357
        %v1359 = vmul.f32 %v1352, %v1357
        %v1360 = vld [vmem:[#allocation2 + $0x8] sm:$0xff]
        %v1361 = vld [vmem:[#allocation2 + $0x10] sm:$0xff]
        %v1362 = vld [vmem:[#allocation7 + $0xa] sm:$0x1]
        %v1363 = vlaneseq
        %v1364 = vshrl.u32 %v1363, 7
        %v1365 = vsub.s32 0, %v1364
        %v1366 = vrot.slane %v1362, %v1365
        %v1367 = vmul.f32 %v1360, %v1366
        %v1368 = vmul.f32 %v1361, %v1366
        %v1369 = vld [vmem:[#allocation2 + $0x9] sm:$0xff]
        %v1370 = vld [vmem:[#allocation2 + $0x11] sm:$0xff]
        %v1371 = vld [vmem:[#allocation7 + $0xf] sm:$0x1]
        %v1372 = vlaneseq
        %v1373 = vshrl.u32 %v1372, 7
        %v1374 = vsub.s32 0, %v1373
        %v1375 = vrot.slane %v1371, %v1374
        %v1376 = vmul.f32 %v1369, %v1375
        %v1377 = vmul.f32 %v1370, %v1375
        %v1378 = vld [vmem:[#allocation2 + $0xa] sm:$0xff]
        %v1379 = vld [vmem:[#allocation2 + $0x12] sm:$0xff]
        %v1380 = vld [vmem:[#allocation7 + $0x14] sm:$0x1]
        %v1381 = vlaneseq
        %v1382 = vshrl.u32 %v1381, 7
        %v1383 = vsub.s32 0, %v1382
        %v1384 = vrot.slane %v1380, %v1383
        %v1385 = vmul.f32 %v1378, %v1384
        %v1386 = vmul.f32 %v1379, %v1384
        %v1387 = vadd.f32 %v1349, %v1385
        %v1388 = vadd.f32 %v1350, %v1386
        %1389 = vrot.lane.b32.xlu0 %v1325, 8
        %v1390 = vpop.permute.xlu0 %1389
        %1391 = vrot.lane.b32.xlu0 %v1326, 8
        %v1392 = vpop.permute.xlu0 %1391
        %1393 = vst [vmem:[#allocation2 + $0x8] sm:$0xff] %v1390
        %1394 = vst [vmem:[#allocation2 + $0x10] sm:$0xff] %v1392
        %v1395 = vld [vmem:[#allocation2 + $0x6] sm:$0xff]
        %v1396 = vld [vmem:[#allocation2 + $0xe] sm:$0xff]
        %v1397 = vld [vmem:[#allocation7 + $0x1] sm:$0x1]
        %v1398 = vlaneseq
        %v1399 = vshrl.u32 %v1398, 7
        %v1400 = vsub.s32 0, %v1399
        %v1401 = vrot.slane %v1397, %v1400
        %v1402 = vmul.f32 %v1395, %v1401
        %v1403 = vmul.f32 %v1396, %v1401
        %v1404 = vadd.f32 %v1358, %v1402
        %v1405 = vadd.f32 %v1359, %v1403
        %v1406 = vld [vmem:[#allocation2 + $0x7] sm:$0xff]
        %v1407 = vld [vmem:[#allocation2 + $0xf] sm:$0xff]
        %v1408 = vld [vmem:[#allocation7 + $0x6] sm:$0x1]
        %v1409 = vlaneseq
        %v1410 = vshrl.u32 %v1409, 7
        %v1411 = vsub.s32 0, %v1410
        %v1412 = vrot.slane %v1408, %v1411
        %v1413 = vmul.f32 %v1406, %v1412
        %v1414 = vmul.f32 %v1407, %v1412
        %v1415 = vadd.f32 %v1367, %v1413
        %v1416 = vadd.f32 %v1368, %v1414
        %v1417 = vld [vmem:[#allocation2 + $0x8] sm:$0xff]
        %v1418 = vld [vmem:[#allocation2 + $0x10] sm:$0xff]
        %v1419 = vld [vmem:[#allocation7 + $0xb] sm:$0x1]
        %v1420 = vlaneseq
        %v1421 = vshrl.u32 %v1420, 7
        %v1422 = vsub.s32 0, %v1421
        %v1423 = vrot.slane %v1419, %v1422
        %v1424 = vmul.f32 %v1417, %v1423
        %v1425 = vmul.f32 %v1418, %v1423
        %v1426 = vadd.f32 %v1376, %v1424
        %v1427 = vadd.f32 %v1377, %v1425
        %v1428 = vld [vmem:[#allocation2 + $0x9] sm:$0xff]
        %v1429 = vld [vmem:[#allocation2 + $0x11] sm:$0xff]
        %v1430 = vld [vmem:[#allocation7 + $0x10] sm:$0x1]
        %v1431 = vlaneseq
        %v1432 = vshrl.u32 %v1431, 7
        %v1433 = vsub.s32 0, %v1432
        %v1434 = vrot.slane %v1430, %v1433
        %v1435 = vmul.f32 %v1428, %v1434
        %v1436 = vmul.f32 %v1429, %v1434
        %v1437 = vadd.f32 %v1387, %v1435
        %v1438 = vadd.f32 %v1388, %v1436
        %v1439 = vld [vmem:[#allocation2 + $0xa] sm:$0xff]
        %v1440 = vld [vmem:[#allocation2 + $0x12] sm:$0xff]
        %v1441 = vld [vmem:[#allocation7 + $0x15] sm:$0x1]
        %v1442 = vlaneseq
        %v1443 = vshrl.u32 %v1442, 7
        %v1444 = vsub.s32 0, %v1443
        %v1445 = vrot.slane %v1441, %v1444
        %v1446 = vmul.f32 %v1439, %v1445
        %v1447 = vmul.f32 %v1440, %v1445
        %v1448 = vadd.f32 %v1404, %v1446
        %v1449 = vadd.f32 %v1405, %v1447
        %1450 = vst [vmem:[#allocation2 + $0x8] sm:$0xff] %v1325
        %1451 = vst [vmem:[#allocation2 + $0x10] sm:$0xff] %v1326
        %v1452 = vld [vmem:[#allocation2 + $0x6] sm:$0xff]
        %v1453 = vld [vmem:[#allocation2 + $0xe] sm:$0xff]
        %v1454 = vld [vmem:[#allocation7 + $0x2] sm:$0x1]
        %v1455 = vlaneseq
        %v1456 = vshrl.u32 %v1455, 7
        %v1457 = vsub.s32 0, %v1456
        %v1458 = vrot.slane %v1454, %v1457
        %v1459 = vmul.f32 %v1452, %v1458
        %v1460 = vmul.f32 %v1453, %v1458
        %v1461 = vadd.f32 %v1415, %v1459
        %v1462 = vadd.f32 %v1416, %v1460
        %v1463 = vld [vmem:[#allocation2 + $0x7] sm:$0xff]
        %v1464 = vld [vmem:[#allocation2 + $0xf] sm:$0xff]
        %v1465 = vld [vmem:[#allocation7 + $0x7] sm:$0x1]
        %v1466 = vlaneseq
        %v1467 = vshrl.u32 %v1466, 7
        %v1468 = vsub.s32 0, %v1467
        %v1469 = vrot.slane %v1465, %v1468
        %v1470 = vmul.f32 %v1463, %v1469
        %v1471 = vmul.f32 %v1464, %v1469
        %v1472 = vadd.f32 %v1426, %v1470
        %v1473 = vadd.f32 %v1427, %v1471
        %v1474 = vld [vmem:[#allocation2 + $0x8] sm:$0xff]
        %v1475 = vld [vmem:[#allocation2 + $0x10] sm:$0xff]
        %v1476 = vld [vmem:[#allocation7 + $0xc] sm:$0x1]
        %v1477 = vlaneseq
        %v1478 = vshrl.u32 %v1477, 7
        %v1479 = vsub.s32 0, %v1478
        %v1480 = vrot.slane %v1476, %v1479
        %v1481 = vmul.f32 %v1474, %v1480
        %v1482 = vmul.f32 %v1475, %v1480
        %v1483 = vadd.f32 %v1437, %v1481
        %v1484 = vadd.f32 %v1438, %v1482
        %v1485 = vld [vmem:[#allocation2 + $0x9] sm:$0xff]
        %v1486 = vld [vmem:[#allocation2 + $0x11] sm:$0xff]
        %v1487 = vld [vmem:[#allocation7 + $0x11] sm:$0x1]
        %v1488 = vlaneseq
        %v1489 = vshrl.u32 %v1488, 7
        %v1490 = vsub.s32 0, %v1489
        %v1491 = vrot.slane %v1487, %v1490
        %v1492 = vmul.f32 %v1485, %v1491
        %v1493 = vmul.f32 %v1486, %v1491
        %v1494 = vadd.f32 %v1448, %v1492
        %v1495 = vadd.f32 %v1449, %v1493
        %v1496 = vld [vmem:[#allocation2 + $0xa] sm:$0xff]
        %v1497 = vld [vmem:[#allocation2 + $0x12] sm:$0xff]
        %v1498 = vld [vmem:[#allocation7 + $0x16] sm:$0x1]
        %v1499 = vlaneseq
        %v1500 = vshrl.u32 %v1499, 7
        %v1501 = vsub.s32 0, %v1500
        %v1502 = vrot.slane %v1498, %v1501
        %v1503 = vmul.f32 %v1496, %v1502
        %v1504 = vmul.f32 %v1497, %v1502
        %v1505 = vadd.f32 %v1461, %v1503
        %v1506 = vadd.f32 %v1462, %v1504
        %1507 = vrot.lane.b32.xlu0 %v1325, 120
        %v1508 = vpop.permute.xlu0 %1507
        %1509 = vrot.lane.b32.xlu0 %v1326, 120
        %v1510 = vpop.permute.xlu0 %1509
        %1511 = vst [vmem:[#allocation2 + $0x8] sm:$0xff] %v1508
        %1512 = vst [vmem:[#allocation2 + $0x10] sm:$0xff] %v1510
        %v1513 = vld [vmem:[#allocation2 + $0x6] sm:$0xff]
        %v1514 = vld [vmem:[#allocation2 + $0xe] sm:$0xff]
        %v1515 = vld [vmem:[#allocation7 + $0x3] sm:$0x1]
        %v1516 = vlaneseq
        %v1517 = vshrl.u32 %v1516, 7
        %v1518 = vsub.s32 0, %v1517
        %v1519 = vrot.slane %v1515, %v1518
        %v1520 = vmul.f32 %v1513, %v1519
        %v1521 = vmul.f32 %v1514, %v1519
        %v1522 = vadd.f32 %v1472, %v1520
        %v1523 = vadd.f32 %v1473, %v1521
        %v1524 = vld [vmem:[#allocation2 + $0x7] sm:$0xff]
        %v1525 = vld [vmem:[#allocation2 + $0xf] sm:$0xff]
        %v1526 = vld [vmem:[#allocation7 + $0x8] sm:$0x1]
        %v1527 = vlaneseq
        %v1528 = vshrl.u32 %v1527, 7
        %v1529 = vsub.s32 0, %v1528
        %v1530 = vrot.slane %v1526, %v1529
        %v1531 = vmul.f32 %v1524, %v1530
        %v1532 = vmul.f32 %v1525, %v1530
        %v1533 = vadd.f32 %v1483, %v1531
        %v1534 = vadd.f32 %v1484, %v1532
        %v1535 = vld [vmem:[#allocation2 + $0x8] sm:$0xff]
        %v1536 = vld [vmem:[#allocation2 + $0x10] sm:$0xff]
        %v1537 = vld [vmem:[#allocation7 + $0xd] sm:$0x1]
        %v1538 = vlaneseq
        %v1539 = vshrl.u32 %v1538, 7
        %v1540 = vsub.s32 0, %v1539
        %v1541 = vrot.slane %v1537, %v1540
        %v1542 = vmul.f32 %v1535, %v1541
        %v1543 = vmul.f32 %v1536, %v1541
        %v1544 = vadd.f32 %v1494, %v1542
        %v1545 = vadd.f32 %v1495, %v1543
        %v1546 = vld [vmem:[#allocation2 + $0x9] sm:$0xff]
        %v1547 = vld [vmem:[#allocation2 + $0x11] sm:$0xff]
        %v1548 = vld [vmem:[#allocation7 + $0x12] sm:$0x1]
        %v1549 = vlaneseq
        %v1550 = vshrl.u32 %v1549, 7
        %v1551 = vsub.s32 0, %v1550
        %v1552 = vrot.slane %v1548, %v1551
        %v1553 = vmul.f32 %v1546, %v1552
        %v1554 = vmul.f32 %v1547, %v1552
        %v1555 = vadd.f32 %v1505, %v1553
        %v1556 = vadd.f32 %v1506, %v1554
        %v1557 = vld [vmem:[#allocation2 + $0xa] sm:$0xff]
        %v1558 = vld [vmem:[#allocation2 + $0x12] sm:$0xff]
        %v1559 = vld [vmem:[#allocation7 + $0x17] sm:$0x1]
        %v1560 = vlaneseq
        %v1561 = vshrl.u32 %v1560, 7
        %v1562 = vsub.s32 0, %v1561
        %v1563 = vrot.slane %v1559, %v1562
        %v1564 = vmul.f32 %v1557, %v1563
        %v1565 = vmul.f32 %v1558, %v1563
        %v1566 = vadd.f32 %v1522, %v1564
        %v1567 = vadd.f32 %v1523, %v1565
        %1568 = vrot.lane.b32.xlu0 %v1325, 112
        %v1569 = vpop.permute.xlu0 %1568
        %1570 = vrot.lane.b32.xlu0 %v1326, 112
        %v1571 = vpop.permute.xlu0 %1570
        %1572 = vst [vmem:[#allocation2 + $0x8] sm:$0xff] %v1569
        %1573 = vst [vmem:[#allocation2 + $0x10] sm:$0xff] %v1571
        %v1574 = vld [vmem:[#allocation2 + $0x6] sm:$0xff]
        %v1575 = vld [vmem:[#allocation2 + $0xe] sm:$0xff]
        %v1576 = vld [vmem:[#allocation7 + $0x4] sm:$0x1]
        %v1577 = vlaneseq
        %v1578 = vshrl.u32 %v1577, 7
        %v1579 = vsub.s32 0, %v1578
        %v1580 = vrot.slane %v1576, %v1579
        %v1581 = vmul.f32 %v1574, %v1580
        %v1582 = vmul.f32 %v1575, %v1580
        %v1583 = vadd.f32 %v1533, %v1581
        %v1584 = vadd.f32 %v1534, %v1582
        %v1585 = vld [vmem:[#allocation2 + $0x7] sm:$0xff]
        %v1586 = vld [vmem:[#allocation2 + $0xf] sm:$0xff]
        %v1587 = vld [vmem:[#allocation7 + $0x9] sm:$0x1]
        %v1588 = vlaneseq
        %v1589 = vshrl.u32 %v1588, 7
        %v1590 = vsub.s32 0, %v1589
        %v1591 = vrot.slane %v1587, %v1590
        %v1592 = vmul.f32 %v1585, %v1591
        %v1593 = vmul.f32 %v1586, %v1591
        %v1594 = vadd.f32 %v1544, %v1592
        %v1595 = vadd.f32 %v1545, %v1593
        %v1596 = vld [vmem:[#allocation2 + $0x8] sm:$0xff]
        %v1597 = vld [vmem:[#allocation2 + $0x10] sm:$0xff]
        %v1598 = vld [vmem:[#allocation7 + $0xe] sm:$0x1]
        %v1599 = vlaneseq
        %v1600 = vshrl.u32 %v1599, 7
        %v1601 = vsub.s32 0, %v1600
        %v1602 = vrot.slane %v1598, %v1601
        %v1603 = vmul.f32 %v1596, %v1602
        %v1604 = vmul.f32 %v1597, %v1602
        %v1605 = vadd.f32 %v1555, %v1603
        %v1606 = vadd.f32 %v1556, %v1604
        %v1607 = vld [vmem:[#allocation2 + $0x9] sm:$0xff]
        %v1608 = vld [vmem:[#allocation2 + $0x11] sm:$0xff]
        %v1609 = vld [vmem:[#allocation7 + $0x13] sm:$0x1]
        %v1610 = vlaneseq
        %v1611 = vshrl.u32 %v1610, 7
        %v1612 = vsub.s32 0, %v1611
        %v1613 = vrot.slane %v1609, %v1612
        %v1614 = vmul.f32 %v1607, %v1613
        %v1615 = vmul.f32 %v1608, %v1613
        %v1616 = vadd.f32 %v1566, %v1614
        %v1617 = vadd.f32 %v1567, %v1615
        %v1618 = vld [vmem:[#allocation2 + $0xa] sm:$0xff]
        %v1619 = vld [vmem:[#allocation2 + $0x12] sm:$0xff]
        %v1620 = vld [vmem:[#allocation7 + $0x18] sm:$0x1]
        %v1621 = vlaneseq
        %v1622 = vshrl.u32 %v1621, 7
        %v1623 = vsub.s32 0, %v1622
        %v1624 = vrot.slane %v1620, %v1623
        %v1625 = vmul.f32 %v1618, %v1624
        %v1626 = vmul.f32 %v1619, %v1624
        %v1627 = vadd.f32 %v1583, %v1625
        %v1628 = vadd.f32 %v1584, %v1626
        %v1629 = vadd.f32 %v1627, %v1594
        %v1630 = vadd.f32 %v1628, %v1595
        %v1631 = vadd.f32 %v1605, %v1616
        %v1632 = vadd.f32 %v1606, %v1617
        %v1633 = vadd.f32 %v1629, %v1631
        %v1634 = vadd.f32 %v1630, %v1632
        %v1635 = vmax.f32 %v1633, 0.0
        %v1636 = vmax.f32 %v1634, 0.0
        %v1637 = vld [vmem:[#allocation7 + $0x23] sm:$0x1]
        %v1638 = vlaneseq
        %v1639 = vshrl.u32 %v1638, 7
        %v1640 = vsub.s32 0, %v1639
        %v1641 = vrot.slane %v1637, %v1640
        %v1642 = vadd.f32 %v1635, %v1641
        %v1643 = vadd.f32 %v1636, %v1641
        %1644 = vrot.lane.b32.xlu0 %v1635, 8
        %v1645 = vpop.permute.xlu0 %1644
        %1646 = vrot.lane.b32.xlu0 %v1636, 8
        %v1647 = vpop.permute.xlu0 %1646
        %1648 = vst [vmem:[#allocation2 + $0x8] sm:$0xff] %v1645
        %1649 = vst [vmem:[#allocation2 + $0x10] sm:$0xff] %v1647
        %v1650 = vld [vmem:[#allocation2 + $0x7] sm:$0xff]
        %v1651 = vld [vmem:[#allocation2 + $0xf] sm:$0xff]
        %v1652 = vld [vmem:[#allocation7 + $0x19] sm:$0x1]
        %v1653 = vlaneseq
        %v1654 = vshrl.u32 %v1653, 7
        %v1655 = vsub.s32 0, %v1654
        %v1656 = vrot.slane %v1652, %v1655
        %v1657 = vmul.f32 %v1650, %v1656
        %v1658 = vmul.f32 %v1651, %v1656
        %v1659 = vadd.f32 %v1642, %v1657
        %v1660 = vadd.f32 %v1643, %v1658
        %v1661 = vld [vmem:[#allocation2 + $0x8] sm:$0xff]
        %v1662 = vld [vmem:[#allocation2 + $0x10] sm:$0xff]
        %v1663 = vld [vmem:[#allocation7 + $0x1c] sm:$0x1]
        %v1664 = vlaneseq
        %v1665 = vshrl.u32 %v1664, 7
        %v1666 = vsub.s32 0, %v1665
        %v1667 = vrot.slane %v1663, %v1666
        %v1668 = vmul.f32 %v1661, %v1667
        %v1669 = vmul.f32 %v1662, %v1667
        %v1670 = vld [vmem:[#allocation2 + $0x9] sm:$0xff]
        %v1671 = vld [vmem:[#allocation2 + $0x11] sm:$0xff]
        %v1672 = vld [vmem:[#allocation7 + $0x1f] sm:$0x1]
        %v1673 = vlaneseq
        %v1674 = vshrl.u32 %v1673, 7
        %v1675 = vsub.s32 0, %v1674
        %v1676 = vrot.slane %v1672, %v1675
        %v1677 = vmul.f32 %v1670, %v1676
        %v1678 = vmul.f32 %v1671, %v1676
        %1679 = vst [vmem:[#allocation2 + $0x8] sm:$0xff] %v1635
        %1680 = vst [vmem:[#allocation2 + $0x10] sm:$0xff] %v1636
        %v1681 = vld [vmem:[#allocation2 + $0x7] sm:$0xff]
        %v1682 = vld [vmem:[#allocation2 + $0xf] sm:$0xff]
        %v1683 = vld [vmem:[#allocation7 + $0x1a] sm:$0x1]
        %v1684 = vlaneseq
        %v1685 = vshrl.u32 %v1684, 7
        %v1686 = vsub.s32 0, %v1685
        %v1687 = vrot.slane %v1683, %v1686
        %v1688 = vmul.f32 %v1681, %v1687
        %v1689 = vmul.f32 %v1682, %v1687
        %v1690 = vld [vmem:[#allocation2 + $0x8] sm:$0xff]
        %v1691 = vld [vmem:[#allocation2 + $0x10] sm:$0xff]
        %v1692 = vld [vmem:[#allocation7 + $0x1d] sm:$0x1]
        %v1693 = vlaneseq
        %v1694 = vshrl.u32 %v1693, 7
        %v1695 = vsub.s32 0, %v1694
        %v1696 = vrot.slane %v1692, %v1695
        %v1697 = vmul.f32 %v1690, %v1696
        %v1698 = vmul.f32 %v1691, %v1696
        %v1699 = vadd.f32 %v1659, %v1697
        %v1700 = vadd.f32 %v1660, %v1698
        %v1701 = vld [vmem:[#allocation2 + $0x9] sm:$0xff]
        %v1702 = vld [vmem:[#allocation2 + $0x11] sm:$0xff]
        %v1703 = vld [vmem:[#allocation7 + $0x20] sm:$0x1]
        %v1704 = vlaneseq
        %v1705 = vshrl.u32 %v1704, 7
        %v1706 = vsub.s32 0, %v1705
        %v1707 = vrot.slane %v1703, %v1706
        %v1708 = vmul.f32 %v1701, %v1707
        %v1709 = vmul.f32 %v1702, %v1707
        %v1710 = vadd.f32 %v1668, %v1708
        %v1711 = vadd.f32 %v1669, %v1709
        %1712 = vrot.lane.b32.xlu0 %v1635, 120
        %v1713 = vpop.permute.xlu0 %1712
        %1714 = vrot.lane.b32.xlu0 %v1636, 120
        %v1715 = vpop.permute.xlu0 %1714
        %1716 = vst [vmem:[#allocation2 + $0x8] sm:$0xff] %v1713
        %1717 = vst [vmem:[#allocation2 + $0x10] sm:$0xff] %v1715
        %v1718 = vld [vmem:[#allocation2 + $0x7] sm:$0xff]
        %v1719 = vld [vmem:[#allocation2 + $0xf] sm:$0xff]
        %v1720 = vld [vmem:[#allocation7 + $0x1b] sm:$0x1]
        %v1721 = vlaneseq
        %v1722 = vshrl.u32 %v1721, 7
        %v1723 = vsub.s32 0, %v1722
        %v1724 = vrot.slane %v1720, %v1723
        %v1725 = vmul.f32 %v1718, %v1724
        %v1726 = vmul.f32 %v1719, %v1724
        %v1727 = vadd.f32 %v1677, %v1725
        %v1728 = vadd.f32 %v1678, %v1726
        %v1729 = vld [vmem:[#allocation2 + $0x8] sm:$0xff]
        %v1730 = vld [vmem:[#allocation2 + $0x10] sm:$0xff]
        %v1731 = vld [vmem:[#allocation7 + $0x1e] sm:$0x1]
        %v1732 = vlaneseq
        %v1733 = vshrl.u32 %v1732, 7
        %v1734 = vsub.s32 0, %v1733
        %v1735 = vrot.slane %v1731, %v1734
        %v1736 = vmul.f32 %v1729, %v1735
        %v1737 = vmul.f32 %v1730, %v1735
        %v1738 = vadd.f32 %v1688, %v1736
        %v1739 = vadd.f32 %v1689, %v1737
        %v1740 = vld [vmem:[#allocation2 + $0x9] sm:$0xff]
        %v1741 = vld [vmem:[#allocation2 + $0x11] sm:$0xff]
        %v1742 = vld [vmem:[#allocation7 + $0x21] sm:$0x1]
        %v1743 = vlaneseq
        %v1744 = vshrl.u32 %v1743, 7
        %v1745 = vsub.s32 0, %v1744
        %v1746 = vrot.slane %v1742, %v1745
        %v1747 = vmul.f32 %v1740, %v1746
        %v1748 = vmul.f32 %v1741, %v1746
        %v1749 = vadd.f32 %v1699, %v1747
        %v1750 = vadd.f32 %v1700, %v1748
        %v1751 = vadd.f32 %v1749, %v1710
        %v1752 = vadd.f32 %v1750, %v1711
        %v1753 = vadd.f32 %v1727, %v1738
        %v1754 = vadd.f32 %v1728, %v1739
        %v1755 = vadd.f32 %v1751, %v1753
        %v1756 = vadd.f32 %v1752, %v1754
        %v1757 = vld [vmem:[#allocation7 + $0x29] sm:$0x1]
        %v1758 = vld [vmem:[#allocation7 + $0x2a] sm:$0x1]
        %v1759 = vadd.f32 %v1755, %v1756
        %v1760 = vrot.slane %v1759, 4
        %v1761 = vadd.f32 %v1759, %v1760
        %v1762 = vrot.slane %v1761, 2
        %v1763 = vadd.f32 %v1761, %v1762
        %v1764 = vrot.slane %v1763, 1
        %v1765 = vadd.f32 %v1763, %v1764
        %v1766 = vmul.f32 %v1765, %v1757
        %v1767 = vsel %vm746, %v1766, 0.0
        %1768 = vadd.xlane.f32.xlu0 %v1767
        %v1769 = vpop.xlane.xlu0 %1768
        %v1770 = vmul.f32 %v1769, 0.0009765625
        %v1771 = vmul.f32 %v1770, %v1757
        %v1772 = vadd.f32 %v1771, 0.0
        %v1773 = vmul.f32 %v1765, %v1758
        %v1774 = vsel %vm746, %v1773, 0.0
        %1775 = vadd.xlane.f32.xlu0 %v1774
        %v1776 = vpop.xlane.xlu0 %1775
        %v1777 = vmul.f32 %v1776, 0.0009765625
        %v1778 = vmul.f32 %v1777, %v1758
        %v1779 = vadd.f32 %v1772, %v1778
        %v1780 = vlaneseq
        %v1781 = vshrl.u32 %v1780, 7
        %v1782 = vsub.s32 0, %v1781
        %v1783 = vrot.slane %v1779, %v1782
        %v1784 = vsub.f32 %v1755, %v1783
        %v1785 = vsub.f32 %v1756, %v1783
        %v1786 = vmul.f32 %v1784, %v1784
        %v1787 = vmul.f32 %v1785, %v1785
        %v1788 = vadd.f32 %v1786, %v1787
        %v1789 = vrot.slane %v1788, 4
        %v1790 = vadd.f32 %v1788, %v1789
        %v1791 = vrot.slane %v1790, 2
        %v1792 = vadd.f32 %v1790, %v1791
        %v1793 = vrot.slane %v1792, 1
        %v1794 = vadd.f32 %v1792, %v1793
        %v1795 = vmul.f32 %v1794, %v1757
        %v1796 = vsel %vm746, %v1795, 0.0
        %1797 = vadd.xlane.f32.xlu0 %v1796
        %v1798 = vpop.xlane.xlu0 %1797
        %v1799 = vmul.f32 %v1798, 0.0009765625
        %v1800 = vmul.f32 %v1799, %v1757
        %v1801 = vadd.f32 %v1800, 0.0
        %v1802 = vmul.f32 %v1794, %v1758
        %v1803 = vsel %vm746, %v1802, 0.0
        %1804 = vadd.xlane.f32.xlu0 %v1803
        %v1805 = vpop.xlane.xlu0 %1804
        %v1806 = vmul.f32 %v1805, 0.0009765625
        %v1807 = vmul.f32 %v1806, %v1758
        %v1808 = vadd.f32 %v1801, %v1807
        %v1809 = vld [vmem:[#allocation7 + $0x25] sm:$0x1]
        %v1810 = vld [vmem:[#allocation7 + $0x26] sm:$0x1]
        %v1811 = vadd.f32 %v1808, 1e-05
        %v1812 = vrsqrt.pop %v1811
        %v1813 = vlaneseq
        %v1814 = vshrl.u32 %v1813, 7
        %v1815 = vsub.s32 0, %v1814
        %v1816 = vrot.slane %v1812, %v1815
        %v1817 = vmul.f32 %v1784, %v1816
        %v1818 = vmul.f32 %v1785, %v1816
        %v1819 = vlaneseq
        %v1820 = vshrl.u32 %v1819, 7
        %v1821 = vsub.s32 0, %v1820
        %v1822 = vrot.slane %v1809, %v1821
        %v1823 = vmul.f32 %v1817, %v1822
        %v1824 = vmul.f32 %v1818, %v1822
        %v1825 = vlaneseq
        %v1826 = vshrl.u32 %v1825, 7
        %v1827 = vsub.s32 0, %v1826
        %v1828 = vrot.slane %v1810, %v1827
        %v1829 = vadd.f32 %v1823, %v1828
        %v1830 = vadd.f32 %v1824, %v1828
        %v1831 = vmax.f32 %v1829, 0.0
        %v1832 = vmax.f32 %v1830, 0.0
        %1833 = vst [vmem:[#allocation3 + $0x20] sm:$0xff] %v1831
        %1834 = vst [vmem:[#allocation3 + $0x28] sm:$0xff] %v1832
        %v1835 = vld [vmem:[%s256 + $0x30] sm:$0xff]
        %v1836 = vld [vmem:[%s256 + $0x38] sm:$0xff]
        %v1837 = vld [vmem:[#allocation7 + $0x22] sm:$0x1]
        %v1838 = vlaneseq
        %v1839 = vshrl.u32 %v1838, 7
        %v1840 = vsub.s32 0, %v1839
        %v1841 = vrot.slane %v1837, %v1840
        %v1842 = vadd.f32 %v1835, %v1841
        %v1843 = vadd.f32 %v1836, %v1841
        %1844 = vrot.lane.b32.xlu0 %v1835, 16
        %v1845 = vpop.permute.xlu0 %1844
        %1846 = vrot.lane.b32.xlu0 %v1836, 16
        %v1847 = vpop.permute.xlu0 %1846
        %1848 = vst [vmem:[#allocation2 + $0x8] sm:$0xff] %v1845
        %1849 = vst [vmem:[#allocation2 + $0x10] sm:$0xff] %v1847
        %v1850 = vld [vmem:[#allocation2 + $0x6] sm:$0xff]
        %v1851 = vld [vmem:[#allocation2 + $0xe] sm:$0xff]
        %v1852 = vld [vmem:[#allocation7] sm:$0x1]
        %v1853 = vlaneseq
        %v1854 = vshrl.u32 %v1853, 7
        %v1855 = vsub.s32 0, %v1854
        %v1856 = vrot.slane %v1852, %v1855
        %v1857 = vmul.f32 %v1850, %v1856
        %v1858 = vmul.f32 %v1851, %v1856
        %v1859 = vadd.f32 %v1842, %v1857
        %v1860 = vadd.f32 %v1843, %v1858
        %v1861 = vld [vmem:[#allocation2 + $0x7] sm:$0xff]
        %v1862 = vld [vmem:[#allocation2 + $0xf] sm:$0xff]
        %v1863 = vld [vmem:[#allocation7 + $0x5] sm:$0x1]
        %v1864 = vlaneseq
        %v1865 = vshrl.u32 %v1864, 7
        %v1866 = vsub.s32 0, %v1865
        %v1867 = vrot.slane %v1863, %v1866
        %v1868 = vmul.f32 %v1861, %v1867
        %v1869 = vmul.f32 %v1862, %v1867
        %v1870 = vld [vmem:[#allocation2 + $0x8] sm:$0xff]
        %v1871 = vld [vmem:[#allocation2 + $0x10] sm:$0xff]
        %v1872 = vld [vmem:[#allocation7 + $0xa] sm:$0x1]
        %v1873 = vlaneseq
        %v1874 = vshrl.u32 %v1873, 7
        %v1875 = vsub.s32 0, %v1874
        %v1876 = vrot.slane %v1872, %v1875
        %v1877 = vmul.f32 %v1870, %v1876
        %v1878 = vmul.f32 %v1871, %v1876
        %v1879 = vld [vmem:[#allocation2 + $0x9] sm:$0xff]
        %v1880 = vld [vmem:[#allocation2 + $0x11] sm:$0xff]
        %v1881 = vld [vmem:[#allocation7 + $0xf] sm:$0x1]
        %v1882 = vlaneseq
        %v1883 = vshrl.u32 %v1882, 7
        %v1884 = vsub.s32 0, %v1883
        %v1885 = vrot.slane %v1881, %v1884
        %v1886 = vmul.f32 %v1879, %v1885
        %v1887 = vmul.f32 %v1880, %v1885
        %v1888 = vld [vmem:[#allocation2 + $0xa] sm:$0xff]
        %v1889 = vld [vmem:[#allocation2 + $0x12] sm:$0xff]
        %v1890 = vld [vmem:[#allocation7 + $0x14] sm:$0x1]
        %v1891 = vlaneseq
        %v1892 = vshrl.u32 %v1891, 7
        %v1893 = vsub.s32 0, %v1892
        %v1894 = vrot.slane %v1890, %v1893
        %v1895 = vmul.f32 %v1888, %v1894
        %v1896 = vmul.f32 %v1889, %v1894
        %v1897 = vadd.f32 %v1859, %v1895
        %v1898 = vadd.f32 %v1860, %v1896
        %1899 = vrot.lane.b32.xlu0 %v1835, 8
        %v1900 = vpop.permute.xlu0 %1899
        %1901 = vrot.lane.b32.xlu0 %v1836, 8
        %v1902 = vpop.permute.xlu0 %1901
        %1903 = vst [vmem:[#allocation2 + $0x8] sm:$0xff] %v1900
        %1904 = vst [vmem:[#allocation2 + $0x10] sm:$0xff] %v1902
        %v1905 = vld [vmem:[#allocation2 + $0x6] sm:$0xff]
        %v1906 = vld [vmem:[#allocation2 + $0xe] sm:$0xff]
        %v1907 = vld [vmem:[#allocation7 + $0x1] sm:$0x1]
        %v1908 = vlaneseq
        %v1909 = vshrl.u32 %v1908, 7
        %v1910 = vsub.s32 0, %v1909
        %v1911 = vrot.slane %v1907, %v1910
        %v1912 = vmul.f32 %v1905, %v1911
        %v1913 = vmul.f32 %v1906, %v1911
        %v1914 = vadd.f32 %v1868, %v1912
        %v1915 = vadd.f32 %v1869, %v1913
        %v1916 = vld [vmem:[#allocation2 + $0x7] sm:$0xff]
        %v1917 = vld [vmem:[#allocation2 + $0xf] sm:$0xff]
        %v1918 = vld [vmem:[#allocation7 + $0x6] sm:$0x1]
        %v1919 = vlaneseq
        %v1920 = vshrl.u32 %v1919, 7
        %v1921 = vsub.s32 0, %v1920
        %v1922 = vrot.slane %v1918, %v1921
        %v1923 = vmul.f32 %v1916, %v1922
        %v1924 = vmul.f32 %v1917, %v1922
        %v1925 = vadd.f32 %v1877, %v1923
        %v1926 = vadd.f32 %v1878, %v1924
        %v1927 = vld [vmem:[#allocation2 + $0x8] sm:$0xff]
        %v1928 = vld [vmem:[#allocation2 + $0x10] sm:$0xff]
        %v1929 = vld [vmem:[#allocation7 + $0xb] sm:$0x1]
        %v1930 = vlaneseq
        %v1931 = vshrl.u32 %v1930, 7
        %v1932 = vsub.s32 0, %v1931
        %v1933 = vrot.slane %v1929, %v1932
        %v1934 = vmul.f32 %v1927, %v1933
        %v1935 = vmul.f32 %v1928, %v1933
        %v1936 = vadd.f32 %v1886, %v1934
        %v1937 = vadd.f32 %v1887, %v1935
        %v1938 = vld [vmem:[#allocation2 + $0x9] sm:$0xff]
        %v1939 = vld [vmem:[#allocation2 + $0x11] sm:$0xff]
        %v1940 = vld [vmem:[#allocation7 + $0x10] sm:$0x1]
        %v1941 = vlaneseq
        %v1942 = vshrl.u32 %v1941, 7
        %v1943 = vsub.s32 0, %v1942
        %v1944 = vrot.slane %v1940, %v1943
        %v1945 = vmul.f32 %v1938, %v1944
        %v1946 = vmul.f32 %v1939, %v1944
        %v1947 = vadd.f32 %v1897, %v1945
        %v1948 = vadd.f32 %v1898, %v1946
        %v1949 = vld [vmem:[#allocation2 + $0xa] sm:$0xff]
        %v1950 = vld [vmem:[#allocation2 + $0x12] sm:$0xff]
        %v1951 = vld [vmem:[#allocation7 + $0x15] sm:$0x1]
        %v1952 = vlaneseq
        %v1953 = vshrl.u32 %v1952, 7
        %v1954 = vsub.s32 0, %v1953
        %v1955 = vrot.slane %v1951, %v1954
        %v1956 = vmul.f32 %v1949, %v1955
        %v1957 = vmul.f32 %v1950, %v1955
        %v1958 = vadd.f32 %v1914, %v1956
        %v1959 = vadd.f32 %v1915, %v1957
        %1960 = vst [vmem:[#allocation2 + $0x8] sm:$0xff] %v1835
        %1961 = vst [vmem:[#allocation2 + $0x10] sm:$0xff] %v1836
        %v1962 = vld [vmem:[#allocation2 + $0x6] sm:$0xff]
        %v1963 = vld [vmem:[#allocation2 + $0xe] sm:$0xff]
        %v1964 = vld [vmem:[#allocation7 + $0x2] sm:$0x1]
        %v1965 = vlaneseq
        %v1966 = vshrl.u32 %v1965, 7
        %v1967 = vsub.s32 0, %v1966
        %v1968 = vrot.slane %v1964, %v1967
        %v1969 = vmul.f32 %v1962, %v1968
        %v1970 = vmul.f32 %v1963, %v1968
        %v1971 = vadd.f32 %v1925, %v1969
        %v1972 = vadd.f32 %v1926, %v1970
        %v1973 = vld [vmem:[#allocation2 + $0x7] sm:$0xff]
        %v1974 = vld [vmem:[#allocation2 + $0xf] sm:$0xff]
        %v1975 = vld [vmem:[#allocation7 + $0x7] sm:$0x1]
        %v1976 = vlaneseq
        %v1977 = vshrl.u32 %v1976, 7
        %v1978 = vsub.s32 0, %v1977
        %v1979 = vrot.slane %v1975, %v1978
        %v1980 = vmul.f32 %v1973, %v1979
        %v1981 = vmul.f32 %v1974, %v1979
        %v1982 = vadd.f32 %v1936, %v1980
        %v1983 = vadd.f32 %v1937, %v1981
        %v1984 = vld [vmem:[#allocation2 + $0x8] sm:$0xff]
        %v1985 = vld [vmem:[#allocation2 + $0x10] sm:$0xff]
        %v1986 = vld [vmem:[#allocation7 + $0xc] sm:$0x1]
        %v1987 = vlaneseq
        %v1988 = vshrl.u32 %v1987, 7
        %v1989 = vsub.s32 0, %v1988
        %v1990 = vrot.slane %v1986, %v1989
        %v1991 = vmul.f32 %v1984, %v1990
        %v1992 = vmul.f32 %v1985, %v1990
        %v1993 = vadd.f32 %v1947, %v1991
        %v1994 = vadd.f32 %v1948, %v1992
        %v1995 = vld [vmem:[#allocation2 + $0x9] sm:$0xff]
        %v1996 = vld [vmem:[#allocation2 + $0x11] sm:$0xff]
        %v1997 = vld [vmem:[#allocation7 + $0x11] sm:$0x1]
        %v1998 = vlaneseq
        %v1999 = vshrl.u32 %v1998, 7
        %v2000 = vsub.s32 0, %v1999
        %v2001 = vrot.slane %v1997, %v2000
        %v2002 = vmul.f32 %v1995, %v2001
        %v2003 = vmul.f32 %v1996, %v2001
        %v2004 = vadd.f32 %v1958, %v2002
        %v2005 = vadd.f32 %v1959, %v2003
        %v2006 = vld [vmem:[#allocation2 + $0xa] sm:$0xff]
        %v2007 = vld [vmem:[#allocation2 + $0x12] sm:$0xff]
        %v2008 = vld [vmem:[#allocation7 + $0x16] sm:$0x1]
        %v2009 = vlaneseq
        %v2010 = vshrl.u32 %v2009, 7
        %v2011 = vsub.s32 0, %v2010
        %v2012 = vrot.slane %v2008, %v2011
        %v2013 = vmul.f32 %v2006, %v2012
        %v2014 = vmul.f32 %v2007, %v2012
        %v2015 = vadd.f32 %v1971, %v2013
        %v2016 = vadd.f32 %v1972, %v2014
        %2017 = vrot.lane.b32.xlu0 %v1835, 120
        %v2018 = vpop.permute.xlu0 %2017
        %2019 = vrot.lane.b32.xlu0 %v1836, 120
        %v2020 = vpop.permute.xlu0 %2019
        %2021 = vst [vmem:[#allocation2 + $0x8] sm:$0xff] %v2018
        %2022 = vst [vmem:[#allocation2 + $0x10] sm:$0xff] %v2020
        %v2023 = vld [vmem:[#allocation2 + $0x6] sm:$0xff]
        %v2024 = vld [vmem:[#allocation2 + $0xe] sm:$0xff]
        %v2025 = vld [vmem:[#allocation7 + $0x3] sm:$0x1]
        %v2026 = vlaneseq
        %v2027 = vshrl.u32 %v2026, 7
        %v2028 = vsub.s32 0, %v2027
        %v2029 = vrot.slane %v2025, %v2028
        %v2030 = vmul.f32 %v2023, %v2029
        %v2031 = vmul.f32 %v2024, %v2029
        %v2032 = vadd.f32 %v1982, %v2030
        %v2033 = vadd.f32 %v1983, %v2031
        %v2034 = vld [vmem:[#allocation2 + $0x7] sm:$0xff]
        %v2035 = vld [vmem:[#allocation2 + $0xf] sm:$0xff]
        %v2036 = vld [vmem:[#allocation7 + $0x8] sm:$0x1]
        %v2037 = vlaneseq
        %v2038 = vshrl.u32 %v2037, 7
        %v2039 = vsub.s32 0, %v2038
        %v2040 = vrot.slane %v2036, %v2039
        %v2041 = vmul.f32 %v2034, %v2040
        %v2042 = vmul.f32 %v2035, %v2040
        %v2043 = vadd.f32 %v1993, %v2041
        %v2044 = vadd.f32 %v1994, %v2042
        %v2045 = vld [vmem:[#allocation2 + $0x8] sm:$0xff]
        %v2046 = vld [vmem:[#allocation2 + $0x10] sm:$0xff]
        %v2047 = vld [vmem:[#allocation7 + $0xd] sm:$0x1]
        %v2048 = vlaneseq
        %v2049 = vshrl.u32 %v2048, 7
        %v2050 = vsub.s32 0, %v2049
        %v2051 = vrot.slane %v2047, %v2050
        %v2052 = vmul.f32 %v2045, %v2051
        %v2053 = vmul.f32 %v2046, %v2051
        %v2054 = vadd.f32 %v2004, %v2052
        %v2055 = vadd.f32 %v2005, %v2053
        %v2056 = vld [vmem:[#allocation2 + $0x9] sm:$0xff]
        %v2057 = vld [vmem:[#allocation2 + $0x11] sm:$0xff]
        %v2058 = vld [vmem:[#allocation7 + $0x12] sm:$0x1]
        %v2059 = vlaneseq
        %v2060 = vshrl.u32 %v2059, 7
        %v2061 = vsub.s32 0, %v2060
        %v2062 = vrot.slane %v2058, %v2061
        %v2063 = vmul.f32 %v2056, %v2062
        %v2064 = vmul.f32 %v2057, %v2062
        %v2065 = vadd.f32 %v2015, %v2063
        %v2066 = vadd.f32 %v2016, %v2064
        %v2067 = vld [vmem:[#allocation2 + $0xa] sm:$0xff]
        %v2068 = vld [vmem:[#allocation2 + $0x12] sm:$0xff]
        %v2069 = vld [vmem:[#allocation7 + $0x17] sm:$0x1]
        %v2070 = vlaneseq
        %v2071 = vshrl.u32 %v2070, 7
        %v2072 = vsub.s32 0, %v2071
        %v2073 = vrot.slane %v2069, %v2072
        %v2074 = vmul.f32 %v2067, %v2073
        %v2075 = vmul.f32 %v2068, %v2073
        %v2076 = vadd.f32 %v2032, %v2074
        %v2077 = vadd.f32 %v2033, %v2075
        %2078 = vrot.lane.b32.xlu0 %v1835, 112
        %v2079 = vpop.permute.xlu0 %2078
        %2080 = vrot.lane.b32.xlu0 %v1836, 112
        %v2081 = vpop.permute.xlu0 %2080
        %2082 = vst [vmem:[#allocation2 + $0x8] sm:$0xff] %v2079
        %2083 = vst [vmem:[#allocation2 + $0x10] sm:$0xff] %v2081
        %v2084 = vld [vmem:[#allocation2 + $0x6] sm:$0xff]
        %v2085 = vld [vmem:[#allocation2 + $0xe] sm:$0xff]
        %v2086 = vld [vmem:[#allocation7 + $0x4] sm:$0x1]
        %v2087 = vlaneseq
        %v2088 = vshrl.u32 %v2087, 7
        %v2089 = vsub.s32 0, %v2088
        %v2090 = vrot.slane %v2086, %v2089
        %v2091 = vmul.f32 %v2084, %v2090
        %v2092 = vmul.f32 %v2085, %v2090
        %v2093 = vadd.f32 %v2043, %v2091
        %v2094 = vadd.f32 %v2044, %v2092
        %v2095 = vld [vmem:[#allocation2 + $0x7] sm:$0xff]
        %v2096 = vld [vmem:[#allocation2 + $0xf] sm:$0xff]
        %v2097 = vld [vmem:[#allocation7 + $0x9] sm:$0x1]
        %v2098 = vlaneseq
        %v2099 = vshrl.u32 %v2098, 7
        %v2100 = vsub.s32 0, %v2099
        %v2101 = vrot.slane %v2097, %v2100
        %v2102 = vmul.f32 %v2095, %v2101
        %v2103 = vmul.f32 %v2096, %v2101
        %v2104 = vadd.f32 %v2054, %v2102
        %v2105 = vadd.f32 %v2055, %v2103
        %v2106 = vld [vmem:[#allocation2 + $0x8] sm:$0xff]
        %v2107 = vld [vmem:[#allocation2 + $0x10] sm:$0xff]
        %v2108 = vld [vmem:[#allocation7 + $0xe] sm:$0x1]
        %v2109 = vlaneseq
        %v2110 = vshrl.u32 %v2109, 7
        %v2111 = vsub.s32 0, %v2110
        %v2112 = vrot.slane %v2108, %v2111
        %v2113 = vmul.f32 %v2106, %v2112
        %v2114 = vmul.f32 %v2107, %v2112
        %v2115 = vadd.f32 %v2065, %v2113
        %v2116 = vadd.f32 %v2066, %v2114
        %v2117 = vld [vmem:[#allocation2 + $0x9] sm:$0xff]
        %v2118 = vld [vmem:[#allocation2 + $0x11] sm:$0xff]
        %v2119 = vld [vmem:[#allocation7 + $0x13] sm:$0x1]
        %v2120 = vlaneseq
        %v2121 = vshrl.u32 %v2120, 7
        %v2122 = vsub.s32 0, %v2121
        %v2123 = vrot.slane %v2119, %v2122
        %v2124 = vmul.f32 %v2117, %v2123
        %v2125 = vmul.f32 %v2118, %v2123
        %v2126 = vadd.f32 %v2076, %v2124
        %v2127 = vadd.f32 %v2077, %v2125
        %v2128 = vld [vmem:[#allocation2 + $0xa] sm:$0xff]
        %v2129 = vld [vmem:[#allocation2 + $0x12] sm:$0xff]
        %v2130 = vld [vmem:[#allocation7 + $0x18] sm:$0x1]
        %v2131 = vlaneseq
        %v2132 = vshrl.u32 %v2131, 7
        %v2133 = vsub.s32 0, %v2132
        %v2134 = vrot.slane %v2130, %v2133
        %v2135 = vmul.f32 %v2128, %v2134
        %v2136 = vmul.f32 %v2129, %v2134
        %v2137 = vadd.f32 %v2093, %v2135
        %v2138 = vadd.f32 %v2094, %v2136
        %v2139 = vadd.f32 %v2137, %v2104
        %v2140 = vadd.f32 %v2138, %v2105
        %v2141 = vadd.f32 %v2115, %v2126
        %v2142 = vadd.f32 %v2116, %v2127
        %v2143 = vadd.f32 %v2139, %v2141
        %v2144 = vadd.f32 %v2140, %v2142
        %v2145 = vmax.f32 %v2143, 0.0
        %v2146 = vmax.f32 %v2144, 0.0
        %v2147 = vld [vmem:[#allocation7 + $0x23] sm:$0x1]
        %v2148 = vlaneseq
        %v2149 = vshrl.u32 %v2148, 7
        %v2150 = vsub.s32 0, %v2149
        %v2151 = vrot.slane %v2147, %v2150
        %v2152 = vadd.f32 %v2145, %v2151
        %v2153 = vadd.f32 %v2146, %v2151
        %2154 = vrot.lane.b32.xlu0 %v2145, 8
        %v2155 = vpop.permute.xlu0 %2154
        %2156 = vrot.lane.b32.xlu0 %v2146, 8
        %v2157 = vpop.permute.xlu0 %2156
        %2158 = vst [vmem:[#allocation2 + $0x8] sm:$0xff] %v2155
        %2159 = vst [vmem:[#allocation2 + $0x10] sm:$0xff] %v2157
        %v2160 = vld [vmem:[#allocation2 + $0x7] sm:$0xff]
        %v2161 = vld [vmem:[#allocation2 + $0xf] sm:$0xff]
        %v2162 = vld [vmem:[#allocation7 + $0x19] sm:$0x1]
        %v2163 = vlaneseq
        %v2164 = vshrl.u32 %v2163, 7
        %v2165 = vsub.s32 0, %v2164
        %v2166 = vrot.slane %v2162, %v2165
        %v2167 = vmul.f32 %v2160, %v2166
        %v2168 = vmul.f32 %v2161, %v2166
        %v2169 = vadd.f32 %v2152, %v2167
        %v2170 = vadd.f32 %v2153, %v2168
        %v2171 = vld [vmem:[#allocation2 + $0x8] sm:$0xff]
        %v2172 = vld [vmem:[#allocation2 + $0x10] sm:$0xff]
        %v2173 = vld [vmem:[#allocation7 + $0x1c] sm:$0x1]
        %v2174 = vlaneseq
        %v2175 = vshrl.u32 %v2174, 7
        %v2176 = vsub.s32 0, %v2175
        %v2177 = vrot.slane %v2173, %v2176
        %v2178 = vmul.f32 %v2171, %v2177
        %v2179 = vmul.f32 %v2172, %v2177
        %v2180 = vld [vmem:[#allocation2 + $0x9] sm:$0xff]
        %v2181 = vld [vmem:[#allocation2 + $0x11] sm:$0xff]
        %v2182 = vld [vmem:[#allocation7 + $0x1f] sm:$0x1]
        %v2183 = vlaneseq
        %v2184 = vshrl.u32 %v2183, 7
        %v2185 = vsub.s32 0, %v2184
        %v2186 = vrot.slane %v2182, %v2185
        %v2187 = vmul.f32 %v2180, %v2186
        %v2188 = vmul.f32 %v2181, %v2186
        %2189 = vst [vmem:[#allocation2 + $0x8] sm:$0xff] %v2145
        %2190 = vst [vmem:[#allocation2 + $0x10] sm:$0xff] %v2146
        %v2191 = vld [vmem:[#allocation2 + $0x7] sm:$0xff]
        %v2192 = vld [vmem:[#allocation2 + $0xf] sm:$0xff]
        %v2193 = vld [vmem:[#allocation7 + $0x1a] sm:$0x1]
        %v2194 = vlaneseq
        %v2195 = vshrl.u32 %v2194, 7
        %v2196 = vsub.s32 0, %v2195
        %v2197 = vrot.slane %v2193, %v2196
        %v2198 = vmul.f32 %v2191, %v2197
        %v2199 = vmul.f32 %v2192, %v2197
        %v2200 = vld [vmem:[#allocation2 + $0x8] sm:$0xff]
        %v2201 = vld [vmem:[#allocation2 + $0x10] sm:$0xff]
        %v2202 = vld [vmem:[#allocation7 + $0x1d] sm:$0x1]
        %v2203 = vlaneseq
        %v2204 = vshrl.u32 %v2203, 7
        %v2205 = vsub.s32 0, %v2204
        %v2206 = vrot.slane %v2202, %v2205
        %v2207 = vmul.f32 %v2200, %v2206
        %v2208 = vmul.f32 %v2201, %v2206
        %v2209 = vadd.f32 %v2169, %v2207
        %v2210 = vadd.f32 %v2170, %v2208
        %v2211 = vld [vmem:[#allocation2 + $0x9] sm:$0xff]
        %v2212 = vld [vmem:[#allocation2 + $0x11] sm:$0xff]
        %v2213 = vld [vmem:[#allocation7 + $0x20] sm:$0x1]
        %v2214 = vlaneseq
        %v2215 = vshrl.u32 %v2214, 7
        %v2216 = vsub.s32 0, %v2215
        %v2217 = vrot.slane %v2213, %v2216
        %v2218 = vmul.f32 %v2211, %v2217
        %v2219 = vmul.f32 %v2212, %v2217
        %v2220 = vadd.f32 %v2178, %v2218
        %v2221 = vadd.f32 %v2179, %v2219
        %2222 = vrot.lane.b32.xlu0 %v2145, 120
        %v2223 = vpop.permute.xlu0 %2222
        %2224 = vrot.lane.b32.xlu0 %v2146, 120
        %v2225 = vpop.permute.xlu0 %2224
        %2226 = vst [vmem:[#allocation2 + $0x8] sm:$0xff] %v2223
        %2227 = vst [vmem:[#allocation2 + $0x10] sm:$0xff] %v2225
        %v2228 = vld [vmem:[#allocation2 + $0x7] sm:$0xff]
        %v2229 = vld [vmem:[#allocation2 + $0xf] sm:$0xff]
        %v2230 = vld [vmem:[#allocation7 + $0x1b] sm:$0x1]
        %v2231 = vlaneseq
        %v2232 = vshrl.u32 %v2231, 7
        %v2233 = vsub.s32 0, %v2232
        %v2234 = vrot.slane %v2230, %v2233
        %v2235 = vmul.f32 %v2228, %v2234
        %v2236 = vmul.f32 %v2229, %v2234
        %v2237 = vadd.f32 %v2187, %v2235
        %v2238 = vadd.f32 %v2188, %v2236
        %v2239 = vld [vmem:[#allocation2 + $0x8] sm:$0xff]
        %v2240 = vld [vmem:[#allocation2 + $0x10] sm:$0xff]
        %v2241 = vld [vmem:[#allocation7 + $0x1e] sm:$0x1]
        %v2242 = vlaneseq
        %v2243 = vshrl.u32 %v2242, 7
        %v2244 = vsub.s32 0, %v2243
        %v2245 = vrot.slane %v2241, %v2244
        %v2246 = vmul.f32 %v2239, %v2245
        %v2247 = vmul.f32 %v2240, %v2245
        %v2248 = vadd.f32 %v2198, %v2246
        %v2249 = vadd.f32 %v2199, %v2247
        %v2250 = vld [vmem:[#allocation2 + $0x9] sm:$0xff]
        %v2251 = vld [vmem:[#allocation2 + $0x11] sm:$0xff]
        %v2252 = vld [vmem:[#allocation7 + $0x21] sm:$0x1]
        %v2253 = vlaneseq
        %v2254 = vshrl.u32 %v2253, 7
        %v2255 = vsub.s32 0, %v2254
        %v2256 = vrot.slane %v2252, %v2255
        %v2257 = vmul.f32 %v2250, %v2256
        %v2258 = vmul.f32 %v2251, %v2256
        %v2259 = vadd.f32 %v2209, %v2257
        %v2260 = vadd.f32 %v2210, %v2258
        %v2261 = vadd.f32 %v2259, %v2220
        %v2262 = vadd.f32 %v2260, %v2221
        %v2263 = vadd.f32 %v2237, %v2248
        %v2264 = vadd.f32 %v2238, %v2249
        %v2265 = vadd.f32 %v2261, %v2263
        %v2266 = vadd.f32 %v2262, %v2264
        %v2267 = vld [vmem:[#allocation7 + $0x29] sm:$0x1]
        %v2268 = vld [vmem:[#allocation7 + $0x2a] sm:$0x1]
        %v2269 = vadd.f32 %v2265, %v2266
        %v2270 = vrot.slane %v2269, 4
        %v2271 = vadd.f32 %v2269, %v2270
        %v2272 = vrot.slane %v2271, 2
        %v2273 = vadd.f32 %v2271, %v2272
        %v2274 = vrot.slane %v2273, 1
        %v2275 = vadd.f32 %v2273, %v2274
        %v2276 = vmul.f32 %v2275, %v2267
        %v2277 = vsel %vm746, %v2276, 0.0
        %2278 = vadd.xlane.f32.xlu0 %v2277
        %v2279 = vpop.xlane.xlu0 %2278
        %v2280 = vmul.f32 %v2279, 0.0009765625
        %v2281 = vmul.f32 %v2280, %v2267
        %v2282 = vadd.f32 %v2281, 0.0
        %v2283 = vmul.f32 %v2275, %v2268
        %v2284 = vsel %vm746, %v2283, 0.0
        %2285 = vadd.xlane.f32.xlu0 %v2284
        %v2286 = vpop.xlane.xlu0 %2285
        %v2287 = vmul.f32 %v2286, 0.0009765625
        %v2288 = vmul.f32 %v2287, %v2268
        %v2289 = vadd.f32 %v2282, %v2288
        %v2290 = vlaneseq
        %v2291 = vshrl.u32 %v2290, 7
        %v2292 = vsub.s32 0, %v2291
        %v2293 = vrot.slane %v2289, %v2292
        %v2294 = vsub.f32 %v2265, %v2293
        %v2295 = vsub.f32 %v2266, %v2293
        %v2296 = vmul.f32 %v2294, %v2294
        %v2297 = vmul.f32 %v2295, %v2295
        %v2298 = vadd.f32 %v2296, %v2297
        %v2299 = vrot.slane %v2298, 4
        %v2300 = vadd.f32 %v2298, %v2299
        %v2301 = vrot.slane %v2300, 2
        %v2302 = vadd.f32 %v2300, %v2301
        %v2303 = vrot.slane %v2302, 1
        %v2304 = vadd.f32 %v2302, %v2303
        %v2305 = vmul.f32 %v2304, %v2267
        %v2306 = vsel %vm746, %v2305, 0.0
        %2307 = vadd.xlane.f32.xlu0 %v2306
        %v2308 = vpop.xlane.xlu0 %2307
        %v2309 = vmul.f32 %v2308, 0.0009765625
        %v2310 = vmul.f32 %v2309, %v2267
        %v2311 = vadd.f32 %v2310, 0.0
        %v2312 = vmul.f32 %v2304, %v2268
        %v2313 = vsel %vm746, %v2312, 0.0
        %2314 = vadd.xlane.f32.xlu0 %v2313
        %v2315 = vpop.xlane.xlu0 %2314
        %v2316 = vmul.f32 %v2315, 0.0009765625
        %v2317 = vmul.f32 %v2316, %v2268
        %v2318 = vadd.f32 %v2311, %v2317
        %v2319 = vld [vmem:[#allocation7 + $0x25] sm:$0x1]
        %v2320 = vld [vmem:[#allocation7 + $0x26] sm:$0x1]
        %v2321 = vadd.f32 %v2318, 1e-05
        %v2322 = vrsqrt.pop %v2321
        %v2323 = vlaneseq
        %v2324 = vshrl.u32 %v2323, 7
        %v2325 = vsub.s32 0, %v2324
        %v2326 = vrot.slane %v2322, %v2325
        %v2327 = vmul.f32 %v2294, %v2326
        %v2328 = vmul.f32 %v2295, %v2326
        %v2329 = vlaneseq
        %v2330 = vshrl.u32 %v2329, 7
        %v2331 = vsub.s32 0, %v2330
        %v2332 = vrot.slane %v2319, %v2331
        %v2333 = vmul.f32 %v2327, %v2332
        %v2334 = vmul.f32 %v2328, %v2332
        %v2335 = vlaneseq
        %v2336 = vshrl.u32 %v2335, 7
        %v2337 = vsub.s32 0, %v2336
        %v2338 = vrot.slane %v2320, %v2337
        %v2339 = vadd.f32 %v2333, %v2338
        %v2340 = vadd.f32 %v2334, %v2338
        %v2341 = vmax.f32 %v2339, 0.0
        %v2342 = vmax.f32 %v2340, 0.0
        %2343 = vst [vmem:[#allocation3 + $0x30] sm:$0xff] %v2341
        %2344 = vst [vmem:[#allocation3 + $0x38] sm:$0xff] %v2342
        %v2345 = vld [vmem:[#allocation3] sm:$0xff]
        %v2346 = vld [vmem:[#allocation3 + $0x8] sm:$0xff]
        %v2347 = vld [vmem:[#allocation3 + $0x10] sm:$0xff]
        %v2348 = vld [vmem:[#allocation3 + $0x18] sm:$0xff]
        %v2349 = vld [vmem:[#allocation3 + $0x20] sm:$0xff]
        %v2350 = vld [vmem:[#allocation3 + $0x28] sm:$0xff]
        %v2351 = vld [vmem:[#allocation3 + $0x30] sm:$0xff]
        %v2352 = vld [vmem:[#allocation3 + $0x38] sm:$0xff]
        %v2353 = vpack.c.bf16 %v2346, %v2345
        %v2354 = vpack.c.bf16 %v2348, %v2347
        %v2355 = vpack.c.bf16 %v2350, %v2349
        %v2356 = vpack.c.bf16 %v2352, %v2351
        %v2357 = vld [vmem:[#allocation9] sm:$0xf]
        %v2358 = vld [vmem:[#allocation9 + $0x4] sm:$0xf]
        %v2359 = vld [vmem:[#allocation9 + $0x8] sm:$0xf]
        %v2360 = vld [vmem:[#allocation9 + $0xc] sm:$0xf]
        %v2361 = vld [vmem:[#allocation9 + $0x10] sm:$0xf]
        %v2362 = vld [vmem:[#allocation9 + $0x14] sm:$0xf]
        %v2363 = vld [vmem:[#allocation9 + $0x18] sm:$0xf]
        %v2364 = vld [vmem:[#allocation9 + $0x1c] sm:$0xf]
        %v2365 = vld [vmem:[#allocation9 + $0x20] sm:$0xf]
        %v2366 = vld [vmem:[#allocation9 + $0x24] sm:$0xf]
        %v2367 = vld [vmem:[#allocation9 + $0x28] sm:$0xf]
        %v2368 = vld [vmem:[#allocation9 + $0x2c] sm:$0xf]
        %v2369 = vld [vmem:[#allocation9 + $0x30] sm:$0xf]
        %v2370 = vld [vmem:[#allocation9 + $0x34] sm:$0xf]
        %v2371 = vld [vmem:[#allocation9 + $0x38] sm:$0xf]
        %v2372 = vld [vmem:[#allocation9 + $0x3c] sm:$0xf]
        %v2389 = vunpack.c.l.b16 %v2357
        %v2390 = vunpack.c.l.b16 %v2358
        %v2391 = vunpack.c.l.b16 %v2359
        %v2392 = vunpack.c.l.b16 %v2360
        %v2393 = vunpack.c.l.b16 %v2361
        %v2394 = vunpack.c.l.b16 %v2362
        %v2395 = vunpack.c.l.b16 %v2363
        %v2396 = vunpack.c.l.b16 %v2364
        %v2397 = vunpack.c.l.b16 %v2365
        %v2398 = vunpack.c.l.b16 %v2366
        %v2399 = vunpack.c.l.b16 %v2367
        %v2400 = vunpack.c.l.b16 %v2368
        %v2401 = vunpack.c.l.b16 %v2369
        %v2402 = vunpack.c.l.b16 %v2370
        %v2403 = vunpack.c.l.b16 %v2371
        %v2404 = vunpack.c.l.b16 %v2372
        %v2405 = vpack.c.b16 %v2390, %v2389
        %v2406 = vpack.c.b16 %v2392, %v2391
        %v2407 = vpack.c.b16 %v2394, %v2393
        %v2408 = vpack.c.b16 %v2396, %v2395
        %v2409 = vpack.c.b16 %v2398, %v2397
        %v2410 = vpack.c.b16 %v2400, %v2399
        %v2411 = vpack.c.b16 %v2402, %v2401
        %v2412 = vpack.c.b16 %v2404, %v2403
        %2421 = vmatprep.subr.bf16.mxu0 0
        %2422 = vmatpush1.bf16.msra.mxu0 %v2412
        %2423 = vmatprep.subr.bf16.mxu0 0
        %2424 = vmatpush1.bf16.msra.mxu0 %v2411
        %2425 = vmatprep.subr.bf16.mxu0 0
        %2426 = vmatpush1.bf16.msra.mxu0 %v2410
        %2427 = vmatprep.subr.bf16.mxu0 0
        %2428 = vmatpush1.bf16.msra.mxu0 %v2409
        %2429 = vmatprep.subr.bf16.mxu0 0
        %2430 = vmatpush1.bf16.msra.mxu0 %v2408
        %2431 = vmatprep.subr.bf16.mxu0 0
        %2432 = vmatpush1.bf16.msra.mxu0 %v2407
        %2433 = vmatprep.subr.bf16.mxu0 0
        %2434 = vmatpush1.bf16.msra.mxu0 %v2406
        %2435 = vmatprep.subr.bf16.mxu0 0
        %2436 = vmatpush1.bf16.msra.mxu0 %v2405
        %2437 = vmatprep.subr.bf16.mxu0 0
        %2438 = vmatpush2.bf16.msra.mxu0 0
        %2439 = vmatprep.subr.bf16.mxu0 0
        %2440 = vmatpush2.bf16.msra.mxu0 0
        %2441 = vmatprep.subr.bf16.mxu0 0
        %2442 = vmatpush2.bf16.msra.mxu0 0
        %2443 = vmatprep.subr.bf16.mxu0 0
        %2444 = vmatpush2.bf16.msra.mxu0 0
        %2445 = vmatprep.subr.bf16.mxu0 0
        %2446 = vmatpush2.bf16.msra.mxu0 0
        %2447 = vmatprep.subr.bf16.mxu0 0
        %2448 = vmatpush2.bf16.msra.mxu0 0
        %2449 = vmatprep.subr.bf16.mxu0 0
        %2450 = vmatpush2.bf16.msra.mxu0 0
        %2451 = vmatprep.subr.bf16.mxu0 0
        %2452 = vmatpush2.bf16.msra.mxu0 0
        %2453 = vmatprep.mubr.bf16.mxu0 0
        %2454 = vmatmul.mubr.bf16.gmra.mxu0 %v2353
        %v2455 = vpop.f32.mrf.mxu0
        %v2456 = vadd.f32 0.0, %v2455
        %v2457 = vpop.f32.mrf.mxu0
        %v2458 = vpop.f32.mrf.mxu0
        %v2459 = vadd.f32 0.0, %v2458
        %v2460 = vpop.f32.mrf.mxu0
        %2461 = vmatprep.mubr.bf16.mxu0 0
        %2462 = vmatmul.mubr.bf16.gmra.mxu0 %v2354
        %v2463 = vpop.f32.mrf.mxu0
        %v2464 = vadd.f32 0.0, %v2463
        %v2465 = vpop.f32.mrf.mxu0
        %v2466 = vpop.f32.mrf.mxu0
        %v2467 = vadd.f32 0.0, %v2466
        %v2468 = vpop.f32.mrf.mxu0
        %2469 = vmatprep.mubr.bf16.mxu0 0
        %2470 = vmatmul.mubr.bf16.gmra.mxu0 %v2355
        %v2471 = vpop.f32.mrf.mxu0
        %v2472 = vadd.f32 0.0, %v2471
        %v2473 = vpop.f32.mrf.mxu0
        %v2474 = vpop.f32.mrf.mxu0
        %v2475 = vadd.f32 0.0, %v2474
        %v2476 = vpop.f32.mrf.mxu0
        %2477 = vmatprep.mubr.bf16.mxu0 0
        %2478 = vmatmul.mubr.bf16.gmra.mxu0 %v2356
        %v2479 = vpop.f32.mrf.mxu0
        %v2480 = vadd.f32 0.0, %v2479
        %v2481 = vpop.f32.mrf.mxu0
        %v2482 = vpop.f32.mrf.mxu0
        %v2483 = vadd.f32 0.0, %v2482
        %v2484 = vpop.f32.mrf.mxu0
        %2485 = vdwg.mxu0
        %v2486 = vadd.f32 %v2345, %v2456
        %v2487 = vadd.f32 %v2346, %v2459
        %v2488 = vadd.f32 %v2347, %v2464
        %v2489 = vadd.f32 %v2348, %v2467
        %v2490 = vadd.f32 %v2349, %v2472
        %v2491 = vadd.f32 %v2350, %v2475
        %v2492 = vadd.f32 %v2351, %v2480
        %v2493 = vadd.f32 %v2352, %v2483
        %v2494 = vld [vmem:[#allocation7 + $0x24] sm:$0x1]
        %v2495 = vlaneseq
        %v2496 = vshrl.u32 %v2495, 7
        %v2497 = vsub.s32 0, %v2496
        %v2498 = vrot.slane %v2494, %v2497
        %v2499 = vadd.f32 %v2486, %v2498
        %v2500 = vadd.f32 %v2487, %v2498
        %v2501 = vadd.f32 %v2488, %v2498
        %v2502 = vadd.f32 %v2489, %v2498
        %v2503 = vadd.f32 %v2490, %v2498
        %v2504 = vadd.f32 %v2491, %v2498
        %v2505 = vadd.f32 %v2492, %v2498
        %v2506 = vadd.f32 %v2493, %v2498
        %v2507 = vld [vmem:[#allocation7 + $0x29] sm:$0x1]
        %v2508 = vld [vmem:[#allocation7 + $0x2a] sm:$0x1]
        %v2509 = vadd.f32 %v2499, %v2500
        %v2510 = vrot.slane %v2509, 4
        %v2511 = vadd.f32 %v2509, %v2510
        %v2512 = vrot.slane %v2511, 2
        %v2513 = vadd.f32 %v2511, %v2512
        %v2514 = vrot.slane %v2513, 1
        %v2515 = vadd.f32 %v2513, %v2514
        %v2516 = vmul.f32 %v2515, %v2507
        %v2517 = vsel %vm746, %v2516, 0.0
        %2518 = vadd.xlane.f32.xlu0 %v2517
        %v2519 = vpop.xlane.xlu0 %2518
        %v2520 = vmul.f32 %v2519, 0.0009765625
        %v2521 = vmul.f32 %v2520, %v2507
        %v2522 = vadd.f32 %v2521, 0.0
        %v2523 = vmul.f32 %v2515, %v2508
        %v2524 = vsel %vm746, %v2523, 0.0
        %2525 = vadd.xlane.f32.xlu0 %v2524
        %v2526 = vpop.xlane.xlu0 %2525
        %v2527 = vmul.f32 %v2526, 0.0009765625
        %v2528 = vmul.f32 %v2527, %v2508
        %v2529 = vadd.f32 %v2522, %v2528
        %v2530 = vlaneseq
        %v2531 = vshrl.u32 %v2530, 7
        %v2532 = vsub.s32 0, %v2531
        %v2533 = vrot.slane %v2529, %v2532
        %v2534 = vsub.f32 %v2499, %v2533
        %v2535 = vsub.f32 %v2500, %v2533
        %v2536 = vmul.f32 %v2534, %v2534
        %v2537 = vmul.f32 %v2535, %v2535
        %v2538 = vadd.f32 %v2536, %v2537
        %v2539 = vrot.slane %v2538, 4
        %v2540 = vadd.f32 %v2538, %v2539
        %v2541 = vrot.slane %v2540, 2
        %v2542 = vadd.f32 %v2540, %v2541
        %v2543 = vrot.slane %v2542, 1
        %v2544 = vadd.f32 %v2542, %v2543
        %v2545 = vmul.f32 %v2544, %v2507
        %v2546 = vsel %vm746, %v2545, 0.0
        %2547 = vadd.xlane.f32.xlu0 %v2546
        %v2548 = vpop.xlane.xlu0 %2547
        %v2549 = vmul.f32 %v2548, 0.0009765625
        %v2550 = vmul.f32 %v2549, %v2507
        %v2551 = vadd.f32 %v2550, 0.0
        %v2552 = vmul.f32 %v2544, %v2508
        %v2553 = vsel %vm746, %v2552, 0.0
        %2554 = vadd.xlane.f32.xlu0 %v2553
        %v2555 = vpop.xlane.xlu0 %2554
        %v2556 = vmul.f32 %v2555, 0.0009765625
        %v2557 = vmul.f32 %v2556, %v2508
        %v2558 = vadd.f32 %v2551, %v2557
        %v2559 = vld [vmem:[#allocation7 + $0x27] sm:$0x1]
        %v2560 = vld [vmem:[#allocation7 + $0x28] sm:$0x1]
        %v2561 = vadd.f32 %v2558, 1e-05
        %v2562 = vrsqrt.pop %v2561
        %v2563 = vlaneseq
        %v2564 = vshrl.u32 %v2563, 7
        %v2565 = vsub.s32 0, %v2564
        %v2566 = vrot.slane %v2562, %v2565
        %v2567 = vmul.f32 %v2534, %v2566
        %v2568 = vmul.f32 %v2535, %v2566
        %v2569 = vlaneseq
        %v2570 = vshrl.u32 %v2569, 7
        %v2571 = vsub.s32 0, %v2570
        %v2572 = vrot.slane %v2559, %v2571
        %v2573 = vmul.f32 %v2567, %v2572
        %v2574 = vmul.f32 %v2568, %v2572
        %v2575 = vlaneseq
        %v2576 = vshrl.u32 %v2575, 7
        %v2577 = vsub.s32 0, %v2576
        %v2578 = vrot.slane %v2560, %v2577
        %v2579 = vadd.f32 %v2573, %v2578
        %v2580 = vadd.f32 %v2574, %v2578
        %v2581 = vmax.f32 %v2579, 0.0
        %v2582 = vmax.f32 %v2580, 0.0
        %2583 = vst [vmem:[#allocation3] sm:$0xff] %v2581
        %2584 = vst [vmem:[#allocation3 + $0x8] sm:$0xff] %v2582
        %v2585 = vld [vmem:[#allocation7 + $0x29] sm:$0x1]
        %v2586 = vld [vmem:[#allocation7 + $0x2a] sm:$0x1]
        %v2587 = vadd.f32 %v2501, %v2502
        %v2588 = vrot.slane %v2587, 4
        %v2589 = vadd.f32 %v2587, %v2588
        %v2590 = vrot.slane %v2589, 2
        %v2591 = vadd.f32 %v2589, %v2590
        %v2592 = vrot.slane %v2591, 1
        %v2593 = vadd.f32 %v2591, %v2592
        %v2594 = vmul.f32 %v2593, %v2585
        %v2595 = vsel %vm746, %v2594, 0.0
        %2596 = vadd.xlane.f32.xlu0 %v2595
        %v2597 = vpop.xlane.xlu0 %2596
        %v2598 = vmul.f32 %v2597, 0.0009765625
        %v2599 = vmul.f32 %v2598, %v2585
        %v2600 = vadd.f32 %v2599, 0.0
        %v2601 = vmul.f32 %v2593, %v2586
        %v2602 = vsel %vm746, %v2601, 0.0
        %2603 = vadd.xlane.f32.xlu0 %v2602
        %v2604 = vpop.xlane.xlu0 %2603
        %v2605 = vmul.f32 %v2604, 0.0009765625
        %v2606 = vmul.f32 %v2605, %v2586
        %v2607 = vadd.f32 %v2600, %v2606
        %v2608 = vlaneseq
        %v2609 = vshrl.u32 %v2608, 7
        %v2610 = vsub.s32 0, %v2609
        %v2611 = vrot.slane %v2607, %v2610
        %v2612 = vsub.f32 %v2501, %v2611
        %v2613 = vsub.f32 %v2502, %v2611
        %v2614 = vmul.f32 %v2612, %v2612
        %v2615 = vmul.f32 %v2613, %v2613
        %v2616 = vadd.f32 %v2614, %v2615
        %v2617 = vrot.slane %v2616, 4
        %v2618 = vadd.f32 %v2616, %v2617
        %v2619 = vrot.slane %v2618, 2
        %v2620 = vadd.f32 %v2618, %v2619
        %v2621 = vrot.slane %v2620, 1
        %v2622 = vadd.f32 %v2620, %v2621
        %v2623 = vmul.f32 %v2622, %v2585
        %v2624 = vsel %vm746, %v2623, 0.0
        %2625 = vadd.xlane.f32.xlu0 %v2624
        %v2626 = vpop.xlane.xlu0 %2625
        %v2627 = vmul.f32 %v2626, 0.0009765625
        %v2628 = vmul.f32 %v2627, %v2585
        %v2629 = vadd.f32 %v2628, 0.0
        %v2630 = vmul.f32 %v2622, %v2586
        %v2631 = vsel %vm746, %v2630, 0.0
        %2632 = vadd.xlane.f32.xlu0 %v2631
        %v2633 = vpop.xlane.xlu0 %2632
        %v2634 = vmul.f32 %v2633, 0.0009765625
        %v2635 = vmul.f32 %v2634, %v2586
        %v2636 = vadd.f32 %v2629, %v2635
        %v2637 = vld [vmem:[#allocation7 + $0x27] sm:$0x1]
        %v2638 = vld [vmem:[#allocation7 + $0x28] sm:$0x1]
        %v2639 = vadd.f32 %v2636, 1e-05
        %v2640 = vrsqrt.pop %v2639
        %v2641 = vlaneseq
        %v2642 = vshrl.u32 %v2641, 7
        %v2643 = vsub.s32 0, %v2642
        %v2644 = vrot.slane %v2640, %v2643
        %v2645 = vmul.f32 %v2612, %v2644
        %v2646 = vmul.f32 %v2613, %v2644
        %v2647 = vlaneseq
        %v2648 = vshrl.u32 %v2647, 7
        %v2649 = vsub.s32 0, %v2648
        %v2650 = vrot.slane %v2637, %v2649
        %v2651 = vmul.f32 %v2645, %v2650
        %v2652 = vmul.f32 %v2646, %v2650
        %v2653 = vlaneseq
        %v2654 = vshrl.u32 %v2653, 7
        %v2655 = vsub.s32 0, %v2654
        %v2656 = vrot.slane %v2638, %v2655
        %v2657 = vadd.f32 %v2651, %v2656
        %v2658 = vadd.f32 %v2652, %v2656
        %v2659 = vmax.f32 %v2657, 0.0
        %v2660 = vmax.f32 %v2658, 0.0
        %2661 = vst [vmem:[#allocation3 + $0x10] sm:$0xff] %v2659
        %2662 = vst [vmem:[#allocation3 + $0x18] sm:$0xff] %v2660
        %v2663 = vld [vmem:[#allocation7 + $0x29] sm:$0x1]
        %v2664 = vld [vmem:[#allocation7 + $0x2a] sm:$0x1]
        %v2665 = vadd.f32 %v2503, %v2504
        %v2666 = vrot.slane %v2665, 4
        %v2667 = vadd.f32 %v2665, %v2666
        %v2668 = vrot.slane %v2667, 2
        %v2669 = vadd.f32 %v2667, %v2668
        %v2670 = vrot.slane %v2669, 1
        %v2671 = vadd.f32 %v2669, %v2670
        %v2672 = vmul.f32 %v2671, %v2663
        %v2673 = vsel %vm746, %v2672, 0.0
        %2674 = vadd.xlane.f32.xlu0 %v2673
        %v2675 = vpop.xlane.xlu0 %2674
        %v2676 = vmul.f32 %v2675, 0.0009765625
        %v2677 = vmul.f32 %v2676, %v2663
        %v2678 = vadd.f32 %v2677, 0.0
        %v2679 = vmul.f32 %v2671, %v2664
        %v2680 = vsel %vm746, %v2679, 0.0
        %2681 = vadd.xlane.f32.xlu0 %v2680
        %v2682 = vpop.xlane.xlu0 %2681
        %v2683 = vmul.f32 %v2682, 0.0009765625
        %v2684 = vmul.f32 %v2683, %v2664
        %v2685 = vadd.f32 %v2678, %v2684
        %v2686 = vlaneseq
        %v2687 = vshrl.u32 %v2686, 7
        %v2688 = vsub.s32 0, %v2687
        %v2689 = vrot.slane %v2685, %v2688
        %v2690 = vsub.f32 %v2503, %v2689
        %v2691 = vsub.f32 %v2504, %v2689
        %v2692 = vmul.f32 %v2690, %v2690
        %v2693 = vmul.f32 %v2691, %v2691
        %v2694 = vadd.f32 %v2692, %v2693
        %v2695 = vrot.slane %v2694, 4
        %v2696 = vadd.f32 %v2694, %v2695
        %v2697 = vrot.slane %v2696, 2
        %v2698 = vadd.f32 %v2696, %v2697
        %v2699 = vrot.slane %v2698, 1
        %v2700 = vadd.f32 %v2698, %v2699
        %v2701 = vmul.f32 %v2700, %v2663
        %v2702 = vsel %vm746, %v2701, 0.0
        %2703 = vadd.xlane.f32.xlu0 %v2702
        %v2704 = vpop.xlane.xlu0 %2703
        %v2705 = vmul.f32 %v2704, 0.0009765625
        %v2706 = vmul.f32 %v2705, %v2663
        %v2707 = vadd.f32 %v2706, 0.0
        %v2708 = vmul.f32 %v2700, %v2664
        %v2709 = vsel %vm746, %v2708, 0.0
        %2710 = vadd.xlane.f32.xlu0 %v2709
        %v2711 = vpop.xlane.xlu0 %2710
        %v2712 = vmul.f32 %v2711, 0.0009765625
        %v2713 = vmul.f32 %v2712, %v2664
        %v2714 = vadd.f32 %v2707, %v2713
        %v2715 = vld [vmem:[#allocation7 + $0x27] sm:$0x1]
        %v2716 = vld [vmem:[#allocation7 + $0x28] sm:$0x1]
        %v2717 = vadd.f32 %v2714, 1e-05
        %v2718 = vrsqrt.pop %v2717
        %v2719 = vlaneseq
        %v2720 = vshrl.u32 %v2719, 7
        %v2721 = vsub.s32 0, %v2720
        %v2722 = vrot.slane %v2718, %v2721
        %v2723 = vmul.f32 %v2690, %v2722
        %v2724 = vmul.f32 %v2691, %v2722
        %v2725 = vlaneseq
        %v2726 = vshrl.u32 %v2725, 7
        %v2727 = vsub.s32 0, %v2726
        %v2728 = vrot.slane %v2715, %v2727
        %v2729 = vmul.f32 %v2723, %v2728
        %v2730 = vmul.f32 %v2724, %v2728
        %v2731 = vlaneseq
        %v2732 = vshrl.u32 %v2731, 7
        %v2733 = vsub.s32 0, %v2732
        %v2734 = vrot.slane %v2716, %v2733
        %v2735 = vadd.f32 %v2729, %v2734
        %v2736 = vadd.f32 %v2730, %v2734
        %v2737 = vmax.f32 %v2735, 0.0
        %v2738 = vmax.f32 %v2736, 0.0
        %2739 = vst [vmem:[#allocation3 + $0x20] sm:$0xff] %v2737
        %2740 = vst [vmem:[#allocation3 + $0x28] sm:$0xff] %v2738
        %v2741 = vld [vmem:[#allocation7 + $0x29] sm:$0x1]
        %v2742 = vld [vmem:[#allocation7 + $0x2a] sm:$0x1]
        %v2743 = vadd.f32 %v2505, %v2506
        %v2744 = vrot.slane %v2743, 4
        %v2745 = vadd.f32 %v2743, %v2744
        %v2746 = vrot.slane %v2745, 2
        %v2747 = vadd.f32 %v2745, %v2746
        %v2748 = vrot.slane %v2747, 1
        %v2749 = vadd.f32 %v2747, %v2748
        %v2750 = vmul.f32 %v2749, %v2741
        %v2751 = vsel %vm746, %v2750, 0.0
        %2752 = vadd.xlane.f32.xlu0 %v2751
        %v2753 = vpop.xlane.xlu0 %2752
        %v2754 = vmul.f32 %v2753, 0.0009765625
        %v2755 = vmul.f32 %v2754, %v2741
        %v2756 = vadd.f32 %v2755, 0.0
        %v2757 = vmul.f32 %v2749, %v2742
        %v2758 = vsel %vm746, %v2757, 0.0
        %2759 = vadd.xlane.f32.xlu0 %v2758
        %v2760 = vpop.xlane.xlu0 %2759
        %v2761 = vmul.f32 %v2760, 0.0009765625
        %v2762 = vmul.f32 %v2761, %v2742
        %v2763 = vadd.f32 %v2756, %v2762
        %v2764 = vlaneseq
        %v2765 = vshrl.u32 %v2764, 7
        %v2766 = vsub.s32 0, %v2765
        %v2767 = vrot.slane %v2763, %v2766
        %v2768 = vsub.f32 %v2505, %v2767
        %v2769 = vsub.f32 %v2506, %v2767
        %v2770 = vmul.f32 %v2768, %v2768
        %v2771 = vmul.f32 %v2769, %v2769
        %v2772 = vadd.f32 %v2770, %v2771
        %v2773 = vrot.slane %v2772, 4
        %v2774 = vadd.f32 %v2772, %v2773
        %v2775 = vrot.slane %v2774, 2
        %v2776 = vadd.f32 %v2774, %v2775
        %v2777 = vrot.slane %v2776, 1
        %v2778 = vadd.f32 %v2776, %v2777
        %v2779 = vmul.f32 %v2778, %v2741
        %v2780 = vsel %vm746, %v2779, 0.0
        %2781 = vadd.xlane.f32.xlu0 %v2780
        %v2782 = vpop.xlane.xlu0 %2781
        %v2783 = vmul.f32 %v2782, 0.0009765625
        %v2784 = vmul.f32 %v2783, %v2741
        %v2785 = vadd.f32 %v2784, 0.0
        %v2786 = vmul.f32 %v2778, %v2742
        %v2787 = vsel %vm746, %v2786, 0.0
        %2788 = vadd.xlane.f32.xlu0 %v2787
        %v2789 = vpop.xlane.xlu0 %2788
        %v2790 = vmul.f32 %v2789, 0.0009765625
        %v2791 = vmul.f32 %v2790, %v2742
        %v2792 = vadd.f32 %v2785, %v2791
        %v2793 = vld [vmem:[#allocation7 + $0x27] sm:$0x1]
        %v2794 = vld [vmem:[#allocation7 + $0x28] sm:$0x1]
        %v2795 = vadd.f32 %v2792, 1e-05
        %v2796 = vrsqrt.pop %v2795
        %v2797 = vlaneseq
        %v2798 = vshrl.u32 %v2797, 7
        %v2799 = vsub.s32 0, %v2798
        %v2800 = vrot.slane %v2796, %v2799
        %v2801 = vmul.f32 %v2768, %v2800
        %v2802 = vmul.f32 %v2769, %v2800
        %v2803 = vlaneseq
        %v2804 = vshrl.u32 %v2803, 7
        %v2805 = vsub.s32 0, %v2804
        %v2806 = vrot.slane %v2793, %v2805
        %v2807 = vmul.f32 %v2801, %v2806
        %v2808 = vmul.f32 %v2802, %v2806
        %v2809 = vlaneseq
        %v2810 = vshrl.u32 %v2809, 7
        %v2811 = vsub.s32 0, %v2810
        %v2812 = vrot.slane %v2794, %v2811
        %v2813 = vadd.f32 %v2807, %v2812
        %v2814 = vadd.f32 %v2808, %v2812
        %v2815 = vmax.f32 %v2813, 0.0
        %v2816 = vmax.f32 %v2814, 0.0
        %2817 = vst [vmem:[#allocation3 + $0x30] sm:$0xff] %v2815
        %2818 = vst [vmem:[#allocation3 + $0x38] sm:$0xff] %v2816
        %v2819 = vld [vmem:[#allocation3] sm:$0xff]
        %v2820 = vld [vmem:[#allocation3 + $0x8] sm:$0xff]
        %v2821 = vld [vmem:[#allocation3 + $0x10] sm:$0xff]
        %v2822 = vld [vmem:[#allocation3 + $0x18] sm:$0xff]
        %v2823 = vld [vmem:[#allocation3 + $0x20] sm:$0xff]
        %v2824 = vld [vmem:[#allocation3 + $0x28] sm:$0xff]
        %v2825 = vld [vmem:[#allocation3 + $0x30] sm:$0xff]
        %v2826 = vld [vmem:[#allocation3 + $0x38] sm:$0xff]
        %v2827 = vpack.c.bf16 %v2820, %v2819
        %v2828 = vpack.c.bf16 %v2822, %v2821
        %v2829 = vpack.c.bf16 %v2824, %v2823
        %v2830 = vpack.c.bf16 %v2826, %v2825
        %v2831 = vld [vmem:[#allocation10] sm:$0xf]
        %v2832 = vld [vmem:[#allocation10 + $0x4] sm:$0xf]
        %v2833 = vld [vmem:[#allocation10 + $0x8] sm:$0xf]
        %v2834 = vld [vmem:[#allocation10 + $0xc] sm:$0xf]
        %v2835 = vld [vmem:[#allocation10 + $0x10] sm:$0xf]
        %v2836 = vld [vmem:[#allocation10 + $0x14] sm:$0xf]
        %v2837 = vld [vmem:[#allocation10 + $0x18] sm:$0xf]
        %v2838 = vld [vmem:[#allocation10 + $0x1c] sm:$0xf]
        %v2839 = vld [vmem:[#allocation10 + $0x20] sm:$0xf]
        %v2840 = vld [vmem:[#allocation10 + $0x24] sm:$0xf]
        %v2841 = vld [vmem:[#allocation10 + $0x28] sm:$0xf]
        %v2842 = vld [vmem:[#allocation10 + $0x2c] sm:$0xf]
        %v2843 = vld [vmem:[#allocation10 + $0x30] sm:$0xf]
        %v2844 = vld [vmem:[#allocation10 + $0x34] sm:$0xf]
        %v2845 = vld [vmem:[#allocation10 + $0x38] sm:$0xf]
        %v2846 = vld [vmem:[#allocation10 + $0x3c] sm:$0xf]
        %v2847 = vld [vmem:[#allocation12] sm:$0x1]
        %v2848 = vlaneseq
        %v2849 = vshrl.u32 %v2848, 7
        %v2850 = vsub.s32 0, %v2849
        %v2851 = vrot.slane %v2847, %v2850
        %v2868 = vunpack.c.l.b16 %v2831
        %v2869 = vunpack.c.l.b16 %v2832
        %v2870 = vunpack.c.l.b16 %v2833
        %v2871 = vunpack.c.l.b16 %v2834
        %v2872 = vunpack.c.l.b16 %v2835
        %v2873 = vunpack.c.l.b16 %v2836
        %v2874 = vunpack.c.l.b16 %v2837
        %v2875 = vunpack.c.l.b16 %v2838
        %v2876 = vunpack.c.l.b16 %v2839
        %v2877 = vunpack.c.l.b16 %v2840
        %v2878 = vunpack.c.l.b16 %v2841
        %v2879 = vunpack.c.l.b16 %v2842
        %v2880 = vunpack.c.l.b16 %v2843
        %v2881 = vunpack.c.l.b16 %v2844
        %v2882 = vunpack.c.l.b16 %v2845
        %v2883 = vunpack.c.l.b16 %v2846
        %v2884 = vpack.c.b16 %v2869, %v2868
        %v2885 = vpack.c.b16 %v2871, %v2870
        %v2886 = vpack.c.b16 %v2873, %v2872
        %v2887 = vpack.c.b16 %v2875, %v2874
        %v2888 = vpack.c.b16 %v2877, %v2876
        %v2889 = vpack.c.b16 %v2879, %v2878
        %v2890 = vpack.c.b16 %v2881, %v2880
        %v2891 = vpack.c.b16 %v2883, %v2882
        %2900 = vmatprep.subr.bf16.mxu0 0
        %2901 = vmatpush1.bf16.msra.mxu0 %v2891
        %2902 = vmatprep.subr.bf16.mxu0 0
        %2903 = vmatpush1.bf16.msra.mxu0 %v2890
        %2904 = vmatprep.subr.bf16.mxu0 0
        %2905 = vmatpush1.bf16.msra.mxu0 %v2889
        %2906 = vmatprep.subr.bf16.mxu0 0
        %2907 = vmatpush1.bf16.msra.mxu0 %v2888
        %2908 = vmatprep.subr.bf16.mxu0 0
        %2909 = vmatpush1.bf16.msra.mxu0 %v2887
        %2910 = vmatprep.subr.bf16.mxu0 0
        %2911 = vmatpush1.bf16.msra.mxu0 %v2886
        %2912 = vmatprep.subr.bf16.mxu0 0
        %2913 = vmatpush1.bf16.msra.mxu0 %v2885
        %2914 = vmatprep.subr.bf16.mxu0 0
        %2915 = vmatpush1.bf16.msra.mxu0 %v2884
        %2916 = vmatprep.subr.bf16.mxu0 0
        %2917 = vmatpush2.bf16.msra.mxu0 0
        %2918 = vmatprep.subr.bf16.mxu0 0
        %2919 = vmatpush2.bf16.msra.mxu0 0
        %2920 = vmatprep.subr.bf16.mxu0 0
        %2921 = vmatpush2.bf16.msra.mxu0 0
        %2922 = vmatprep.subr.bf16.mxu0 0
        %2923 = vmatpush2.bf16.msra.mxu0 0
        %2924 = vmatprep.subr.bf16.mxu0 0
        %2925 = vmatpush2.bf16.msra.mxu0 0
        %2926 = vmatprep.subr.bf16.mxu0 0
        %2927 = vmatpush2.bf16.msra.mxu0 0
        %2928 = vmatprep.subr.bf16.mxu0 0
        %2929 = vmatpush2.bf16.msra.mxu0 0
        %2930 = vmatprep.subr.bf16.mxu0 0
        %2931 = vmatpush2.bf16.msra.mxu0 0
        %2932 = vmatprep.mubr.bf16.mxu0 0
        %2933 = vmatmul.mubr.bf16.gmra.mxu0 %v2827
        %v2934 = vpop.f32.mrf.mxu0
        %v2935 = vadd.f32 %v2851, %v2934
        %v2936 = vpop.f32.mrf.mxu0
        %v2937 = vpop.f32.mrf.mxu0
        %v2938 = vadd.f32 %v2851, %v2937
        %v2939 = vpop.f32.mrf.mxu0
        %2940 = vmatprep.mubr.bf16.mxu0 0
        %2941 = vmatmul.mubr.bf16.gmra.mxu0 %v2828
        %v2942 = vpop.f32.mrf.mxu0
        %v2943 = vadd.f32 %v2851, %v2942
        %v2944 = vpop.f32.mrf.mxu0
        %v2945 = vpop.f32.mrf.mxu0
        %v2946 = vadd.f32 %v2851, %v2945
        %v2947 = vpop.f32.mrf.mxu0
        %2948 = vmatprep.mubr.bf16.mxu0 0
        %2949 = vmatmul.mubr.bf16.gmra.mxu0 %v2829
        %v2950 = vpop.f32.mrf.mxu0
        %v2951 = vadd.f32 %v2851, %v2950
        %v2952 = vpop.f32.mrf.mxu0
        %v2953 = vpop.f32.mrf.mxu0
        %v2954 = vadd.f32 %v2851, %v2953
        %v2955 = vpop.f32.mrf.mxu0
        %2956 = vmatprep.mubr.bf16.mxu0 0
        %2957 = vmatmul.mubr.bf16.gmra.mxu0 %v2830
        %v2958 = vpop.f32.mrf.mxu0
        %v2959 = vadd.f32 %v2851, %v2958
        %v2960 = vpop.f32.mrf.mxu0
        %v2961 = vpop.f32.mrf.mxu0
        %v2962 = vadd.f32 %v2851, %v2961
        %v2963 = vpop.f32.mrf.mxu0
        %2964 = vdwg.mxu0
        %v2965 = vld [vmem:[#allocation12 + $0x3] sm:$0x1]
        %v2966 = vld [vmem:[#allocation12 + $0x4] sm:$0x1]
        %v2967 = vadd.f32 %v2935, %v2938
        %v2968 = vrot.slane %v2967, 4
        %v2969 = vadd.f32 %v2967, %v2968
        %v2970 = vrot.slane %v2969, 2
        %v2971 = vadd.f32 %v2969, %v2970
        %v2972 = vrot.slane %v2971, 1
        %v2973 = vadd.f32 %v2971, %v2972
        %v2974 = vmul.f32 %v2973, %v2965
        %v2975 = vsel %vm746, %v2974, 0.0
        %2976 = vadd.xlane.f32.xlu0 %v2975
        %v2977 = vpop.xlane.xlu0 %2976
        %v2978 = vmul.f32 %v2977, 0.0009765625
        %v2979 = vmul.f32 %v2978, %v2965
        %v2980 = vadd.f32 %v2979, 0.0
        %v2981 = vmul.f32 %v2973, %v2966
        %v2982 = vsel %vm746, %v2981, 0.0
        %2983 = vadd.xlane.f32.xlu0 %v2982
        %v2984 = vpop.xlane.xlu0 %2983
        %v2985 = vmul.f32 %v2984, 0.0009765625
        %v2986 = vmul.f32 %v2985, %v2966
        %v2987 = vadd.f32 %v2980, %v2986
        %v2988 = vlaneseq
        %v2989 = vshrl.u32 %v2988, 7
        %v2990 = vsub.s32 0, %v2989
        %v2991 = vrot.slane %v2987, %v2990
        %v2992 = vsub.f32 %v2935, %v2991
        %v2993 = vsub.f32 %v2938, %v2991
        %v2994 = vmul.f32 %v2992, %v2992
        %v2995 = vmul.f32 %v2993, %v2993
        %v2996 = vadd.f32 %v2994, %v2995
        %v2997 = vrot.slane %v2996, 4
        %v2998 = vadd.f32 %v2996, %v2997
        %v2999 = vrot.slane %v2998, 2
        %v3000 = vadd.f32 %v2998, %v2999
        %v3001 = vrot.slane %v3000, 1
        %v3002 = vadd.f32 %v3000, %v3001
        %v3003 = vmul.f32 %v3002, %v2965
        %v3004 = vsel %vm746, %v3003, 0.0
        %3005 = vadd.xlane.f32.xlu0 %v3004
        %v3006 = vpop.xlane.xlu0 %3005
        %v3007 = vmul.f32 %v3006, 0.0009765625
        %v3008 = vmul.f32 %v3007, %v2965
        %v3009 = vadd.f32 %v3008, 0.0
        %v3010 = vmul.f32 %v3002, %v2966
        %v3011 = vsel %vm746, %v3010, 0.0
        %3012 = vadd.xlane.f32.xlu0 %v3011
        %v3013 = vpop.xlane.xlu0 %3012
        %v3014 = vmul.f32 %v3013, 0.0009765625
        %v3015 = vmul.f32 %v3014, %v2966
        %v3016 = vadd.f32 %v3009, %v3015
        %v3017 = vld [vmem:[#allocation12 + $0x1] sm:$0x1]
        %v3018 = vld [vmem:[#allocation12 + $0x2] sm:$0x1]
        %v3019 = vadd.f32 %v3016, 1e-05
        %v3020 = vrsqrt.pop %v3019
        %v3021 = vlaneseq
        %v3022 = vshrl.u32 %v3021, 7
        %v3023 = vsub.s32 0, %v3022
        %v3024 = vrot.slane %v3020, %v3023
        %v3025 = vmul.f32 %v2992, %v3024
        %v3026 = vmul.f32 %v2993, %v3024
        %v3027 = vlaneseq
        %v3028 = vshrl.u32 %v3027, 7
        %v3029 = vsub.s32 0, %v3028
        %v3030 = vrot.slane %v3017, %v3029
        %v3031 = vmul.f32 %v3025, %v3030
        %v3032 = vmul.f32 %v3026, %v3030
        %v3033 = vlaneseq
        %v3034 = vshrl.u32 %v3033, 7
        %v3035 = vsub.s32 0, %v3034
        %v3036 = vrot.slane %v3018, %v3035
        %v3037 = vadd.f32 %v3031, %v3036
        %v3038 = vadd.f32 %v3032, %v3036
        %3039 = vst [vmem:[%s298] sm:$0xff] %v3037
        %3040 = vst [vmem:[%s298 + $0x8] sm:$0xff] %v3038
        %v3041 = vld [vmem:[#allocation12 + $0x3] sm:$0x1]
        %v3042 = vld [vmem:[#allocation12 + $0x4] sm:$0x1]
        %v3043 = vadd.f32 %v2943, %v2946
        %v3044 = vrot.slane %v3043, 4
        %v3045 = vadd.f32 %v3043, %v3044
        %v3046 = vrot.slane %v3045, 2
        %v3047 = vadd.f32 %v3045, %v3046
        %v3048 = vrot.slane %v3047, 1
        %v3049 = vadd.f32 %v3047, %v3048
        %v3050 = vmul.f32 %v3049, %v3041
        %v3051 = vsel %vm746, %v3050, 0.0
        %3052 = vadd.xlane.f32.xlu0 %v3051
        %v3053 = vpop.xlane.xlu0 %3052
        %v3054 = vmul.f32 %v3053, 0.0009765625
        %v3055 = vmul.f32 %v3054, %v3041
        %v3056 = vadd.f32 %v3055, 0.0
        %v3057 = vmul.f32 %v3049, %v3042
        %v3058 = vsel %vm746, %v3057, 0.0
        %3059 = vadd.xlane.f32.xlu0 %v3058
        %v3060 = vpop.xlane.xlu0 %3059
        %v3061 = vmul.f32 %v3060, 0.0009765625
        %v3062 = vmul.f32 %v3061, %v3042
        %v3063 = vadd.f32 %v3056, %v3062
        %v3064 = vlaneseq
        %v3065 = vshrl.u32 %v3064, 7
        %v3066 = vsub.s32 0, %v3065
        %v3067 = vrot.slane %v3063, %v3066
        %v3068 = vsub.f32 %v2943, %v3067
        %v3069 = vsub.f32 %v2946, %v3067
        %v3070 = vmul.f32 %v3068, %v3068
        %v3071 = vmul.f32 %v3069, %v3069
        %v3072 = vadd.f32 %v3070, %v3071
        %v3073 = vrot.slane %v3072, 4
        %v3074 = vadd.f32 %v3072, %v3073
        %v3075 = vrot.slane %v3074, 2
        %v3076 = vadd.f32 %v3074, %v3075
        %v3077 = vrot.slane %v3076, 1
        %v3078 = vadd.f32 %v3076, %v3077
        %v3079 = vmul.f32 %v3078, %v3041
        %v3080 = vsel %vm746, %v3079, 0.0
        %3081 = vadd.xlane.f32.xlu0 %v3080
        %v3082 = vpop.xlane.xlu0 %3081
        %v3083 = vmul.f32 %v3082, 0.0009765625
        %v3084 = vmul.f32 %v3083, %v3041
        %v3085 = vadd.f32 %v3084, 0.0
        %v3086 = vmul.f32 %v3078, %v3042
        %v3087 = vsel %vm746, %v3086, 0.0
        %3088 = vadd.xlane.f32.xlu0 %v3087
        %v3089 = vpop.xlane.xlu0 %3088
        %v3090 = vmul.f32 %v3089, 0.0009765625
        %v3091 = vmul.f32 %v3090, %v3042
        %v3092 = vadd.f32 %v3085, %v3091
        %v3093 = vld [vmem:[#allocation12 + $0x1] sm:$0x1]
        %v3094 = vld [vmem:[#allocation12 + $0x2] sm:$0x1]
        %v3095 = vadd.f32 %v3092, 1e-05
        %v3096 = vrsqrt.pop %v3095
        %v3097 = vlaneseq
        %v3098 = vshrl.u32 %v3097, 7
        %v3099 = vsub.s32 0, %v3098
        %v3100 = vrot.slane %v3096, %v3099
        %v3101 = vmul.f32 %v3068, %v3100
        %v3102 = vmul.f32 %v3069, %v3100
        %v3103 = vlaneseq
        %v3104 = vshrl.u32 %v3103, 7
        %v3105 = vsub.s32 0, %v3104
        %v3106 = vrot.slane %v3093, %v3105
        %v3107 = vmul.f32 %v3101, %v3106
        %v3108 = vmul.f32 %v3102, %v3106
        %v3109 = vlaneseq
        %v3110 = vshrl.u32 %v3109, 7
        %v3111 = vsub.s32 0, %v3110
        %v3112 = vrot.slane %v3094, %v3111
        %v3113 = vadd.f32 %v3107, %v3112
        %v3114 = vadd.f32 %v3108, %v3112
        %3115 = vst [vmem:[%s298 + $0x10] sm:$0xff] %v3113
        %3116 = vst [vmem:[%s298 + $0x18] sm:$0xff] %v3114
        %v3117 = vld [vmem:[#allocation12 + $0x3] sm:$0x1]
        %v3118 = vld [vmem:[#allocation12 + $0x4] sm:$0x1]
        %v3119 = vadd.f32 %v2951, %v2954
        %v3120 = vrot.slane %v3119, 4
        %v3121 = vadd.f32 %v3119, %v3120
        %v3122 = vrot.slane %v3121, 2
        %v3123 = vadd.f32 %v3121, %v3122
        %v3124 = vrot.slane %v3123, 1
        %v3125 = vadd.f32 %v3123, %v3124
        %v3126 = vmul.f32 %v3125, %v3117
        %v3127 = vsel %vm746, %v3126, 0.0
        %3128 = vadd.xlane.f32.xlu0 %v3127
        %v3129 = vpop.xlane.xlu0 %3128
        %v3130 = vmul.f32 %v3129, 0.0009765625
        %v3131 = vmul.f32 %v3130, %v3117
        %v3132 = vadd.f32 %v3131, 0.0
        %v3133 = vmul.f32 %v3125, %v3118
        %v3134 = vsel %vm746, %v3133, 0.0
        %3135 = vadd.xlane.f32.xlu0 %v3134
        %v3136 = vpop.xlane.xlu0 %3135
        %v3137 = vmul.f32 %v3136, 0.0009765625
        %v3138 = vmul.f32 %v3137, %v3118
        %v3139 = vadd.f32 %v3132, %v3138
        %v3140 = vlaneseq
        %v3141 = vshrl.u32 %v3140, 7
        %v3142 = vsub.s32 0, %v3141
        %v3143 = vrot.slane %v3139, %v3142
        %v3144 = vsub.f32 %v2951, %v3143
        %v3145 = vsub.f32 %v2954, %v3143
        %v3146 = vmul.f32 %v3144, %v3144
        %v3147 = vmul.f32 %v3145, %v3145
        %v3148 = vadd.f32 %v3146, %v3147
        %v3149 = vrot.slane %v3148, 4
        %v3150 = vadd.f32 %v3148, %v3149
        %v3151 = vrot.slane %v3150, 2
        %v3152 = vadd.f32 %v3150, %v3151
        %v3153 = vrot.slane %v3152, 1
        %v3154 = vadd.f32 %v3152, %v3153
        %v3155 = vmul.f32 %v3154, %v3117
        %v3156 = vsel %vm746, %v3155, 0.0
        %3157 = vadd.xlane.f32.xlu0 %v3156
        %v3158 = vpop.xlane.xlu0 %3157
        %v3159 = vmul.f32 %v3158, 0.0009765625
        %v3160 = vmul.f32 %v3159, %v3117
        %v3161 = vadd.f32 %v3160, 0.0
        %v3162 = vmul.f32 %v3154, %v3118
        %v3163 = vsel %vm746, %v3162, 0.0
        %3164 = vadd.xlane.f32.xlu0 %v3163
        %v3165 = vpop.xlane.xlu0 %3164
        %v3166 = vmul.f32 %v3165, 0.0009765625
        %v3167 = vmul.f32 %v3166, %v3118
        %v3168 = vadd.f32 %v3161, %v3167
        %v3169 = vld [vmem:[#allocation12 + $0x1] sm:$0x1]
        %v3170 = vld [vmem:[#allocation12 + $0x2] sm:$0x1]
        %v3171 = vadd.f32 %v3168, 1e-05
        %v3172 = vrsqrt.pop %v3171
        %v3173 = vlaneseq
        %v3174 = vshrl.u32 %v3173, 7
        %v3175 = vsub.s32 0, %v3174
        %v3176 = vrot.slane %v3172, %v3175
        %v3177 = vmul.f32 %v3144, %v3176
        %v3178 = vmul.f32 %v3145, %v3176
        %v3179 = vlaneseq
        %v3180 = vshrl.u32 %v3179, 7
        %v3181 = vsub.s32 0, %v3180
        %v3182 = vrot.slane %v3169, %v3181
        %v3183 = vmul.f32 %v3177, %v3182
        %v3184 = vmul.f32 %v3178, %v3182
        %v3185 = vlaneseq
        %v3186 = vshrl.u32 %v3185, 7
        %v3187 = vsub.s32 0, %v3186
        %v3188 = vrot.slane %v3170, %v3187
        %v3189 = vadd.f32 %v3183, %v3188
        %v3190 = vadd.f32 %v3184, %v3188
        %3191 = vst [vmem:[%s298 + $0x20] sm:$0xff] %v3189
        %3192 = vst [vmem:[%s298 + $0x28] sm:$0xff] %v3190
        %v3193 = vld [vmem:[#allocation12 + $0x3] sm:$0x1]
        %v3194 = vld [vmem:[#allocation12 + $0x4] sm:$0x1]
        %v3195 = vadd.f32 %v2959, %v2962
        %v3196 = vrot.slane %v3195, 4
        %v3197 = vadd.f32 %v3195, %v3196
        %v3198 = vrot.slane %v3197, 2
        %v3199 = vadd.f32 %v3197, %v3198
        %v3200 = vrot.slane %v3199, 1
        %v3201 = vadd.f32 %v3199, %v3200
        %v3202 = vmul.f32 %v3201, %v3193
        %v3203 = vsel %vm746, %v3202, 0.0
        %3204 = vadd.xlane.f32.xlu0 %v3203
        %v3205 = vpop.xlane.xlu0 %3204
        %v3206 = vmul.f32 %v3205, 0.0009765625
        %v3207 = vmul.f32 %v3206, %v3193
        %v3208 = vadd.f32 %v3207, 0.0
        %v3209 = vmul.f32 %v3201, %v3194
        %v3210 = vsel %vm746, %v3209, 0.0
        %3211 = vadd.xlane.f32.xlu0 %v3210
        %v3212 = vpop.xlane.xlu0 %3211
        %v3213 = vmul.f32 %v3212, 0.0009765625
        %v3214 = vmul.f32 %v3213, %v3194
        %v3215 = vadd.f32 %v3208, %v3214
        %v3216 = vlaneseq
        %v3217 = vshrl.u32 %v3216, 7
        %v3218 = vsub.s32 0, %v3217
        %v3219 = vrot.slane %v3215, %v3218
        %v3220 = vsub.f32 %v2959, %v3219
        %v3221 = vsub.f32 %v2962, %v3219
        %v3222 = vmul.f32 %v3220, %v3220
        %v3223 = vmul.f32 %v3221, %v3221
        %v3224 = vadd.f32 %v3222, %v3223
        %v3225 = vrot.slane %v3224, 4
        %v3226 = vadd.f32 %v3224, %v3225
        %v3227 = vrot.slane %v3226, 2
        %v3228 = vadd.f32 %v3226, %v3227
        %v3229 = vrot.slane %v3228, 1
        %v3230 = vadd.f32 %v3228, %v3229
        %v3231 = vmul.f32 %v3230, %v3193
        %v3232 = vsel %vm746, %v3231, 0.0
        %3233 = vadd.xlane.f32.xlu0 %v3232
        %v3234 = vpop.xlane.xlu0 %3233
        %v3235 = vmul.f32 %v3234, 0.0009765625
        %v3236 = vmul.f32 %v3235, %v3193
        %v3237 = vadd.f32 %v3236, 0.0
        %v3238 = vmul.f32 %v3230, %v3194
        %v3239 = vsel %vm746, %v3238, 0.0
        %3240 = vadd.xlane.f32.xlu0 %v3239
        %v3241 = vpop.xlane.xlu0 %3240
        %v3242 = vmul.f32 %v3241, 0.0009765625
        %v3243 = vmul.f32 %v3242, %v3194
        %v3244 = vadd.f32 %v3237, %v3243
        %v3245 = vld [vmem:[#allocation12 + $0x1] sm:$0x1]
        %v3246 = vld [vmem:[#allocation12 + $0x2] sm:$0x1]
        %v3247 = vadd.f32 %v3244, 1e-05
        %v3248 = vrsqrt.pop %v3247
        %v3249 = vlaneseq
        %v3250 = vshrl.u32 %v3249, 7
        %v3251 = vsub.s32 0, %v3250
        %v3252 = vrot.slane %v3248, %v3251
        %v3253 = vmul.f32 %v3220, %v3252
        %v3254 = vmul.f32 %v3221, %v3252
        %v3255 = vlaneseq
        %v3256 = vshrl.u32 %v3255, 7
        %v3257 = vsub.s32 0, %v3256
        %v3258 = vrot.slane %v3245, %v3257
        %v3259 = vmul.f32 %v3253, %v3258
        %v3260 = vmul.f32 %v3254, %v3258
        %v3261 = vlaneseq
        %v3262 = vshrl.u32 %v3261, 7
        %v3263 = vsub.s32 0, %v3262
        %v3264 = vrot.slane %v3246, %v3263
        %v3265 = vadd.f32 %v3259, %v3264
        %v3266 = vadd.f32 %v3260, %v3264
        %3267 = vst [vmem:[%s298 + $0x30] sm:$0xff] %v3265
        %3268 = vst [vmem:[%s298 + $0x38] sm:$0xff] %v3266
        %s3269 = sand.u32 %s142, 1
        %s3270 = scalar_lea.sflag [#allocation6], %s3269
        %s3271 = sand.u32 %s142, 1
        %s3272 = smul.addr %s3271, 64
        %s3273 = scalar_lea.vmem [#allocation13], %s3272
        // Predicated region
        $region61: #{tpu_custom_call.1} parent=39 // pred_check
          %p3274 = pneg %p152
        $region62: #{tpu_custom_call.1} parent=39 // pred_check_branch
          %3276 = sbr.rel (%p3274) target = $region64
        $region63: #{tpu_custom_call.1} parent=39 // pred_region
          %s3277 = smul.u32 8, %s24
          %s3279 = ssub.s32 1024, 1024
          %3280 = vsyncadd %s3270, %s3279
          %s3281 = smul.addr %s3277, 128
          %s3282 = scalar_lea.hbm %s5, %s3281
          %s3283 = sshll.u32 %s3273, 4
          %s3284 = int_to_ptr.vmem [resolvable:$true] %s3283
          %3289 = dma.vmem_to_hbm [thread:$0]  %s3284, 1024, %s3282, %s3270, 128, 128, 8
        $region64: #{tpu_custom_call.1} parent=39 // pred_fallthru
          _
      $region40: #{tpu_custom_call.1} parent=5 // pred_fallthru
        _
      %p3290 = scmp.le.s32.totalorder 2, %s19
      // Predicated region
      $region65: #{tpu_custom_call.1} parent=5 // pred_check
        %p3291 = pneg %p3290
      $region66: #{tpu_custom_call.1} parent=5 // pred_check_branch
        %3293 = sbr.rel (%p3291) target = $region68
      $region67: #{tpu_custom_call.1} parent=5 // pred_region
        %s3294 = ssub.s32 %s19, 2
        // Predicated region
        $region69: #{tpu_custom_call.1} parent=67 // pred_check
          %p3295 = pneg %p158
        $region70: #{tpu_custom_call.1} parent=67 // pred_check_branch
          %3297 = sbr.rel (%p3295) target = $region72
        $region71: #{tpu_custom_call.1} parent=67 // pred_region
          %s3298 = sand.u32 %s143, 1
          %s3299 = scalar_lea.sflag [#allocation6], %s3298
          %s3300 = sand.u32 %s143, 1
          %s3301 = smul.addr %s3300, 64
          %s3302 = scalar_lea.vmem [#allocation13], %s3301
          %3303 = dma.done %s3299, 1024
        $region72: #{tpu_custom_call.1} parent=67 // pred_fallthru
          _
      $region68: #{tpu_custom_call.1} parent=5 // pred_fallthru
        _
    $region6: #{tpu_custom_call.1} parent=1 // loop_footer
      %s23 = sadd.s32 1, %s19
    $region7: #{tpu_custom_call.1} parent=1 // loop_footer_branch
      %18 = sbr.rel target = $region3
    $region8: #{tpu_custom_call.1} parent=1 // loop_exit
      _
    %3304 = vsyncpa [#allocation5], 1
    %s3305 = scalar_lea.sflag [#allocation5], 1
    %3306 = vsyncpa %s3305, 1
    %3307 = vsyncpa [#allocation8], 1
    %3308 = vsyncpa [#allocation11], 1
    %3309 = vsyncpa [#allocation6], 1
    %s3310 = scalar_lea.sflag [#allocation6], 1
    %3311 = vsyncpa %s3310, 1

</llo_original>
